<compile_context>
chip_gen: v7x
topology: tpu7x:2x2x1
jax: 0.10.0
libtpu: 0.0.40
codegen_flags: <defaults>
</compile_context>

<pallas_src>
import jax
import jax.numpy as jnp
from jax import lax
from jax.experimental import pallas as pl
from jax.experimental.pallas import tpu as pltpu

_VMEM_LIMIT = 32 * 1024 * 1024   # safe on v5e/v6e (128 MiB) and v7x (64 MiB/TC)
_LANE = 128


def _round_up(x, m):
    return (x + m - 1) // m * m


# -----------------------------------------------------------------------------
# Kernels (closures over static geometry)
# -----------------------------------------------------------------------------
def _make_identity_kernel(h, w, cp):
    """Stride-1 ResBlock with identity shortcut (Cin == Cout == cp, padded)."""
    wp = w + 2                     # row stride of the zero-padded flat plane
    m = h * wp                     # matmul M (includes 2 garbage cols per row)

    def kernel(xflat_ref, mask_ref, w1_ref, s1_ref, w2_ref, s2_ref,
               o_ref, slab, y1flat):
        # ---- conv1: gather 9 taps into a (m, 9*cp) bf16 im2col slab.  Each
        # tap is a contiguous row-slice of the flattened padded input.
        for t in range(9):
            di, dj = t // 3, t % 3
            slab[:, t * cp:(t + 1) * cp] = xflat_ref[0, pl.ds(di * wp + dj, m), :]
        acc1 = jnp.dot(slab[...], w1_ref[...], preferred_element_type=jnp.float32)
        # bn1 + relu; zero the 2 garbage columns per row so they become the
        # zero border of the conv2 input plane.
        y1 = jnp.maximum(acc1 + s1_ref[...], 0.0) * mask_ref[...]

        # ---- stage y1 as a zero-padded flat plane (interior at offset wp+1).
        # Only the thin top/bottom borders are zeroed each step; the masked
        # garbage columns keep the left/right borders zero.
        y1flat[pl.ds(0, wp + 1), :] = jnp.zeros((wp + 1, cp), y1flat.dtype)
        tail0 = wp + 1 + m
        tail = y1flat.shape[0] - tail0
        y1flat[pl.ds(tail0, tail), :] = jnp.zeros((tail, cp), y1flat.dtype)
        y1flat[pl.ds(wp + 1, m), :] = y1.astype(y1flat.dtype)

        # ---- conv2 (reuses the same slab scratch) + bn2 + relu.
        for t in range(9):
            di, dj = t // 3, t % 3
            slab[:, t * cp:(t + 1) * cp] = y1flat[pl.ds(di * wp + dj, m), :]
        acc2 = jnp.dot(slab[...], w2_ref[...], preferred_element_type=jnp.float32)
        y2 = jnp.maximum(acc2 + s2_ref[...], 0.0)

        # ---- identity shortcut (interior of the padded input) + final relu.
        sc = xflat_ref[0, pl.ds(wp + 1, m), :].astype(jnp.float32)
        o_ref[0] = jnp.maximum(y2 + sc, 0.0).astype(o_ref.dtype)

    return kernel


def _make_downsample_kernel(ho, wo, cpin, cpout):
    """Stride-2 conv1 + (1x1 stride-2 conv + BN) shortcut path."""
    whp = wo + 2                   # polyphase-plane AND padded-y1 row stride
    m = ho * whp                   # matmul M (2 garbage cols per output row)

    def kernel(xph_ref, mask_ref, w1_ref, s1_ref, w2_ref, s2_ref,
               ws_ref, ss_ref, o_ref, slab1, slab2, y1flat):
        # ---- conv1 (3x3, stride 2): each tap lives in one of the 4 polyphase
        # planes of the padded input; within a plane it is a contiguous slice.
        for t in range(9):
            di, dj = t // 3, t % 3
            ph = (di % 2) * 2 + (dj % 2)
            off = (di // 2) * whp + (dj // 2)
            slab1[:, t * cpin:(t + 1) * cpin] = xph_ref[0, ph, pl.ds(off, m), :]
        acc1 = jnp.dot(slab1[...], w1_ref[...], preferred_element_type=jnp.float32)
        y1 = jnp.maximum(acc1 + s1_ref[...], 0.0) * mask_ref[...]

        # ---- stage padded y1 plane for conv2 (border rows zeroed, interior
        # written with masked garbage columns -> left/right borders stay zero).
        y1flat[pl.ds(0, whp + 1), :] = jnp.zeros((whp + 1, cpout), y1flat.dtype)
        tail0 = whp + 1 + m
        tail = y1flat.shape[0] - tail0
        y1flat[pl.ds(tail0, tail), :] = jnp.zeros((tail, cpout), y1flat.dtype)
        y1flat[pl.ds(whp + 1, m), :] = y1.astype(y1flat.dtype)

        # ---- conv2 (3x3, stride 1) + bn2 + relu.
        for t in range(9):
            di, dj = t // 3, t % 3
            slab2[:, t * cpout:(t + 1) * cpout] = y1flat[pl.ds(di * whp + dj, m), :]
        acc2 = jnp.dot(slab2[...], w2_ref[...], preferred_element_type=jnp.float32)
        y2 = jnp.maximum(acc2 + s2_ref[...], 0.0)

        # ---- shortcut: 1x1 stride-2 conv + BN == one matmul on phase (1, 1),
        # whose flat grid aligns exactly with the conv2 output grid.
        sc = jnp.dot(xph_ref[0, 3, pl.ds(0, m), :], ws_ref[...],
                     preferred_element_type=jnp.float32) + ss_ref[...]
        o_ref[0] = jnp.maximum(y2 + sc, 0.0).astype(o_ref.dtype)

    return kernel


# -----------------------------------------------------------------------------
# pallas_call wrappers (NHWC, channel-padded to 128 lanes)
# -----------------------------------------------------------------------------
def _col_mask(m, row_stride, valid_w):
    col = jnp.arange(m, dtype=jnp.int32) % row_stride
    return (col < valid_w).astype(jnp.float32).reshape(m, 1)


def _resblock_identity(params, x_nhwc):
    n, h, w, cin = x_nhwc.shape
    assert params["cin"] == cin and cin == params["cout"], \
        "identity-shortcut path requires in_channels == out_channels"
    cout, cp = params["cout"], params["cpout"]
    wp = w + 2
    m = h * wp
    na = _round_up((h + 2) * wp + 2, 8)     # flat-plane rows (incl. headroom)

    # Halo + channel zero-pad + bf16 cast + spatial flatten: one XLA producer
    # pass; the kernel then reads bf16 (half the activation HBM bytes).
    xp = jnp.pad(x_nhwc.astype(jnp.bfloat16),
                 ((0, 0), (1, 1), (1, 1), (0, cp - cin)))
    xflat = xp.reshape(n, (h + 2) * wp, cp)
    xflat = jnp.pad(xflat, ((0, 0), (0, na - (h + 2) * wp), (0, 0)))
    mask = _col_mask(m, wp, w)

    out_flat = pl.pallas_call(
        _make_identity_kernel(h, w, cp),
        out_shape=jax.ShapeDtypeStruct((n, m, cp), x_nhwc.dtype),
        grid=(n,),
        in_specs=[
            pl.BlockSpec((1, na, cp), lambda b: (b, 0, 0)),
            pl.BlockSpec((m, 1), lambda b: (0, 0)),
            pl.BlockSpec((9 * cp, cp), lambda b: (0, 0)),
            pl.BlockSpec((1, cp), lambda b: (0, 0)),
            pl.BlockSpec((9 * cp, cp), lambda b: (0, 0)),
            pl.BlockSpec((1, cp), lambda b: (0, 0)),
        ],
        out_specs=pl.BlockSpec((1, m, cp), lambda b: (b, 0, 0)),
        scratch_shapes=[
            pltpu.VMEM((m, 9 * cp), jnp.bfloat16),   # shared im2col slab
            pltpu.VMEM((na, cp), jnp.bfloat16),      # padded y1 plane
        ],
        compiler_params=pltpu.CompilerParams(
            dimension_semantics=("parallel",),
            vmem_limit_bytes=_VMEM_LIMIT),
    )(xflat, mask, params["w1m"], params["shift1"], params["w2m"], params["shift2"])

    # (n, h*wp, cp) -> valid (h, w) window, real channels.
    return out_flat.reshape(n, h, wp, cp)[:, :, :w, :cout]


def _resblock_downsample(params, x_nhwc):
    n, h, w, cin = x_nhwc.shape
    assert h % 2 == 0 and w % 2 == 0, "downsample path requires even H, W"
    assert params["cin"] == cin
    cout, cpin, cpout = params["cout"], params["cpin"], params["cpout"]
    ho, wo = h // 2, w // 2
    whp = wo + 2                    # polyphase-plane / padded-y1 row stride
    hh = ho + 1
    m = ho * whp
    nph = _round_up(hh * whp + 1, 8)
    ny = _round_up((ho + 2) * whp + 2, 8)

    # Zero-pad (1 top/bottom row, 1 left col, 3 right cols so each polyphase
    # plane is wo+2 wide == padded-y1 stride), pad channels, cast to bf16 and
    # split into the 4 stride-2 phases: one fused XLA producer pass, no 9x
    # im2col expansion in HBM.
    xp = jnp.pad(x_nhwc.astype(jnp.bfloat16),
                 ((0, 0), (1, 1), (1, 3), (0, cpin - cin)))
    phases = [xp[:, p::2, q::2, :].reshape(n, hh * whp, cpin)
              for p in range(2) for q in range(2)]
    xph = jnp.stack(phases, axis=1)                       # (n, 4, hh*whp, cpin)
    xph = jnp.pad(xph, ((0, 0), (0, 0), (0, nph - hh * whp), (0, 0)))
    mask = _col_mask(m, whp, wo)

    out_flat = pl.pallas_call(
        _make_downsample_kernel(ho, wo, cpin, cpout),
        out_shape=jax.ShapeDtypeStruct((n, m, cpout), x_nhwc.dtype),
        grid=(n,),
        in_specs=[
            pl.BlockSpec((1, 4, nph, cpin), lambda b: (b, 0, 0, 0)),
            pl.BlockSpec((m, 1), lambda b: (0, 0)),
            pl.BlockSpec((9 * cpin, cpout), lambda b: (0, 0)),
            pl.BlockSpec((1, cpout), lambda b: (0, 0)),
            pl.BlockSpec((9 * cpout, cpout), lambda b: (0, 0)),
            pl.BlockSpec((1, cpout), lambda b: (0, 0)),
            pl.BlockSpec((cpin, cpout), lambda b: (0, 0)),
            pl.BlockSpec((1, cpout), lambda b: (0, 0)),
        ],
        out_specs=pl.BlockSpec((1, m, cpout), lambda b: (b, 0, 0)),
        scratch_shapes=[
            pltpu.VMEM((m, 9 * cpin), jnp.bfloat16),   # conv1 im2col slab
            pltpu.VMEM((m, 9 * cpout), jnp.bfloat16),  # conv2 im2col slab
            pltpu.VMEM((ny, cpout), jnp.bfloat16),     # padded y1 plane
        ],
        compiler_params=pltpu.CompilerParams(
            dimension_semantics=("parallel",),
            vmem_limit_bytes=_VMEM_LIMIT),
    )(xph, mask, params["w1m"], params["shift1"], params["w2m"], params["shift2"],
      params["wsm"], params["shift_s"])

    return out_flat.reshape(n, ho, whp, cpout)[:, :, :wo, :cout]


def resblock_forward(params, x_nchw, downsample):
    # TODO(synk): in a full network keep activations NHWC end-to-end and drop
    # these boundary transposes (they are extra full HBM passes).
    x = jnp.transpose(x_nchw, (0, 2, 3, 1))               # NCHW -> NHWC
    if downsample:
        out = _resblock_downsample(params, x)
    else:
        out = _resblock_identity(params, x)
    return jnp.transpose(out, (0, 3, 1, 2))                # back to NCHW


# -----------------------------------------------------------------------------
# Parameter construction / BN folding (channel-padded to 128)
# -----------------------------------------------------------------------------
def _fold_conv3x3(w_pt, scale, cpin, cpout):
    """PyTorch (Cout, Cin, 3, 3) + BN scale -> (9*Cpin, Cpout) bf16, tap-major."""
    cout, cin = w_pt.shape[0], w_pt.shape[1]
    w = jnp.transpose(w_pt, (2, 3, 1, 0)).reshape(9, cin, cout) * scale[None, None, :]
    w = jnp.pad(w, ((0, 0), (0, cpin - cin), (0, cpout - cout)))
    return w.reshape(9 * cpin, cpout).astype(jnp.bfloat16)


def _fold_conv1x1(w_pt, scale, cpin, cpout):
    cout, cin = w_pt.shape[0], w_pt.shape[1]
    w = jnp.transpose(w_pt[:, :, 0, 0], (1, 0)) * scale[None, :]
    w = jnp.pad(w, ((0, cpin - cin), (0, cpout - cout)))
    return w.astype(jnp.bfloat16)


def _pad_shift(shift, cpout):
    return jnp.pad(shift, (0, cpout - shift.shape[0])).reshape(1, cpout)


def make_params(key, cin, cout, downsample, eps=1e-5):
    cpin, cpout = _round_up(cin, _LANE), _round_up(cout, _LANE)
    ks = iter(jax.random.split(key, 20))

    def uniform(shape, bound):
        return jax.random.uniform(next(ks), shape, jnp.float32, -bound, bound)

    def normal(shape, scale=0.1):
        return scale * jax.random.normal(next(ks), shape, jnp.float32)

    b1 = 1.0 / (cin * 9) ** 0.5
    w1 = uniform((cout, cin, 3, 3), b1)
    bias1 = uniform((cout,), b1)
    b2 = 1.0 / (cout * 9) ** 0.5
    w2 = uniform((cout, cout, 3, 3), b2)
    bias2 = uniform((cout,), b2)

    def bn(c):
        gamma = 1.0 + normal((c,))
        beta = normal((c,))
        mean = normal((c,))
        var = jnp.abs(1.0 + normal((c,)))
        return gamma, beta, mean, var

    bn1 = bn(cout)
    bn2 = bn(cout)

    def fold(gamma, beta, mean, var, bias):
        scale = gamma / jnp.sqrt(var + eps)
        shift = beta + scale * (bias - mean)
        return scale, shift

    scale1, shift1 = fold(*bn1, bias1)
    scale2, shift2 = fold(*bn2, bias2)

    raw = dict(w1=w1, b1=bias1, w2=w2, b2=bias2, bn1=bn1, bn2=bn2)
    params = dict(
        raw=raw, cin=cin, cout=cout, cpin=cpin, cpout=cpout,
        w1m=_fold_conv3x3(w1, scale1, cpin, cpout),
        shift1=_pad_shift(shift1, cpout),
        w2m=_fold_conv3x3(w2, scale2, cpout, cpout),
        shift2=_pad_shift(shift2, cpout),
    )

    if downsample:
        bs = 1.0 / cin ** 0.5
        ws = uniform((cout, cin, 1, 1), bs)
        biass = uniform((cout,), bs)
        bns = bn(cout)
        raw.update(ws=ws, bs=biass, bns=bns)
        scale_s, shift_s = fold(*bns, biass)
        params.update(
            wsm=_fold_conv1x1(ws, scale_s, cpin, cpout),
            shift_s=_pad_shift(shift_s, cpout),
        )
    return params


# -----------------------------------------------------------------------------
# Pure-JAX reference (for correctness check)
# -----------------------------------------------------------------------------
def _ref_conv(x_nhwc, w_pt, b, stride, padding):
    w_hwio = jnp.transpose(w_pt, (2, 3, 1, 0))
    y = lax.conv_general_dilated(
        x_nhwc, w_hwio, (stride, stride),
        [(padding, padding), (padding, padding)],
        dimension_numbers=("NHWC", "HWIO", "NHWC"))
    return y + b.reshape(1, 1, 1, -1)


def _ref_bn(x, gamma, beta, mean, var, eps=1e-5):
    return gamma * (x - mean) / jnp.sqrt(var + eps) + beta


def resblock_reference(params, x_nchw, downsample):
    raw = params["raw"]
    x = jnp.transpose(x_nchw, (0, 2, 3, 1))
    stride1 = 2 if downsample else 1
    y = jax.nn.relu(_ref_bn(_ref_conv(x, raw["w1"], raw["b1"], stride1, 1), *raw["bn1"]))
    y = jax.nn.relu(_ref_bn(_ref_conv(y, raw["w2"], raw["b2"], 1, 1), *raw["bn2"]))
    if downsample:
        sc = _ref_bn(_ref_conv(x, raw["ws"], raw["bs"], 2, 0), *raw["bns"])
    else:
        sc = x
    out = jax.nn.relu(y + sc)
    return jnp.transpose(out, (0, 3, 1, 2))


# -----------------------------------------------------------------------------
if __name__ == "__main__":
    key = jax.random.PRNGKey(0)
    kx, kp1, kp2 = jax.random.split(key, 3)

    N, Cin, H, W = 2, 4, 16, 16
    x = jax.random.normal(kx, (N, Cin, H, W), jnp.float32)

    # Tolerance documents the bf16 staging of activations/weights (f32 accum).
    TOL = 3e-2

    # Case 1: downsample=False (identity shortcut, in_channels == out_channels)
    params1 = make_params(kp1, Cin, Cin, downsample=False)
    out1 = jax.block_until_ready(resblock_forward(params1, x, downsample=False))
    ref1 = resblock_reference(params1, x, downsample=False)
    assert out1.shape == (N, Cin, H, W)
    assert jnp.allclose(out1, ref1, atol=TOL, rtol=TOL), \
        float(jnp.max(jnp.abs(out1 - ref1)))

    # Case 2: downsample=True (1x1 stride-2 conv + BN shortcut)
    Cout = 8
    params2 = make_params(kp2, Cin, Cout, downsample=True)
    out2 = jax.block_until_ready(resblock_forward(params2, x, downsample=True))
    ref2 = resblock_reference(params2, x, downsample=True)
    assert out2.shape == (N, Cout, H // 2, W // 2)
    assert jnp.allclose(out2, ref2, atol=TOL, rtol=TOL), \
        float(jnp.max(jnp.abs(out2 - ref2)))

    print("KERNEL_OK")
</pallas_src>

<mosaic_0001>
module attributes {stable_mosaic.version = 11 : i64} {
  func.func @kernel(%arg0: i32, %arg1: memref<1x328x128xbf16, #tpu.memory_space<vmem>>, %arg2: memref<288x1xf32, #tpu.memory_space<vmem>>, %arg3: memref<1152x128xbf16, #tpu.memory_space<vmem>>, %arg4: memref<1x128xf32, #tpu.memory_space<vmem>>, %arg5: memref<1152x128xbf16, #tpu.memory_space<vmem>>, %arg6: memref<1x128xf32, #tpu.memory_space<vmem>>, %arg7: memref<1x288x128xf32, #tpu.memory_space<vmem>>, %arg8: memref<288x1152xbf16, #tpu.memory_space<vmem>>, %arg9: memref<328x128xbf16, #tpu.memory_space<vmem>>) attributes {dimension_semantics = [#tpu.dimension_semantics<parallel>], iteration_bounds = array<i64: 2>, scalar_prefetch = 0 : i64, scratch_operands = 2 : i64, tpu.core_type = #tpu.core_type<tc>, window_params = [{transform_indices = @transform_0, window_bounds = array<i64: 1, 328, 128>}, {pipeline_mode = #tpu.pipeline_mode<synchronous>, transform_indices = @transform_1, window_bounds = array<i64: 288, 1>}, {pipeline_mode = #tpu.pipeline_mode<synchronous>, transform_indices = @transform_2, window_bounds = array<i64: 1152, 128>}, {pipeline_mode = #tpu.pipeline_mode<synchronous>, transform_indices = @transform_3, window_bounds = array<i64: 1, 128>}, {pipeline_mode = #tpu.pipeline_mode<synchronous>, transform_indices = @transform_4, window_bounds = array<i64: 1152, 128>}, {pipeline_mode = #tpu.pipeline_mode<synchronous>, transform_indices = @transform_5, window_bounds = array<i64: 1, 128>}, {transform_indices = @transform_6, window_bounds = array<i64: 1, 288, 128>}]} {
    %c0 = arith.constant 0 : index
    %c0_0 = arith.constant 0 : index
    %c0_1 = arith.constant 0 : index
    %0 = vector.load %arg1[%c0, %c0_0, %c0_1] : memref<1x328x128xbf16, #tpu.memory_space<vmem>>, vector<1x288x128xbf16>
    %1 = vector.shape_cast %0 : vector<1x288x128xbf16> to vector<288x128xbf16>
    %c0_2 = arith.constant 0 : index
    %c0_3 = arith.constant 0 : index
    %2 = vector.load %arg8[%c0_2, %c0_3] : memref<288x1152xbf16, #tpu.memory_space<vmem>>, vector<288x128xbf16>
    tpu.vector_store %arg8[%c0_2, %c0_3], %1 {strides = array<i32>} : memref<288x1152xbf16, #tpu.memory_space<vmem>>, vector<288x128xbf16>,
    %c0_4 = arith.constant 0 : index
    %c1 = arith.constant 1 : index
    %c0_5 = arith.constant 0 : index
    %3 = vector.load %arg1[%c0_4, %c1, %c0_5] : memref<1x328x128xbf16, #tpu.memory_space<vmem>>, vector<1x288x128xbf16>
    %4 = vector.shape_cast %3 : vector<1x288x128xbf16> to vector<288x128xbf16>
    %c0_6 = arith.constant 0 : index
    %c128 = arith.constant 128 : index
    %5 = vector.load %arg8[%c0_6, %c128] : memref<288x1152xbf16, #tpu.memory_space<vmem>>, vector<288x128xbf16>
    tpu.vector_store %arg8[%c0_6, %c128], %4 {strides = array<i32>} : memref<288x1152xbf16, #tpu.memory_space<vmem>>, vector<288x128xbf16>,
    %c0_7 = arith.constant 0 : index
    %c2 = arith.constant 2 : index
    %c0_8 = arith.constant 0 : index
    %6 = vector.load %arg1[%c0_7, %c2, %c0_8] : memref<1x328x128xbf16, #tpu.memory_space<vmem>>, vector<1x288x128xbf16>
    %7 = vector.shape_cast %6 : vector<1x288x128xbf16> to vector<288x128xbf16>
    %c0_9 = arith.constant 0 : index
    %c256 = arith.constant 256 : index
    %8 = vector.load %arg8[%c0_9, %c256] : memref<288x1152xbf16, #tpu.memory_space<vmem>>, vector<288x128xbf16>
    tpu.vector_store %arg8[%c0_9, %c256], %7 {strides = array<i32>} : memref<288x1152xbf16, #tpu.memory_space<vmem>>, vector<288x128xbf16>,
    %c0_10 = arith.constant 0 : index
    %c18 = arith.constant 18 : index
    %c0_11 = arith.constant 0 : index
    %9 = vector.load %arg1[%c0_10, %c18, %c0_11] : memref<1x328x128xbf16, #tpu.memory_space<vmem>>, vector<1x288x128xbf16>
    %10 = vector.shape_cast %9 : vector<1x288x128xbf16> to vector<288x128xbf16>
    %c0_12 = arith.constant 0 : index
    %c384 = arith.constant 384 : index
    %11 = vector.load %arg8[%c0_12, %c384] : memref<288x1152xbf16, #tpu.memory_space<vmem>>, vector<288x128xbf16>
    tpu.vector_store %arg8[%c0_12, %c384], %10 {strides = array<i32>} : memref<288x1152xbf16, #tpu.memory_space<vmem>>, vector<288x128xbf16>,
    %c0_13 = arith.constant 0 : index
    %c19 = arith.constant 19 : index
    %c0_14 = arith.constant 0 : index
    %12 = vector.load %arg1[%c0_13, %c19, %c0_14] : memref<1x328x128xbf16, #tpu.memory_space<vmem>>, vector<1x288x128xbf16>
    %13 = vector.shape_cast %12 : vector<1x288x128xbf16> to vector<288x128xbf16>
    %c0_15 = arith.constant 0 : index
    %c512 = arith.constant 512 : index
    %14 = vector.load %arg8[%c0_15, %c512] : memref<288x1152xbf16, #tpu.memory_space<vmem>>, vector<288x128xbf16>
    tpu.vector_store %arg8[%c0_15, %c512], %13 {strides = array<i32>} : memref<288x1152xbf16, #tpu.memory_space<vmem>>, vector<288x128xbf16>,
    %c0_16 = arith.constant 0 : index
    %c20 = arith.constant 20 : index
    %c0_17 = arith.constant 0 : index
    %15 = vector.load %arg1[%c0_16, %c20, %c0_17] : memref<1x328x128xbf16, #tpu.memory_space<vmem>>, vector<1x288x128xbf16>
    %16 = vector.shape_cast %15 : vector<1x288x128xbf16> to vector<288x128xbf16>
    %c0_18 = arith.constant 0 : index
    %c640 = arith.constant 640 : index
    %17 = vector.load %arg8[%c0_18, %c640] : memref<288x1152xbf16, #tpu.memory_space<vmem>>, vector<288x128xbf16>
    tpu.vector_store %arg8[%c0_18, %c640], %16 {strides = array<i32>} : memref<288x1152xbf16, #tpu.memory_space<vmem>>, vector<288x128xbf16>,
    %c0_19 = arith.constant 0 : index
    %c36 = arith.constant 36 : index
    %c0_20 = arith.constant 0 : index
    %18 = vector.load %arg1[%c0_19, %c36, %c0_20] : memref<1x328x128xbf16, #tpu.memory_space<vmem>>, vector<1x288x128xbf16>
    %19 = vector.shape_cast %18 : vector<1x288x128xbf16> to vector<288x128xbf16>
    %c0_21 = arith.constant 0 : index
    %c768 = arith.constant 768 : index
    %20 = vector.load %arg8[%c0_21, %c768] : memref<288x1152xbf16, #tpu.memory_space<vmem>>, vector<288x128xbf16>
    tpu.vector_store %arg8[%c0_21, %c768], %19 {strides = array<i32>} : memref<288x1152xbf16, #tpu.memory_space<vmem>>, vector<288x128xbf16>,
    %c0_22 = arith.constant 0 : index
    %c37 = arith.constant 37 : index
    %c0_23 = arith.constant 0 : index
    %21 = vector.load %arg1[%c0_22, %c37, %c0_23] : memref<1x328x128xbf16, #tpu.memory_space<vmem>>, vector<1x288x128xbf16>
    %22 = vector.shape_cast %21 : vector<1x288x128xbf16> to vector<288x128xbf16>
    %c0_24 = arith.constant 0 : index
    %c896 = arith.constant 896 : index
    %23 = vector.load %arg8[%c0_24, %c896] : memref<288x1152xbf16, #tpu.memory_space<vmem>>, vector<288x128xbf16>
    tpu.vector_store %arg8[%c0_24, %c896], %22 {strides = array<i32>} : memref<288x1152xbf16, #tpu.memory_space<vmem>>, vector<288x128xbf16>,
    %c0_25 = arith.constant 0 : index
    %c38 = arith.constant 38 : index
    %c0_26 = arith.constant 0 : index
    %24 = vector.load %arg1[%c0_25, %c38, %c0_26] : memref<1x328x128xbf16, #tpu.memory_space<vmem>>, vector<1x288x128xbf16>
    %25 = vector.shape_cast %24 : vector<1x288x128xbf16> to vector<288x128xbf16>
    %c0_27 = arith.constant 0 : index
    %c1024 = arith.constant 1024 : index
    %26 = vector.load %arg8[%c0_27, %c1024] : memref<288x1152xbf16, #tpu.memory_space<vmem>>, vector<288x128xbf16>
    tpu.vector_store %arg8[%c0_27, %c1024], %25 {strides = array<i32>} : memref<288x1152xbf16, #tpu.memory_space<vmem>>, vector<288x128xbf16>,
    %c0_28 = arith.constant 0 : index
    %c0_29 = arith.constant 0 : index
    %27 = vector.load %arg8[%c0_28, %c0_29] : memref<288x1152xbf16, #tpu.memory_space<vmem>>, vector<288x1152xbf16>
    %c0_30 = arith.constant 0 : index
    %c0_31 = arith.constant 0 : index
    %28 = vector.load %arg3[%c0_30, %c0_31] : memref<1152x128xbf16, #tpu.memory_space<vmem>>, vector<1152x128xbf16>
    %cst = arith.constant dense<0.000000e+00> : vector<288x128xf32>
    %29 = tpu.matmul %27, %28, %cst {dimension_numbers = #tpu.dot_dimension_numbers<[1], [0], [0], [1], [0, 0, 1, 1], [], []>} : vector<288x1152xbf16>, vector<1152x128xbf16>, vector<288x128xf32> -> vector<288x128xf32>
    %c0_32 = arith.constant 0 : index
    %c0_33 = arith.constant 0 : index
    %30 = vector.load %arg4[%c0_32, %c0_33] : memref<1x128xf32, #tpu.memory_space<vmem>>, vector<1x128xf32>
    %31 = vector.broadcast %30 : vector<1x128xf32> to vector<288x128xf32>
    %32 = arith.addf %29, %31 : vector<288x128xf32>
    %cst_34 = arith.constant 0.000000e+00 : f32
    %33 = vector.broadcast %cst_34 : f32 to vector<288x128xf32>
    %34 = arith.maximumf %32, %33 : vector<288x128xf32>
    %c0_35 = arith.constant 0 : index
    %c0_36 = arith.constant 0 : index
    %35 = vector.load %arg2[%c0_35, %c0_36] : memref<288x1xf32, #tpu.memory_space<vmem>>, vector<288x1xf32>
    %36 = vector.broadcast %35 : vector<288x1xf32> to vector<288x128xf32>
    %37 = arith.mulf %34, %36 : vector<288x128xf32>
    %cst_37 = arith.constant 0.000000e+00 : bf16
    %38 = vector.broadcast %cst_37 : bf16 to vector<19x128xbf16>
    %c0_38 = arith.constant 0 : index
    %c0_39 = arith.constant 0 : index
    %39 = vector.load %arg9[%c0_38, %c0_39] : memref<328x128xbf16, #tpu.memory_space<vmem>>, vector<19x128xbf16>
    tpu.vector_store %arg9[%c0_38, %c0_39], %38 {strides = array<i32>} : memref<328x128xbf16, #tpu.memory_space<vmem>>, vector<19x128xbf16>,
    %cst_40 = arith.constant 0.000000e+00 : bf16
    %40 = vector.broadcast %cst_40 : bf16 to vector<21x128xbf16>
    %c307 = arith.constant 307 : index
    %c0_41 = arith.constant 0 : index
    %41 = vector.load %arg9[%c307, %c0_41] : memref<328x128xbf16, #tpu.memory_space<vmem>>, vector<21x128xbf16>
    tpu.vector_store %arg9[%c307, %c0_41], %40 {strides = array<i32>} : memref<328x128xbf16, #tpu.memory_space<vmem>>, vector<21x128xbf16>,
    %42 = arith.truncf %37 : vector<288x128xf32> to vector<288x128xbf16>
    %c19_42 = arith.constant 19 : index
    %c0_43 = arith.constant 0 : index
    %43 = vector.load %arg9[%c19_42, %c0_43] : memref<328x128xbf16, #tpu.memory_space<vmem>>, vector<288x128xbf16>
    tpu.vector_store %arg9[%c19_42, %c0_43], %42 {strides = array<i32>} : memref<328x128xbf16, #tpu.memory_space<vmem>>, vector<288x128xbf16>,
    %c0_44 = arith.constant 0 : index
    %c0_45 = arith.constant 0 : index
    %44 = vector.load %arg9[%c0_44, %c0_45] : memref<328x128xbf16, #tpu.memory_space<vmem>>, vector<288x128xbf16>
    %c0_46 = arith.constant 0 : index
    %c0_47 = arith.constant 0 : index
    %45 = vector.load %arg8[%c0_46, %c0_47] : memref<288x1152xbf16, #tpu.memory_space<vmem>>, vector<288x128xbf16>
    tpu.vector_store %arg8[%c0_46, %c0_47], %44 {strides = array<i32>} : memref<288x1152xbf16, #tpu.memory_space<vmem>>, vector<288x128xbf16>,
    %c1_48 = arith.constant 1 : index
    %c0_49 = arith.constant 0 : index
    %46 = vector.load %arg9[%c1_48, %c0_49] : memref<328x128xbf16, #tpu.memory_space<vmem>>, vector<288x128xbf16>
    %c0_50 = arith.constant 0 : index
    %c128_51 = arith.constant 128 : index
    %47 = vector.load %arg8[%c0_50, %c128_51] : memref<288x1152xbf16, #tpu.memory_space<vmem>>, vector<288x128xbf16>
    tpu.vector_store %arg8[%c0_50, %c128_51], %46 {strides = array<i32>} : memref<288x1152xbf16, #tpu.memory_space<vmem>>, vector<288x128xbf16>,
    %c2_52 = arith.constant 2 : index
    %c0_53 = arith.constant 0 : index
    %48 = vector.load %arg9[%c2_52, %c0_53] : memref<328x128xbf16, #tpu.memory_space<vmem>>, vector<288x128xbf16>
    %c0_54 = arith.constant 0 : index
    %c256_55 = arith.constant 256 : index
    %49 = vector.load %arg8[%c0_54, %c256_55] : memref<288x1152xbf16, #tpu.memory_space<vmem>>, vector<288x128xbf16>
    tpu.vector_store %arg8[%c0_54, %c256_55], %48 {strides = array<i32>} : memref<288x1152xbf16, #tpu.memory_space<vmem>>, vector<288x128xbf16>,
    %c18_56 = arith.constant 18 : index
    %c0_57 = arith.constant 0 : index
    %50 = vector.load %arg9[%c18_56, %c0_57] : memref<328x128xbf16, #tpu.memory_space<vmem>>, vector<288x128xbf16>
    %c0_58 = arith.constant 0 : index
    %c384_59 = arith.constant 384 : index
    %51 = vector.load %arg8[%c0_58, %c384_59] : memref<288x1152xbf16, #tpu.memory_space<vmem>>, vector<288x128xbf16>
    tpu.vector_store %arg8[%c0_58, %c384_59], %50 {strides = array<i32>} : memref<288x1152xbf16, #tpu.memory_space<vmem>>, vector<288x128xbf16>,
    %c19_60 = arith.constant 19 : index
    %c0_61 = arith.constant 0 : index
    %52 = vector.load %arg9[%c19_60, %c0_61] : memref<328x128xbf16, #tpu.memory_space<vmem>>, vector<288x128xbf16>
    %c0_62 = arith.constant 0 : index
    %c512_63 = arith.constant 512 : index
    %53 = vector.load %arg8[%c0_62, %c512_63] : memref<288x1152xbf16, #tpu.memory_space<vmem>>, vector<288x128xbf16>
    tpu.vector_store %arg8[%c0_62, %c512_63], %52 {strides = array<i32>} : memref<288x1152xbf16, #tpu.memory_space<vmem>>, vector<288x128xbf16>,
    %c20_64 = arith.constant 20 : index
    %c0_65 = arith.constant 0 : index
    %54 = vector.load %arg9[%c20_64, %c0_65] : memref<328x128xbf16, #tpu.memory_space<vmem>>, vector<288x128xbf16>
    %c0_66 = arith.constant 0 : index
    %c640_67 = arith.constant 640 : index
    %55 = vector.load %arg8[%c0_66, %c640_67] : memref<288x1152xbf16, #tpu.memory_space<vmem>>, vector<288x128xbf16>
    tpu.vector_store %arg8[%c0_66, %c640_67], %54 {strides = array<i32>} : memref<288x1152xbf16, #tpu.memory_space<vmem>>, vector<288x128xbf16>,
    %c36_68 = arith.constant 36 : index
    %c0_69 = arith.constant 0 : index
    %56 = vector.load %arg9[%c36_68, %c0_69] : memref<328x128xbf16, #tpu.memory_space<vmem>>, vector<288x128xbf16>
    %c0_70 = arith.constant 0 : index
    %c768_71 = arith.constant 768 : index
    %57 = vector.load %arg8[%c0_70, %c768_71] : memref<288x1152xbf16, #tpu.memory_space<vmem>>, vector<288x128xbf16>
    tpu.vector_store %arg8[%c0_70, %c768_71], %56 {strides = array<i32>} : memref<288x1152xbf16, #tpu.memory_space<vmem>>, vector<288x128xbf16>,
    %c37_72 = arith.constant 37 : index
    %c0_73 = arith.constant 0 : index
    %58 = vector.load %arg9[%c37_72, %c0_73] : memref<328x128xbf16, #tpu.memory_space<vmem>>, vector<288x128xbf16>
    %c0_74 = arith.constant 0 : index
    %c896_75 = arith.constant 896 : index
    %59 = vector.load %arg8[%c0_74, %c896_75] : memref<288x1152xbf16, #tpu.memory_space<vmem>>, vector<288x128xbf16>
    tpu.vector_store %arg8[%c0_74, %c896_75], %58 {strides = array<i32>} : memref<288x1152xbf16, #tpu.memory_space<vmem>>, vector<288x128xbf16>,
    %c38_76 = arith.constant 38 : index
    %c0_77 = arith.constant 0 : index
    %60 = vector.load %arg9[%c38_76, %c0_77] : memref<328x128xbf16, #tpu.memory_space<vmem>>, vector<288x128xbf16>
    %c0_78 = arith.constant 0 : index
    %c1024_79 = arith.constant 1024 : index
    %61 = vector.load %arg8[%c0_78, %c1024_79] : memref<288x1152xbf16, #tpu.memory_space<vmem>>, vector<288x128xbf16>
    tpu.vector_store %arg8[%c0_78, %c1024_79], %60 {strides = array<i32>} : memref<288x1152xbf16, #tpu.memory_space<vmem>>, vector<288x128xbf16>,
    %c0_80 = arith.constant 0 : index
    %c0_81 = arith.constant 0 : index
    %62 = vector.load %arg8[%c0_80, %c0_81] : memref<288x1152xbf16, #tpu.memory_space<vmem>>, vector<288x1152xbf16>
    %c0_82 = arith.constant 0 : index
    %c0_83 = arith.constant 0 : index
    %63 = vector.load %arg5[%c0_82, %c0_83] : memref<1152x128xbf16, #tpu.memory_space<vmem>>, vector<1152x128xbf16>
    %cst_84 = arith.constant dense<0.000000e+00> : vector<288x128xf32>
    %64 = tpu.matmul %62, %63, %cst_84 {dimension_numbers = #tpu.dot_dimension_numbers<[1], [0], [0], [1], [0, 0, 1, 1], [], []>} : vector<288x1152xbf16>, vector<1152x128xbf16>, vector<288x128xf32> -> vector<288x128xf32>
    %c0_85 = arith.constant 0 : index
    %c0_86 = arith.constant 0 : index
    %65 = vector.load %arg6[%c0_85, %c0_86] : memref<1x128xf32, #tpu.memory_space<vmem>>, vector<1x128xf32>
    %66 = vector.broadcast %65 : vector<1x128xf32> to vector<288x128xf32>
    %67 = arith.addf %64, %66 : vector<288x128xf32>
    %cst_87 = arith.constant 0.000000e+00 : f32
    %68 = vector.broadcast %cst_87 : f32 to vector<288x128xf32>
    %69 = arith.maximumf %67, %68 : vector<288x128xf32>
    %c0_88 = arith.constant 0 : index
    %c19_89 = arith.constant 19 : index
    %c0_90 = arith.constant 0 : index
    %70 = vector.load %arg1[%c0_88, %c19_89, %c0_90] : memref<1x328x128xbf16, #tpu.memory_space<vmem>>, vector<1x288x128xbf16>
    %71 = vector.shape_cast %70 : vector<1x288x128xbf16> to vector<288x128xbf16>
    %72 = arith.extf %71 : vector<288x128xbf16> to vector<288x128xf32>
    %73 = arith.addf %69, %72 : vector<288x128xf32>
    %cst_91 = arith.constant 0.000000e+00 : f32
    %74 = vector.broadcast %cst_91 : f32 to vector<288x128xf32>
    %75 = arith.maximumf %73, %74 : vector<288x128xf32>
    %c0_92 = arith.constant 0 : index
    %c0_93 = arith.constant 0 : index
    %c0_94 = arith.constant 0 : index
    %76 = vector.load %arg7[%c0_92, %c0_93, %c0_94] : memref<1x288x128xf32, #tpu.memory_space<vmem>>, vector<1x288x128xf32>
    %77 = vector.shape_cast %76 : vector<1x288x128xf32> to vector<288x128xf32>
    %78 = vector.shape_cast %75 : vector<288x128xf32> to vector<1x288x128xf32>
    tpu.vector_store %arg7[%c0_92, %c0_93, %c0_94], %78 {strides = array<i32>} : memref<1x288x128xf32, #tpu.memory_space<vmem>>, vector<1x288x128xf32>,
    return
  }
  func.func @transform_0(%arg0: i32) -> (i32, i32, i32) {
    %c0_i32 = arith.constant 0 : i32
    %c0_i32_0 = arith.constant 0 : i32
    %c0_i32_1 = arith.constant 0 : i32
    return %arg0, %c0_i32, %c0_i32_0 : i32, i32, i32
  }
  func.func @transform_1(%arg0: i32) -> (i32, i32) {
    %c0_i32 = arith.constant 0 : i32
    %c0_i32_0 = arith.constant 0 : i32
    %c0_i32_1 = arith.constant 0 : i32
    return %c0_i32, %c0_i32_0 : i32, i32
  }
  func.func @transform_2(%arg0: i32) -> (i32, i32) {
    %c0_i32 = arith.constant 0 : i32
    %c0_i32_0 = arith.constant 0 : i32
    %c0_i32_1 = arith.constant 0 : i32
    return %c0_i32, %c0_i32_0 : i32, i32
  }
  func.func @transform_3(%arg0: i32) -> (i32, i32) {
    %c0_i32 = arith.constant 0 : i32
    %c0_i32_0 = arith.constant 0 : i32
    %c0_i32_1 = arith.constant 0 : i32
    return %c0_i32, %c0_i32_0 : i32, i32
  }
  func.func @transform_4(%arg0: i32) -> (i32, i32) {
    %c0_i32 = arith.constant 0 : i32
    %c0_i32_0 = arith.constant 0 : i32
    %c0_i32_1 = arith.constant 0 : i32
    return %c0_i32, %c0_i32_0 : i32, i32
  }
  func.func @transform_5(%arg0: i32) -> (i32, i32) {
    %c0_i32 = arith.constant 0 : i32
    %c0_i32_0 = arith.constant 0 : i32
    %c0_i32_1 = arith.constant 0 : i32
    return %c0_i32, %c0_i32_0 : i32, i32
  }
  func.func @transform_6(%arg0: i32) -> (i32, i32, i32) {
    %c0_i32 = arith.constant 0 : i32
    %c0_i32_0 = arith.constant 0 : i32
    %c0_i32_1 = arith.constant 0 : i32
    return %arg0, %c0_i32, %c0_i32_0 : i32, i32, i32
  }
}

</mosaic_0001>

<llo_original>
// kernel: tpu_custom_call.1
$region0: #{tpu_custom_call.1}
  #allocation0 [shape = 'u32[]', space=smem, size = 0x4, offset = 0x4, fixed_abs, tag = 'smem constant byte address 0x4 - core index']
  #allocation1 [shape = 'u32[144,128]{1,0:T(1,128)}', space=vmem, size = 0x12000, scoped, tag = 'internal scratch']
  #allocation2 [shape = 'bf16[288,1152]{1,0:T(16,128)(2,1)}', space=vmem, size = 0xa2000, scoped, tag = 'scratch operand']
  #allocation3 [shape = 'bf16[328,128]{1,0:T(8,128)(2,1)}', space=vmem, size = 0x14800, scoped, tag = 'scratch operand']
  %s0 = inlined_call_operand.hbm [shape: bf16[2,328,128], index: 0, kind: input, shape index: {}]
  %s1 = inlined_call_operand.vmem [shape: f32[288,1], index: 1, kind: input, shape index: {}]
  %s2 = inlined_call_operand.hbm [shape: bf16[1152,128], index: 2, kind: input, shape index: {}]
  %s3 = inlined_call_operand.vmem [shape: f32[1,128], index: 3, kind: input, shape index: {}]
  %s4 = inlined_call_operand.hbm [shape: bf16[1152,128], index: 4, kind: input, shape index: {}]
  %s5 = inlined_call_operand.vmem [shape: f32[1,128], index: 5, kind: input, shape index: {}]
  %s6 = inlined_call_operand.hbm [shape: f32[2,288,128], index: 6, kind: output, shape index: {}]
  %s7 = sld [smem:[#allocation0]]
  $region69: #{tpu_custom_call.1} parent=0
    _
  %s9 = ssub.s32 1, %s7
  %s10 = scalar_select 0, %s9, %s7
  $region1: #{tpu_custom_call.1} parent=0
    #allocation4 [shape = 'u8[167936]{0}', space=vmem, size = 0x29000, scoped, tag = 'input window, operand 0']
    #allocation5 [shape = 's32[2]{0}', space=sflag, size = 0x8, scoped, tag = 'scoped memory for tpu_custom_call.1']
    #allocation6 [shape = 's32[2]{0}', space=sflag, size = 0x8, scoped, tag = 'scoped memory for tpu_custom_call.1']
    #allocation7 [shape = 'u8[294912]{0}', space=vmem, size = 0x48000, scoped, tag = 'input window, operand 2, single buffered']
    #allocation8 [shape = 's32[1]{0}', space=sflag, size = 0x4, scoped, tag = 'scoped memory for tpu_custom_call.1']
    #allocation9 [shape = 'u8[294912]{0}', space=vmem, size = 0x48000, scoped, tag = 'input window, operand 4, single buffered']
    #allocation10 [shape = 'u8[294912]{0}', space=vmem, size = 0x48000, scoped, tag = 'output window, operand 0']
    %11 = vsyncpa [#allocation5], 0
    %s12 = scalar_lea.sflag [#allocation5], 1
    %13 = vsyncpa %s12, 0
    %14 = vsyncpa [#allocation8], 0
    %15 = vsyncpa [#allocation6], 0
    %s16 = scalar_lea.sflag [#allocation6], 1
    %17 = vsyncpa %s16, 0
    loop: start=0, step=1, limit=4
    $region2: #{tpu_custom_call.1} parent=1 // loop_pre_header
      _
    $region3: #{tpu_custom_call.1} parent=1 // loop_header
      %s19 = sphi 0, %s23
      %p20 = scmp.ge.s32.totalorder %s19, 4
      %s29 = sphi 0, %s31
      %s32 = sphi 0, %s29
      %s33 = sphi 0, %s32
      %s49 = sphi 0, %s33
      %s53 = sphi 0, %s53
      %s55 = sphi 0, %s53
      %s56 = sphi 0, %s55
      %s70 = sphi 0, %s56
      %s74 = sphi 0, %s74
      %s76 = sphi 0, %s74
      %s77 = sphi 0, %s76
      %s91 = sphi 0, %s77
      %s95 = sphi 0, %s95
      %s97 = sphi 0, %s95
      %s98 = sphi 0, %s97
      %s112 = sphi 0, %s98
      %s116 = sphi 0, %s116
      %s118 = sphi 0, %s116
      %s119 = sphi 0, %s118
      %s133 = sphi 0, %s119
      %s137 = sphi 0, %s137
      %s139 = sphi 0, %s137
      %s140 = sphi 0, %s139
      %s154 = sphi 0, %s140
      %s160 = sphi 0, %s162
      %s163 = sphi 0, %s160
      %s164 = sphi 0, %s163
      %s180 = sphi 0, %s164
    $region4: #{tpu_custom_call.1} parent=1 // loop_header_branch
      %22 = sbr.rel (%p20) target = $region8
    $region5: #{tpu_custom_call.1} parent=1 // loop_body
      %s24 = ssub.s32 %s19, 1
      %s25 = ssub.s32 %s19, 2
      %s26 = sadd.s32 %s19, 1
      %s27 = ssub.s32 %s19, %s26
      %p28 = scmp.eq.s32.totalorder %s27, 0
      %s30 = sadd.s32 %s29, 1
      %s31 = scalar_select %p28, %s29, %s30
      %p34 = pneg %p28
      %p35 = scmp.eq.s32.totalorder %s19, 1
      %p36 = por %p34, %p35
      %p37 = scmp.ne.s32.totalorder %s29, %s32
      %p38 = scmp.eq.s32.totalorder %s19, 0
      %p39 = por %p37, %p38
      %p40 = scmp.ne.s32.totalorder %s29, %s32
      %p41 = scmp.eq.s32.totalorder %s24, 1
      %p42 = por %p40, %p41
      %p43 = scmp.ne.s32.totalorder %s32, %s33
      %p44 = scmp.eq.s32.totalorder %s24, 0
      %p45 = por %p43, %p44
      %p46 = scmp.ne.s32.totalorder %s32, %s33
      %p47 = scmp.eq.s32.totalorder %s25, 1
      %p48 = por %p46, %p47
      %p50 = scmp.ne.s32.totalorder %s33, %s49
      %p51 = scmp.eq.s32.totalorder %s25, 0
      %p52 = por %p50, %p51
      %s54 = sadd.s32 %s53, 1
      %p57 = scmp.eq.s32.totalorder %s19, 1
      %p58 = scmp.ne.s32.totalorder %s53, %s55
      %p59 = scmp.eq.s32.totalorder %s19, 0
      %p60 = por %p58, %p59
      %p61 = scmp.ne.s32.totalorder %s53, %s55
      %p62 = scmp.eq.s32.totalorder %s24, 1
      %p63 = por %p61, %p62
      %p64 = scmp.ne.s32.totalorder %s55, %s56
      %p65 = scmp.eq.s32.totalorder %s24, 0
      %p66 = por %p64, %p65
      %p67 = scmp.ne.s32.totalorder %s55, %s56
      %p68 = scmp.eq.s32.totalorder %s25, 1
      %p69 = por %p67, %p68
      %p71 = scmp.ne.s32.totalorder %s56, %s70
      %p72 = scmp.eq.s32.totalorder %s25, 0
      %p73 = por %p71, %p72
      %s75 = sadd.s32 %s74, 1
      %p78 = scmp.eq.s32.totalorder %s19, 1
      %p79 = scmp.ne.s32.totalorder %s74, %s76
      %p80 = scmp.eq.s32.totalorder %s19, 0
      %p81 = por %p79, %p80
      %p82 = scmp.ne.s32.totalorder %s74, %s76
      %p83 = scmp.eq.s32.totalorder %s24, 1
      %p84 = por %p82, %p83
      %p85 = scmp.ne.s32.totalorder %s76, %s77
      %p86 = scmp.eq.s32.totalorder %s24, 0
      %p87 = por %p85, %p86
      %p88 = scmp.ne.s32.totalorder %s76, %s77
      %p89 = scmp.eq.s32.totalorder %s25, 1
      %p90 = por %p88, %p89
      %p92 = scmp.ne.s32.totalorder %s77, %s91
      %p93 = scmp.eq.s32.totalorder %s25, 0
      %p94 = por %p92, %p93
      %s96 = sadd.s32 %s95, 1
      %p99 = scmp.eq.s32.totalorder %s19, 1
      %p100 = scmp.ne.s32.totalorder %s95, %s97
      %p101 = scmp.eq.s32.totalorder %s19, 0
      %p102 = por %p100, %p101
      %p103 = scmp.ne.s32.totalorder %s95, %s97
      %p104 = scmp.eq.s32.totalorder %s24, 1
      %p105 = por %p103, %p104
      %p106 = scmp.ne.s32.totalorder %s97, %s98
      %p107 = scmp.eq.s32.totalorder %s24, 0
      %p108 = por %p106, %p107
      %p109 = scmp.ne.s32.totalorder %s97, %s98
      %p110 = scmp.eq.s32.totalorder %s25, 1
      %p111 = por %p109, %p110
      %p113 = scmp.ne.s32.totalorder %s98, %s112
      %p114 = scmp.eq.s32.totalorder %s25, 0
      %p115 = por %p113, %p114
      %s117 = sadd.s32 %s116, 1
      %p120 = scmp.eq.s32.totalorder %s19, 1
      %p121 = scmp.ne.s32.totalorder %s116, %s118
      %p122 = scmp.eq.s32.totalorder %s19, 0
      %p123 = por %p121, %p122
      %p124 = scmp.ne.s32.totalorder %s116, %s118
      %p125 = scmp.eq.s32.totalorder %s24, 1
      %p126 = por %p124, %p125
      %p127 = scmp.ne.s32.totalorder %s118, %s119
      %p128 = scmp.eq.s32.totalorder %s24, 0
      %p129 = por %p127, %p128
      %p130 = scmp.ne.s32.totalorder %s118, %s119
      %p131 = scmp.eq.s32.totalorder %s25, 1
      %p132 = por %p130, %p131
      %p134 = scmp.ne.s32.totalorder %s119, %s133
      %p135 = scmp.eq.s32.totalorder %s25, 0
      %p136 = por %p134, %p135
      %s138 = sadd.s32 %s137, 1
      %p141 = scmp.eq.s32.totalorder %s19, 1
      %p142 = scmp.ne.s32.totalorder %s137, %s139
      %p143 = scmp.eq.s32.totalorder %s19, 0
      %p144 = por %p142, %p143
      %p145 = scmp.ne.s32.totalorder %s137, %s139
      %p146 = scmp.eq.s32.totalorder %s24, 1
      %p147 = por %p145, %p146
      %p148 = scmp.ne.s32.totalorder %s139, %s140
      %p149 = scmp.eq.s32.totalorder %s24, 0
      %p150 = por %p148, %p149
      %p151 = scmp.ne.s32.totalorder %s139, %s140
      %p152 = scmp.eq.s32.totalorder %s25, 1
      %p153 = por %p151, %p152
      %p155 = scmp.ne.s32.totalorder %s140, %s154
      %p156 = scmp.eq.s32.totalorder %s25, 0
      %p157 = por %p155, %p156
      %s158 = ssub.s32 %s19, %s26
      %p159 = scmp.eq.s32.totalorder %s158, 0
      %s161 = sadd.s32 %s160, 1
      %s162 = scalar_select %p159, %s160, %s161
      %p165 = pneg %p159
      %p166 = scmp.eq.s32.totalorder %s19, 1
      %p167 = por %p165, %p166
      %p168 = scmp.ne.s32.totalorder %s160, %s163
      %p169 = scmp.eq.s32.totalorder %s19, 0
      %p170 = por %p168, %p169
      %p171 = scmp.ne.s32.totalorder %s160, %s163
      %p172 = scmp.eq.s32.totalorder %s24, 1
      %p173 = por %p171, %p172
      %p174 = scmp.ne.s32.totalorder %s163, %s164
      %p175 = scmp.eq.s32.totalorder %s24, 0
      %p176 = por %p174, %p175
      %p177 = scmp.ne.s32.totalorder %s163, %s164
      %p178 = scmp.eq.s32.totalorder %s25, 1
      %p179 = por %p177, %p178
      %p181 = scmp.ne.s32.totalorder %s164, %s180
      %p182 = scmp.eq.s32.totalorder %s25, 0
      %p183 = por %p181, %p182
      %p184 = scmp.le.s32.totalorder 1, %s19
      %p185 = scmp.lt.s32.totalorder %s19, 3
      %p186 = pnand %p184, %p185
      %p187 = pneg %p186
      // Predicated region
      $region9: #{tpu_custom_call.1} parent=5 // pred_check
        _
      $region10: #{tpu_custom_call.1} parent=5 // pred_check_branch
        %189 = sbr.rel (%p186) target = $region12
      $region11: #{tpu_custom_call.1} parent=5 // pred_region
        %s190 = ssub.s32 %s19, 1
        // Predicated region
        $region13: #{tpu_custom_call.1} parent=11 // pred_check
          %p191 = pneg %p66
        $region14: #{tpu_custom_call.1} parent=11 // pred_check_branch
          %193 = sbr.rel (%p191) target = $region16
        $region15: #{tpu_custom_call.1} parent=11 // pred_region
          _
        $region16: #{tpu_custom_call.1} parent=11 // pred_fallthru
          _
        // Predicated region
        $region17: #{tpu_custom_call.1} parent=11 // pred_check
          %p194 = pneg %p87
        $region18: #{tpu_custom_call.1} parent=11 // pred_check_branch
          %196 = sbr.rel (%p194) target = $region20
        $region19: #{tpu_custom_call.1} parent=11 // pred_region
          %s198 = ssub.s32 9216, 9216
          %199 = vsyncadd [#allocation8], %s198
          %s200 = sshll.u32 [#allocation7], 4
          %s201 = int_to_ptr.vmem [resolvable:$true] %s200
          %206 = dma.hbm_to_vmem [thread:$0]  %s2, 9216, %s201, [#allocation8], 64, 64, 4
        $region20: #{tpu_custom_call.1} parent=11 // pred_fallthru
          _
        // Predicated region
        $region21: #{tpu_custom_call.1} parent=11 // pred_check
          %p207 = pneg %p108
        $region22: #{tpu_custom_call.1} parent=11 // pred_check_branch
          %209 = sbr.rel (%p207) target = $region24
        $region23: #{tpu_custom_call.1} parent=11 // pred_region
          _
        $region24: #{tpu_custom_call.1} parent=11 // pred_fallthru
          _
        // Predicated region
        $region25: #{tpu_custom_call.1} parent=11 // pred_check
          %p210 = pneg %p129
        $region26: #{tpu_custom_call.1} parent=11 // pred_check_branch
          %212 = sbr.rel (%p210) target = $region28
        $region27: #{tpu_custom_call.1} parent=11 // pred_region
          %s214 = ssub.s32 9216, 9216
          %215 = vsyncadd [#allocation8], %s214
          %s216 = sshll.u32 [#allocation9], 4
          %s217 = int_to_ptr.vmem [resolvable:$true] %s216
          %222 = dma.hbm_to_vmem [thread:$0]  %s4, 9216, %s217, [#allocation8], 64, 64, 4
        $region28: #{tpu_custom_call.1} parent=11 // pred_fallthru
          _
        // Predicated region
        $region29: #{tpu_custom_call.1} parent=11 // pred_check
          %p223 = pneg %p150
        $region30: #{tpu_custom_call.1} parent=11 // pred_check_branch
          %225 = sbr.rel (%p223) target = $region32
        $region31: #{tpu_custom_call.1} parent=11 // pred_region
          _
        $region32: #{tpu_custom_call.1} parent=11 // pred_fallthru
          _
      $region12: #{tpu_custom_call.1} parent=5 // pred_fallthru
        _
      %p226 = scmp.lt.s32.totalorder %s19, 2
      // Predicated region
      $region33: #{tpu_custom_call.1} parent=5 // pred_check
        %p227 = pneg %p226
      $region34: #{tpu_custom_call.1} parent=5 // pred_check_branch
        %229 = sbr.rel (%p227) target = $region36
      $region35: #{tpu_custom_call.1} parent=5 // pred_region
        // Predicated region
        $region37: #{tpu_custom_call.1} parent=35 // pred_check
          %p230 = pneg %p39
        $region38: #{tpu_custom_call.1} parent=35 // pred_check_branch
          %232 = sbr.rel (%p230) target = $region40
        $region39: #{tpu_custom_call.1} parent=35 // pred_region
          %s233 = sand.u32 %s29, 1
          %s234 = scalar_lea.sflag [#allocation5], %s233
          %s235 = sand.u32 %s29, 1
          %s236 = smul.addr %s235, 164
          %s237 = scalar_lea.vmem [#allocation4], %s236
          %s239 = ssub.s32 2624, 2624
          %240 = vsyncadd %s234, %s239
          %s241 = smul.addr %s19, 41
          %s242 = smul.addr %s241, 64
          %s243 = scalar_lea.hbm %s0, %s242
          %s244 = sshll.u32 %s237, 4
          %s245 = int_to_ptr.vmem [resolvable:$true] %s244
          %250 = dma.hbm_to_vmem [thread:$0]  %s243, 2624, %s245, %s234, 64, 64, 4
        $region40: #{tpu_custom_call.1} parent=35 // pred_fallthru
          _
      $region36: #{tpu_custom_call.1} parent=5 // pred_fallthru
        _
      %p251 = scmp.le.s32.totalorder 1, %s19
      %p252 = scmp.lt.s32.totalorder %s19, 3
      %p253 = pnand %p251, %p252
      %p254 = pneg %p253
      // Predicated region
      $region41: #{tpu_custom_call.1} parent=5 // pred_check
        _
      $region42: #{tpu_custom_call.1} parent=5 // pred_check_branch
        %256 = sbr.rel (%p253) target = $region44
      $region43: #{tpu_custom_call.1} parent=5 // pred_region
        %s257 = ssub.s32 %s19, 1
        %s258 = sand.u32 %s32, 1
        %s259 = scalar_lea.sflag [#allocation5], %s258
        %s260 = sand.u32 %s32, 1
        %s261 = smul.addr %s260, 164
        %s262 = scalar_lea.vmem [#allocation4], %s261
        // Predicated region
        $region45: #{tpu_custom_call.1} parent=43 // pred_check
          %p263 = pneg %p45
        $region46: #{tpu_custom_call.1} parent=43 // pred_check_branch
          %265 = sbr.rel (%p263) target = $region48
        $region47: #{tpu_custom_call.1} parent=43 // pred_region
          %266 = dma.done %s259, 2624
        $region48: #{tpu_custom_call.1} parent=43 // pred_fallthru
          _
        // Predicated region
        $region49: #{tpu_custom_call.1} parent=43 // pred_check
          %p267 = pneg %p87
        $region50: #{tpu_custom_call.1} parent=43 // pred_check_branch
          %269 = sbr.rel (%p267) target = $region52
        $region51: #{tpu_custom_call.1} parent=43 // pred_region
          %270 = dma.done [#allocation8], 9216
        $region52: #{tpu_custom_call.1} parent=43 // pred_fallthru
          _
        // Predicated region
        $region53: #{tpu_custom_call.1} parent=43 // pred_check
          %p271 = pneg %p129
        $region54: #{tpu_custom_call.1} parent=43 // pred_check_branch
          %273 = sbr.rel (%p271) target = $region56
        $region55: #{tpu_custom_call.1} parent=43 // pred_region
          %274 = dma.done [#allocation8], 9216
        $region56: #{tpu_custom_call.1} parent=43 // pred_fallthru
          _
        %s275 = sand.u32 %s32, 1
        %s276 = scalar_lea.sflag [#allocation5], %s275
        %s277 = sand.u32 %s32, 1
        %s278 = smul.addr %s277, 164
        %s279 = scalar_lea.vmem [#allocation4], %s278
        %p280 = pneg %p45
        %p281 = pneg %p42
        %p282 = pneg %p66
        %p283 = pneg %p63
        %p284 = pneg %p87
        %p285 = pneg %p84
        %p286 = pneg %p108
        %p287 = pneg %p105
        %p288 = pneg %p129
        %p289 = pneg %p126
        %p290 = pneg %p150
        %p291 = pneg %p147
        %p292 = pneg %p176
        %p293 = pneg %p173
        %s294 = sand.u32 %s163, 1
        %s295 = scalar_lea.sflag [#allocation6], %s294
        %s296 = sand.u32 %s163, 1
        %s297 = smul.addr %s296, 288
        %s298 = scalar_lea.vmem [#allocation10], %s297
        %v300 = vld [vmem:[%s262] sm:$0xf]
        %v301 = vld [vmem:[%s262 + $0x4] sm:$0xf]
        %v302 = vld [vmem:[%s262 + $0x8] sm:$0xf]
        %v303 = vld [vmem:[%s262 + $0xc] sm:$0xf]
        %v304 = vld [vmem:[%s262 + $0x10] sm:$0xf]
        %v305 = vld [vmem:[%s262 + $0x14] sm:$0xf]
        %v306 = vld [vmem:[%s262 + $0x18] sm:$0xf]
        %v307 = vld [vmem:[%s262 + $0x1c] sm:$0xf]
        %v308 = vld [vmem:[%s262 + $0x20] sm:$0xf]
        %v309 = vld [vmem:[%s262 + $0x24] sm:$0xf]
        %v310 = vld [vmem:[%s262 + $0x28] sm:$0xf]
        %v311 = vld [vmem:[%s262 + $0x2c] sm:$0xf]
        %v312 = vld [vmem:[%s262 + $0x30] sm:$0xf]
        %v313 = vld [vmem:[%s262 + $0x34] sm:$0xf]
        %v314 = vld [vmem:[%s262 + $0x38] sm:$0xf]
        %v315 = vld [vmem:[%s262 + $0x3c] sm:$0xf]
        %v316 = vld [vmem:[%s262 + $0x40] sm:$0xf]
        %v317 = vld [vmem:[%s262 + $0x44] sm:$0xf]
        %v318 = vld [vmem:[%s262 + $0x48] sm:$0xf]
        %v319 = vld [vmem:[%s262 + $0x4c] sm:$0xf]
        %v320 = vld [vmem:[%s262 + $0x50] sm:$0xf]
        %v321 = vld [vmem:[%s262 + $0x54] sm:$0xf]
        %v322 = vld [vmem:[%s262 + $0x58] sm:$0xf]
        %v323 = vld [vmem:[%s262 + $0x5c] sm:$0xf]
        %v324 = vld [vmem:[%s262 + $0x60] sm:$0xf]
        %v325 = vld [vmem:[%s262 + $0x64] sm:$0xf]
        %v326 = vld [vmem:[%s262 + $0x68] sm:$0xf]
        %v327 = vld [vmem:[%s262 + $0x6c] sm:$0xf]
        %v328 = vld [vmem:[%s262 + $0x70] sm:$0xf]
        %v329 = vld [vmem:[%s262 + $0x74] sm:$0xf]
        %v330 = vld [vmem:[%s262 + $0x78] sm:$0xf]
        %v331 = vld [vmem:[%s262 + $0x7c] sm:$0xf]
        %v332 = vld [vmem:[%s262 + $0x80] sm:$0xf]
        %v333 = vld [vmem:[%s262 + $0x84] sm:$0xf]
        %v334 = vld [vmem:[%s262 + $0x88] sm:$0xf]
        %v335 = vld [vmem:[%s262 + $0x8c] sm:$0xf]
        %v372 = vunpack.c.l.b16 %v300
        %v373 = vunpack.c.l.b16 %v301
        %v374 = vunpack.c.l.b16 %v302
        %v375 = vunpack.c.l.b16 %v303
        %v376 = vunpack.c.l.b16 %v304
        %v377 = vunpack.c.l.b16 %v305
        %v378 = vunpack.c.l.b16 %v306
        %v379 = vunpack.c.l.b16 %v307
        %v380 = vunpack.c.l.b16 %v308
        %v381 = vunpack.c.l.b16 %v309
        %v382 = vunpack.c.l.b16 %v310
        %v383 = vunpack.c.l.b16 %v311
        %v384 = vunpack.c.l.b16 %v312
        %v385 = vunpack.c.l.b16 %v313
        %v386 = vunpack.c.l.b16 %v314
        %v387 = vunpack.c.l.b16 %v315
        %v388 = vunpack.c.l.b16 %v316
        %v389 = vunpack.c.l.b16 %v317
        %v390 = vunpack.c.l.b16 %v318
        %v391 = vunpack.c.l.b16 %v319
        %v392 = vunpack.c.l.b16 %v320
        %v393 = vunpack.c.l.b16 %v321
        %v394 = vunpack.c.l.b16 %v322
        %v395 = vunpack.c.l.b16 %v323
        %v396 = vunpack.c.l.b16 %v324
        %v397 = vunpack.c.l.b16 %v325
        %v398 = vunpack.c.l.b16 %v326
        %v399 = vunpack.c.l.b16 %v327
        %v400 = vunpack.c.l.b16 %v328
        %v401 = vunpack.c.l.b16 %v329
        %v402 = vunpack.c.l.b16 %v330
        %v403 = vunpack.c.l.b16 %v331
        %v404 = vunpack.c.l.b16 %v332
        %v405 = vunpack.c.l.b16 %v333
        %v406 = vunpack.c.l.b16 %v334
        %v407 = vunpack.c.l.b16 %v335
        %v408 = vpack.c.b16 %v373, %v372
        %v409 = vpack.c.b16 %v375, %v374
        %v410 = vpack.c.b16 %v377, %v376
        %v411 = vpack.c.b16 %v379, %v378
        %v412 = vpack.c.b16 %v381, %v380
        %v413 = vpack.c.b16 %v383, %v382
        %v414 = vpack.c.b16 %v385, %v384
        %v415 = vpack.c.b16 %v387, %v386
        %v416 = vpack.c.b16 %v389, %v388
        %v417 = vpack.c.b16 %v391, %v390
        %v418 = vpack.c.b16 %v393, %v392
        %v419 = vpack.c.b16 %v395, %v394
        %v420 = vpack.c.b16 %v397, %v396
        %v421 = vpack.c.b16 %v399, %v398
        %v422 = vpack.c.b16 %v401, %v400
        %v423 = vpack.c.b16 %v403, %v402
        %v424 = vpack.c.b16 %v405, %v404
        %v425 = vpack.c.b16 %v407, %v406
        %444 = vst [vmem:[#allocation2] sm:$0xff] %v408
        %445 = vst [vmem:[#allocation2 + $0x48] sm:$0xff] %v409
        %446 = vst [vmem:[#allocation2 + $0x90] sm:$0xff] %v410
        %447 = vst [vmem:[#allocation2 + $0xd8] sm:$0xff] %v411
        %448 = vst [vmem:[#allocation2 + $0x120] sm:$0xff] %v412
        %449 = vst [vmem:[#allocation2 + $0x168] sm:$0xff] %v413
        %450 = vst [vmem:[#allocation2 + $0x1b0] sm:$0xff] %v414
        %451 = vst [vmem:[#allocation2 + $0x1f8] sm:$0xff] %v415
        %452 = vst [vmem:[#allocation2 + $0x240] sm:$0xff] %v416
        %453 = vst [vmem:[#allocation2 + $0x288] sm:$0xff] %v417
        %454 = vst [vmem:[#allocation2 + $0x2d0] sm:$0xff] %v418
        %455 = vst [vmem:[#allocation2 + $0x318] sm:$0xff] %v419
        %456 = vst [vmem:[#allocation2 + $0x360] sm:$0xff] %v420
        %457 = vst [vmem:[#allocation2 + $0x3a8] sm:$0xff] %v421
        %458 = vst [vmem:[#allocation2 + $0x3f0] sm:$0xff] %v422
        %459 = vst [vmem:[#allocation2 + $0x438] sm:$0xff] %v423
        %460 = vst [vmem:[#allocation2 + $0x480] sm:$0xff] %v424
        %461 = vst [vmem:[#allocation2 + $0x4c8] sm:$0xff] %v425
        %v462 = vld [vmem:[%s262] sm:$0xf]
        %v463 = vld [vmem:[%s262 + $0x4] sm:$0xf]
        %v464 = vld [vmem:[%s262 + $0x8] sm:$0xf]
        %v465 = vld [vmem:[%s262 + $0xc] sm:$0xf]
        %v466 = vld [vmem:[%s262 + $0x10] sm:$0xf]
        %v467 = vld [vmem:[%s262 + $0x14] sm:$0xf]
        %v468 = vld [vmem:[%s262 + $0x18] sm:$0xf]
        %v469 = vld [vmem:[%s262 + $0x1c] sm:$0xf]
        %v470 = vld [vmem:[%s262 + $0x20] sm:$0xf]
        %v471 = vld [vmem:[%s262 + $0x24] sm:$0xf]
        %v472 = vld [vmem:[%s262 + $0x28] sm:$0xf]
        %v473 = vld [vmem:[%s262 + $0x2c] sm:$0xf]
        %v474 = vld [vmem:[%s262 + $0x30] sm:$0xf]
        %v475 = vld [vmem:[%s262 + $0x34] sm:$0xf]
        %v476 = vld [vmem:[%s262 + $0x38] sm:$0xf]
        %v477 = vld [vmem:[%s262 + $0x3c] sm:$0xf]
        %v478 = vld [vmem:[%s262 + $0x40] sm:$0xf]
        %v479 = vld [vmem:[%s262 + $0x44] sm:$0xf]
        %v480 = vld [vmem:[%s262 + $0x48] sm:$0xf]
        %v481 = vld [vmem:[%s262 + $0x4c] sm:$0xf]
        %v482 = vld [vmem:[%s262 + $0x50] sm:$0xf]
        %v483 = vld [vmem:[%s262 + $0x54] sm:$0xf]
        %v484 = vld [vmem:[%s262 + $0x58] sm:$0xf]
        %v485 = vld [vmem:[%s262 + $0x5c] sm:$0xf]
        %v486 = vld [vmem:[%s262 + $0x60] sm:$0xf]
        %v487 = vld [vmem:[%s262 + $0x64] sm:$0xf]
        %v488 = vld [vmem:[%s262 + $0x68] sm:$0xf]
        %v489 = vld [vmem:[%s262 + $0x6c] sm:$0xf]
        %v490 = vld [vmem:[%s262 + $0x70] sm:$0xf]
        %v491 = vld [vmem:[%s262 + $0x74] sm:$0xf]
        %v492 = vld [vmem:[%s262 + $0x78] sm:$0xf]
        %v493 = vld [vmem:[%s262 + $0x7c] sm:$0xf]
        %v494 = vld [vmem:[%s262 + $0x80] sm:$0xf]
        %v495 = vld [vmem:[%s262 + $0x84] sm:$0xf]
        %v496 = vld [vmem:[%s262 + $0x88] sm:$0xf]
        %v497 = vld [vmem:[%s262 + $0x8c] sm:$0xf]
        %v498 = vld [vmem:[%s262 + $0x90] sm:$0x1]
        %v536 = vunpack.c.l.b16 %v462
        %v537 = vunpack.c.l.b16 %v463
        %v538 = vunpack.c.l.b16 %v464
        %v539 = vunpack.c.l.b16 %v465
        %v540 = vunpack.c.l.b16 %v466
        %v541 = vunpack.c.l.b16 %v467
        %v542 = vunpack.c.l.b16 %v468
        %v543 = vunpack.c.l.b16 %v469
        %v544 = vunpack.c.l.b16 %v470
        %v545 = vunpack.c.l.b16 %v471
        %v546 = vunpack.c.l.b16 %v472
        %v547 = vunpack.c.l.b16 %v473
        %v548 = vunpack.c.l.b16 %v474
        %v549 = vunpack.c.l.b16 %v475
        %v550 = vunpack.c.l.b16 %v476
        %v551 = vunpack.c.l.b16 %v477
        %v552 = vunpack.c.l.b16 %v478
        %v553 = vunpack.c.l.b16 %v479
        %v554 = vunpack.c.l.b16 %v480
        %v555 = vunpack.c.l.b16 %v481
        %v556 = vunpack.c.l.b16 %v482
        %v557 = vunpack.c.l.b16 %v483
        %v558 = vunpack.c.l.b16 %v484
        %v559 = vunpack.c.l.b16 %v485
        %v560 = vunpack.c.l.b16 %v486
        %v561 = vunpack.c.l.b16 %v487
        %v562 = vunpack.c.l.b16 %v488
        %v563 = vunpack.c.l.b16 %v489
        %v564 = vunpack.c.l.b16 %v490
        %v565 = vunpack.c.l.b16 %v491
        %v566 = vunpack.c.l.b16 %v492
        %v567 = vunpack.c.l.b16 %v493
        %v568 = vunpack.c.l.b16 %v494
        %v569 = vunpack.c.l.b16 %v495
        %v570 = vunpack.c.l.b16 %v496
        %v571 = vunpack.c.l.b16 %v497
        %v572 = vunpack.c.l.b16 %v498
        %v573 = vpack.c.b16 %v537, %v536
        %v574 = vpack.c.b16 %v539, %v538
        %v575 = vpack.c.b16 %v541, %v540
        %v576 = vpack.c.b16 %v543, %v542
        %v577 = vpack.c.b16 %v545, %v544
        %v578 = vpack.c.b16 %v547, %v546
        %v579 = vpack.c.b16 %v549, %v548
        %v580 = vpack.c.b16 %v551, %v550
        %v581 = vpack.c.b16 %v553, %v552
        %v582 = vpack.c.b16 %v555, %v554
        %v583 = vpack.c.b16 %v557, %v556
        %v584 = vpack.c.b16 %v559, %v558
        %v585 = vpack.c.b16 %v561, %v560
        %v586 = vpack.c.b16 %v563, %v562
        %v587 = vpack.c.b16 %v565, %v564
        %v588 = vpack.c.b16 %v567, %v566
        %v589 = vpack.c.b16 %v569, %v568
        %v590 = vpack.c.b16 %v571, %v570
        %v591 = vpack.c.b16 %v572, %v572
        %vm592 = vsmask.f32 7424
        %v594 = vshrl.u32 %v573, 16
        %v596 = vshll.u32 %v573, 16
        %v598 = vrot.slane %v596, 1
        %v599 = vor.u32 %v594, %v598
        %v601 = vshll.u32 %v574, 16
        %v603 = vrot.slane %v601, 1
        %v604 = vsel %vm592, %v599, %v603
        %v605 = vshrl.u32 %v574, 16
        %v607 = vor.u32 %v605, %v603
        %v609 = vshll.u32 %v575, 16
        %v611 = vrot.slane %v609, 1
        %v612 = vsel %vm592, %v607, %v611
        %v613 = vshrl.u32 %v575, 16
        %v615 = vor.u32 %v613, %v611
        %v617 = vshll.u32 %v576, 16
        %v619 = vrot.slane %v617, 1
        %v620 = vsel %vm592, %v615, %v619
        %v621 = vshrl.u32 %v576, 16
        %v623 = vor.u32 %v621, %v619
        %v625 = vshll.u32 %v577, 16
        %v627 = vrot.slane %v625, 1
        %v628 = vsel %vm592, %v623, %v627
        %v629 = vshrl.u32 %v577, 16
        %v631 = vor.u32 %v629, %v627
        %v633 = vshll.u32 %v578, 16
        %v635 = vrot.slane %v633, 1
        %v636 = vsel %vm592, %v631, %v635
        %v637 = vshrl.u32 %v578, 16
        %v639 = vor.u32 %v637, %v635
        %v641 = vshll.u32 %v579, 16
        %v643 = vrot.slane %v641, 1
        %v644 = vsel %vm592, %v639, %v643
        %v645 = vshrl.u32 %v579, 16
        %v647 = vor.u32 %v645, %v643
        %v649 = vshll.u32 %v580, 16
        %v651 = vrot.slane %v649, 1
        %v652 = vsel %vm592, %v647, %v651
        %v653 = vshrl.u32 %v580, 16
        %v655 = vor.u32 %v653, %v651
        %v657 = vshll.u32 %v581, 16
        %v659 = vrot.slane %v657, 1
        %v660 = vsel %vm592, %v655, %v659
        %v661 = vshrl.u32 %v581, 16
        %v663 = vor.u32 %v661, %v659
        %v665 = vshll.u32 %v582, 16
        %v667 = vrot.slane %v665, 1
        %v668 = vsel %vm592, %v663, %v667
        %v669 = vshrl.u32 %v582, 16
        %v671 = vor.u32 %v669, %v667
        %v673 = vshll.u32 %v583, 16
        %v675 = vrot.slane %v673, 1
        %v676 = vsel %vm592, %v671, %v675
        %v677 = vshrl.u32 %v583, 16
        %v679 = vor.u32 %v677, %v675
        %v681 = vshll.u32 %v584, 16
        %v683 = vrot.slane %v681, 1
        %v684 = vsel %vm592, %v679, %v683
        %v685 = vshrl.u32 %v584, 16
        %v687 = vor.u32 %v685, %v683
        %v689 = vshll.u32 %v585, 16
        %v691 = vrot.slane %v689, 1
        %v692 = vsel %vm592, %v687, %v691
        %v693 = vshrl.u32 %v585, 16
        %v695 = vor.u32 %v693, %v691
        %v697 = vshll.u32 %v586, 16
        %v699 = vrot.slane %v697, 1
        %v700 = vsel %vm592, %v695, %v699
        %v701 = vshrl.u32 %v586, 16
        %v703 = vor.u32 %v701, %v699
        %v705 = vshll.u32 %v587, 16
        %v707 = vrot.slane %v705, 1
        %v708 = vsel %vm592, %v703, %v707
        %v709 = vshrl.u32 %v587, 16
        %v711 = vor.u32 %v709, %v707
        %v713 = vshll.u32 %v588, 16
        %v715 = vrot.slane %v713, 1
        %v716 = vsel %vm592, %v711, %v715
        %v717 = vshrl.u32 %v588, 16
        %v719 = vor.u32 %v717, %v715
        %v721 = vshll.u32 %v589, 16
        %v723 = vrot.slane %v721, 1
        %v724 = vsel %vm592, %v719, %v723
        %v725 = vshrl.u32 %v589, 16
        %v727 = vor.u32 %v725, %v723
        %v729 = vshll.u32 %v590, 16
        %v731 = vrot.slane %v729, 1
        %v732 = vsel %vm592, %v727, %v731
        %v733 = vshrl.u32 %v590, 16
        %v735 = vor.u32 %v733, %v731
        %v737 = vshll.u32 %v591, 16
        %v739 = vrot.slane %v737, 1
        %v740 = vsel %vm592, %v735, %v739
        %759 = vst [vmem:[#allocation2 + $0x8] sm:$0xff] %v604
        %760 = vst [vmem:[#allocation2 + $0x50] sm:$0xff] %v612
        %761 = vst [vmem:[#allocation2 + $0x98] sm:$0xff] %v620
        %762 = vst [vmem:[#allocation2 + $0xe0] sm:$0xff] %v628
        %763 = vst [vmem:[#allocation2 + $0x128] sm:$0xff] %v636
        %764 = vst [vmem:[#allocation2 + $0x170] sm:$0xff] %v644
        %765 = vst [vmem:[#allocation2 + $0x1b8] sm:$0xff] %v652
        %766 = vst [vmem:[#allocation2 + $0x200] sm:$0xff] %v660
        %767 = vst [vmem:[#allocation2 + $0x248] sm:$0xff] %v668
        %768 = vst [vmem:[#allocation2 + $0x290] sm:$0xff] %v676
        %769 = vst [vmem:[#allocation2 + $0x2d8] sm:$0xff] %v684
        %770 = vst [vmem:[#allocation2 + $0x320] sm:$0xff] %v692
        %771 = vst [vmem:[#allocation2 + $0x368] sm:$0xff] %v700
        %772 = vst [vmem:[#allocation2 + $0x3b0] sm:$0xff] %v708
        %773 = vst [vmem:[#allocation2 + $0x3f8] sm:$0xff] %v716
        %774 = vst [vmem:[#allocation2 + $0x440] sm:$0xff] %v724
        %775 = vst [vmem:[#allocation2 + $0x488] sm:$0xff] %v732
        %776 = vst [vmem:[#allocation2 + $0x4d0] sm:$0xff] %v740
        %v777 = vld [vmem:[%s262] sm:$0xe]
        %v778 = vld [vmem:[%s262 + $0x4] sm:$0xf]
        %v779 = vld [vmem:[%s262 + $0x8] sm:$0xf]
        %v780 = vld [vmem:[%s262 + $0xc] sm:$0xf]
        %v781 = vld [vmem:[%s262 + $0x10] sm:$0xf]
        %v782 = vld [vmem:[%s262 + $0x14] sm:$0xf]
        %v783 = vld [vmem:[%s262 + $0x18] sm:$0xf]
        %v784 = vld [vmem:[%s262 + $0x1c] sm:$0xf]
        %v785 = vld [vmem:[%s262 + $0x20] sm:$0xf]
        %v786 = vld [vmem:[%s262 + $0x24] sm:$0xf]
        %v787 = vld [vmem:[%s262 + $0x28] sm:$0xf]
        %v788 = vld [vmem:[%s262 + $0x2c] sm:$0xf]
        %v789 = vld [vmem:[%s262 + $0x30] sm:$0xf]
        %v790 = vld [vmem:[%s262 + $0x34] sm:$0xf]
        %v791 = vld [vmem:[%s262 + $0x38] sm:$0xf]
        %v792 = vld [vmem:[%s262 + $0x3c] sm:$0xf]
        %v793 = vld [vmem:[%s262 + $0x40] sm:$0xf]
        %v794 = vld [vmem:[%s262 + $0x44] sm:$0xf]
        %v795 = vld [vmem:[%s262 + $0x48] sm:$0xf]
        %v796 = vld [vmem:[%s262 + $0x4c] sm:$0xf]
        %v797 = vld [vmem:[%s262 + $0x50] sm:$0xf]
        %v798 = vld [vmem:[%s262 + $0x54] sm:$0xf]
        %v799 = vld [vmem:[%s262 + $0x58] sm:$0xf]
        %v800 = vld [vmem:[%s262 + $0x5c] sm:$0xf]
        %v801 = vld [vmem:[%s262 + $0x60] sm:$0xf]
        %v802 = vld [vmem:[%s262 + $0x64] sm:$0xf]
        %v803 = vld [vmem:[%s262 + $0x68] sm:$0xf]
        %v804 = vld [vmem:[%s262 + $0x6c] sm:$0xf]
        %v805 = vld [vmem:[%s262 + $0x70] sm:$0xf]
        %v806 = vld [vmem:[%s262 + $0x74] sm:$0xf]
        %v807 = vld [vmem:[%s262 + $0x78] sm:$0xf]
        %v808 = vld [vmem:[%s262 + $0x7c] sm:$0xf]
        %v809 = vld [vmem:[%s262 + $0x80] sm:$0xf]
        %v810 = vld [vmem:[%s262 + $0x84] sm:$0xf]
        %v811 = vld [vmem:[%s262 + $0x88] sm:$0xf]
        %v812 = vld [vmem:[%s262 + $0x8c] sm:$0xf]
        %v813 = vld [vmem:[%s262 + $0x90] sm:$0x1]
        %v851 = vunpack.c.l.b16 %v777
        %v852 = vunpack.c.l.b16 %v778
        %v853 = vunpack.c.l.b16 %v779
        %v854 = vunpack.c.l.b16 %v780
        %v855 = vunpack.c.l.b16 %v781
        %v856 = vunpack.c.l.b16 %v782
        %v857 = vunpack.c.l.b16 %v783
        %v858 = vunpack.c.l.b16 %v784
        %v859 = vunpack.c.l.b16 %v785
        %v860 = vunpack.c.l.b16 %v786
        %v861 = vunpack.c.l.b16 %v787
        %v862 = vunpack.c.l.b16 %v788
        %v863 = vunpack.c.l.b16 %v789
        %v864 = vunpack.c.l.b16 %v790
        %v865 = vunpack.c.l.b16 %v791
        %v866 = vunpack.c.l.b16 %v792
        %v867 = vunpack.c.l.b16 %v793
        %v868 = vunpack.c.l.b16 %v794
        %v869 = vunpack.c.l.b16 %v795
        %v870 = vunpack.c.l.b16 %v796
        %v871 = vunpack.c.l.b16 %v797
        %v872 = vunpack.c.l.b16 %v798
        %v873 = vunpack.c.l.b16 %v799
        %v874 = vunpack.c.l.b16 %v800
        %v875 = vunpack.c.l.b16 %v801
        %v876 = vunpack.c.l.b16 %v802
        %v877 = vunpack.c.l.b16 %v803
        %v878 = vunpack.c.l.b16 %v804
        %v879 = vunpack.c.l.b16 %v805
        %v880 = vunpack.c.l.b16 %v806
        %v881 = vunpack.c.l.b16 %v807
        %v882 = vunpack.c.l.b16 %v808
        %v883 = vunpack.c.l.b16 %v809
        %v884 = vunpack.c.l.b16 %v810
        %v885 = vunpack.c.l.b16 %v811
        %v886 = vunpack.c.l.b16 %v812
        %v887 = vunpack.c.l.b16 %v813
        %v888 = vpack.c.b16 %v852, %v851
        %v889 = vpack.c.b16 %v854, %v853
        %v890 = vpack.c.b16 %v856, %v855
        %v891 = vpack.c.b16 %v858, %v857
        %v892 = vpack.c.b16 %v860, %v859
        %v893 = vpack.c.b16 %v862, %v861
        %v894 = vpack.c.b16 %v864, %v863
        %v895 = vpack.c.b16 %v866, %v865
        %v896 = vpack.c.b16 %v868, %v867
        %v897 = vpack.c.b16 %v870, %v869
        %v898 = vpack.c.b16 %v872, %v871
        %v899 = vpack.c.b16 %v874, %v873
        %v900 = vpack.c.b16 %v876, %v875
        %v901 = vpack.c.b16 %v878, %v877
        %v902 = vpack.c.b16 %v880, %v879
        %v903 = vpack.c.b16 %v882, %v881
        %v904 = vpack.c.b16 %v884, %v883
        %v905 = vpack.c.b16 %v886, %v885
        %v906 = vpack.c.b16 %v887, %v887
        %vm907 = vcmask 1046528
        %v908 = vrot.slane %v888, 1
        %v909 = vrot.slane %v889, 1
        %v910 = vsel %vm907, %v908, %v909
        %v911 = vrot.slane %v890, 1
        %v912 = vsel %vm907, %v909, %v911
        %v913 = vrot.slane %v891, 1
        %v914 = vsel %vm907, %v911, %v913
        %v915 = vrot.slane %v892, 1
        %v916 = vsel %vm907, %v913, %v915
        %v917 = vrot.slane %v893, 1
        %v918 = vsel %vm907, %v915, %v917
        %v919 = vrot.slane %v894, 1
        %v920 = vsel %vm907, %v917, %v919
        %v921 = vrot.slane %v895, 1
        %v922 = vsel %vm907, %v919, %v921
        %v923 = vrot.slane %v896, 1
        %v924 = vsel %vm907, %v921, %v923
        %v925 = vrot.slane %v897, 1
        %v926 = vsel %vm907, %v923, %v925
        %v927 = vrot.slane %v898, 1
        %v928 = vsel %vm907, %v925, %v927
        %v929 = vrot.slane %v899, 1
        %v930 = vsel %vm907, %v927, %v929
        %v931 = vrot.slane %v900, 1
        %v932 = vsel %vm907, %v929, %v931
        %v933 = vrot.slane %v901, 1
        %v934 = vsel %vm907, %v931, %v933
        %v935 = vrot.slane %v902, 1
        %v936 = vsel %vm907, %v933, %v935
        %v937 = vrot.slane %v903, 1
        %v938 = vsel %vm907, %v935, %v937
        %v939 = vrot.slane %v904, 1
        %v940 = vsel %vm907, %v937, %v939
        %v941 = vrot.slane %v905, 1
        %v942 = vsel %vm907, %v939, %v941
        %v943 = vrot.slane %v906, 1
        %v944 = vsel %vm907, %v941, %v943
        %963 = vst [vmem:[#allocation2 + $0x10] sm:$0xff] %v910
        %964 = vst [vmem:[#allocation2 + $0x58] sm:$0xff] %v912
        %965 = vst [vmem:[#allocation2 + $0xa0] sm:$0xff] %v914
        %966 = vst [vmem:[#allocation2 + $0xe8] sm:$0xff] %v916
        %967 = vst [vmem:[#allocation2 + $0x130] sm:$0xff] %v918
        %968 = vst [vmem:[#allocation2 + $0x178] sm:$0xff] %v920
        %969 = vst [vmem:[#allocation2 + $0x1c0] sm:$0xff] %v922
        %970 = vst [vmem:[#allocation2 + $0x208] sm:$0xff] %v924
        %971 = vst [vmem:[#allocation2 + $0x250] sm:$0xff] %v926
        %972 = vst [vmem:[#allocation2 + $0x298] sm:$0xff] %v928
        %973 = vst [vmem:[#allocation2 + $0x2e0] sm:$0xff] %v930
        %974 = vst [vmem:[#allocation2 + $0x328] sm:$0xff] %v932
        %975 = vst [vmem:[#allocation2 + $0x370] sm:$0xff] %v934
        %976 = vst [vmem:[#allocation2 + $0x3b8] sm:$0xff] %v936
        %977 = vst [vmem:[#allocation2 + $0x400] sm:$0xff] %v938
        %978 = vst [vmem:[#allocation2 + $0x448] sm:$0xff] %v940
        %979 = vst [vmem:[#allocation2 + $0x490] sm:$0xff] %v942
        %980 = vst [vmem:[#allocation2 + $0x4d8] sm:$0xff] %v944
        %v981 = vld [vmem:[%s262 + $0x8] sm:$0xe]
        %v982 = vld [vmem:[%s262 + $0xc] sm:$0xf]
        %v983 = vld [vmem:[%s262 + $0x10] sm:$0xf]
        %v984 = vld [vmem:[%s262 + $0x14] sm:$0xf]
        %v985 = vld [vmem:[%s262 + $0x18] sm:$0xf]
        %v986 = vld [vmem:[%s262 + $0x1c] sm:$0xf]
        %v987 = vld [vmem:[%s262 + $0x20] sm:$0xf]
        %v988 = vld [vmem:[%s262 + $0x24] sm:$0xf]
        %v989 = vld [vmem:[%s262 + $0x28] sm:$0xf]
        %v990 = vld [vmem:[%s262 + $0x2c] sm:$0xf]
        %v991 = vld [vmem:[%s262 + $0x30] sm:$0xf]
        %v992 = vld [vmem:[%s262 + $0x34] sm:$0xf]
        %v993 = vld [vmem:[%s262 + $0x38] sm:$0xf]
        %v994 = vld [vmem:[%s262 + $0x3c] sm:$0xf]
        %v995 = vld [vmem:[%s262 + $0x40] sm:$0xf]
        %v996 = vld [vmem:[%s262 + $0x44] sm:$0xf]
        %v997 = vld [vmem:[%s262 + $0x48] sm:$0xf]
        %v998 = vld [vmem:[%s262 + $0x4c] sm:$0xf]
        %v999 = vld [vmem:[%s262 + $0x50] sm:$0xf]
        %v1000 = vld [vmem:[%s262 + $0x54] sm:$0xf]
        %v1001 = vld [vmem:[%s262 + $0x58] sm:$0xf]
        %v1002 = vld [vmem:[%s262 + $0x5c] sm:$0xf]
        %v1003 = vld [vmem:[%s262 + $0x60] sm:$0xf]
        %v1004 = vld [vmem:[%s262 + $0x64] sm:$0xf]
        %v1005 = vld [vmem:[%s262 + $0x68] sm:$0xf]
        %v1006 = vld [vmem:[%s262 + $0x6c] sm:$0xf]
        %v1007 = vld [vmem:[%s262 + $0x70] sm:$0xf]
        %v1008 = vld [vmem:[%s262 + $0x74] sm:$0xf]
        %v1009 = vld [vmem:[%s262 + $0x78] sm:$0xf]
        %v1010 = vld [vmem:[%s262 + $0x7c] sm:$0xf]
        %v1011 = vld [vmem:[%s262 + $0x80] sm:$0xf]
        %v1012 = vld [vmem:[%s262 + $0x84] sm:$0xf]
        %v1013 = vld [vmem:[%s262 + $0x88] sm:$0xf]
        %v1014 = vld [vmem:[%s262 + $0x8c] sm:$0xf]
        %v1015 = vld [vmem:[%s262 + $0x90] sm:$0xf]
        %v1016 = vld [vmem:[%s262 + $0x94] sm:$0xf]
        %v1017 = vld [vmem:[%s262 + $0x98] sm:$0x1]
        %v1055 = vunpack.c.l.b16 %v981
        %v1056 = vunpack.c.l.b16 %v982
        %v1057 = vunpack.c.l.b16 %v983
        %v1058 = vunpack.c.l.b16 %v984
        %v1059 = vunpack.c.l.b16 %v985
        %v1060 = vunpack.c.l.b16 %v986
        %v1061 = vunpack.c.l.b16 %v987
        %v1062 = vunpack.c.l.b16 %v988
        %v1063 = vunpack.c.l.b16 %v989
        %v1064 = vunpack.c.l.b16 %v990
        %v1065 = vunpack.c.l.b16 %v991
        %v1066 = vunpack.c.l.b16 %v992
        %v1067 = vunpack.c.l.b16 %v993
        %v1068 = vunpack.c.l.b16 %v994
        %v1069 = vunpack.c.l.b16 %v995
        %v1070 = vunpack.c.l.b16 %v996
        %v1071 = vunpack.c.l.b16 %v997
        %v1072 = vunpack.c.l.b16 %v998
        %v1073 = vunpack.c.l.b16 %v999
        %v1074 = vunpack.c.l.b16 %v1000
        %v1075 = vunpack.c.l.b16 %v1001
        %v1076 = vunpack.c.l.b16 %v1002
        %v1077 = vunpack.c.l.b16 %v1003
        %v1078 = vunpack.c.l.b16 %v1004
        %v1079 = vunpack.c.l.b16 %v1005
        %v1080 = vunpack.c.l.b16 %v1006
        %v1081 = vunpack.c.l.b16 %v1007
        %v1082 = vunpack.c.l.b16 %v1008
        %v1083 = vunpack.c.l.b16 %v1009
        %v1084 = vunpack.c.l.b16 %v1010
        %v1085 = vunpack.c.l.b16 %v1011
        %v1086 = vunpack.c.l.b16 %v1012
        %v1087 = vunpack.c.l.b16 %v1013
        %v1088 = vunpack.c.l.b16 %v1014
        %v1089 = vunpack.c.l.b16 %v1015
        %v1090 = vunpack.c.l.b16 %v1016
        %v1091 = vunpack.c.l.b16 %v1017
        %v1092 = vpack.c.b16 %v1056, %v1055
        %v1093 = vpack.c.b16 %v1058, %v1057
        %v1094 = vpack.c.b16 %v1060, %v1059
        %v1095 = vpack.c.b16 %v1062, %v1061
        %v1096 = vpack.c.b16 %v1064, %v1063
        %v1097 = vpack.c.b16 %v1066, %v1065
        %v1098 = vpack.c.b16 %v1068, %v1067
        %v1099 = vpack.c.b16 %v1070, %v1069
        %v1100 = vpack.c.b16 %v1072, %v1071
        %v1101 = vpack.c.b16 %v1074, %v1073
        %v1102 = vpack.c.b16 %v1076, %v1075
        %v1103 = vpack.c.b16 %v1078, %v1077
        %v1104 = vpack.c.b16 %v1080, %v1079
        %v1105 = vpack.c.b16 %v1082, %v1081
        %v1106 = vpack.c.b16 %v1084, %v1083
        %v1107 = vpack.c.b16 %v1086, %v1085
        %v1108 = vpack.c.b16 %v1088, %v1087
        %v1109 = vpack.c.b16 %v1090, %v1089
        %v1110 = vpack.c.b16 %v1091, %v1091
        %v1111 = vrot.slane %v1092, 1
        %v1112 = vrot.slane %v1093, 1
        %v1113 = vsel %vm907, %v1111, %v1112
        %v1114 = vrot.slane %v1094, 1
        %v1115 = vsel %vm907, %v1112, %v1114
        %v1116 = vrot.slane %v1095, 1
        %v1117 = vsel %vm907, %v1114, %v1116
        %v1118 = vrot.slane %v1096, 1
        %v1119 = vsel %vm907, %v1116, %v1118
        %v1120 = vrot.slane %v1097, 1
        %v1121 = vsel %vm907, %v1118, %v1120
        %v1122 = vrot.slane %v1098, 1
        %v1123 = vsel %vm907, %v1120, %v1122
        %v1124 = vrot.slane %v1099, 1
        %v1125 = vsel %vm907, %v1122, %v1124
        %v1126 = vrot.slane %v1100, 1
        %v1127 = vsel %vm907, %v1124, %v1126
        %v1128 = vrot.slane %v1101, 1
        %v1129 = vsel %vm907, %v1126, %v1128
        %v1130 = vrot.slane %v1102, 1
        %v1131 = vsel %vm907, %v1128, %v1130
        %v1132 = vrot.slane %v1103, 1
        %v1133 = vsel %vm907, %v1130, %v1132
        %v1134 = vrot.slane %v1104, 1
        %v1135 = vsel %vm907, %v1132, %v1134
        %v1136 = vrot.slane %v1105, 1
        %v1137 = vsel %vm907, %v1134, %v1136
        %v1138 = vrot.slane %v1106, 1
        %v1139 = vsel %vm907, %v1136, %v1138
        %v1140 = vrot.slane %v1107, 1
        %v1141 = vsel %vm907, %v1138, %v1140
        %v1142 = vrot.slane %v1108, 1
        %v1143 = vsel %vm907, %v1140, %v1142
        %v1144 = vrot.slane %v1109, 1
        %v1145 = vsel %vm907, %v1142, %v1144
        %v1146 = vrot.slane %v1110, 1
        %v1147 = vsel %vm907, %v1144, %v1146
        %1166 = vst [vmem:[#allocation2 + $0x18] sm:$0xff] %v1113
        %1167 = vst [vmem:[#allocation2 + $0x60] sm:$0xff] %v1115
        %1168 = vst [vmem:[#allocation2 + $0xa8] sm:$0xff] %v1117
        %1169 = vst [vmem:[#allocation2 + $0xf0] sm:$0xff] %v1119
        %1170 = vst [vmem:[#allocation2 + $0x138] sm:$0xff] %v1121
        %1171 = vst [vmem:[#allocation2 + $0x180] sm:$0xff] %v1123
        %1172 = vst [vmem:[#allocation2 + $0x1c8] sm:$0xff] %v1125
        %1173 = vst [vmem:[#allocation2 + $0x210] sm:$0xff] %v1127
        %1174 = vst [vmem:[#allocation2 + $0x258] sm:$0xff] %v1129
        %1175 = vst [vmem:[#allocation2 + $0x2a0] sm:$0xff] %v1131
        %1176 = vst [vmem:[#allocation2 + $0x2e8] sm:$0xff] %v1133
        %1177 = vst [vmem:[#allocation2 + $0x330] sm:$0xff] %v1135
        %1178 = vst [vmem:[#allocation2 + $0x378] sm:$0xff] %v1137
        %1179 = vst [vmem:[#allocation2 + $0x3c0] sm:$0xff] %v1139
        %1180 = vst [vmem:[#allocation2 + $0x408] sm:$0xff] %v1141
        %1181 = vst [vmem:[#allocation2 + $0x450] sm:$0xff] %v1143
        %1182 = vst [vmem:[#allocation2 + $0x498] sm:$0xff] %v1145
        %1183 = vst [vmem:[#allocation2 + $0x4e0] sm:$0xff] %v1147
        %v1184 = vld [vmem:[%s262 + $0x8] sm:$0xe]
        %v1185 = vld [vmem:[%s262 + $0xc] sm:$0xf]
        %v1186 = vld [vmem:[%s262 + $0x10] sm:$0xf]
        %v1187 = vld [vmem:[%s262 + $0x14] sm:$0xf]
        %v1188 = vld [vmem:[%s262 + $0x18] sm:$0xf]
        %v1189 = vld [vmem:[%s262 + $0x1c] sm:$0xf]
        %v1190 = vld [vmem:[%s262 + $0x20] sm:$0xf]
        %v1191 = vld [vmem:[%s262 + $0x24] sm:$0xf]
        %v1192 = vld [vmem:[%s262 + $0x28] sm:$0xf]
        %v1193 = vld [vmem:[%s262 + $0x2c] sm:$0xf]
        %v1194 = vld [vmem:[%s262 + $0x30] sm:$0xf]
        %v1195 = vld [vmem:[%s262 + $0x34] sm:$0xf]
        %v1196 = vld [vmem:[%s262 + $0x38] sm:$0xf]
        %v1197 = vld [vmem:[%s262 + $0x3c] sm:$0xf]
        %v1198 = vld [vmem:[%s262 + $0x40] sm:$0xf]
        %v1199 = vld [vmem:[%s262 + $0x44] sm:$0xf]
        %v1200 = vld [vmem:[%s262 + $0x48] sm:$0xf]
        %v1201 = vld [vmem:[%s262 + $0x4c] sm:$0xf]
        %v1202 = vld [vmem:[%s262 + $0x50] sm:$0xf]
        %v1203 = vld [vmem:[%s262 + $0x54] sm:$0xf]
        %v1204 = vld [vmem:[%s262 + $0x58] sm:$0xf]
        %v1205 = vld [vmem:[%s262 + $0x5c] sm:$0xf]
        %v1206 = vld [vmem:[%s262 + $0x60] sm:$0xf]
        %v1207 = vld [vmem:[%s262 + $0x64] sm:$0xf]
        %v1208 = vld [vmem:[%s262 + $0x68] sm:$0xf]
        %v1209 = vld [vmem:[%s262 + $0x6c] sm:$0xf]
        %v1210 = vld [vmem:[%s262 + $0x70] sm:$0xf]
        %v1211 = vld [vmem:[%s262 + $0x74] sm:$0xf]
        %v1212 = vld [vmem:[%s262 + $0x78] sm:$0xf]
        %v1213 = vld [vmem:[%s262 + $0x7c] sm:$0xf]
        %v1214 = vld [vmem:[%s262 + $0x80] sm:$0xf]
        %v1215 = vld [vmem:[%s262 + $0x84] sm:$0xf]
        %v1216 = vld [vmem:[%s262 + $0x88] sm:$0xf]
        %v1217 = vld [vmem:[%s262 + $0x8c] sm:$0xf]
        %v1218 = vld [vmem:[%s262 + $0x90] sm:$0xf]
        %v1219 = vld [vmem:[%s262 + $0x94] sm:$0xf]
        %v1220 = vld [vmem:[%s262 + $0x98] sm:$0x3]
        %v1258 = vunpack.c.l.b16 %v1184
        %v1259 = vunpack.c.l.b16 %v1185
        %v1260 = vunpack.c.l.b16 %v1186
        %v1261 = vunpack.c.l.b16 %v1187
        %v1262 = vunpack.c.l.b16 %v1188
        %v1263 = vunpack.c.l.b16 %v1189
        %v1264 = vunpack.c.l.b16 %v1190
        %v1265 = vunpack.c.l.b16 %v1191
        %v1266 = vunpack.c.l.b16 %v1192
        %v1267 = vunpack.c.l.b16 %v1193
        %v1268 = vunpack.c.l.b16 %v1194
        %v1269 = vunpack.c.l.b16 %v1195
        %v1270 = vunpack.c.l.b16 %v1196
        %v1271 = vunpack.c.l.b16 %v1197
        %v1272 = vunpack.c.l.b16 %v1198
        %v1273 = vunpack.c.l.b16 %v1199
        %v1274 = vunpack.c.l.b16 %v1200
        %v1275 = vunpack.c.l.b16 %v1201
        %v1276 = vunpack.c.l.b16 %v1202
        %v1277 = vunpack.c.l.b16 %v1203
        %v1278 = vunpack.c.l.b16 %v1204
        %v1279 = vunpack.c.l.b16 %v1205
        %v1280 = vunpack.c.l.b16 %v1206
        %v1281 = vunpack.c.l.b16 %v1207
        %v1282 = vunpack.c.l.b16 %v1208
        %v1283 = vunpack.c.l.b16 %v1209
        %v1284 = vunpack.c.l.b16 %v1210
        %v1285 = vunpack.c.l.b16 %v1211
        %v1286 = vunpack.c.l.b16 %v1212
        %v1287 = vunpack.c.l.b16 %v1213
        %v1288 = vunpack.c.l.b16 %v1214
        %v1289 = vunpack.c.l.b16 %v1215
        %v1290 = vunpack.c.l.b16 %v1216
        %v1291 = vunpack.c.l.b16 %v1217
        %v1292 = vunpack.c.l.b16 %v1218
        %v1293 = vunpack.c.l.b16 %v1219
        %v1294 = vunpack.c.l.b16 %v1220
        %v1295 = vpack.c.b16 %v1259, %v1258
        %v1296 = vpack.c.b16 %v1261, %v1260
        %v1297 = vpack.c.b16 %v1263, %v1262
        %v1298 = vpack.c.b16 %v1265, %v1264
        %v1299 = vpack.c.b16 %v1267, %v1266
        %v1300 = vpack.c.b16 %v1269, %v1268
        %v1301 = vpack.c.b16 %v1271, %v1270
        %v1302 = vpack.c.b16 %v1273, %v1272
        %v1303 = vpack.c.b16 %v1275, %v1274
        %v1304 = vpack.c.b16 %v1277, %v1276
        %v1305 = vpack.c.b16 %v1279, %v1278
        %v1306 = vpack.c.b16 %v1281, %v1280
        %v1307 = vpack.c.b16 %v1283, %v1282
        %v1308 = vpack.c.b16 %v1285, %v1284
        %v1309 = vpack.c.b16 %v1287, %v1286
        %v1310 = vpack.c.b16 %v1289, %v1288
        %v1311 = vpack.c.b16 %v1291, %v1290
        %v1312 = vpack.c.b16 %v1293, %v1292
        %v1313 = vpack.c.b16 %v1294, %v1294
        %vm1314 = vsmask.f32 6400
        %v1316 = vshrl.u32 %v1295, 16
        %v1318 = vrot.slane %v1316, 1
        %v1319 = vshll.u32 %v1295, 16
        %v1321 = vrot.slane %v1319, 2
        %v1322 = vor.u32 %v1318, %v1321
        %v1324 = vshrl.u32 %v1296, 16
        %v1326 = vrot.slane %v1324, 1
        %v1327 = vshll.u32 %v1296, 16
        %v1329 = vrot.slane %v1327, 2
        %v1330 = vor.u32 %v1326, %v1329
        %v1331 = vsel %vm1314, %v1322, %v1330
        %v1333 = vshrl.u32 %v1297, 16
        %v1335 = vrot.slane %v1333, 1
        %v1336 = vshll.u32 %v1297, 16
        %v1338 = vrot.slane %v1336, 2
        %v1339 = vor.u32 %v1335, %v1338
        %v1340 = vsel %vm1314, %v1330, %v1339
        %v1342 = vshrl.u32 %v1298, 16
        %v1344 = vrot.slane %v1342, 1
        %v1345 = vshll.u32 %v1298, 16
        %v1347 = vrot.slane %v1345, 2
        %v1348 = vor.u32 %v1344, %v1347
        %v1349 = vsel %vm1314, %v1339, %v1348
        %v1351 = vshrl.u32 %v1299, 16
        %v1353 = vrot.slane %v1351, 1
        %v1354 = vshll.u32 %v1299, 16
        %v1356 = vrot.slane %v1354, 2
        %v1357 = vor.u32 %v1353, %v1356
        %v1358 = vsel %vm1314, %v1348, %v1357
        %v1360 = vshrl.u32 %v1300, 16
        %v1362 = vrot.slane %v1360, 1
        %v1363 = vshll.u32 %v1300, 16
        %v1365 = vrot.slane %v1363, 2
        %v1366 = vor.u32 %v1362, %v1365
        %v1367 = vsel %vm1314, %v1357, %v1366
        %v1369 = vshrl.u32 %v1301, 16
        %v1371 = vrot.slane %v1369, 1
        %v1372 = vshll.u32 %v1301, 16
        %v1374 = vrot.slane %v1372, 2
        %v1375 = vor.u32 %v1371, %v1374
        %v1376 = vsel %vm1314, %v1366, %v1375
        %v1378 = vshrl.u32 %v1302, 16
        %v1380 = vrot.slane %v1378, 1
        %v1381 = vshll.u32 %v1302, 16
        %v1383 = vrot.slane %v1381, 2
        %v1384 = vor.u32 %v1380, %v1383
        %v1385 = vsel %vm1314, %v1375, %v1384
        %v1387 = vshrl.u32 %v1303, 16
        %v1389 = vrot.slane %v1387, 1
        %v1390 = vshll.u32 %v1303, 16
        %v1392 = vrot.slane %v1390, 2
        %v1393 = vor.u32 %v1389, %v1392
        %v1394 = vsel %vm1314, %v1384, %v1393
        %v1396 = vshrl.u32 %v1304, 16
        %v1398 = vrot.slane %v1396, 1
        %v1399 = vshll.u32 %v1304, 16
        %v1401 = vrot.slane %v1399, 2
        %v1402 = vor.u32 %v1398, %v1401
        %v1403 = vsel %vm1314, %v1393, %v1402
        %v1405 = vshrl.u32 %v1305, 16
        %v1407 = vrot.slane %v1405, 1
        %v1408 = vshll.u32 %v1305, 16
        %v1410 = vrot.slane %v1408, 2
        %v1411 = vor.u32 %v1407, %v1410
        %v1412 = vsel %vm1314, %v1402, %v1411
        %v1414 = vshrl.u32 %v1306, 16
        %v1416 = vrot.slane %v1414, 1
        %v1417 = vshll.u32 %v1306, 16
        %v1419 = vrot.slane %v1417, 2
        %v1420 = vor.u32 %v1416, %v1419
        %v1421 = vsel %vm1314, %v1411, %v1420
        %v1423 = vshrl.u32 %v1307, 16
        %v1425 = vrot.slane %v1423, 1
        %v1426 = vshll.u32 %v1307, 16
        %v1428 = vrot.slane %v1426, 2
        %v1429 = vor.u32 %v1425, %v1428
        %v1430 = vsel %vm1314, %v1420, %v1429
        %v1432 = vshrl.u32 %v1308, 16
        %v1434 = vrot.slane %v1432, 1
        %v1435 = vshll.u32 %v1308, 16
        %v1437 = vrot.slane %v1435, 2
        %v1438 = vor.u32 %v1434, %v1437
        %v1439 = vsel %vm1314, %v1429, %v1438
        %v1441 = vshrl.u32 %v1309, 16
        %v1443 = vrot.slane %v1441, 1
        %v1444 = vshll.u32 %v1309, 16
        %v1446 = vrot.slane %v1444, 2
        %v1447 = vor.u32 %v1443, %v1446
        %v1448 = vsel %vm1314, %v1438, %v1447
        %v1450 = vshrl.u32 %v1310, 16
        %v1452 = vrot.slane %v1450, 1
        %v1453 = vshll.u32 %v1310, 16
        %v1455 = vrot.slane %v1453, 2
        %v1456 = vor.u32 %v1452, %v1455
        %v1457 = vsel %vm1314, %v1447, %v1456
        %v1459 = vshrl.u32 %v1311, 16
        %v1461 = vrot.slane %v1459, 1
        %v1462 = vshll.u32 %v1311, 16
        %v1464 = vrot.slane %v1462, 2
        %v1465 = vor.u32 %v1461, %v1464
        %v1466 = vsel %vm1314, %v1456, %v1465
        %v1468 = vshrl.u32 %v1312, 16
        %v1470 = vrot.slane %v1468, 1
        %v1471 = vshll.u32 %v1312, 16
        %v1473 = vrot.slane %v1471, 2
        %v1474 = vor.u32 %v1470, %v1473
        %v1475 = vsel %vm1314, %v1465, %v1474
        %v1477 = vshrl.u32 %v1313, 16
        %v1479 = vrot.slane %v1477, 1
        %v1480 = vshll.u32 %v1313, 16
        %v1482 = vrot.slane %v1480, 2
        %v1483 = vor.u32 %v1479, %v1482
        %v1484 = vsel %vm1314, %v1474, %v1483
        %1503 = vst [vmem:[#allocation2 + $0x20] sm:$0xff] %v1331
        %1504 = vst [vmem:[#allocation2 + $0x68] sm:$0xff] %v1340
        %1505 = vst [vmem:[#allocation2 + $0xb0] sm:$0xff] %v1349
        %1506 = vst [vmem:[#allocation2 + $0xf8] sm:$0xff] %v1358
        %1507 = vst [vmem:[#allocation2 + $0x140] sm:$0xff] %v1367
        %1508 = vst [vmem:[#allocation2 + $0x188] sm:$0xff] %v1376
        %1509 = vst [vmem:[#allocation2 + $0x1d0] sm:$0xff] %v1385
        %1510 = vst [vmem:[#allocation2 + $0x218] sm:$0xff] %v1394
        %1511 = vst [vmem:[#allocation2 + $0x260] sm:$0xff] %v1403
        %1512 = vst [vmem:[#allocation2 + $0x2a8] sm:$0xff] %v1412
        %1513 = vst [vmem:[#allocation2 + $0x2f0] sm:$0xff] %v1421
        %1514 = vst [vmem:[#allocation2 + $0x338] sm:$0xff] %v1430
        %1515 = vst [vmem:[#allocation2 + $0x380] sm:$0xff] %v1439
        %1516 = vst [vmem:[#allocation2 + $0x3c8] sm:$0xff] %v1448
        %1517 = vst [vmem:[#allocation2 + $0x410] sm:$0xff] %v1457
        %1518 = vst [vmem:[#allocation2 + $0x458] sm:$0xff] %v1466
        %1519 = vst [vmem:[#allocation2 + $0x4a0] sm:$0xff] %v1475
        %1520 = vst [vmem:[#allocation2 + $0x4e8] sm:$0xff] %v1484
        %v1521 = vld [vmem:[%s262 + $0x8] sm:$0xc]
        %v1522 = vld [vmem:[%s262 + $0xc] sm:$0xf]
        %v1523 = vld [vmem:[%s262 + $0x10] sm:$0xf]
        %v1524 = vld [vmem:[%s262 + $0x14] sm:$0xf]
        %v1525 = vld [vmem:[%s262 + $0x18] sm:$0xf]
        %v1526 = vld [vmem:[%s262 + $0x1c] sm:$0xf]
        %v1527 = vld [vmem:[%s262 + $0x20] sm:$0xf]
        %v1528 = vld [vmem:[%s262 + $0x24] sm:$0xf]
        %v1529 = vld [vmem:[%s262 + $0x28] sm:$0xf]
        %v1530 = vld [vmem:[%s262 + $0x2c] sm:$0xf]
        %v1531 = vld [vmem:[%s262 + $0x30] sm:$0xf]
        %v1532 = vld [vmem:[%s262 + $0x34] sm:$0xf]
        %v1533 = vld [vmem:[%s262 + $0x38] sm:$0xf]
        %v1534 = vld [vmem:[%s262 + $0x3c] sm:$0xf]
        %v1535 = vld [vmem:[%s262 + $0x40] sm:$0xf]
        %v1536 = vld [vmem:[%s262 + $0x44] sm:$0xf]
        %v1537 = vld [vmem:[%s262 + $0x48] sm:$0xf]
        %v1538 = vld [vmem:[%s262 + $0x4c] sm:$0xf]
        %v1539 = vld [vmem:[%s262 + $0x50] sm:$0xf]
        %v1540 = vld [vmem:[%s262 + $0x54] sm:$0xf]
        %v1541 = vld [vmem:[%s262 + $0x58] sm:$0xf]
        %v1542 = vld [vmem:[%s262 + $0x5c] sm:$0xf]
        %v1543 = vld [vmem:[%s262 + $0x60] sm:$0xf]
        %v1544 = vld [vmem:[%s262 + $0x64] sm:$0xf]
        %v1545 = vld [vmem:[%s262 + $0x68] sm:$0xf]
        %v1546 = vld [vmem:[%s262 + $0x6c] sm:$0xf]
        %v1547 = vld [vmem:[%s262 + $0x70] sm:$0xf]
        %v1548 = vld [vmem:[%s262 + $0x74] sm:$0xf]
        %v1549 = vld [vmem:[%s262 + $0x78] sm:$0xf]
        %v1550 = vld [vmem:[%s262 + $0x7c] sm:$0xf]
        %v1551 = vld [vmem:[%s262 + $0x80] sm:$0xf]
        %v1552 = vld [vmem:[%s262 + $0x84] sm:$0xf]
        %v1553 = vld [vmem:[%s262 + $0x88] sm:$0xf]
        %v1554 = vld [vmem:[%s262 + $0x8c] sm:$0xf]
        %v1555 = vld [vmem:[%s262 + $0x90] sm:$0xf]
        %v1556 = vld [vmem:[%s262 + $0x94] sm:$0xf]
        %v1557 = vld [vmem:[%s262 + $0x98] sm:$0x3]
        %v1595 = vunpack.c.l.b16 %v1521
        %v1596 = vunpack.c.l.b16 %v1522
        %v1597 = vunpack.c.l.b16 %v1523
        %v1598 = vunpack.c.l.b16 %v1524
        %v1599 = vunpack.c.l.b16 %v1525
        %v1600 = vunpack.c.l.b16 %v1526
        %v1601 = vunpack.c.l.b16 %v1527
        %v1602 = vunpack.c.l.b16 %v1528
        %v1603 = vunpack.c.l.b16 %v1529
        %v1604 = vunpack.c.l.b16 %v1530
        %v1605 = vunpack.c.l.b16 %v1531
        %v1606 = vunpack.c.l.b16 %v1532
        %v1607 = vunpack.c.l.b16 %v1533
        %v1608 = vunpack.c.l.b16 %v1534
        %v1609 = vunpack.c.l.b16 %v1535
        %v1610 = vunpack.c.l.b16 %v1536
        %v1611 = vunpack.c.l.b16 %v1537
        %v1612 = vunpack.c.l.b16 %v1538
        %v1613 = vunpack.c.l.b16 %v1539
        %v1614 = vunpack.c.l.b16 %v1540
        %v1615 = vunpack.c.l.b16 %v1541
        %v1616 = vunpack.c.l.b16 %v1542
        %v1617 = vunpack.c.l.b16 %v1543
        %v1618 = vunpack.c.l.b16 %v1544
        %v1619 = vunpack.c.l.b16 %v1545
        %v1620 = vunpack.c.l.b16 %v1546
        %v1621 = vunpack.c.l.b16 %v1547
        %v1622 = vunpack.c.l.b16 %v1548
        %v1623 = vunpack.c.l.b16 %v1549
        %v1624 = vunpack.c.l.b16 %v1550
        %v1625 = vunpack.c.l.b16 %v1551
        %v1626 = vunpack.c.l.b16 %v1552
        %v1627 = vunpack.c.l.b16 %v1553
        %v1628 = vunpack.c.l.b16 %v1554
        %v1629 = vunpack.c.l.b16 %v1555
        %v1630 = vunpack.c.l.b16 %v1556
        %v1631 = vunpack.c.l.b16 %v1557
        %v1632 = vpack.c.b16 %v1596, %v1595
        %v1633 = vpack.c.b16 %v1598, %v1597
        %v1634 = vpack.c.b16 %v1600, %v1599
        %v1635 = vpack.c.b16 %v1602, %v1601
        %v1636 = vpack.c.b16 %v1604, %v1603
        %v1637 = vpack.c.b16 %v1606, %v1605
        %v1638 = vpack.c.b16 %v1608, %v1607
        %v1639 = vpack.c.b16 %v1610, %v1609
        %v1640 = vpack.c.b16 %v1612, %v1611
        %v1641 = vpack.c.b16 %v1614, %v1613
        %v1642 = vpack.c.b16 %v1616, %v1615
        %v1643 = vpack.c.b16 %v1618, %v1617
        %v1644 = vpack.c.b16 %v1620, %v1619
        %v1645 = vpack.c.b16 %v1622, %v1621
        %v1646 = vpack.c.b16 %v1624, %v1623
        %v1647 = vpack.c.b16 %v1626, %v1625
        %v1648 = vpack.c.b16 %v1628, %v1627
        %v1649 = vpack.c.b16 %v1630, %v1629
        %v1650 = vpack.c.b16 %v1631, %v1631
        %vm1651 = vcmask 1045504
        %v1652 = vrot.slane %v1632, 2
        %v1653 = vrot.slane %v1633, 2
        %v1654 = vsel %vm1651, %v1652, %v1653
        %v1655 = vrot.slane %v1634, 2
        %v1656 = vsel %vm1651, %v1653, %v1655
        %v1657 = vrot.slane %v1635, 2
        %v1658 = vsel %vm1651, %v1655, %v1657
        %v1659 = vrot.slane %v1636, 2
        %v1660 = vsel %vm1651, %v1657, %v1659
        %v1661 = vrot.slane %v1637, 2
        %v1662 = vsel %vm1651, %v1659, %v1661
        %v1663 = vrot.slane %v1638, 2
        %v1664 = vsel %vm1651, %v1661, %v1663
        %v1665 = vrot.slane %v1639, 2
        %v1666 = vsel %vm1651, %v1663, %v1665
        %v1667 = vrot.slane %v1640, 2
        %v1668 = vsel %vm1651, %v1665, %v1667
        %v1669 = vrot.slane %v1641, 2
        %v1670 = vsel %vm1651, %v1667, %v1669
        %v1671 = vrot.slane %v1642, 2
        %v1672 = vsel %vm1651, %v1669, %v1671
        %v1673 = vrot.slane %v1643, 2
        %v1674 = vsel %vm1651, %v1671, %v1673
        %v1675 = vrot.slane %v1644, 2
        %v1676 = vsel %vm1651, %v1673, %v1675
        %v1677 = vrot.slane %v1645, 2
        %v1678 = vsel %vm1651, %v1675, %v1677
        %v1679 = vrot.slane %v1646, 2
        %v1680 = vsel %vm1651, %v1677, %v1679
        %v1681 = vrot.slane %v1647, 2
        %v1682 = vsel %vm1651, %v1679, %v1681
        %v1683 = vrot.slane %v1648, 2
        %v1684 = vsel %vm1651, %v1681, %v1683
        %v1685 = vrot.slane %v1649, 2
        %v1686 = vsel %vm1651, %v1683, %v1685
        %v1687 = vrot.slane %v1650, 2
        %v1688 = vsel %vm1651, %v1685, %v1687
        %1707 = vst [vmem:[#allocation2 + $0x28] sm:$0xff] %v1654
        %1708 = vst [vmem:[#allocation2 + $0x70] sm:$0xff] %v1656
        %1709 = vst [vmem:[#allocation2 + $0xb8] sm:$0xff] %v1658
        %1710 = vst [vmem:[#allocation2 + $0x100] sm:$0xff] %v1660
        %1711 = vst [vmem:[#allocation2 + $0x148] sm:$0xff] %v1662
        %1712 = vst [vmem:[#allocation2 + $0x190] sm:$0xff] %v1664
        %1713 = vst [vmem:[#allocation2 + $0x1d8] sm:$0xff] %v1666
        %1714 = vst [vmem:[#allocation2 + $0x220] sm:$0xff] %v1668
        %1715 = vst [vmem:[#allocation2 + $0x268] sm:$0xff] %v1670
        %1716 = vst [vmem:[#allocation2 + $0x2b0] sm:$0xff] %v1672
        %1717 = vst [vmem:[#allocation2 + $0x2f8] sm:$0xff] %v1674
        %1718 = vst [vmem:[#allocation2 + $0x340] sm:$0xff] %v1676
        %1719 = vst [vmem:[#allocation2 + $0x388] sm:$0xff] %v1678
        %1720 = vst [vmem:[#allocation2 + $0x3d0] sm:$0xff] %v1680
        %1721 = vst [vmem:[#allocation2 + $0x418] sm:$0xff] %v1682
        %1722 = vst [vmem:[#allocation2 + $0x460] sm:$0xff] %v1684
        %1723 = vst [vmem:[#allocation2 + $0x4a8] sm:$0xff] %v1686
        %1724 = vst [vmem:[#allocation2 + $0x4f0] sm:$0xff] %v1688
        %v1725 = vld [vmem:[%s262 + $0x10] sm:$0xc]
        %v1726 = vld [vmem:[%s262 + $0x14] sm:$0xf]
        %v1727 = vld [vmem:[%s262 + $0x18] sm:$0xf]
        %v1728 = vld [vmem:[%s262 + $0x1c] sm:$0xf]
        %v1729 = vld [vmem:[%s262 + $0x20] sm:$0xf]
        %v1730 = vld [vmem:[%s262 + $0x24] sm:$0xf]
        %v1731 = vld [vmem:[%s262 + $0x28] sm:$0xf]
        %v1732 = vld [vmem:[%s262 + $0x2c] sm:$0xf]
        %v1733 = vld [vmem:[%s262 + $0x30] sm:$0xf]
        %v1734 = vld [vmem:[%s262 + $0x34] sm:$0xf]
        %v1735 = vld [vmem:[%s262 + $0x38] sm:$0xf]
        %v1736 = vld [vmem:[%s262 + $0x3c] sm:$0xf]
        %v1737 = vld [vmem:[%s262 + $0x40] sm:$0xf]
        %v1738 = vld [vmem:[%s262 + $0x44] sm:$0xf]
        %v1739 = vld [vmem:[%s262 + $0x48] sm:$0xf]
        %v1740 = vld [vmem:[%s262 + $0x4c] sm:$0xf]
        %v1741 = vld [vmem:[%s262 + $0x50] sm:$0xf]
        %v1742 = vld [vmem:[%s262 + $0x54] sm:$0xf]
        %v1743 = vld [vmem:[%s262 + $0x58] sm:$0xf]
        %v1744 = vld [vmem:[%s262 + $0x5c] sm:$0xf]
        %v1745 = vld [vmem:[%s262 + $0x60] sm:$0xf]
        %v1746 = vld [vmem:[%s262 + $0x64] sm:$0xf]
        %v1747 = vld [vmem:[%s262 + $0x68] sm:$0xf]
        %v1748 = vld [vmem:[%s262 + $0x6c] sm:$0xf]
        %v1749 = vld [vmem:[%s262 + $0x70] sm:$0xf]
        %v1750 = vld [vmem:[%s262 + $0x74] sm:$0xf]
        %v1751 = vld [vmem:[%s262 + $0x78] sm:$0xf]
        %v1752 = vld [vmem:[%s262 + $0x7c] sm:$0xf]
        %v1753 = vld [vmem:[%s262 + $0x80] sm:$0xf]
        %v1754 = vld [vmem:[%s262 + $0x84] sm:$0xf]
        %v1755 = vld [vmem:[%s262 + $0x88] sm:$0xf]
        %v1756 = vld [vmem:[%s262 + $0x8c] sm:$0xf]
        %v1757 = vld [vmem:[%s262 + $0x90] sm:$0xf]
        %v1758 = vld [vmem:[%s262 + $0x94] sm:$0xf]
        %v1759 = vld [vmem:[%s262 + $0x98] sm:$0xf]
        %v1760 = vld [vmem:[%s262 + $0x9c] sm:$0xf]
        %v1761 = vld [vmem:[%s262 + $0xa0] sm:$0x3]
        %v1799 = vunpack.c.l.b16 %v1725
        %v1800 = vunpack.c.l.b16 %v1726
        %v1801 = vunpack.c.l.b16 %v1727
        %v1802 = vunpack.c.l.b16 %v1728
        %v1803 = vunpack.c.l.b16 %v1729
        %v1804 = vunpack.c.l.b16 %v1730
        %v1805 = vunpack.c.l.b16 %v1731
        %v1806 = vunpack.c.l.b16 %v1732
        %v1807 = vunpack.c.l.b16 %v1733
        %v1808 = vunpack.c.l.b16 %v1734
        %v1809 = vunpack.c.l.b16 %v1735
        %v1810 = vunpack.c.l.b16 %v1736
        %v1811 = vunpack.c.l.b16 %v1737
        %v1812 = vunpack.c.l.b16 %v1738
        %v1813 = vunpack.c.l.b16 %v1739
        %v1814 = vunpack.c.l.b16 %v1740
        %v1815 = vunpack.c.l.b16 %v1741
        %v1816 = vunpack.c.l.b16 %v1742
        %v1817 = vunpack.c.l.b16 %v1743
        %v1818 = vunpack.c.l.b16 %v1744
        %v1819 = vunpack.c.l.b16 %v1745
        %v1820 = vunpack.c.l.b16 %v1746
        %v1821 = vunpack.c.l.b16 %v1747
        %v1822 = vunpack.c.l.b16 %v1748
        %v1823 = vunpack.c.l.b16 %v1749
        %v1824 = vunpack.c.l.b16 %v1750
        %v1825 = vunpack.c.l.b16 %v1751
        %v1826 = vunpack.c.l.b16 %v1752
        %v1827 = vunpack.c.l.b16 %v1753
        %v1828 = vunpack.c.l.b16 %v1754
        %v1829 = vunpack.c.l.b16 %v1755
        %v1830 = vunpack.c.l.b16 %v1756
        %v1831 = vunpack.c.l.b16 %v1757
        %v1832 = vunpack.c.l.b16 %v1758
        %v1833 = vunpack.c.l.b16 %v1759
        %v1834 = vunpack.c.l.b16 %v1760
        %v1835 = vunpack.c.l.b16 %v1761
        %v1836 = vpack.c.b16 %v1800, %v1799
        %v1837 = vpack.c.b16 %v1802, %v1801
        %v1838 = vpack.c.b16 %v1804, %v1803
        %v1839 = vpack.c.b16 %v1806, %v1805
        %v1840 = vpack.c.b16 %v1808, %v1807
        %v1841 = vpack.c.b16 %v1810, %v1809
        %v1842 = vpack.c.b16 %v1812, %v1811
        %v1843 = vpack.c.b16 %v1814, %v1813
        %v1844 = vpack.c.b16 %v1816, %v1815
        %v1845 = vpack.c.b16 %v1818, %v1817
        %v1846 = vpack.c.b16 %v1820, %v1819
        %v1847 = vpack.c.b16 %v1822, %v1821
        %v1848 = vpack.c.b16 %v1824, %v1823
        %v1849 = vpack.c.b16 %v1826, %v1825
        %v1850 = vpack.c.b16 %v1828, %v1827
        %v1851 = vpack.c.b16 %v1830, %v1829
        %v1852 = vpack.c.b16 %v1832, %v1831
        %v1853 = vpack.c.b16 %v1834, %v1833
        %v1854 = vpack.c.b16 %v1835, %v1835
        %v1855 = vrot.slane %v1836, 2
        %v1856 = vrot.slane %v1837, 2
        %v1857 = vsel %vm1651, %v1855, %v1856
        %v1858 = vrot.slane %v1838, 2
        %v1859 = vsel %vm1651, %v1856, %v1858
        %v1860 = vrot.slane %v1839, 2
        %v1861 = vsel %vm1651, %v1858, %v1860
        %v1862 = vrot.slane %v1840, 2
        %v1863 = vsel %vm1651, %v1860, %v1862
        %v1864 = vrot.slane %v1841, 2
        %v1865 = vsel %vm1651, %v1862, %v1864
        %v1866 = vrot.slane %v1842, 2
        %v1867 = vsel %vm1651, %v1864, %v1866
        %v1868 = vrot.slane %v1843, 2
        %v1869 = vsel %vm1651, %v1866, %v1868
        %v1870 = vrot.slane %v1844, 2
        %v1871 = vsel %vm1651, %v1868, %v1870
        %v1872 = vrot.slane %v1845, 2
        %v1873 = vsel %vm1651, %v1870, %v1872
        %v1874 = vrot.slane %v1846, 2
        %v1875 = vsel %vm1651, %v1872, %v1874
        %v1876 = vrot.slane %v1847, 2
        %v1877 = vsel %vm1651, %v1874, %v1876
        %v1878 = vrot.slane %v1848, 2
        %v1879 = vsel %vm1651, %v1876, %v1878
        %v1880 = vrot.slane %v1849, 2
        %v1881 = vsel %vm1651, %v1878, %v1880
        %v1882 = vrot.slane %v1850, 2
        %v1883 = vsel %vm1651, %v1880, %v1882
        %v1884 = vrot.slane %v1851, 2
        %v1885 = vsel %vm1651, %v1882, %v1884
        %v1886 = vrot.slane %v1852, 2
        %v1887 = vsel %vm1651, %v1884, %v1886
        %v1888 = vrot.slane %v1853, 2
        %v1889 = vsel %vm1651, %v1886, %v1888
        %v1890 = vrot.slane %v1854, 2
        %v1891 = vsel %vm1651, %v1888, %v1890
        %1910 = vst [vmem:[#allocation2 + $0x30] sm:$0xff] %v1857
        %1911 = vst [vmem:[#allocation2 + $0x78] sm:$0xff] %v1859
        %1912 = vst [vmem:[#allocation2 + $0xc0] sm:$0xff] %v1861
        %1913 = vst [vmem:[#allocation2 + $0x108] sm:$0xff] %v1863
        %1914 = vst [vmem:[#allocation2 + $0x150] sm:$0xff] %v1865
        %1915 = vst [vmem:[#allocation2 + $0x198] sm:$0xff] %v1867
        %1916 = vst [vmem:[#allocation2 + $0x1e0] sm:$0xff] %v1869
        %1917 = vst [vmem:[#allocation2 + $0x228] sm:$0xff] %v1871
        %1918 = vst [vmem:[#allocation2 + $0x270] sm:$0xff] %v1873
        %1919 = vst [vmem:[#allocation2 + $0x2b8] sm:$0xff] %v1875
        %1920 = vst [vmem:[#allocation2 + $0x300] sm:$0xff] %v1877
        %1921 = vst [vmem:[#allocation2 + $0x348] sm:$0xff] %v1879
        %1922 = vst [vmem:[#allocation2 + $0x390] sm:$0xff] %v1881
        %1923 = vst [vmem:[#allocation2 + $0x3d8] sm:$0xff] %v1883
        %1924 = vst [vmem:[#allocation2 + $0x420] sm:$0xff] %v1885
        %1925 = vst [vmem:[#allocation2 + $0x468] sm:$0xff] %v1887
        %1926 = vst [vmem:[#allocation2 + $0x4b0] sm:$0xff] %v1889
        %1927 = vst [vmem:[#allocation2 + $0x4f8] sm:$0xff] %v1891
        %v1928 = vld [vmem:[%s262 + $0x10] sm:$0xc]
        %v1929 = vld [vmem:[%s262 + $0x14] sm:$0xf]
        %v1930 = vld [vmem:[%s262 + $0x18] sm:$0xf]
        %v1931 = vld [vmem:[%s262 + $0x1c] sm:$0xf]
        %v1932 = vld [vmem:[%s262 + $0x20] sm:$0xf]
        %v1933 = vld [vmem:[%s262 + $0x24] sm:$0xf]
        %v1934 = vld [vmem:[%s262 + $0x28] sm:$0xf]
        %v1935 = vld [vmem:[%s262 + $0x2c] sm:$0xf]
        %v1936 = vld [vmem:[%s262 + $0x30] sm:$0xf]
        %v1937 = vld [vmem:[%s262 + $0x34] sm:$0xf]
        %v1938 = vld [vmem:[%s262 + $0x38] sm:$0xf]
        %v1939 = vld [vmem:[%s262 + $0x3c] sm:$0xf]
        %v1940 = vld [vmem:[%s262 + $0x40] sm:$0xf]
        %v1941 = vld [vmem:[%s262 + $0x44] sm:$0xf]
        %v1942 = vld [vmem:[%s262 + $0x48] sm:$0xf]
        %v1943 = vld [vmem:[%s262 + $0x4c] sm:$0xf]
        %v1944 = vld [vmem:[%s262 + $0x50] sm:$0xf]
        %v1945 = vld [vmem:[%s262 + $0x54] sm:$0xf]
        %v1946 = vld [vmem:[%s262 + $0x58] sm:$0xf]
        %v1947 = vld [vmem:[%s262 + $0x5c] sm:$0xf]
        %v1948 = vld [vmem:[%s262 + $0x60] sm:$0xf]
        %v1949 = vld [vmem:[%s262 + $0x64] sm:$0xf]
        %v1950 = vld [vmem:[%s262 + $0x68] sm:$0xf]
        %v1951 = vld [vmem:[%s262 + $0x6c] sm:$0xf]
        %v1952 = vld [vmem:[%s262 + $0x70] sm:$0xf]
        %v1953 = vld [vmem:[%s262 + $0x74] sm:$0xf]
        %v1954 = vld [vmem:[%s262 + $0x78] sm:$0xf]
        %v1955 = vld [vmem:[%s262 + $0x7c] sm:$0xf]
        %v1956 = vld [vmem:[%s262 + $0x80] sm:$0xf]
        %v1957 = vld [vmem:[%s262 + $0x84] sm:$0xf]
        %v1958 = vld [vmem:[%s262 + $0x88] sm:$0xf]
        %v1959 = vld [vmem:[%s262 + $0x8c] sm:$0xf]
        %v1960 = vld [vmem:[%s262 + $0x90] sm:$0xf]
        %v1961 = vld [vmem:[%s262 + $0x94] sm:$0xf]
        %v1962 = vld [vmem:[%s262 + $0x98] sm:$0xf]
        %v1963 = vld [vmem:[%s262 + $0x9c] sm:$0xf]
        %v1964 = vld [vmem:[%s262 + $0xa0] sm:$0x7]
        %v2002 = vunpack.c.l.b16 %v1928
        %v2003 = vunpack.c.l.b16 %v1929
        %v2004 = vunpack.c.l.b16 %v1930
        %v2005 = vunpack.c.l.b16 %v1931
        %v2006 = vunpack.c.l.b16 %v1932
        %v2007 = vunpack.c.l.b16 %v1933
        %v2008 = vunpack.c.l.b16 %v1934
        %v2009 = vunpack.c.l.b16 %v1935
        %v2010 = vunpack.c.l.b16 %v1936
        %v2011 = vunpack.c.l.b16 %v1937
        %v2012 = vunpack.c.l.b16 %v1938
        %v2013 = vunpack.c.l.b16 %v1939
        %v2014 = vunpack.c.l.b16 %v1940
        %v2015 = vunpack.c.l.b16 %v1941
        %v2016 = vunpack.c.l.b16 %v1942
        %v2017 = vunpack.c.l.b16 %v1943
        %v2018 = vunpack.c.l.b16 %v1944
        %v2019 = vunpack.c.l.b16 %v1945
        %v2020 = vunpack.c.l.b16 %v1946
        %v2021 = vunpack.c.l.b16 %v1947
        %v2022 = vunpack.c.l.b16 %v1948
        %v2023 = vunpack.c.l.b16 %v1949
        %v2024 = vunpack.c.l.b16 %v1950
        %v2025 = vunpack.c.l.b16 %v1951
        %v2026 = vunpack.c.l.b16 %v1952
        %v2027 = vunpack.c.l.b16 %v1953
        %v2028 = vunpack.c.l.b16 %v1954
        %v2029 = vunpack.c.l.b16 %v1955
        %v2030 = vunpack.c.l.b16 %v1956
        %v2031 = vunpack.c.l.b16 %v1957
        %v2032 = vunpack.c.l.b16 %v1958
        %v2033 = vunpack.c.l.b16 %v1959
        %v2034 = vunpack.c.l.b16 %v1960
        %v2035 = vunpack.c.l.b16 %v1961
        %v2036 = vunpack.c.l.b16 %v1962
        %v2037 = vunpack.c.l.b16 %v1963
        %v2038 = vunpack.c.l.b16 %v1964
        %v2039 = vpack.c.b16 %v2003, %v2002
        %v2040 = vpack.c.b16 %v2005, %v2004
        %v2041 = vpack.c.b16 %v2007, %v2006
        %v2042 = vpack.c.b16 %v2009, %v2008
        %v2043 = vpack.c.b16 %v2011, %v2010
        %v2044 = vpack.c.b16 %v2013, %v2012
        %v2045 = vpack.c.b16 %v2015, %v2014
        %v2046 = vpack.c.b16 %v2017, %v2016
        %v2047 = vpack.c.b16 %v2019, %v2018
        %v2048 = vpack.c.b16 %v2021, %v2020
        %v2049 = vpack.c.b16 %v2023, %v2022
        %v2050 = vpack.c.b16 %v2025, %v2024
        %v2051 = vpack.c.b16 %v2027, %v2026
        %v2052 = vpack.c.b16 %v2029, %v2028
        %v2053 = vpack.c.b16 %v2031, %v2030
        %v2054 = vpack.c.b16 %v2033, %v2032
        %v2055 = vpack.c.b16 %v2035, %v2034
        %v2056 = vpack.c.b16 %v2037, %v2036
        %v2057 = vpack.c.b16 %v2038, %v2038
        %vm2058 = vsmask.f32 5376
        %v2060 = vshrl.u32 %v2039, 16
        %v2062 = vrot.slane %v2060, 2
        %v2063 = vshll.u32 %v2039, 16
        %v2065 = vrot.slane %v2063, 3
        %v2066 = vor.u32 %v2062, %v2065
        %v2068 = vshrl.u32 %v2040, 16
        %v2070 = vrot.slane %v2068, 2
        %v2071 = vshll.u32 %v2040, 16
        %v2073 = vrot.slane %v2071, 3
        %v2074 = vor.u32 %v2070, %v2073
        %v2075 = vsel %vm2058, %v2066, %v2074
        %v2077 = vshrl.u32 %v2041, 16
        %v2079 = vrot.slane %v2077, 2
        %v2080 = vshll.u32 %v2041, 16
        %v2082 = vrot.slane %v2080, 3
        %v2083 = vor.u32 %v2079, %v2082
        %v2084 = vsel %vm2058, %v2074, %v2083
        %v2086 = vshrl.u32 %v2042, 16
        %v2088 = vrot.slane %v2086, 2
        %v2089 = vshll.u32 %v2042, 16
        %v2091 = vrot.slane %v2089, 3
        %v2092 = vor.u32 %v2088, %v2091
        %v2093 = vsel %vm2058, %v2083, %v2092
        %v2095 = vshrl.u32 %v2043, 16
        %v2097 = vrot.slane %v2095, 2
        %v2098 = vshll.u32 %v2043, 16
        %v2100 = vrot.slane %v2098, 3
        %v2101 = vor.u32 %v2097, %v2100
        %v2102 = vsel %vm2058, %v2092, %v2101
        %v2104 = vshrl.u32 %v2044, 16
        %v2106 = vrot.slane %v2104, 2
        %v2107 = vshll.u32 %v2044, 16
        %v2109 = vrot.slane %v2107, 3
        %v2110 = vor.u32 %v2106, %v2109
        %v2111 = vsel %vm2058, %v2101, %v2110
        %v2113 = vshrl.u32 %v2045, 16
        %v2115 = vrot.slane %v2113, 2
        %v2116 = vshll.u32 %v2045, 16
        %v2118 = vrot.slane %v2116, 3
        %v2119 = vor.u32 %v2115, %v2118
        %v2120 = vsel %vm2058, %v2110, %v2119
        %v2122 = vshrl.u32 %v2046, 16
        %v2124 = vrot.slane %v2122, 2
        %v2125 = vshll.u32 %v2046, 16
        %v2127 = vrot.slane %v2125, 3
        %v2128 = vor.u32 %v2124, %v2127
        %v2129 = vsel %vm2058, %v2119, %v2128
        %v2131 = vshrl.u32 %v2047, 16
        %v2133 = vrot.slane %v2131, 2
        %v2134 = vshll.u32 %v2047, 16
        %v2136 = vrot.slane %v2134, 3
        %v2137 = vor.u32 %v2133, %v2136
        %v2138 = vsel %vm2058, %v2128, %v2137
        %v2140 = vshrl.u32 %v2048, 16
        %v2142 = vrot.slane %v2140, 2
        %v2143 = vshll.u32 %v2048, 16
        %v2145 = vrot.slane %v2143, 3
        %v2146 = vor.u32 %v2142, %v2145
        %v2147 = vsel %vm2058, %v2137, %v2146
        %v2149 = vshrl.u32 %v2049, 16
        %v2151 = vrot.slane %v2149, 2
        %v2152 = vshll.u32 %v2049, 16
        %v2154 = vrot.slane %v2152, 3
        %v2155 = vor.u32 %v2151, %v2154
        %v2156 = vsel %vm2058, %v2146, %v2155
        %v2158 = vshrl.u32 %v2050, 16
        %v2160 = vrot.slane %v2158, 2
        %v2161 = vshll.u32 %v2050, 16
        %v2163 = vrot.slane %v2161, 3
        %v2164 = vor.u32 %v2160, %v2163
        %v2165 = vsel %vm2058, %v2155, %v2164
        %v2167 = vshrl.u32 %v2051, 16
        %v2169 = vrot.slane %v2167, 2
        %v2170 = vshll.u32 %v2051, 16
        %v2172 = vrot.slane %v2170, 3
        %v2173 = vor.u32 %v2169, %v2172
        %v2174 = vsel %vm2058, %v2164, %v2173
        %v2176 = vshrl.u32 %v2052, 16
        %v2178 = vrot.slane %v2176, 2
        %v2179 = vshll.u32 %v2052, 16
        %v2181 = vrot.slane %v2179, 3
        %v2182 = vor.u32 %v2178, %v2181
        %v2183 = vsel %vm2058, %v2173, %v2182
        %v2185 = vshrl.u32 %v2053, 16
        %v2187 = vrot.slane %v2185, 2
        %v2188 = vshll.u32 %v2053, 16
        %v2190 = vrot.slane %v2188, 3
        %v2191 = vor.u32 %v2187, %v2190
        %v2192 = vsel %vm2058, %v2182, %v2191
        %v2194 = vshrl.u32 %v2054, 16
        %v2196 = vrot.slane %v2194, 2
        %v2197 = vshll.u32 %v2054, 16
        %v2199 = vrot.slane %v2197, 3
        %v2200 = vor.u32 %v2196, %v2199
        %v2201 = vsel %vm2058, %v2191, %v2200
        %v2203 = vshrl.u32 %v2055, 16
        %v2205 = vrot.slane %v2203, 2
        %v2206 = vshll.u32 %v2055, 16
        %v2208 = vrot.slane %v2206, 3
        %v2209 = vor.u32 %v2205, %v2208
        %v2210 = vsel %vm2058, %v2200, %v2209
        %v2212 = vshrl.u32 %v2056, 16
        %v2214 = vrot.slane %v2212, 2
        %v2215 = vshll.u32 %v2056, 16
        %v2217 = vrot.slane %v2215, 3
        %v2218 = vor.u32 %v2214, %v2217
        %v2219 = vsel %vm2058, %v2209, %v2218
        %v2221 = vshrl.u32 %v2057, 16
        %v2223 = vrot.slane %v2221, 2
        %v2224 = vshll.u32 %v2057, 16
        %v2226 = vrot.slane %v2224, 3
        %v2227 = vor.u32 %v2223, %v2226
        %v2228 = vsel %vm2058, %v2218, %v2227
        %2247 = vst [vmem:[#allocation2 + $0x38] sm:$0xff] %v2075
        %2248 = vst [vmem:[#allocation2 + $0x80] sm:$0xff] %v2084
        %2249 = vst [vmem:[#allocation2 + $0xc8] sm:$0xff] %v2093
        %2250 = vst [vmem:[#allocation2 + $0x110] sm:$0xff] %v2102
        %2251 = vst [vmem:[#allocation2 + $0x158] sm:$0xff] %v2111
        %2252 = vst [vmem:[#allocation2 + $0x1a0] sm:$0xff] %v2120
        %2253 = vst [vmem:[#allocation2 + $0x1e8] sm:$0xff] %v2129
        %2254 = vst [vmem:[#allocation2 + $0x230] sm:$0xff] %v2138
        %2255 = vst [vmem:[#allocation2 + $0x278] sm:$0xff] %v2147
        %2256 = vst [vmem:[#allocation2 + $0x2c0] sm:$0xff] %v2156
        %2257 = vst [vmem:[#allocation2 + $0x308] sm:$0xff] %v2165
        %2258 = vst [vmem:[#allocation2 + $0x350] sm:$0xff] %v2174
        %2259 = vst [vmem:[#allocation2 + $0x398] sm:$0xff] %v2183
        %2260 = vst [vmem:[#allocation2 + $0x3e0] sm:$0xff] %v2192
        %2261 = vst [vmem:[#allocation2 + $0x428] sm:$0xff] %v2201
        %2262 = vst [vmem:[#allocation2 + $0x470] sm:$0xff] %v2210
        %2263 = vst [vmem:[#allocation2 + $0x4b8] sm:$0xff] %v2219
        %2264 = vst [vmem:[#allocation2 + $0x500] sm:$0xff] %v2228
        %v2265 = vld [vmem:[%s262 + $0x10] sm:$0x8]
        %v2266 = vld [vmem:[%s262 + $0x14] sm:$0xf]
        %v2267 = vld [vmem:[%s262 + $0x18] sm:$0xf]
        %v2268 = vld [vmem:[%s262 + $0x1c] sm:$0xf]
        %v2269 = vld [vmem:[%s262 + $0x20] sm:$0xf]
        %v2270 = vld [vmem:[%s262 + $0x24] sm:$0xf]
        %v2271 = vld [vmem:[%s262 + $0x28] sm:$0xf]
        %v2272 = vld [vmem:[%s262 + $0x2c] sm:$0xf]
        %v2273 = vld [vmem:[%s262 + $0x30] sm:$0xf]
        %v2274 = vld [vmem:[%s262 + $0x34] sm:$0xf]
        %v2275 = vld [vmem:[%s262 + $0x38] sm:$0xf]
        %v2276 = vld [vmem:[%s262 + $0x3c] sm:$0xf]
        %v2277 = vld [vmem:[%s262 + $0x40] sm:$0xf]
        %v2278 = vld [vmem:[%s262 + $0x44] sm:$0xf]
        %v2279 = vld [vmem:[%s262 + $0x48] sm:$0xf]
        %v2280 = vld [vmem:[%s262 + $0x4c] sm:$0xf]
        %v2281 = vld [vmem:[%s262 + $0x50] sm:$0xf]
        %v2282 = vld [vmem:[%s262 + $0x54] sm:$0xf]
        %v2283 = vld [vmem:[%s262 + $0x58] sm:$0xf]
        %v2284 = vld [vmem:[%s262 + $0x5c] sm:$0xf]
        %v2285 = vld [vmem:[%s262 + $0x60] sm:$0xf]
        %v2286 = vld [vmem:[%s262 + $0x64] sm:$0xf]
        %v2287 = vld [vmem:[%s262 + $0x68] sm:$0xf]
        %v2288 = vld [vmem:[%s262 + $0x6c] sm:$0xf]
        %v2289 = vld [vmem:[%s262 + $0x70] sm:$0xf]
        %v2290 = vld [vmem:[%s262 + $0x74] sm:$0xf]
        %v2291 = vld [vmem:[%s262 + $0x78] sm:$0xf]
        %v2292 = vld [vmem:[%s262 + $0x7c] sm:$0xf]
        %v2293 = vld [vmem:[%s262 + $0x80] sm:$0xf]
        %v2294 = vld [vmem:[%s262 + $0x84] sm:$0xf]
        %v2295 = vld [vmem:[%s262 + $0x88] sm:$0xf]
        %v2296 = vld [vmem:[%s262 + $0x8c] sm:$0xf]
        %v2297 = vld [vmem:[%s262 + $0x90] sm:$0xf]
        %v2298 = vld [vmem:[%s262 + $0x94] sm:$0xf]
        %v2299 = vld [vmem:[%s262 + $0x98] sm:$0xf]
        %v2300 = vld [vmem:[%s262 + $0x9c] sm:$0xf]
        %v2301 = vld [vmem:[%s262 + $0xa0] sm:$0x7]
        %v2339 = vunpack.c.l.b16 %v2265
        %v2340 = vunpack.c.l.b16 %v2266
        %v2341 = vunpack.c.l.b16 %v2267
        %v2342 = vunpack.c.l.b16 %v2268
        %v2343 = vunpack.c.l.b16 %v2269
        %v2344 = vunpack.c.l.b16 %v2270
        %v2345 = vunpack.c.l.b16 %v2271
        %v2346 = vunpack.c.l.b16 %v2272
        %v2347 = vunpack.c.l.b16 %v2273
        %v2348 = vunpack.c.l.b16 %v2274
        %v2349 = vunpack.c.l.b16 %v2275
        %v2350 = vunpack.c.l.b16 %v2276
        %v2351 = vunpack.c.l.b16 %v2277
        %v2352 = vunpack.c.l.b16 %v2278
        %v2353 = vunpack.c.l.b16 %v2279
        %v2354 = vunpack.c.l.b16 %v2280
        %v2355 = vunpack.c.l.b16 %v2281
        %v2356 = vunpack.c.l.b16 %v2282
        %v2357 = vunpack.c.l.b16 %v2283
        %v2358 = vunpack.c.l.b16 %v2284
        %v2359 = vunpack.c.l.b16 %v2285
        %v2360 = vunpack.c.l.b16 %v2286
        %v2361 = vunpack.c.l.b16 %v2287
        %v2362 = vunpack.c.l.b16 %v2288
        %v2363 = vunpack.c.l.b16 %v2289
        %v2364 = vunpack.c.l.b16 %v2290
        %v2365 = vunpack.c.l.b16 %v2291
        %v2366 = vunpack.c.l.b16 %v2292
        %v2367 = vunpack.c.l.b16 %v2293
        %v2368 = vunpack.c.l.b16 %v2294
        %v2369 = vunpack.c.l.b16 %v2295
        %v2370 = vunpack.c.l.b16 %v2296
        %v2371 = vunpack.c.l.b16 %v2297
        %v2372 = vunpack.c.l.b16 %v2298
        %v2373 = vunpack.c.l.b16 %v2299
        %v2374 = vunpack.c.l.b16 %v2300
        %v2375 = vunpack.c.l.b16 %v2301
        %v2376 = vpack.c.b16 %v2340, %v2339
        %v2377 = vpack.c.b16 %v2342, %v2341
        %v2378 = vpack.c.b16 %v2344, %v2343
        %v2379 = vpack.c.b16 %v2346, %v2345
        %v2380 = vpack.c.b16 %v2348, %v2347
        %v2381 = vpack.c.b16 %v2350, %v2349
        %v2382 = vpack.c.b16 %v2352, %v2351
        %v2383 = vpack.c.b16 %v2354, %v2353
        %v2384 = vpack.c.b16 %v2356, %v2355
        %v2385 = vpack.c.b16 %v2358, %v2357
        %v2386 = vpack.c.b16 %v2360, %v2359
        %v2387 = vpack.c.b16 %v2362, %v2361
        %v2388 = vpack.c.b16 %v2364, %v2363
        %v2389 = vpack.c.b16 %v2366, %v2365
        %v2390 = vpack.c.b16 %v2368, %v2367
        %v2391 = vpack.c.b16 %v2370, %v2369
        %v2392 = vpack.c.b16 %v2372, %v2371
        %v2393 = vpack.c.b16 %v2374, %v2373
        %v2394 = vpack.c.b16 %v2375, %v2375
        %vm2395 = vcmask 1044480
        %v2396 = vrot.slane %v2376, 3
        %v2397 = vrot.slane %v2377, 3
        %v2398 = vsel %vm2395, %v2396, %v2397
        %v2399 = vrot.slane %v2378, 3
        %v2400 = vsel %vm2395, %v2397, %v2399
        %v2401 = vrot.slane %v2379, 3
        %v2402 = vsel %vm2395, %v2399, %v2401
        %v2403 = vrot.slane %v2380, 3
        %v2404 = vsel %vm2395, %v2401, %v2403
        %v2405 = vrot.slane %v2381, 3
        %v2406 = vsel %vm2395, %v2403, %v2405
        %v2407 = vrot.slane %v2382, 3
        %v2408 = vsel %vm2395, %v2405, %v2407
        %v2409 = vrot.slane %v2383, 3
        %v2410 = vsel %vm2395, %v2407, %v2409
        %v2411 = vrot.slane %v2384, 3
        %v2412 = vsel %vm2395, %v2409, %v2411
        %v2413 = vrot.slane %v2385, 3
        %v2414 = vsel %vm2395, %v2411, %v2413
        %v2415 = vrot.slane %v2386, 3
        %v2416 = vsel %vm2395, %v2413, %v2415
        %v2417 = vrot.slane %v2387, 3
        %v2418 = vsel %vm2395, %v2415, %v2417
        %v2419 = vrot.slane %v2388, 3
        %v2420 = vsel %vm2395, %v2417, %v2419
        %v2421 = vrot.slane %v2389, 3
        %v2422 = vsel %vm2395, %v2419, %v2421
        %v2423 = vrot.slane %v2390, 3
        %v2424 = vsel %vm2395, %v2421, %v2423
        %v2425 = vrot.slane %v2391, 3
        %v2426 = vsel %vm2395, %v2423, %v2425
        %v2427 = vrot.slane %v2392, 3
        %v2428 = vsel %vm2395, %v2425, %v2427
        %v2429 = vrot.slane %v2393, 3
        %v2430 = vsel %vm2395, %v2427, %v2429
        %v2431 = vrot.slane %v2394, 3
        %v2432 = vsel %vm2395, %v2429, %v2431
        %2451 = vst [vmem:[#allocation2 + $0x40] sm:$0xff] %v2398
        %2452 = vst [vmem:[#allocation2 + $0x88] sm:$0xff] %v2400
        %2453 = vst [vmem:[#allocation2 + $0xd0] sm:$0xff] %v2402
        %2454 = vst [vmem:[#allocation2 + $0x118] sm:$0xff] %v2404
        %2455 = vst [vmem:[#allocation2 + $0x160] sm:$0xff] %v2406
        %2456 = vst [vmem:[#allocation2 + $0x1a8] sm:$0xff] %v2408
        %2457 = vst [vmem:[#allocation2 + $0x1f0] sm:$0xff] %v2410
        %2458 = vst [vmem:[#allocation2 + $0x238] sm:$0xff] %v2412
        %2459 = vst [vmem:[#allocation2 + $0x280] sm:$0xff] %v2414
        %2460 = vst [vmem:[#allocation2 + $0x2c8] sm:$0xff] %v2416
        %2461 = vst [vmem:[#allocation2 + $0x310] sm:$0xff] %v2418
        %2462 = vst [vmem:[#allocation2 + $0x358] sm:$0xff] %v2420
        %2463 = vst [vmem:[#allocation2 + $0x3a0] sm:$0xff] %v2422
        %2464 = vst [vmem:[#allocation2 + $0x3e8] sm:$0xff] %v2424
        %2465 = vst [vmem:[#allocation2 + $0x430] sm:$0xff] %v2426
        %2466 = vst [vmem:[#allocation2 + $0x478] sm:$0xff] %v2428
        %2467 = vst [vmem:[#allocation2 + $0x4c0] sm:$0xff] %v2430
        %2468 = vst [vmem:[#allocation2 + $0x508] sm:$0xff] %v2432
        %v2469 = vld [vmem:[#allocation2] sm:$0xff]
        %v2470 = vld [vmem:[#allocation2 + $0x8] sm:$0xff]
        %v2471 = vld [vmem:[#allocation2 + $0x10] sm:$0xff]
        %v2472 = vld [vmem:[#allocation2 + $0x18] sm:$0xff]
        %v2473 = vld [vmem:[#allocation2 + $0x20] sm:$0xff]
        %v2474 = vld [vmem:[#allocation2 + $0x28] sm:$0xff]
        %v2475 = vld [vmem:[#allocation2 + $0x30] sm:$0xff]
        %v2476 = vld [vmem:[#allocation2 + $0x38] sm:$0xff]
        %v2477 = vld [vmem:[#allocation2 + $0x40] sm:$0xff]
        %v2478 = vld [vmem:[#allocation2 + $0x48] sm:$0xff]
        %v2479 = vld [vmem:[#allocation2 + $0x50] sm:$0xff]
        %v2480 = vld [vmem:[#allocation2 + $0x58] sm:$0xff]
        %v2481 = vld [vmem:[#allocation2 + $0x60] sm:$0xff]
        %v2482 = vld [vmem:[#allocation2 + $0x68] sm:$0xff]
        %v2483 = vld [vmem:[#allocation2 + $0x70] sm:$0xff]
        %v2484 = vld [vmem:[#allocation2 + $0x78] sm:$0xff]
        %v2485 = vld [vmem:[#allocation2 + $0x80] sm:$0xff]
        %v2486 = vld [vmem:[#allocation2 + $0x88] sm:$0xff]
        %v2487 = vld [vmem:[#allocation2 + $0x90] sm:$0xff]
        %v2488 = vld [vmem:[#allocation2 + $0x98] sm:$0xff]
        %v2489 = vld [vmem:[#allocation2 + $0xa0] sm:$0xff]
        %v2490 = vld [vmem:[#allocation2 + $0xa8] sm:$0xff]
        %v2491 = vld [vmem:[#allocation2 + $0xb0] sm:$0xff]
        %v2492 = vld [vmem:[#allocation2 + $0xb8] sm:$0xff]
        %v2493 = vld [vmem:[#allocation2 + $0xc0] sm:$0xff]
        %v2494 = vld [vmem:[#allocation2 + $0xc8] sm:$0xff]
        %v2495 = vld [vmem:[#allocation2 + $0xd0] sm:$0xff]
        %v2496 = vld [vmem:[#allocation2 + $0xd8] sm:$0xff]
        %v2497 = vld [vmem:[#allocation2 + $0xe0] sm:$0xff]
        %v2498 = vld [vmem:[#allocation2 + $0xe8] sm:$0xff]
        %v2499 = vld [vmem:[#allocation2 + $0xf0] sm:$0xff]
        %v2500 = vld [vmem:[#allocation2 + $0xf8] sm:$0xff]
        %v2501 = vld [vmem:[#allocation2 + $0x100] sm:$0xff]
        %v2502 = vld [vmem:[#allocation2 + $0x108] sm:$0xff]
        %v2503 = vld [vmem:[#allocation2 + $0x110] sm:$0xff]
        %v2504 = vld [vmem:[#allocation2 + $0x118] sm:$0xff]
        %v2505 = vld [vmem:[#allocation2 + $0x120] sm:$0xff]
        %v2506 = vld [vmem:[#allocation2 + $0x128] sm:$0xff]
        %v2507 = vld [vmem:[#allocation2 + $0x130] sm:$0xff]
        %v2508 = vld [vmem:[#allocation2 + $0x138] sm:$0xff]
        %v2509 = vld [vmem:[#allocation2 + $0x140] sm:$0xff]
        %v2510 = vld [vmem:[#allocation2 + $0x148] sm:$0xff]
        %v2511 = vld [vmem:[#allocation2 + $0x150] sm:$0xff]
        %v2512 = vld [vmem:[#allocation2 + $0x158] sm:$0xff]
        %v2513 = vld [vmem:[#allocation2 + $0x160] sm:$0xff]
        %v2514 = vld [vmem:[#allocation2 + $0x168] sm:$0xff]
        %v2515 = vld [vmem:[#allocation2 + $0x170] sm:$0xff]
        %v2516 = vld [vmem:[#allocation2 + $0x178] sm:$0xff]
        %v2517 = vld [vmem:[#allocation2 + $0x180] sm:$0xff]
        %v2518 = vld [vmem:[#allocation2 + $0x188] sm:$0xff]
        %v2519 = vld [vmem:[#allocation2 + $0x190] sm:$0xff]
        %v2520 = vld [vmem:[#allocation2 + $0x198] sm:$0xff]
        %v2521 = vld [vmem:[#allocation2 + $0x1a0] sm:$0xff]
        %v2522 = vld [vmem:[#allocation2 + $0x1a8] sm:$0xff]
        %v2523 = vld [vmem:[#allocation2 + $0x1b0] sm:$0xff]
        %v2524 = vld [vmem:[#allocation2 + $0x1b8] sm:$0xff]
        %v2525 = vld [vmem:[#allocation2 + $0x1c0] sm:$0xff]
        %v2526 = vld [vmem:[#allocation2 + $0x1c8] sm:$0xff]
        %v2527 = vld [vmem:[#allocation2 + $0x1d0] sm:$0xff]
        %v2528 = vld [vmem:[#allocation2 + $0x1d8] sm:$0xff]
        %v2529 = vld [vmem:[#allocation2 + $0x1e0] sm:$0xff]
        %v2530 = vld [vmem:[#allocation2 + $0x1e8] sm:$0xff]
        %v2531 = vld [vmem:[#allocation2 + $0x1f0] sm:$0xff]
        %v2532 = vld [vmem:[#allocation2 + $0x1f8] sm:$0xff]
        %v2533 = vld [vmem:[#allocation2 + $0x200] sm:$0xff]
        %v2534 = vld [vmem:[#allocation2 + $0x208] sm:$0xff]
        %v2535 = vld [vmem:[#allocation2 + $0x210] sm:$0xff]
        %v2536 = vld [vmem:[#allocation2 + $0x218] sm:$0xff]
        %v2537 = vld [vmem:[#allocation2 + $0x220] sm:$0xff]
        %v2538 = vld [vmem:[#allocation2 + $0x228] sm:$0xff]
        %v2539 = vld [vmem:[#allocation2 + $0x230] sm:$0xff]
        %v2540 = vld [vmem:[#allocation2 + $0x238] sm:$0xff]
        %v2541 = vld [vmem:[#allocation2 + $0x240] sm:$0xff]
        %v2542 = vld [vmem:[#allocation2 + $0x248] sm:$0xff]
        %v2543 = vld [vmem:[#allocation2 + $0x250] sm:$0xff]
        %v2544 = vld [vmem:[#allocation2 + $0x258] sm:$0xff]
        %v2545 = vld [vmem:[#allocation2 + $0x260] sm:$0xff]
        %v2546 = vld [vmem:[#allocation2 + $0x268] sm:$0xff]
        %v2547 = vld [vmem:[#allocation2 + $0x270] sm:$0xff]
        %v2548 = vld [vmem:[#allocation2 + $0x278] sm:$0xff]
        %v2549 = vld [vmem:[#allocation2 + $0x280] sm:$0xff]
        %v2550 = vld [vmem:[#allocation2 + $0x288] sm:$0xff]
        %v2551 = vld [vmem:[#allocation2 + $0x290] sm:$0xff]
        %v2552 = vld [vmem:[#allocation2 + $0x298] sm:$0xff]
        %v2553 = vld [vmem:[#allocation2 + $0x2a0] sm:$0xff]
        %v2554 = vld [vmem:[#allocation2 + $0x2a8] sm:$0xff]
        %v2555 = vld [vmem:[#allocation2 + $0x2b0] sm:$0xff]
        %v2556 = vld [vmem:[#allocation2 + $0x2b8] sm:$0xff]
        %v2557 = vld [vmem:[#allocation2 + $0x2c0] sm:$0xff]
        %v2558 = vld [vmem:[#allocation2 + $0x2c8] sm:$0xff]
        %v2559 = vld [vmem:[#allocation2 + $0x2d0] sm:$0xff]
        %v2560 = vld [vmem:[#allocation2 + $0x2d8] sm:$0xff]
        %v2561 = vld [vmem:[#allocation2 + $0x2e0] sm:$0xff]
        %v2562 = vld [vmem:[#allocation2 + $0x2e8] sm:$0xff]
        %v2563 = vld [vmem:[#allocation2 + $0x2f0] sm:$0xff]
        %v2564 = vld [vmem:[#allocation2 + $0x2f8] sm:$0xff]
        %v2565 = vld [vmem:[#allocation2 + $0x300] sm:$0xff]
        %v2566 = vld [vmem:[#allocation2 + $0x308] sm:$0xff]
        %v2567 = vld [vmem:[#allocation2 + $0x310] sm:$0xff]
        %v2568 = vld [vmem:[#allocation2 + $0x318] sm:$0xff]
        %v2569 = vld [vmem:[#allocation2 + $0x320] sm:$0xff]
        %v2570 = vld [vmem:[#allocation2 + $0x328] sm:$0xff]
        %v2571 = vld [vmem:[#allocation2 + $0x330] sm:$0xff]
        %v2572 = vld [vmem:[#allocation2 + $0x338] sm:$0xff]
        %v2573 = vld [vmem:[#allocation2 + $0x340] sm:$0xff]
        %v2574 = vld [vmem:[#allocation2 + $0x348] sm:$0xff]
        %v2575 = vld [vmem:[#allocation2 + $0x350] sm:$0xff]
        %v2576 = vld [vmem:[#allocation2 + $0x358] sm:$0xff]
        %v2577 = vld [vmem:[#allocation2 + $0x360] sm:$0xff]
        %v2578 = vld [vmem:[#allocation2 + $0x368] sm:$0xff]
        %v2579 = vld [vmem:[#allocation2 + $0x370] sm:$0xff]
        %v2580 = vld [vmem:[#allocation2 + $0x378] sm:$0xff]
        %v2581 = vld [vmem:[#allocation2 + $0x380] sm:$0xff]
        %v2582 = vld [vmem:[#allocation2 + $0x388] sm:$0xff]
        %v2583 = vld [vmem:[#allocation2 + $0x390] sm:$0xff]
        %v2584 = vld [vmem:[#allocation2 + $0x398] sm:$0xff]
        %v2585 = vld [vmem:[#allocation2 + $0x3a0] sm:$0xff]
        %v2586 = vld [vmem:[#allocation2 + $0x3a8] sm:$0xff]
        %v2587 = vld [vmem:[#allocation2 + $0x3b0] sm:$0xff]
        %v2588 = vld [vmem:[#allocation2 + $0x3b8] sm:$0xff]
        %v2589 = vld [vmem:[#allocation2 + $0x3c0] sm:$0xff]
        %v2590 = vld [vmem:[#allocation2 + $0x3c8] sm:$0xff]
        %v2591 = vld [vmem:[#allocation2 + $0x3d0] sm:$0xff]
        %v2592 = vld [vmem:[#allocation2 + $0x3d8] sm:$0xff]
        %v2593 = vld [vmem:[#allocation2 + $0x3e0] sm:$0xff]
        %v2594 = vld [vmem:[#allocation2 + $0x3e8] sm:$0xff]
        %v2595 = vld [vmem:[#allocation2 + $0x3f0] sm:$0xff]
        %v2596 = vld [vmem:[#allocation2 + $0x3f8] sm:$0xff]
        %v2597 = vld [vmem:[#allocation2 + $0x400] sm:$0xff]
        %v2598 = vld [vmem:[#allocation2 + $0x408] sm:$0xff]
        %v2599 = vld [vmem:[#allocation2 + $0x410] sm:$0xff]
        %v2600 = vld [vmem:[#allocation2 + $0x418] sm:$0xff]
        %v2601 = vld [vmem:[#allocation2 + $0x420] sm:$0xff]
        %v2602 = vld [vmem:[#allocation2 + $0x428] sm:$0xff]
        %v2603 = vld [vmem:[#allocation2 + $0x430] sm:$0xff]
        %v2604 = vld [vmem:[#allocation2 + $0x438] sm:$0xff]
        %v2605 = vld [vmem:[#allocation2 + $0x440] sm:$0xff]
        %v2606 = vld [vmem:[#allocation2 + $0x448] sm:$0xff]
        %v2607 = vld [vmem:[#allocation2 + $0x450] sm:$0xff]
        %v2608 = vld [vmem:[#allocation2 + $0x458] sm:$0xff]
        %v2609 = vld [vmem:[#allocation2 + $0x460] sm:$0xff]
        %v2610 = vld [vmem:[#allocation2 + $0x468] sm:$0xff]
        %v2611 = vld [vmem:[#allocation2 + $0x470] sm:$0xff]
        %v2612 = vld [vmem:[#allocation2 + $0x478] sm:$0xff]
        %v2613 = vld [vmem:[#allocation2 + $0x480] sm:$0xff]
        %v2614 = vld [vmem:[#allocation2 + $0x488] sm:$0xff]
        %v2615 = vld [vmem:[#allocation2 + $0x490] sm:$0xff]
        %v2616 = vld [vmem:[#allocation2 + $0x498] sm:$0xff]
        %v2617 = vld [vmem:[#allocation2 + $0x4a0] sm:$0xff]
        %v2618 = vld [vmem:[#allocation2 + $0x4a8] sm:$0xff]
        %v2619 = vld [vmem:[#allocation2 + $0x4b0] sm:$0xff]
        %v2620 = vld [vmem:[#allocation2 + $0x4b8] sm:$0xff]
        %v2621 = vld [vmem:[#allocation2 + $0x4c0] sm:$0xff]
        %v2622 = vld [vmem:[#allocation2 + $0x4c8] sm:$0xff]
        %v2623 = vld [vmem:[#allocation2 + $0x4d0] sm:$0xff]
        %v2624 = vld [vmem:[#allocation2 + $0x4d8] sm:$0xff]
        %v2625 = vld [vmem:[#allocation2 + $0x4e0] sm:$0xff]
        %v2626 = vld [vmem:[#allocation2 + $0x4e8] sm:$0xff]
        %v2627 = vld [vmem:[#allocation2 + $0x4f0] sm:$0xff]
        %v2628 = vld [vmem:[#allocation2 + $0x4f8] sm:$0xff]
        %v2629 = vld [vmem:[#allocation2 + $0x500] sm:$0xff]
        %v2630 = vld [vmem:[#allocation2 + $0x508] sm:$0xff]
        %v2631 = vld [vmem:[#allocation7] sm:$0xf]
        %v2632 = vld [vmem:[#allocation7 + $0x4] sm:$0xf]
        %v2633 = vld [vmem:[#allocation7 + $0x8] sm:$0xf]
        %v2634 = vld [vmem:[#allocation7 + $0xc] sm:$0xf]
        %v2635 = vld [vmem:[#allocation7 + $0x10] sm:$0xf]
        %v2636 = vld [vmem:[#allocation7 + $0x14] sm:$0xf]
        %v2637 = vld [vmem:[#allocation7 + $0x18] sm:$0xf]
        %v2638 = vld [vmem:[#allocation7 + $0x1c] sm:$0xf]
        %v2639 = vld [vmem:[#allocation7 + $0x20] sm:$0xf]
        %v2640 = vld [vmem:[#allocation7 + $0x24] sm:$0xf]
        %v2641 = vld [vmem:[#allocation7 + $0x28] sm:$0xf]
        %v2642 = vld [vmem:[#allocation7 + $0x2c] sm:$0xf]
        %v2643 = vld [vmem:[#allocation7 + $0x30] sm:$0xf]
        %v2644 = vld [vmem:[#allocation7 + $0x34] sm:$0xf]
        %v2645 = vld [vmem:[#allocation7 + $0x38] sm:$0xf]
        %v2646 = vld [vmem:[#allocation7 + $0x3c] sm:$0xf]
        %v2647 = vld [vmem:[#allocation7 + $0x40] sm:$0xf]
        %v2648 = vld [vmem:[#allocation7 + $0x44] sm:$0xf]
        %v2649 = vld [vmem:[#allocation7 + $0x48] sm:$0xf]
        %v2650 = vld [vmem:[#allocation7 + $0x4c] sm:$0xf]
        %v2651 = vld [vmem:[#allocation7 + $0x50] sm:$0xf]
        %v2652 = vld [vmem:[#allocation7 + $0x54] sm:$0xf]
        %v2653 = vld [vmem:[#allocation7 + $0x58] sm:$0xf]
        %v2654 = vld [vmem:[#allocation7 + $0x5c] sm:$0xf]
        %v2655 = vld [vmem:[#allocation7 + $0x60] sm:$0xf]
        %v2656 = vld [vmem:[#allocation7 + $0x64] sm:$0xf]
        %v2657 = vld [vmem:[#allocation7 + $0x68] sm:$0xf]
        %v2658 = vld [vmem:[#allocation7 + $0x6c] sm:$0xf]
        %v2659 = vld [vmem:[#allocation7 + $0x70] sm:$0xf]
        %v2660 = vld [vmem:[#allocation7 + $0x74] sm:$0xf]
        %v2661 = vld [vmem:[#allocation7 + $0x78] sm:$0xf]
        %v2662 = vld [vmem:[#allocation7 + $0x7c] sm:$0xf]
        %v2663 = vld [vmem:[#allocation7 + $0x80] sm:$0xf]
        %v2664 = vld [vmem:[#allocation7 + $0x84] sm:$0xf]
        %v2665 = vld [vmem:[#allocation7 + $0x88] sm:$0xf]
        %v2666 = vld [vmem:[#allocation7 + $0x8c] sm:$0xf]
        %v2667 = vld [vmem:[#allocation7 + $0x90] sm:$0xf]
        %v2668 = vld [vmem:[#allocation7 + $0x94] sm:$0xf]
        %v2669 = vld [vmem:[#allocation7 + $0x98] sm:$0xf]
        %v2670 = vld [vmem:[#allocation7 + $0x9c] sm:$0xf]
        %v2671 = vld [vmem:[#allocation7 + $0xa0] sm:$0xf]
        %v2672 = vld [vmem:[#allocation7 + $0xa4] sm:$0xf]
        %v2673 = vld [vmem:[#allocation7 + $0xa8] sm:$0xf]
        %v2674 = vld [vmem:[#allocation7 + $0xac] sm:$0xf]
        %v2675 = vld [vmem:[#allocation7 + $0xb0] sm:$0xf]
        %v2676 = vld [vmem:[#allocation7 + $0xb4] sm:$0xf]
        %v2677 = vld [vmem:[#allocation7 + $0xb8] sm:$0xf]
        %v2678 = vld [vmem:[#allocation7 + $0xbc] sm:$0xf]
        %v2679 = vld [vmem:[#allocation7 + $0xc0] sm:$0xf]
        %v2680 = vld [vmem:[#allocation7 + $0xc4] sm:$0xf]
        %v2681 = vld [vmem:[#allocation7 + $0xc8] sm:$0xf]
        %v2682 = vld [vmem:[#allocation7 + $0xcc] sm:$0xf]
        %v2683 = vld [vmem:[#allocation7 + $0xd0] sm:$0xf]
        %v2684 = vld [vmem:[#allocation7 + $0xd4] sm:$0xf]
        %v2685 = vld [vmem:[#allocation7 + $0xd8] sm:$0xf]
        %v2686 = vld [vmem:[#allocation7 + $0xdc] sm:$0xf]
        %v2687 = vld [vmem:[#allocation7 + $0xe0] sm:$0xf]
        %v2688 = vld [vmem:[#allocation7 + $0xe4] sm:$0xf]
        %v2689 = vld [vmem:[#allocation7 + $0xe8] sm:$0xf]
        %v2690 = vld [vmem:[#allocation7 + $0xec] sm:$0xf]
        %v2691 = vld [vmem:[#allocation7 + $0xf0] sm:$0xf]
        %v2692 = vld [vmem:[#allocation7 + $0xf4] sm:$0xf]
        %v2693 = vld [vmem:[#allocation7 + $0xf8] sm:$0xf]
        %v2694 = vld [vmem:[#allocation7 + $0xfc] sm:$0xf]
        %v2695 = vld [vmem:[#allocation7 + $0x100] sm:$0xf]
        %v2696 = vld [vmem:[#allocation7 + $0x104] sm:$0xf]
        %v2697 = vld [vmem:[#allocation7 + $0x108] sm:$0xf]
        %v2698 = vld [vmem:[#allocation7 + $0x10c] sm:$0xf]
        %v2699 = vld [vmem:[#allocation7 + $0x110] sm:$0xf]
        %v2700 = vld [vmem:[#allocation7 + $0x114] sm:$0xf]
        %v2701 = vld [vmem:[#allocation7 + $0x118] sm:$0xf]
        %v2702 = vld [vmem:[#allocation7 + $0x11c] sm:$0xf]
        %v2703 = vld [vmem:[#allocation7 + $0x120] sm:$0xf]
        %v2704 = vld [vmem:[#allocation7 + $0x124] sm:$0xf]
        %v2705 = vld [vmem:[#allocation7 + $0x128] sm:$0xf]
        %v2706 = vld [vmem:[#allocation7 + $0x12c] sm:$0xf]
        %v2707 = vld [vmem:[#allocation7 + $0x130] sm:$0xf]
        %v2708 = vld [vmem:[#allocation7 + $0x134] sm:$0xf]
        %v2709 = vld [vmem:[#allocation7 + $0x138] sm:$0xf]
        %v2710 = vld [vmem:[#allocation7 + $0x13c] sm:$0xf]
        %v2711 = vld [vmem:[#allocation7 + $0x140] sm:$0xf]
        %v2712 = vld [vmem:[#allocation7 + $0x144] sm:$0xf]
        %v2713 = vld [vmem:[#allocation7 + $0x148] sm:$0xf]
        %v2714 = vld [vmem:[#allocation7 + $0x14c] sm:$0xf]
        %v2715 = vld [vmem:[#allocation7 + $0x150] sm:$0xf]
        %v2716 = vld [vmem:[#allocation7 + $0x154] sm:$0xf]
        %v2717 = vld [vmem:[#allocation7 + $0x158] sm:$0xf]
        %v2718 = vld [vmem:[#allocation7 + $0x15c] sm:$0xf]
        %v2719 = vld [vmem:[#allocation7 + $0x160] sm:$0xf]
        %v2720 = vld [vmem:[#allocation7 + $0x164] sm:$0xf]
        %v2721 = vld [vmem:[#allocation7 + $0x168] sm:$0xf]
        %v2722 = vld [vmem:[#allocation7 + $0x16c] sm:$0xf]
        %v2723 = vld [vmem:[#allocation7 + $0x170] sm:$0xf]
        %v2724 = vld [vmem:[#allocation7 + $0x174] sm:$0xf]
        %v2725 = vld [vmem:[#allocation7 + $0x178] sm:$0xf]
        %v2726 = vld [vmem:[#allocation7 + $0x17c] sm:$0xf]
        %v2727 = vld [vmem:[#allocation7 + $0x180] sm:$0xf]
        %v2728 = vld [vmem:[#allocation7 + $0x184] sm:$0xf]
        %v2729 = vld [vmem:[#allocation7 + $0x188] sm:$0xf]
        %v2730 = vld [vmem:[#allocation7 + $0x18c] sm:$0xf]
        %v2731 = vld [vmem:[#allocation7 + $0x190] sm:$0xf]
        %v2732 = vld [vmem:[#allocation7 + $0x194] sm:$0xf]
        %v2733 = vld [vmem:[#allocation7 + $0x198] sm:$0xf]
        %v2734 = vld [vmem:[#allocation7 + $0x19c] sm:$0xf]
        %v2735 = vld [vmem:[#allocation7 + $0x1a0] sm:$0xf]
        %v2736 = vld [vmem:[#allocation7 + $0x1a4] sm:$0xf]
        %v2737 = vld [vmem:[#allocation7 + $0x1a8] sm:$0xf]
        %v2738 = vld [vmem:[#allocation7 + $0x1ac] sm:$0xf]
        %v2739 = vld [vmem:[#allocation7 + $0x1b0] sm:$0xf]
        %v2740 = vld [vmem:[#allocation7 + $0x1b4] sm:$0xf]
        %v2741 = vld [vmem:[#allocation7 + $0x1b8] sm:$0xf]
        %v2742 = vld [vmem:[#allocation7 + $0x1bc] sm:$0xf]
        %v2743 = vld [vmem:[#allocation7 + $0x1c0] sm:$0xf]
        %v2744 = vld [vmem:[#allocation7 + $0x1c4] sm:$0xf]
        %v2745 = vld [vmem:[#allocation7 + $0x1c8] sm:$0xf]
        %v2746 = vld [vmem:[#allocation7 + $0x1cc] sm:$0xf]
        %v2747 = vld [vmem:[#allocation7 + $0x1d0] sm:$0xf]
        %v2748 = vld [vmem:[#allocation7 + $0x1d4] sm:$0xf]
        %v2749 = vld [vmem:[#allocation7 + $0x1d8] sm:$0xf]
        %v2750 = vld [vmem:[#allocation7 + $0x1dc] sm:$0xf]
        %v2751 = vld [vmem:[#allocation7 + $0x1e0] sm:$0xf]
        %v2752 = vld [vmem:[#allocation7 + $0x1e4] sm:$0xf]
        %v2753 = vld [vmem:[#allocation7 + $0x1e8] sm:$0xf]
        %v2754 = vld [vmem:[#allocation7 + $0x1ec] sm:$0xf]
        %v2755 = vld [vmem:[#allocation7 + $0x1f0] sm:$0xf]
        %v2756 = vld [vmem:[#allocation7 + $0x1f4] sm:$0xf]
        %v2757 = vld [vmem:[#allocation7 + $0x1f8] sm:$0xf]
        %v2758 = vld [vmem:[#allocation7 + $0x1fc] sm:$0xf]
        %v2759 = vld [vmem:[#allocation7 + $0x200] sm:$0xf]
        %v2760 = vld [vmem:[#allocation7 + $0x204] sm:$0xf]
        %v2761 = vld [vmem:[#allocation7 + $0x208] sm:$0xf]
        %v2762 = vld [vmem:[#allocation7 + $0x20c] sm:$0xf]
        %v2763 = vld [vmem:[#allocation7 + $0x210] sm:$0xf]
        %v2764 = vld [vmem:[#allocation7 + $0x214] sm:$0xf]
        %v2765 = vld [vmem:[#allocation7 + $0x218] sm:$0xf]
        %v2766 = vld [vmem:[#allocation7 + $0x21c] sm:$0xf]
        %v2767 = vld [vmem:[#allocation7 + $0x220] sm:$0xf]
        %v2768 = vld [vmem:[#allocation7 + $0x224] sm:$0xf]
        %v2769 = vld [vmem:[#allocation7 + $0x228] sm:$0xf]
        %v2770 = vld [vmem:[#allocation7 + $0x22c] sm:$0xf]
        %v2771 = vld [vmem:[#allocation7 + $0x230] sm:$0xf]
        %v2772 = vld [vmem:[#allocation7 + $0x234] sm:$0xf]
        %v2773 = vld [vmem:[#allocation7 + $0x238] sm:$0xf]
        %v2774 = vld [vmem:[#allocation7 + $0x23c] sm:$0xf]
        %v2775 = vld [vmem:[%s3] sm:$0x1]
        %v2777 = vlaneseq
        %v2778 = vshrl.u32 %v2777, 7
        %v2779 = vsub.s32 0, %v2778
        %v2780 = vrot.slane %v2775, %v2779
        %v2926 = vunpack.c.l.b16 %v2631
        %v2927 = vunpack.c.l.b16 %v2632
        %v2928 = vunpack.c.l.b16 %v2633
        %v2929 = vunpack.c.l.b16 %v2634
        %v2930 = vunpack.c.l.b16 %v2635
        %v2931 = vunpack.c.l.b16 %v2636
        %v2932 = vunpack.c.l.b16 %v2637
        %v2933 = vunpack.c.l.b16 %v2638
        %v2934 = vunpack.c.l.b16 %v2639
        %v2935 = vunpack.c.l.b16 %v2640
        %v2936 = vunpack.c.l.b16 %v2641
        %v2937 = vunpack.c.l.b16 %v2642
        %v2938 = vunpack.c.l.b16 %v2643
        %v2939 = vunpack.c.l.b16 %v2644
        %v2940 = vunpack.c.l.b16 %v2645
        %v2941 = vunpack.c.l.b16 %v2646
        %v2942 = vunpack.c.l.b16 %v2647
        %v2943 = vunpack.c.l.b16 %v2648
        %v2944 = vunpack.c.l.b16 %v2649
        %v2945 = vunpack.c.l.b16 %v2650
        %v2946 = vunpack.c.l.b16 %v2651
        %v2947 = vunpack.c.l.b16 %v2652
        %v2948 = vunpack.c.l.b16 %v2653
        %v2949 = vunpack.c.l.b16 %v2654
        %v2950 = vunpack.c.l.b16 %v2655
        %v2951 = vunpack.c.l.b16 %v2656
        %v2952 = vunpack.c.l.b16 %v2657
        %v2953 = vunpack.c.l.b16 %v2658
        %v2954 = vunpack.c.l.b16 %v2659
        %v2955 = vunpack.c.l.b16 %v2660
        %v2956 = vunpack.c.l.b16 %v2661
        %v2957 = vunpack.c.l.b16 %v2662
        %v2958 = vunpack.c.l.b16 %v2663
        %v2959 = vunpack.c.l.b16 %v2664
        %v2960 = vunpack.c.l.b16 %v2665
        %v2961 = vunpack.c.l.b16 %v2666
        %v2962 = vunpack.c.l.b16 %v2667
        %v2963 = vunpack.c.l.b16 %v2668
        %v2964 = vunpack.c.l.b16 %v2669
        %v2965 = vunpack.c.l.b16 %v2670
        %v2966 = vunpack.c.l.b16 %v2671
        %v2967 = vunpack.c.l.b16 %v2672
        %v2968 = vunpack.c.l.b16 %v2673
        %v2969 = vunpack.c.l.b16 %v2674
        %v2970 = vunpack.c.l.b16 %v2675
        %v2971 = vunpack.c.l.b16 %v2676
        %v2972 = vunpack.c.l.b16 %v2677
        %v2973 = vunpack.c.l.b16 %v2678
        %v2974 = vunpack.c.l.b16 %v2679
        %v2975 = vunpack.c.l.b16 %v2680
        %v2976 = vunpack.c.l.b16 %v2681
        %v2977 = vunpack.c.l.b16 %v2682
        %v2978 = vunpack.c.l.b16 %v2683
        %v2979 = vunpack.c.l.b16 %v2684
        %v2980 = vunpack.c.l.b16 %v2685
        %v2981 = vunpack.c.l.b16 %v2686
        %v2982 = vunpack.c.l.b16 %v2687
        %v2983 = vunpack.c.l.b16 %v2688
        %v2984 = vunpack.c.l.b16 %v2689
        %v2985 = vunpack.c.l.b16 %v2690
        %v2986 = vunpack.c.l.b16 %v2691
        %v2987 = vunpack.c.l.b16 %v2692
        %v2988 = vunpack.c.l.b16 %v2693
        %v2989 = vunpack.c.l.b16 %v2694
        %v2990 = vunpack.c.l.b16 %v2695
        %v2991 = vunpack.c.l.b16 %v2696
        %v2992 = vunpack.c.l.b16 %v2697
        %v2993 = vunpack.c.l.b16 %v2698
        %v2994 = vunpack.c.l.b16 %v2699
        %v2995 = vunpack.c.l.b16 %v2700
        %v2996 = vunpack.c.l.b16 %v2701
        %v2997 = vunpack.c.l.b16 %v2702
        %v2998 = vunpack.c.l.b16 %v2703
        %v2999 = vunpack.c.l.b16 %v2704
        %v3000 = vunpack.c.l.b16 %v2705
        %v3001 = vunpack.c.l.b16 %v2706
        %v3002 = vunpack.c.l.b16 %v2707
        %v3003 = vunpack.c.l.b16 %v2708
        %v3004 = vunpack.c.l.b16 %v2709
        %v3005 = vunpack.c.l.b16 %v2710
        %v3006 = vunpack.c.l.b16 %v2711
        %v3007 = vunpack.c.l.b16 %v2712
        %v3008 = vunpack.c.l.b16 %v2713
        %v3009 = vunpack.c.l.b16 %v2714
        %v3010 = vunpack.c.l.b16 %v2715
        %v3011 = vunpack.c.l.b16 %v2716
        %v3012 = vunpack.c.l.b16 %v2717
        %v3013 = vunpack.c.l.b16 %v2718
        %v3014 = vunpack.c.l.b16 %v2719
        %v3015 = vunpack.c.l.b16 %v2720
        %v3016 = vunpack.c.l.b16 %v2721
        %v3017 = vunpack.c.l.b16 %v2722
        %v3018 = vunpack.c.l.b16 %v2723
        %v3019 = vunpack.c.l.b16 %v2724
        %v3020 = vunpack.c.l.b16 %v2725
        %v3021 = vunpack.c.l.b16 %v2726
        %v3022 = vunpack.c.l.b16 %v2727
        %v3023 = vunpack.c.l.b16 %v2728
        %v3024 = vunpack.c.l.b16 %v2729
        %v3025 = vunpack.c.l.b16 %v2730
        %v3026 = vunpack.c.l.b16 %v2731
        %v3027 = vunpack.c.l.b16 %v2732
        %v3028 = vunpack.c.l.b16 %v2733
        %v3029 = vunpack.c.l.b16 %v2734
        %v3030 = vunpack.c.l.b16 %v2735
        %v3031 = vunpack.c.l.b16 %v2736
        %v3032 = vunpack.c.l.b16 %v2737
        %v3033 = vunpack.c.l.b16 %v2738
        %v3034 = vunpack.c.l.b16 %v2739
        %v3035 = vunpack.c.l.b16 %v2740
        %v3036 = vunpack.c.l.b16 %v2741
        %v3037 = vunpack.c.l.b16 %v2742
        %v3038 = vunpack.c.l.b16 %v2743
        %v3039 = vunpack.c.l.b16 %v2744
        %v3040 = vunpack.c.l.b16 %v2745
        %v3041 = vunpack.c.l.b16 %v2746
        %v3042 = vunpack.c.l.b16 %v2747
        %v3043 = vunpack.c.l.b16 %v2748
        %v3044 = vunpack.c.l.b16 %v2749
        %v3045 = vunpack.c.l.b16 %v2750
        %v3046 = vunpack.c.l.b16 %v2751
        %v3047 = vunpack.c.l.b16 %v2752
        %v3048 = vunpack.c.l.b16 %v2753
        %v3049 = vunpack.c.l.b16 %v2754
        %v3050 = vunpack.c.l.b16 %v2755
        %v3051 = vunpack.c.l.b16 %v2756
        %v3052 = vunpack.c.l.b16 %v2757
        %v3053 = vunpack.c.l.b16 %v2758
        %v3054 = vunpack.c.l.b16 %v2759
        %v3055 = vunpack.c.l.b16 %v2760
        %v3056 = vunpack.c.l.b16 %v2761
        %v3057 = vunpack.c.l.b16 %v2762
        %v3058 = vunpack.c.l.b16 %v2763
        %v3059 = vunpack.c.l.b16 %v2764
        %v3060 = vunpack.c.l.b16 %v2765
        %v3061 = vunpack.c.l.b16 %v2766
        %v3062 = vunpack.c.l.b16 %v2767
        %v3063 = vunpack.c.l.b16 %v2768
        %v3064 = vunpack.c.l.b16 %v2769
        %v3065 = vunpack.c.l.b16 %v2770
        %v3066 = vunpack.c.l.b16 %v2771
        %v3067 = vunpack.c.l.b16 %v2772
        %v3068 = vunpack.c.l.b16 %v2773
        %v3069 = vunpack.c.l.b16 %v2774
        %v3070 = vpack.c.b16 %v2927, %v2926
        %v3071 = vpack.c.b16 %v2929, %v2928
        %v3072 = vpack.c.b16 %v2931, %v2930
        %v3073 = vpack.c.b16 %v2933, %v2932
        %v3074 = vpack.c.b16 %v2935, %v2934
        %v3075 = vpack.c.b16 %v2937, %v2936
        %v3076 = vpack.c.b16 %v2939, %v2938
        %v3077 = vpack.c.b16 %v2941, %v2940
        %v3078 = vpack.c.b16 %v2943, %v2942
        %v3079 = vpack.c.b16 %v2945, %v2944
        %v3080 = vpack.c.b16 %v2947, %v2946
        %v3081 = vpack.c.b16 %v2949, %v2948
        %v3082 = vpack.c.b16 %v2951, %v2950
        %v3083 = vpack.c.b16 %v2953, %v2952
        %v3084 = vpack.c.b16 %v2955, %v2954
        %v3085 = vpack.c.b16 %v2957, %v2956
        %v3086 = vpack.c.b16 %v2959, %v2958
        %v3087 = vpack.c.b16 %v2961, %v2960
        %v3088 = vpack.c.b16 %v2963, %v2962
        %v3089 = vpack.c.b16 %v2965, %v2964
        %v3090 = vpack.c.b16 %v2967, %v2966
        %v3091 = vpack.c.b16 %v2969, %v2968
        %v3092 = vpack.c.b16 %v2971, %v2970
        %v3093 = vpack.c.b16 %v2973, %v2972
        %v3094 = vpack.c.b16 %v2975, %v2974
        %v3095 = vpack.c.b16 %v2977, %v2976
        %v3096 = vpack.c.b16 %v2979, %v2978
        %v3097 = vpack.c.b16 %v2981, %v2980
        %v3098 = vpack.c.b16 %v2983, %v2982
        %v3099 = vpack.c.b16 %v2985, %v2984
        %v3100 = vpack.c.b16 %v2987, %v2986
        %v3101 = vpack.c.b16 %v2989, %v2988
        %v3102 = vpack.c.b16 %v2991, %v2990
        %v3103 = vpack.c.b16 %v2993, %v2992
        %v3104 = vpack.c.b16 %v2995, %v2994
        %v3105 = vpack.c.b16 %v2997, %v2996
        %v3106 = vpack.c.b16 %v2999, %v2998
        %v3107 = vpack.c.b16 %v3001, %v3000
        %v3108 = vpack.c.b16 %v3003, %v3002
        %v3109 = vpack.c.b16 %v3005, %v3004
        %v3110 = vpack.c.b16 %v3007, %v3006
        %v3111 = vpack.c.b16 %v3009, %v3008
        %v3112 = vpack.c.b16 %v3011, %v3010
        %v3113 = vpack.c.b16 %v3013, %v3012
        %v3114 = vpack.c.b16 %v3015, %v3014
        %v3115 = vpack.c.b16 %v3017, %v3016
        %v3116 = vpack.c.b16 %v3019, %v3018
        %v3117 = vpack.c.b16 %v3021, %v3020
        %v3118 = vpack.c.b16 %v3023, %v3022
        %v3119 = vpack.c.b16 %v3025, %v3024
        %v3120 = vpack.c.b16 %v3027, %v3026
        %v3121 = vpack.c.b16 %v3029, %v3028
        %v3122 = vpack.c.b16 %v3031, %v3030
        %v3123 = vpack.c.b16 %v3033, %v3032
        %v3124 = vpack.c.b16 %v3035, %v3034
        %v3125 = vpack.c.b16 %v3037, %v3036
        %v3126 = vpack.c.b16 %v3039, %v3038
        %v3127 = vpack.c.b16 %v3041, %v3040
        %v3128 = vpack.c.b16 %v3043, %v3042
        %v3129 = vpack.c.b16 %v3045, %v3044
        %v3130 = vpack.c.b16 %v3047, %v3046
        %v3131 = vpack.c.b16 %v3049, %v3048
        %v3132 = vpack.c.b16 %v3051, %v3050
        %v3133 = vpack.c.b16 %v3053, %v3052
        %v3134 = vpack.c.b16 %v3055, %v3054
        %v3135 = vpack.c.b16 %v3057, %v3056
        %v3136 = vpack.c.b16 %v3059, %v3058
        %v3137 = vpack.c.b16 %v3061, %v3060
        %v3138 = vpack.c.b16 %v3063, %v3062
        %v3139 = vpack.c.b16 %v3065, %v3064
        %v3140 = vpack.c.b16 %v3067, %v3066
        %v3141 = vpack.c.b16 %v3069, %v3068
        %3214 = vmatprep.subr.bf16.mxu0 0
        %3215 = vmatpush1.bf16.msra.mxu0 %v3070
        %3216 = vmatprep.subr.bf16.mxu0 0
        %3217 = vmatpush1.bf16.msra.mxu0 %v3071
        %3218 = vmatprep.subr.bf16.mxu0 0
        %3219 = vmatpush1.bf16.msra.mxu0 %v3072
        %3220 = vmatprep.subr.bf16.mxu0 0
        %3221 = vmatpush1.bf16.msra.mxu0 %v3073
        %3222 = vmatprep.subr.bf16.mxu0 0
        %3223 = vmatpush1.bf16.msra.mxu0 %v3074
        %3224 = vmatprep.subr.bf16.mxu0 0
        %3225 = vmatpush1.bf16.msra.mxu0 %v3075
        %3226 = vmatprep.subr.bf16.mxu0 0
        %3227 = vmatpush1.bf16.msra.mxu0 %v3076
        %3228 = vmatprep.subr.bf16.mxu0 0
        %3229 = vmatpush1.bf16.msra.mxu0 %v3077
        %3230 = vmatprep.subr.bf16.mxu0 0
        %3231 = vmatpush1.bf16.msra.mxu0 %v3078
        %3232 = vmatprep.subr.bf16.mxu0 0
        %3233 = vmatpush1.bf16.msra.mxu0 %v3079
        %3234 = vmatprep.subr.bf16.mxu0 0
        %3235 = vmatpush1.bf16.msra.mxu0 %v3080
        %3236 = vmatprep.subr.bf16.mxu0 0
        %3237 = vmatpush1.bf16.msra.mxu0 %v3081
        %3238 = vmatprep.subr.bf16.mxu0 0
        %3239 = vmatpush1.bf16.msra.mxu0 %v3082
        %3240 = vmatprep.subr.bf16.mxu0 0
        %3241 = vmatpush1.bf16.msra.mxu0 %v3083
        %3242 = vmatprep.subr.bf16.mxu0 0
        %3243 = vmatpush1.bf16.msra.mxu0 %v3084
        %3244 = vmatprep.subr.bf16.mxu0 0
        %3245 = vmatpush1.bf16.msra.mxu0 %v3085
        %3246 = vmatprep.mubr.bf16.mxu0 %v2470
        %3247 = vmatmul.mubr.bf16.gmra.mrb[0].mxu0 %v2469
        %v3248 = vpop.f32.mrb[0].mxu0
        %v3249 = vadd.f32 %v2780, %v3248
        %v3250 = vpop.f32.mrb[0].mxu0
        %v3251 = vpop.f32.mrb[0].mxu0
        %v3252 = vadd.f32 %v2780, %v3251
        %v3253 = vpop.f32.mrb[0].mxu0
        %3254 = vmatprep.mubr.bf16.mxu0 %v2479
        %3255 = vmatmul.mubr.bf16.gmra.mrb[0].mxu0 %v2478
        %v3256 = vpop.f32.mrb[0].mxu0
        %v3257 = vadd.f32 %v2780, %v3256
        %v3258 = vpop.f32.mrb[0].mxu0
        %v3259 = vpop.f32.mrb[0].mxu0
        %v3260 = vadd.f32 %v2780, %v3259
        %v3261 = vpop.f32.mrb[0].mxu0
        %3262 = vmatprep.mubr.bf16.mxu0 %v2488
        %3263 = vmatmul.mubr.bf16.gmra.mrb[0].mxu0 %v2487
        %v3264 = vpop.f32.mrb[0].mxu0
        %v3265 = vadd.f32 %v2780, %v3264
        %v3266 = vpop.f32.mrb[0].mxu0
        %v3267 = vpop.f32.mrb[0].mxu0
        %v3268 = vadd.f32 %v2780, %v3267
        %v3269 = vpop.f32.mrb[0].mxu0
        %3270 = vmatprep.mubr.bf16.mxu0 %v2497
        %3271 = vmatmul.mubr.bf16.gmra.mrb[0].mxu0 %v2496
        %v3272 = vpop.f32.mrb[0].mxu0
        %v3273 = vadd.f32 %v2780, %v3272
        %v3274 = vpop.f32.mrb[0].mxu0
        %v3275 = vpop.f32.mrb[0].mxu0
        %v3276 = vadd.f32 %v2780, %v3275
        %v3277 = vpop.f32.mrb[0].mxu0
        %3278 = vmatprep.mubr.bf16.mxu0 %v2506
        %3279 = vmatmul.mubr.bf16.gmra.mrb[0].mxu0 %v2505
        %v3280 = vpop.f32.mrb[0].mxu0
        %v3281 = vadd.f32 %v2780, %v3280
        %v3282 = vpop.f32.mrb[0].mxu0
        %v3283 = vpop.f32.mrb[0].mxu0
        %v3284 = vadd.f32 %v2780, %v3283
        %v3285 = vpop.f32.mrb[0].mxu0
        %3286 = vmatprep.mubr.bf16.mxu0 %v2515
        %3287 = vmatmul.mubr.bf16.gmra.mrb[0].mxu0 %v2514
        %v3288 = vpop.f32.mrb[0].mxu0
        %v3289 = vadd.f32 %v2780, %v3288
        %v3290 = vpop.f32.mrb[0].mxu0
        %v3291 = vpop.f32.mrb[0].mxu0
        %v3292 = vadd.f32 %v2780, %v3291
        %v3293 = vpop.f32.mrb[0].mxu0
        %3294 = vmatprep.mubr.bf16.mxu0 %v2524
        %3295 = vmatmul.mubr.bf16.gmra.mrb[0].mxu0 %v2523
        %v3296 = vpop.f32.mrb[0].mxu0
        %v3297 = vadd.f32 %v2780, %v3296
        %v3298 = vpop.f32.mrb[0].mxu0
        %v3299 = vpop.f32.mrb[0].mxu0
        %v3300 = vadd.f32 %v2780, %v3299
        %v3301 = vpop.f32.mrb[0].mxu0
        %3302 = vmatprep.mubr.bf16.mxu0 %v2533
        %3303 = vmatmul.mubr.bf16.gmra.mrb[0].mxu0 %v2532
        %v3304 = vpop.f32.mrb[0].mxu0
        %v3305 = vadd.f32 %v2780, %v3304
        %v3306 = vpop.f32.mrb[0].mxu0
        %v3307 = vpop.f32.mrb[0].mxu0
        %v3308 = vadd.f32 %v2780, %v3307
        %v3309 = vpop.f32.mrb[0].mxu0
        %3310 = vmatprep.mubr.bf16.mxu0 %v2542
        %3311 = vmatmul.mubr.bf16.gmra.mrb[0].mxu0 %v2541
        %v3312 = vpop.f32.mrb[0].mxu0
        %v3313 = vadd.f32 %v2780, %v3312
        %v3314 = vpop.f32.mrb[0].mxu0
        %v3315 = vpop.f32.mrb[0].mxu0
        %v3316 = vadd.f32 %v2780, %v3315
        %v3317 = vpop.f32.mrb[0].mxu0
        %3318 = vmatprep.mubr.bf16.mxu0 %v2551
        %3319 = vmatmul.mubr.bf16.gmra.mrb[0].mxu0 %v2550
        %v3320 = vpop.f32.mrb[0].mxu0
        %v3321 = vadd.f32 %v2780, %v3320
        %v3322 = vpop.f32.mrb[0].mxu0
        %v3323 = vpop.f32.mrb[0].mxu0
        %v3324 = vadd.f32 %v2780, %v3323
        %v3325 = vpop.f32.mrb[0].mxu0
        %3326 = vmatprep.mubr.bf16.mxu0 %v2560
        %3327 = vmatmul.mubr.bf16.gmra.mrb[0].mxu0 %v2559
        %v3328 = vpop.f32.mrb[0].mxu0
        %v3329 = vadd.f32 %v2780, %v3328
        %v3330 = vpop.f32.mrb[0].mxu0
        %v3331 = vpop.f32.mrb[0].mxu0
        %v3332 = vadd.f32 %v2780, %v3331
        %v3333 = vpop.f32.mrb[0].mxu0
        %3334 = vmatprep.mubr.bf16.mxu0 %v2569
        %3335 = vmatmul.mubr.bf16.gmra.mrb[0].mxu0 %v2568
        %v3336 = vpop.f32.mrb[0].mxu0
        %v3337 = vadd.f32 %v2780, %v3336
        %v3338 = vpop.f32.mrb[0].mxu0
        %v3339 = vpop.f32.mrb[0].mxu0
        %v3340 = vadd.f32 %v2780, %v3339
        %v3341 = vpop.f32.mrb[0].mxu0
        %3342 = vmatprep.mubr.bf16.mxu0 %v2578
        %3343 = vmatmul.mubr.bf16.gmra.mrb[0].mxu0 %v2577
        %v3344 = vpop.f32.mrb[0].mxu0
        %v3345 = vadd.f32 %v2780, %v3344
        %v3346 = vpop.f32.mrb[0].mxu0
        %v3347 = vpop.f32.mrb[0].mxu0
        %v3348 = vadd.f32 %v2780, %v3347
        %v3349 = vpop.f32.mrb[0].mxu0
        %3350 = vmatprep.mubr.bf16.mxu0 %v2587
        %3351 = vmatmul.mubr.bf16.gmra.mrb[0].mxu0 %v2586
        %v3352 = vpop.f32.mrb[0].mxu0
        %v3353 = vadd.f32 %v2780, %v3352
        %v3354 = vpop.f32.mrb[0].mxu0
        %v3355 = vpop.f32.mrb[0].mxu0
        %v3356 = vadd.f32 %v2780, %v3355
        %v3357 = vpop.f32.mrb[0].mxu0
        %3358 = vmatprep.mubr.bf16.mxu0 %v2596
        %3359 = vmatmul.mubr.bf16.gmra.mrb[0].mxu0 %v2595
        %v3360 = vpop.f32.mrb[0].mxu0
        %v3361 = vadd.f32 %v2780, %v3360
        %v3362 = vpop.f32.mrb[0].mxu0
        %v3363 = vpop.f32.mrb[0].mxu0
        %v3364 = vadd.f32 %v2780, %v3363
        %v3365 = vpop.f32.mrb[0].mxu0
        %3366 = vmatprep.mubr.bf16.mxu0 %v2605
        %3367 = vmatmul.mubr.bf16.gmra.mrb[0].mxu0 %v2604
        %v3368 = vpop.f32.mrb[0].mxu0
        %v3369 = vadd.f32 %v2780, %v3368
        %v3370 = vpop.f32.mrb[0].mxu0
        %v3371 = vpop.f32.mrb[0].mxu0
        %v3372 = vadd.f32 %v2780, %v3371
        %v3373 = vpop.f32.mrb[0].mxu0
        %3374 = vmatprep.mubr.bf16.mxu0 %v2614
        %3375 = vmatmul.mubr.bf16.gmra.mrb[0].mxu0 %v2613
        %v3376 = vpop.f32.mrb[0].mxu0
        %v3377 = vadd.f32 %v2780, %v3376
        %v3378 = vpop.f32.mrb[0].mxu0
        %v3379 = vpop.f32.mrb[0].mxu0
        %v3380 = vadd.f32 %v2780, %v3379
        %v3381 = vpop.f32.mrb[0].mxu0
        %3382 = vmatprep.mubr.bf16.mxu0 %v2623
        %3383 = vmatmul.mubr.bf16.gmra.mrb[0].mxu0 %v2622
        %v3384 = vpop.f32.mrb[0].mxu0
        %v3385 = vadd.f32 %v2780, %v3384
        %v3386 = vpop.f32.mrb[0].mxu0
        %v3387 = vpop.f32.mrb[0].mxu0
        %v3388 = vadd.f32 %v2780, %v3387
        %v3389 = vpop.f32.mrb[0].mxu0
        %3390 = vdwg.mxu0
        %3391 = vmatprep.subr.bf16.mxu0 0
        %3392 = vmatpush1.bf16.msra.mxu0 %v3086
        %3393 = vmatprep.subr.bf16.mxu0 0
        %3394 = vmatpush1.bf16.msra.mxu0 %v3087
        %3395 = vmatprep.subr.bf16.mxu0 0
        %3396 = vmatpush1.bf16.msra.mxu0 %v3088
        %3397 = vmatprep.subr.bf16.mxu0 0
        %3398 = vmatpush1.bf16.msra.mxu0 %v3089
        %3399 = vmatprep.subr.bf16.mxu0 0
        %3400 = vmatpush1.bf16.msra.mxu0 %v3090
        %3401 = vmatprep.subr.bf16.mxu0 0
        %3402 = vmatpush1.bf16.msra.mxu0 %v3091
        %3403 = vmatprep.subr.bf16.mxu0 0
        %3404 = vmatpush1.bf16.msra.mxu0 %v3092
        %3405 = vmatprep.subr.bf16.mxu0 0
        %3406 = vmatpush1.bf16.msra.mxu0 %v3093
        %3407 = vmatprep.subr.bf16.mxu0 0
        %3408 = vmatpush1.bf16.msra.mxu0 %v3094
        %3409 = vmatprep.subr.bf16.mxu0 0
        %3410 = vmatpush1.bf16.msra.mxu0 %v3095
        %3411 = vmatprep.subr.bf16.mxu0 0
        %3412 = vmatpush1.bf16.msra.mxu0 %v3096
        %3413 = vmatprep.subr.bf16.mxu0 0
        %3414 = vmatpush1.bf16.msra.mxu0 %v3097
        %3415 = vmatprep.subr.bf16.mxu0 0
        %3416 = vmatpush1.bf16.msra.mxu0 %v3098
        %3417 = vmatprep.subr.bf16.mxu0 0
        %3418 = vmatpush1.bf16.msra.mxu0 %v3099
        %3419 = vmatprep.subr.bf16.mxu0 0
        %3420 = vmatpush1.bf16.msra.mxu0 %v3100
        %3421 = vmatprep.subr.bf16.mxu0 0
        %3422 = vmatpush1.bf16.msra.mxu0 %v3101
        %3423 = vmatprep.mubr.bf16.mxu0 %v2472
        %3424 = vmatmul.mubr.bf16.gmra.mrb[0].mxu0 %v2471
        %v3425 = vpop.f32.mrb[0].mxu0
        %v3426 = vadd.f32 %v3249, %v3425
        %v3427 = vpop.f32.mrb[0].mxu0
        %v3428 = vpop.f32.mrb[0].mxu0
        %v3429 = vadd.f32 %v3252, %v3428
        %v3430 = vpop.f32.mrb[0].mxu0
        %3431 = vmatprep.mubr.bf16.mxu0 %v2481
        %3432 = vmatmul.mubr.bf16.gmra.mrb[0].mxu0 %v2480
        %v3433 = vpop.f32.mrb[0].mxu0
        %v3434 = vadd.f32 %v3257, %v3433
        %v3435 = vpop.f32.mrb[0].mxu0
        %v3436 = vpop.f32.mrb[0].mxu0
        %v3437 = vadd.f32 %v3260, %v3436
        %v3438 = vpop.f32.mrb[0].mxu0
        %3439 = vmatprep.mubr.bf16.mxu0 %v2490
        %3440 = vmatmul.mubr.bf16.gmra.mrb[0].mxu0 %v2489
        %v3441 = vpop.f32.mrb[0].mxu0
        %v3442 = vadd.f32 %v3265, %v3441
        %v3443 = vpop.f32.mrb[0].mxu0
        %v3444 = vpop.f32.mrb[0].mxu0
        %v3445 = vadd.f32 %v3268, %v3444
        %v3446 = vpop.f32.mrb[0].mxu0
        %3447 = vmatprep.mubr.bf16.mxu0 %v2499
        %3448 = vmatmul.mubr.bf16.gmra.mrb[0].mxu0 %v2498
        %v3449 = vpop.f32.mrb[0].mxu0
        %v3450 = vadd.f32 %v3273, %v3449
        %v3451 = vpop.f32.mrb[0].mxu0
        %v3452 = vpop.f32.mrb[0].mxu0
        %v3453 = vadd.f32 %v3276, %v3452
        %v3454 = vpop.f32.mrb[0].mxu0
        %3455 = vmatprep.mubr.bf16.mxu0 %v2508
        %3456 = vmatmul.mubr.bf16.gmra.mrb[0].mxu0 %v2507
        %v3457 = vpop.f32.mrb[0].mxu0
        %v3458 = vadd.f32 %v3281, %v3457
        %v3459 = vpop.f32.mrb[0].mxu0
        %v3460 = vpop.f32.mrb[0].mxu0
        %v3461 = vadd.f32 %v3284, %v3460
        %v3462 = vpop.f32.mrb[0].mxu0
        %3463 = vmatprep.mubr.bf16.mxu0 %v2517
        %3464 = vmatmul.mubr.bf16.gmra.mrb[0].mxu0 %v2516
        %v3465 = vpop.f32.mrb[0].mxu0
        %v3466 = vadd.f32 %v3289, %v3465
        %v3467 = vpop.f32.mrb[0].mxu0
        %v3468 = vpop.f32.mrb[0].mxu0
        %v3469 = vadd.f32 %v3292, %v3468
        %v3470 = vpop.f32.mrb[0].mxu0
        %3471 = vmatprep.mubr.bf16.mxu0 %v2526
        %3472 = vmatmul.mubr.bf16.gmra.mrb[0].mxu0 %v2525
        %v3473 = vpop.f32.mrb[0].mxu0
        %v3474 = vadd.f32 %v3297, %v3473
        %v3475 = vpop.f32.mrb[0].mxu0
        %v3476 = vpop.f32.mrb[0].mxu0
        %v3477 = vadd.f32 %v3300, %v3476
        %v3478 = vpop.f32.mrb[0].mxu0
        %3479 = vmatprep.mubr.bf16.mxu0 %v2535
        %3480 = vmatmul.mubr.bf16.gmra.mrb[0].mxu0 %v2534
        %v3481 = vpop.f32.mrb[0].mxu0
        %v3482 = vadd.f32 %v3305, %v3481
        %v3483 = vpop.f32.mrb[0].mxu0
        %v3484 = vpop.f32.mrb[0].mxu0
        %v3485 = vadd.f32 %v3308, %v3484
        %v3486 = vpop.f32.mrb[0].mxu0
        %3487 = vmatprep.mubr.bf16.mxu0 %v2544
        %3488 = vmatmul.mubr.bf16.gmra.mrb[0].mxu0 %v2543
        %v3489 = vpop.f32.mrb[0].mxu0
        %v3490 = vadd.f32 %v3313, %v3489
        %v3491 = vpop.f32.mrb[0].mxu0
        %v3492 = vpop.f32.mrb[0].mxu0
        %v3493 = vadd.f32 %v3316, %v3492
        %v3494 = vpop.f32.mrb[0].mxu0
        %3495 = vmatprep.mubr.bf16.mxu0 %v2553
        %3496 = vmatmul.mubr.bf16.gmra.mrb[0].mxu0 %v2552
        %v3497 = vpop.f32.mrb[0].mxu0
        %v3498 = vadd.f32 %v3321, %v3497
        %v3499 = vpop.f32.mrb[0].mxu0
        %v3500 = vpop.f32.mrb[0].mxu0
        %v3501 = vadd.f32 %v3324, %v3500
        %v3502 = vpop.f32.mrb[0].mxu0
        %3503 = vmatprep.mubr.bf16.mxu0 %v2562
        %3504 = vmatmul.mubr.bf16.gmra.mrb[0].mxu0 %v2561
        %v3505 = vpop.f32.mrb[0].mxu0
        %v3506 = vadd.f32 %v3329, %v3505
        %v3507 = vpop.f32.mrb[0].mxu0
        %v3508 = vpop.f32.mrb[0].mxu0
        %v3509 = vadd.f32 %v3332, %v3508
        %v3510 = vpop.f32.mrb[0].mxu0
        %3511 = vmatprep.mubr.bf16.mxu0 %v2571
        %3512 = vmatmul.mubr.bf16.gmra.mrb[0].mxu0 %v2570
        %v3513 = vpop.f32.mrb[0].mxu0
        %v3514 = vadd.f32 %v3337, %v3513
        %v3515 = vpop.f32.mrb[0].mxu0
        %v3516 = vpop.f32.mrb[0].mxu0
        %v3517 = vadd.f32 %v3340, %v3516
        %v3518 = vpop.f32.mrb[0].mxu0
        %3519 = vmatprep.mubr.bf16.mxu0 %v2580
        %3520 = vmatmul.mubr.bf16.gmra.mrb[0].mxu0 %v2579
        %v3521 = vpop.f32.mrb[0].mxu0
        %v3522 = vadd.f32 %v3345, %v3521
        %v3523 = vpop.f32.mrb[0].mxu0
        %v3524 = vpop.f32.mrb[0].mxu0
        %v3525 = vadd.f32 %v3348, %v3524
        %v3526 = vpop.f32.mrb[0].mxu0
        %3527 = vmatprep.mubr.bf16.mxu0 %v2589
        %3528 = vmatmul.mubr.bf16.gmra.mrb[0].mxu0 %v2588
        %v3529 = vpop.f32.mrb[0].mxu0
        %v3530 = vadd.f32 %v3353, %v3529
        %v3531 = vpop.f32.mrb[0].mxu0
        %v3532 = vpop.f32.mrb[0].mxu0
        %v3533 = vadd.f32 %v3356, %v3532
        %v3534 = vpop.f32.mrb[0].mxu0
        %3535 = vmatprep.mubr.bf16.mxu0 %v2598
        %3536 = vmatmul.mubr.bf16.gmra.mrb[0].mxu0 %v2597
        %v3537 = vpop.f32.mrb[0].mxu0
        %v3538 = vadd.f32 %v3361, %v3537
        %v3539 = vpop.f32.mrb[0].mxu0
        %v3540 = vpop.f32.mrb[0].mxu0
        %v3541 = vadd.f32 %v3364, %v3540
        %v3542 = vpop.f32.mrb[0].mxu0
        %3543 = vmatprep.mubr.bf16.mxu0 %v2607
        %3544 = vmatmul.mubr.bf16.gmra.mrb[0].mxu0 %v2606
        %v3545 = vpop.f32.mrb[0].mxu0
        %v3546 = vadd.f32 %v3369, %v3545
        %v3547 = vpop.f32.mrb[0].mxu0
        %v3548 = vpop.f32.mrb[0].mxu0
        %v3549 = vadd.f32 %v3372, %v3548
        %v3550 = vpop.f32.mrb[0].mxu0
        %3551 = vmatprep.mubr.bf16.mxu0 %v2616
        %3552 = vmatmul.mubr.bf16.gmra.mrb[0].mxu0 %v2615
        %v3553 = vpop.f32.mrb[0].mxu0
        %v3554 = vadd.f32 %v3377, %v3553
        %v3555 = vpop.f32.mrb[0].mxu0
        %v3556 = vpop.f32.mrb[0].mxu0
        %v3557 = vadd.f32 %v3380, %v3556
        %v3558 = vpop.f32.mrb[0].mxu0
        %3559 = vmatprep.mubr.bf16.mxu0 %v2625
        %3560 = vmatmul.mubr.bf16.gmra.mrb[0].mxu0 %v2624
        %v3561 = vpop.f32.mrb[0].mxu0
        %v3562 = vadd.f32 %v3385, %v3561
        %v3563 = vpop.f32.mrb[0].mxu0
        %v3564 = vpop.f32.mrb[0].mxu0
        %v3565 = vadd.f32 %v3388, %v3564
        %v3566 = vpop.f32.mrb[0].mxu0
        %3567 = vdwg.mxu0
        %3568 = vmatprep.subr.bf16.mxu0 0
        %3569 = vmatpush1.bf16.msra.mxu0 %v3102
        %3570 = vmatprep.subr.bf16.mxu0 0
        %3571 = vmatpush1.bf16.msra.mxu0 %v3103
        %3572 = vmatprep.subr.bf16.mxu0 0
        %3573 = vmatpush1.bf16.msra.mxu0 %v3104
        %3574 = vmatprep.subr.bf16.mxu0 0
        %3575 = vmatpush1.bf16.msra.mxu0 %v3105
        %3576 = vmatprep.subr.bf16.mxu0 0
        %3577 = vmatpush1.bf16.msra.mxu0 %v3106
        %3578 = vmatprep.subr.bf16.mxu0 0
        %3579 = vmatpush1.bf16.msra.mxu0 %v3107
        %3580 = vmatprep.subr.bf16.mxu0 0
        %3581 = vmatpush1.bf16.msra.mxu0 %v3108
        %3582 = vmatprep.subr.bf16.mxu0 0
        %3583 = vmatpush1.bf16.msra.mxu0 %v3109
        %3584 = vmatprep.subr.bf16.mxu0 0
        %3585 = vmatpush1.bf16.msra.mxu0 %v3110
        %3586 = vmatprep.subr.bf16.mxu0 0
        %3587 = vmatpush1.bf16.msra.mxu0 %v3111
        %3588 = vmatprep.subr.bf16.mxu0 0
        %3589 = vmatpush1.bf16.msra.mxu0 %v3112
        %3590 = vmatprep.subr.bf16.mxu0 0
        %3591 = vmatpush1.bf16.msra.mxu0 %v3113
        %3592 = vmatprep.subr.bf16.mxu0 0
        %3593 = vmatpush1.bf16.msra.mxu0 %v3114
        %3594 = vmatprep.subr.bf16.mxu0 0
        %3595 = vmatpush1.bf16.msra.mxu0 %v3115
        %3596 = vmatprep.subr.bf16.mxu0 0
        %3597 = vmatpush1.bf16.msra.mxu0 %v3116
        %3598 = vmatprep.subr.bf16.mxu0 0
        %3599 = vmatpush1.bf16.msra.mxu0 %v3117
        %3600 = vmatprep.mubr.bf16.mxu0 %v2474
        %3601 = vmatmul.mubr.bf16.gmra.mrb[0].mxu0 %v2473
        %v3602 = vpop.f32.mrb[0].mxu0
        %v3603 = vadd.f32 %v3426, %v3602
        %v3604 = vpop.f32.mrb[0].mxu0
        %v3605 = vpop.f32.mrb[0].mxu0
        %v3606 = vadd.f32 %v3429, %v3605
        %v3607 = vpop.f32.mrb[0].mxu0
        %3608 = vmatprep.mubr.bf16.mxu0 %v2483
        %3609 = vmatmul.mubr.bf16.gmra.mrb[0].mxu0 %v2482
        %v3610 = vpop.f32.mrb[0].mxu0
        %v3611 = vadd.f32 %v3434, %v3610
        %v3612 = vpop.f32.mrb[0].mxu0
        %v3613 = vpop.f32.mrb[0].mxu0
        %v3614 = vadd.f32 %v3437, %v3613
        %v3615 = vpop.f32.mrb[0].mxu0
        %3616 = vmatprep.mubr.bf16.mxu0 %v2492
        %3617 = vmatmul.mubr.bf16.gmra.mrb[0].mxu0 %v2491
        %v3618 = vpop.f32.mrb[0].mxu0
        %v3619 = vadd.f32 %v3442, %v3618
        %v3620 = vpop.f32.mrb[0].mxu0
        %v3621 = vpop.f32.mrb[0].mxu0
        %v3622 = vadd.f32 %v3445, %v3621
        %v3623 = vpop.f32.mrb[0].mxu0
        %3624 = vmatprep.mubr.bf16.mxu0 %v2501
        %3625 = vmatmul.mubr.bf16.gmra.mrb[0].mxu0 %v2500
        %v3626 = vpop.f32.mrb[0].mxu0
        %v3627 = vadd.f32 %v3450, %v3626
        %v3628 = vpop.f32.mrb[0].mxu0
        %v3629 = vpop.f32.mrb[0].mxu0
        %v3630 = vadd.f32 %v3453, %v3629
        %v3631 = vpop.f32.mrb[0].mxu0
        %3632 = vmatprep.mubr.bf16.mxu0 %v2510
        %3633 = vmatmul.mubr.bf16.gmra.mrb[0].mxu0 %v2509
        %v3634 = vpop.f32.mrb[0].mxu0
        %v3635 = vadd.f32 %v3458, %v3634
        %v3636 = vpop.f32.mrb[0].mxu0
        %v3637 = vpop.f32.mrb[0].mxu0
        %v3638 = vadd.f32 %v3461, %v3637
        %v3639 = vpop.f32.mrb[0].mxu0
        %3640 = vmatprep.mubr.bf16.mxu0 %v2519
        %3641 = vmatmul.mubr.bf16.gmra.mrb[0].mxu0 %v2518
        %v3642 = vpop.f32.mrb[0].mxu0
        %v3643 = vadd.f32 %v3466, %v3642
        %v3644 = vpop.f32.mrb[0].mxu0
        %v3645 = vpop.f32.mrb[0].mxu0
        %v3646 = vadd.f32 %v3469, %v3645
        %v3647 = vpop.f32.mrb[0].mxu0
        %3648 = vmatprep.mubr.bf16.mxu0 %v2528
        %3649 = vmatmul.mubr.bf16.gmra.mrb[0].mxu0 %v2527
        %v3650 = vpop.f32.mrb[0].mxu0
        %v3651 = vadd.f32 %v3474, %v3650
        %v3652 = vpop.f32.mrb[0].mxu0
        %v3653 = vpop.f32.mrb[0].mxu0
        %v3654 = vadd.f32 %v3477, %v3653
        %v3655 = vpop.f32.mrb[0].mxu0
        %3656 = vmatprep.mubr.bf16.mxu0 %v2537
        %3657 = vmatmul.mubr.bf16.gmra.mrb[0].mxu0 %v2536
        %v3658 = vpop.f32.mrb[0].mxu0
        %v3659 = vadd.f32 %v3482, %v3658
        %v3660 = vpop.f32.mrb[0].mxu0
        %v3661 = vpop.f32.mrb[0].mxu0
        %v3662 = vadd.f32 %v3485, %v3661
        %v3663 = vpop.f32.mrb[0].mxu0
        %3664 = vmatprep.mubr.bf16.mxu0 %v2546
        %3665 = vmatmul.mubr.bf16.gmra.mrb[0].mxu0 %v2545
        %v3666 = vpop.f32.mrb[0].mxu0
        %v3667 = vadd.f32 %v3490, %v3666
        %v3668 = vpop.f32.mrb[0].mxu0
        %v3669 = vpop.f32.mrb[0].mxu0
        %v3670 = vadd.f32 %v3493, %v3669
        %v3671 = vpop.f32.mrb[0].mxu0
        %3672 = vmatprep.mubr.bf16.mxu0 %v2555
        %3673 = vmatmul.mubr.bf16.gmra.mrb[0].mxu0 %v2554
        %v3674 = vpop.f32.mrb[0].mxu0
        %v3675 = vadd.f32 %v3498, %v3674
        %v3676 = vpop.f32.mrb[0].mxu0
        %v3677 = vpop.f32.mrb[0].mxu0
        %v3678 = vadd.f32 %v3501, %v3677
        %v3679 = vpop.f32.mrb[0].mxu0
        %3680 = vmatprep.mubr.bf16.mxu0 %v2564
        %3681 = vmatmul.mubr.bf16.gmra.mrb[0].mxu0 %v2563
        %v3682 = vpop.f32.mrb[0].mxu0
        %v3683 = vadd.f32 %v3506, %v3682
        %v3684 = vpop.f32.mrb[0].mxu0
        %v3685 = vpop.f32.mrb[0].mxu0
        %v3686 = vadd.f32 %v3509, %v3685
        %v3687 = vpop.f32.mrb[0].mxu0
        %3688 = vmatprep.mubr.bf16.mxu0 %v2573
        %3689 = vmatmul.mubr.bf16.gmra.mrb[0].mxu0 %v2572
        %v3690 = vpop.f32.mrb[0].mxu0
        %v3691 = vadd.f32 %v3514, %v3690
        %v3692 = vpop.f32.mrb[0].mxu0
        %v3693 = vpop.f32.mrb[0].mxu0
        %v3694 = vadd.f32 %v3517, %v3693
        %v3695 = vpop.f32.mrb[0].mxu0
        %3696 = vmatprep.mubr.bf16.mxu0 %v2582
        %3697 = vmatmul.mubr.bf16.gmra.mrb[0].mxu0 %v2581
        %v3698 = vpop.f32.mrb[0].mxu0
        %v3699 = vadd.f32 %v3522, %v3698
        %v3700 = vpop.f32.mrb[0].mxu0
        %v3701 = vpop.f32.mrb[0].mxu0
        %v3702 = vadd.f32 %v3525, %v3701
        %v3703 = vpop.f32.mrb[0].mxu0
        %3704 = vmatprep.mubr.bf16.mxu0 %v2591
        %3705 = vmatmul.mubr.bf16.gmra.mrb[0].mxu0 %v2590
        %v3706 = vpop.f32.mrb[0].mxu0
        %v3707 = vadd.f32 %v3530, %v3706
        %v3708 = vpop.f32.mrb[0].mxu0
        %v3709 = vpop.f32.mrb[0].mxu0
        %v3710 = vadd.f32 %v3533, %v3709
        %v3711 = vpop.f32.mrb[0].mxu0
        %3712 = vmatprep.mubr.bf16.mxu0 %v2600
        %3713 = vmatmul.mubr.bf16.gmra.mrb[0].mxu0 %v2599
        %v3714 = vpop.f32.mrb[0].mxu0
        %v3715 = vadd.f32 %v3538, %v3714
        %v3716 = vpop.f32.mrb[0].mxu0
        %v3717 = vpop.f32.mrb[0].mxu0
        %v3718 = vadd.f32 %v3541, %v3717
        %v3719 = vpop.f32.mrb[0].mxu0
        %3720 = vmatprep.mubr.bf16.mxu0 %v2609
        %3721 = vmatmul.mubr.bf16.gmra.mrb[0].mxu0 %v2608
        %v3722 = vpop.f32.mrb[0].mxu0
        %v3723 = vadd.f32 %v3546, %v3722
        %v3724 = vpop.f32.mrb[0].mxu0
        %v3725 = vpop.f32.mrb[0].mxu0
        %v3726 = vadd.f32 %v3549, %v3725
        %v3727 = vpop.f32.mrb[0].mxu0
        %3728 = vmatprep.mubr.bf16.mxu0 %v2618
        %3729 = vmatmul.mubr.bf16.gmra.mrb[0].mxu0 %v2617
        %v3730 = vpop.f32.mrb[0].mxu0
        %v3731 = vadd.f32 %v3554, %v3730
        %v3732 = vpop.f32.mrb[0].mxu0
        %v3733 = vpop.f32.mrb[0].mxu0
        %v3734 = vadd.f32 %v3557, %v3733
        %v3735 = vpop.f32.mrb[0].mxu0
        %3736 = vmatprep.mubr.bf16.mxu0 %v2627
        %3737 = vmatmul.mubr.bf16.gmra.mrb[0].mxu0 %v2626
        %v3738 = vpop.f32.mrb[0].mxu0
        %v3739 = vadd.f32 %v3562, %v3738
        %v3740 = vpop.f32.mrb[0].mxu0
        %v3741 = vpop.f32.mrb[0].mxu0
        %v3742 = vadd.f32 %v3565, %v3741
        %v3743 = vpop.f32.mrb[0].mxu0
        %3744 = vdwg.mxu0
        %3745 = vmatprep.subr.bf16.mxu0 0
        %3746 = vmatpush1.bf16.msra.mxu0 %v3118
        %3747 = vmatprep.subr.bf16.mxu0 0
        %3748 = vmatpush1.bf16.msra.mxu0 %v3119
        %3749 = vmatprep.subr.bf16.mxu0 0
        %3750 = vmatpush1.bf16.msra.mxu0 %v3120
        %3751 = vmatprep.subr.bf16.mxu0 0
        %3752 = vmatpush1.bf16.msra.mxu0 %v3121
        %3753 = vmatprep.subr.bf16.mxu0 0
        %3754 = vmatpush1.bf16.msra.mxu0 %v3122
        %3755 = vmatprep.subr.bf16.mxu0 0
        %3756 = vmatpush1.bf16.msra.mxu0 %v3123
        %3757 = vmatprep.subr.bf16.mxu0 0
        %3758 = vmatpush1.bf16.msra.mxu0 %v3124
        %3759 = vmatprep.subr.bf16.mxu0 0
        %3760 = vmatpush1.bf16.msra.mxu0 %v3125
        %3761 = vmatprep.subr.bf16.mxu0 0
        %3762 = vmatpush1.bf16.msra.mxu0 %v3126
        %3763 = vmatprep.subr.bf16.mxu0 0
        %3764 = vmatpush1.bf16.msra.mxu0 %v3127
        %3765 = vmatprep.subr.bf16.mxu0 0
        %3766 = vmatpush1.bf16.msra.mxu0 %v3128
        %3767 = vmatprep.subr.bf16.mxu0 0
        %3768 = vmatpush1.bf16.msra.mxu0 %v3129
        %3769 = vmatprep.subr.bf16.mxu0 0
        %3770 = vmatpush1.bf16.msra.mxu0 %v3130
        %3771 = vmatprep.subr.bf16.mxu0 0
        %3772 = vmatpush1.bf16.msra.mxu0 %v3131
        %3773 = vmatprep.subr.bf16.mxu0 0
        %3774 = vmatpush1.bf16.msra.mxu0 %v3132
        %3775 = vmatprep.subr.bf16.mxu0 0
        %3776 = vmatpush1.bf16.msra.mxu0 %v3133
        %3777 = vmatprep.mubr.bf16.mxu0 %v2476
        %3778 = vmatmul.mubr.bf16.gmra.mrb[0].mxu0 %v2475
        %v3779 = vpop.f32.mrb[0].mxu0
        %v3780 = vadd.f32 %v3603, %v3779
        %v3781 = vpop.f32.mrb[0].mxu0
        %v3782 = vpop.f32.mrb[0].mxu0
        %v3783 = vadd.f32 %v3606, %v3782
        %v3784 = vpop.f32.mrb[0].mxu0
        %3785 = vmatprep.mubr.bf16.mxu0 %v2485
        %3786 = vmatmul.mubr.bf16.gmra.mrb[0].mxu0 %v2484
        %v3787 = vpop.f32.mrb[0].mxu0
        %v3788 = vadd.f32 %v3611, %v3787
        %v3789 = vpop.f32.mrb[0].mxu0
        %v3790 = vpop.f32.mrb[0].mxu0
        %v3791 = vadd.f32 %v3614, %v3790
        %v3792 = vpop.f32.mrb[0].mxu0
        %3793 = vmatprep.mubr.bf16.mxu0 %v2494
        %3794 = vmatmul.mubr.bf16.gmra.mrb[0].mxu0 %v2493
        %v3795 = vpop.f32.mrb[0].mxu0
        %v3796 = vadd.f32 %v3619, %v3795
        %v3797 = vpop.f32.mrb[0].mxu0
        %v3798 = vpop.f32.mrb[0].mxu0
        %v3799 = vadd.f32 %v3622, %v3798
        %v3800 = vpop.f32.mrb[0].mxu0
        %3801 = vmatprep.mubr.bf16.mxu0 %v2503
        %3802 = vmatmul.mubr.bf16.gmra.mrb[0].mxu0 %v2502
        %v3803 = vpop.f32.mrb[0].mxu0
        %v3804 = vadd.f32 %v3627, %v3803
        %v3805 = vpop.f32.mrb[0].mxu0
        %v3806 = vpop.f32.mrb[0].mxu0
        %v3807 = vadd.f32 %v3630, %v3806
        %v3808 = vpop.f32.mrb[0].mxu0
        %3809 = vmatprep.mubr.bf16.mxu0 %v2512
        %3810 = vmatmul.mubr.bf16.gmra.mrb[0].mxu0 %v2511
        %v3811 = vpop.f32.mrb[0].mxu0
        %v3812 = vadd.f32 %v3635, %v3811
        %v3813 = vpop.f32.mrb[0].mxu0
        %v3814 = vpop.f32.mrb[0].mxu0
        %v3815 = vadd.f32 %v3638, %v3814
        %v3816 = vpop.f32.mrb[0].mxu0
        %3817 = vmatprep.mubr.bf16.mxu0 %v2521
        %3818 = vmatmul.mubr.bf16.gmra.mrb[0].mxu0 %v2520
        %v3819 = vpop.f32.mrb[0].mxu0
        %v3820 = vadd.f32 %v3643, %v3819
        %v3821 = vpop.f32.mrb[0].mxu0
        %v3822 = vpop.f32.mrb[0].mxu0
        %v3823 = vadd.f32 %v3646, %v3822
        %v3824 = vpop.f32.mrb[0].mxu0
        %3825 = vmatprep.mubr.bf16.mxu0 %v2530
        %3826 = vmatmul.mubr.bf16.gmra.mrb[0].mxu0 %v2529
        %v3827 = vpop.f32.mrb[0].mxu0
        %v3828 = vadd.f32 %v3651, %v3827
        %v3829 = vpop.f32.mrb[0].mxu0
        %v3830 = vpop.f32.mrb[0].mxu0
        %v3831 = vadd.f32 %v3654, %v3830
        %v3832 = vpop.f32.mrb[0].mxu0
        %3833 = vmatprep.mubr.bf16.mxu0 %v2539
        %3834 = vmatmul.mubr.bf16.gmra.mrb[0].mxu0 %v2538
        %v3835 = vpop.f32.mrb[0].mxu0
        %v3836 = vadd.f32 %v3659, %v3835
        %v3837 = vpop.f32.mrb[0].mxu0
        %v3838 = vpop.f32.mrb[0].mxu0
        %v3839 = vadd.f32 %v3662, %v3838
        %v3840 = vpop.f32.mrb[0].mxu0
        %3841 = vmatprep.mubr.bf16.mxu0 %v2548
        %3842 = vmatmul.mubr.bf16.gmra.mrb[0].mxu0 %v2547
        %v3843 = vpop.f32.mrb[0].mxu0
        %v3844 = vadd.f32 %v3667, %v3843
        %v3845 = vpop.f32.mrb[0].mxu0
        %v3846 = vpop.f32.mrb[0].mxu0
        %v3847 = vadd.f32 %v3670, %v3846
        %v3848 = vpop.f32.mrb[0].mxu0
        %3849 = vmatprep.mubr.bf16.mxu0 %v2557
        %3850 = vmatmul.mubr.bf16.gmra.mrb[0].mxu0 %v2556
        %v3851 = vpop.f32.mrb[0].mxu0
        %v3852 = vadd.f32 %v3675, %v3851
        %v3853 = vpop.f32.mrb[0].mxu0
        %v3854 = vpop.f32.mrb[0].mxu0
        %v3855 = vadd.f32 %v3678, %v3854
        %v3856 = vpop.f32.mrb[0].mxu0
        %3857 = vmatprep.mubr.bf16.mxu0 %v2566
        %3858 = vmatmul.mubr.bf16.gmra.mrb[0].mxu0 %v2565
        %v3859 = vpop.f32.mrb[0].mxu0
        %v3860 = vadd.f32 %v3683, %v3859
        %v3861 = vpop.f32.mrb[0].mxu0
        %v3862 = vpop.f32.mrb[0].mxu0
        %v3863 = vadd.f32 %v3686, %v3862
        %v3864 = vpop.f32.mrb[0].mxu0
        %3865 = vmatprep.mubr.bf16.mxu0 %v2575
        %3866 = vmatmul.mubr.bf16.gmra.mrb[0].mxu0 %v2574
        %v3867 = vpop.f32.mrb[0].mxu0
        %v3868 = vadd.f32 %v3691, %v3867
        %v3869 = vpop.f32.mrb[0].mxu0
        %v3870 = vpop.f32.mrb[0].mxu0
        %v3871 = vadd.f32 %v3694, %v3870
        %v3872 = vpop.f32.mrb[0].mxu0
        %3873 = vmatprep.mubr.bf16.mxu0 %v2584
        %3874 = vmatmul.mubr.bf16.gmra.mrb[0].mxu0 %v2583
        %v3875 = vpop.f32.mrb[0].mxu0
        %v3876 = vadd.f32 %v3699, %v3875
        %v3877 = vpop.f32.mrb[0].mxu0
        %v3878 = vpop.f32.mrb[0].mxu0
        %v3879 = vadd.f32 %v3702, %v3878
        %v3880 = vpop.f32.mrb[0].mxu0
        %3881 = vmatprep.mubr.bf16.mxu0 %v2593
        %3882 = vmatmul.mubr.bf16.gmra.mrb[0].mxu0 %v2592
        %v3883 = vpop.f32.mrb[0].mxu0
        %v3884 = vadd.f32 %v3707, %v3883
        %v3885 = vpop.f32.mrb[0].mxu0
        %v3886 = vpop.f32.mrb[0].mxu0
        %v3887 = vadd.f32 %v3710, %v3886
        %v3888 = vpop.f32.mrb[0].mxu0
        %3889 = vmatprep.mubr.bf16.mxu0 %v2602
        %3890 = vmatmul.mubr.bf16.gmra.mrb[0].mxu0 %v2601
        %v3891 = vpop.f32.mrb[0].mxu0
        %v3892 = vadd.f32 %v3715, %v3891
        %v3893 = vpop.f32.mrb[0].mxu0
        %v3894 = vpop.f32.mrb[0].mxu0
        %v3895 = vadd.f32 %v3718, %v3894
        %v3896 = vpop.f32.mrb[0].mxu0
        %3897 = vmatprep.mubr.bf16.mxu0 %v2611
        %3898 = vmatmul.mubr.bf16.gmra.mrb[0].mxu0 %v2610
        %v3899 = vpop.f32.mrb[0].mxu0
        %v3900 = vadd.f32 %v3723, %v3899
        %v3901 = vpop.f32.mrb[0].mxu0
        %v3902 = vpop.f32.mrb[0].mxu0
        %v3903 = vadd.f32 %v3726, %v3902
        %v3904 = vpop.f32.mrb[0].mxu0
        %3905 = vmatprep.mubr.bf16.mxu0 %v2620
        %3906 = vmatmul.mubr.bf16.gmra.mrb[0].mxu0 %v2619
        %v3907 = vpop.f32.mrb[0].mxu0
        %v3908 = vadd.f32 %v3731, %v3907
        %v3909 = vpop.f32.mrb[0].mxu0
        %v3910 = vpop.f32.mrb[0].mxu0
        %v3911 = vadd.f32 %v3734, %v3910
        %v3912 = vpop.f32.mrb[0].mxu0
        %3913 = vmatprep.mubr.bf16.mxu0 %v2629
        %3914 = vmatmul.mubr.bf16.gmra.mrb[0].mxu0 %v2628
        %v3915 = vpop.f32.mrb[0].mxu0
        %v3916 = vadd.f32 %v3739, %v3915
        %v3917 = vpop.f32.mrb[0].mxu0
        %v3918 = vpop.f32.mrb[0].mxu0
        %v3919 = vadd.f32 %v3742, %v3918
        %v3920 = vpop.f32.mrb[0].mxu0
        %3921 = vdwg.mxu0
        %3922 = vmatprep.subr.bf16.mxu0 0
        %3923 = vmatpush1.bf16.msra.mxu0 %v3134
        %3924 = vmatprep.subr.bf16.mxu0 0
        %3925 = vmatpush1.bf16.msra.mxu0 %v3135
        %3926 = vmatprep.subr.bf16.mxu0 0
        %3927 = vmatpush1.bf16.msra.mxu0 %v3136
        %3928 = vmatprep.subr.bf16.mxu0 0
        %3929 = vmatpush1.bf16.msra.mxu0 %v3137
        %3930 = vmatprep.subr.bf16.mxu0 0
        %3931 = vmatpush1.bf16.msra.mxu0 %v3138
        %3932 = vmatprep.subr.bf16.mxu0 0
        %3933 = vmatpush1.bf16.msra.mxu0 %v3139
        %3934 = vmatprep.subr.bf16.mxu0 0
        %3935 = vmatpush1.bf16.msra.mxu0 %v3140
        %3936 = vmatprep.subr.bf16.mxu0 0
        %3937 = vmatpush1.bf16.msra.mxu0 %v3141
        %3938 = vmatprep.subr.bf16.mxu0 0
        %3939 = vmatpush1.bf16.msra.mxu0 0
        %3940 = vmatprep.subr.bf16.mxu0 0
        %3941 = vmatpush1.bf16.msra.mxu0 0
        %3942 = vmatprep.subr.bf16.mxu0 0
        %3943 = vmatpush1.bf16.msra.mxu0 0
        %3944 = vmatprep.subr.bf16.mxu0 0
        %3945 = vmatpush1.bf16.msra.mxu0 0
        %3946 = vmatprep.subr.bf16.mxu0 0
        %3947 = vmatpush1.bf16.msra.mxu0 0
        %3948 = vmatprep.subr.bf16.mxu0 0
        %3949 = vmatpush1.bf16.msra.mxu0 0
        %3950 = vmatprep.subr.bf16.mxu0 0
        %3951 = vmatpush1.bf16.msra.mxu0 0
        %3952 = vmatprep.subr.bf16.mxu0 0
        %3953 = vmatpush1.bf16.msra.mxu0 0
        %3954 = vmatprep.mubr.bf16.mxu0 0
        %3955 = vmatmul.mubr.bf16.gmra.mrb[0].mxu0 %v2477
        %v3956 = vpop.f32.mrb[0].mxu0
        %v3957 = vadd.f32 %v3780, %v3956
        %v3958 = vpop.f32.mrb[0].mxu0
        %v3959 = vpop.f32.mrb[0].mxu0
        %v3960 = vadd.f32 %v3783, %v3959
        %v3961 = vpop.f32.mrb[0].mxu0
        %3962 = vmatprep.mubr.bf16.mxu0 0
        %3963 = vmatmul.mubr.bf16.gmra.mrb[0].mxu0 %v2486
        %v3964 = vpop.f32.mrb[0].mxu0
        %v3965 = vadd.f32 %v3788, %v3964
        %v3966 = vpop.f32.mrb[0].mxu0
        %v3967 = vpop.f32.mrb[0].mxu0
        %v3968 = vadd.f32 %v3791, %v3967
        %v3969 = vpop.f32.mrb[0].mxu0
        %3970 = vmatprep.mubr.bf16.mxu0 0
        %3971 = vmatmul.mubr.bf16.gmra.mrb[0].mxu0 %v2495
        %v3972 = vpop.f32.mrb[0].mxu0
        %v3973 = vadd.f32 %v3796, %v3972
        %v3974 = vpop.f32.mrb[0].mxu0
        %v3975 = vpop.f32.mrb[0].mxu0
        %v3976 = vadd.f32 %v3799, %v3975
        %v3977 = vpop.f32.mrb[0].mxu0
        %3978 = vmatprep.mubr.bf16.mxu0 0
        %3979 = vmatmul.mubr.bf16.gmra.mrb[0].mxu0 %v2504
        %v3980 = vpop.f32.mrb[0].mxu0
        %v3981 = vadd.f32 %v3804, %v3980
        %v3982 = vpop.f32.mrb[0].mxu0
        %v3983 = vpop.f32.mrb[0].mxu0
        %v3984 = vadd.f32 %v3807, %v3983
        %v3985 = vpop.f32.mrb[0].mxu0
        %3986 = vmatprep.mubr.bf16.mxu0 0
        %3987 = vmatmul.mubr.bf16.gmra.mrb[0].mxu0 %v2513
        %v3988 = vpop.f32.mrb[0].mxu0
        %v3989 = vadd.f32 %v3812, %v3988
        %v3990 = vpop.f32.mrb[0].mxu0
        %v3991 = vpop.f32.mrb[0].mxu0
        %v3992 = vadd.f32 %v3815, %v3991
        %v3993 = vpop.f32.mrb[0].mxu0
        %3994 = vmatprep.mubr.bf16.mxu0 0
        %3995 = vmatmul.mubr.bf16.gmra.mrb[0].mxu0 %v2522
        %v3996 = vpop.f32.mrb[0].mxu0
        %v3997 = vadd.f32 %v3820, %v3996
        %v3998 = vpop.f32.mrb[0].mxu0
        %v3999 = vpop.f32.mrb[0].mxu0
        %v4000 = vadd.f32 %v3823, %v3999
        %v4001 = vpop.f32.mrb[0].mxu0
        %4002 = vmatprep.mubr.bf16.mxu0 0
        %4003 = vmatmul.mubr.bf16.gmra.mrb[0].mxu0 %v2531
        %v4004 = vpop.f32.mrb[0].mxu0
        %v4005 = vadd.f32 %v3828, %v4004
        %v4006 = vpop.f32.mrb[0].mxu0
        %v4007 = vpop.f32.mrb[0].mxu0
        %v4008 = vadd.f32 %v3831, %v4007
        %v4009 = vpop.f32.mrb[0].mxu0
        %4010 = vmatprep.mubr.bf16.mxu0 0
        %4011 = vmatmul.mubr.bf16.gmra.mrb[0].mxu0 %v2540
        %v4012 = vpop.f32.mrb[0].mxu0
        %v4013 = vadd.f32 %v3836, %v4012
        %v4014 = vpop.f32.mrb[0].mxu0
        %v4015 = vpop.f32.mrb[0].mxu0
        %v4016 = vadd.f32 %v3839, %v4015
        %v4017 = vpop.f32.mrb[0].mxu0
        %4018 = vmatprep.mubr.bf16.mxu0 0
        %4019 = vmatmul.mubr.bf16.gmra.mrb[0].mxu0 %v2549
        %v4020 = vpop.f32.mrb[0].mxu0
        %v4021 = vadd.f32 %v3844, %v4020
        %v4022 = vpop.f32.mrb[0].mxu0
        %v4023 = vpop.f32.mrb[0].mxu0
        %v4024 = vadd.f32 %v3847, %v4023
        %v4025 = vpop.f32.mrb[0].mxu0
        %4026 = vmatprep.mubr.bf16.mxu0 0
        %4027 = vmatmul.mubr.bf16.gmra.mrb[0].mxu0 %v2558
        %v4028 = vpop.f32.mrb[0].mxu0
        %v4029 = vadd.f32 %v3852, %v4028
        %v4030 = vpop.f32.mrb[0].mxu0
        %v4031 = vpop.f32.mrb[0].mxu0
        %v4032 = vadd.f32 %v3855, %v4031
        %v4033 = vpop.f32.mrb[0].mxu0
        %4034 = vmatprep.mubr.bf16.mxu0 0
        %4035 = vmatmul.mubr.bf16.gmra.mrb[0].mxu0 %v2567
        %v4036 = vpop.f32.mrb[0].mxu0
        %v4037 = vadd.f32 %v3860, %v4036
        %v4038 = vpop.f32.mrb[0].mxu0
        %v4039 = vpop.f32.mrb[0].mxu0
        %v4040 = vadd.f32 %v3863, %v4039
        %v4041 = vpop.f32.mrb[0].mxu0
        %4042 = vmatprep.mubr.bf16.mxu0 0
        %4043 = vmatmul.mubr.bf16.gmra.mrb[0].mxu0 %v2576
        %v4044 = vpop.f32.mrb[0].mxu0
        %v4045 = vadd.f32 %v3868, %v4044
        %v4046 = vpop.f32.mrb[0].mxu0
        %v4047 = vpop.f32.mrb[0].mxu0
        %v4048 = vadd.f32 %v3871, %v4047
        %v4049 = vpop.f32.mrb[0].mxu0
        %4050 = vmatprep.mubr.bf16.mxu0 0
        %4051 = vmatmul.mubr.bf16.gmra.mrb[0].mxu0 %v2585
        %v4052 = vpop.f32.mrb[0].mxu0
        %v4053 = vadd.f32 %v3876, %v4052
        %v4054 = vpop.f32.mrb[0].mxu0
        %v4055 = vpop.f32.mrb[0].mxu0
        %v4056 = vadd.f32 %v3879, %v4055
        %v4057 = vpop.f32.mrb[0].mxu0
        %4058 = vmatprep.mubr.bf16.mxu0 0
        %4059 = vmatmul.mubr.bf16.gmra.mrb[0].mxu0 %v2594
        %v4060 = vpop.f32.mrb[0].mxu0
        %v4061 = vadd.f32 %v3884, %v4060
        %v4062 = vpop.f32.mrb[0].mxu0
        %v4063 = vpop.f32.mrb[0].mxu0
        %v4064 = vadd.f32 %v3887, %v4063
        %v4065 = vpop.f32.mrb[0].mxu0
        %4066 = vmatprep.mubr.bf16.mxu0 0
        %4067 = vmatmul.mubr.bf16.gmra.mrb[0].mxu0 %v2603
        %v4068 = vpop.f32.mrb[0].mxu0
        %v4069 = vadd.f32 %v3892, %v4068
        %v4070 = vpop.f32.mrb[0].mxu0
        %v4071 = vpop.f32.mrb[0].mxu0
        %v4072 = vadd.f32 %v3895, %v4071
        %v4073 = vpop.f32.mrb[0].mxu0
        %4074 = vmatprep.mubr.bf16.mxu0 0
        %4075 = vmatmul.mubr.bf16.gmra.mrb[0].mxu0 %v2612
        %v4076 = vpop.f32.mrb[0].mxu0
        %v4077 = vadd.f32 %v3900, %v4076
        %v4078 = vpop.f32.mrb[0].mxu0
        %v4079 = vpop.f32.mrb[0].mxu0
        %v4080 = vadd.f32 %v3903, %v4079
        %v4081 = vpop.f32.mrb[0].mxu0
        %4082 = vmatprep.mubr.bf16.mxu0 0
        %4083 = vmatmul.mubr.bf16.gmra.mrb[0].mxu0 %v2621
        %v4084 = vpop.f32.mrb[0].mxu0
        %v4085 = vadd.f32 %v3908, %v4084
        %v4086 = vpop.f32.mrb[0].mxu0
        %v4087 = vpop.f32.mrb[0].mxu0
        %v4088 = vadd.f32 %v3911, %v4087
        %v4089 = vpop.f32.mrb[0].mxu0
        %4090 = vmatprep.mubr.bf16.mxu0 0
        %4091 = vmatmul.mubr.bf16.gmra.mrb[0].mxu0 %v2630
        %v4092 = vpop.f32.mrb[0].mxu0
        %v4093 = vadd.f32 %v3916, %v4092
        %v4094 = vpop.f32.mrb[0].mxu0
        %v4095 = vpop.f32.mrb[0].mxu0
        %v4096 = vadd.f32 %v3919, %v4095
        %v4097 = vpop.f32.mrb[0].mxu0
        %4098 = vdwg.mxu0
        %v4099 = vmax.f32 %v3957, 0.0
        %v4100 = vmax.f32 %v3960, 0.0
        %v4101 = vmax.f32 %v3965, 0.0
        %v4102 = vmax.f32 %v3968, 0.0
        %v4103 = vmax.f32 %v3973, 0.0
        %v4104 = vmax.f32 %v3976, 0.0
        %v4105 = vmax.f32 %v3981, 0.0
        %v4106 = vmax.f32 %v3984, 0.0
        %v4107 = vmax.f32 %v3989, 0.0
        %v4108 = vmax.f32 %v3992, 0.0
        %v4109 = vmax.f32 %v3997, 0.0
        %v4110 = vmax.f32 %v4000, 0.0
        %v4111 = vmax.f32 %v4005, 0.0
        %v4112 = vmax.f32 %v4008, 0.0
        %v4113 = vmax.f32 %v4013, 0.0
        %v4114 = vmax.f32 %v4016, 0.0
        %v4115 = vmax.f32 %v4021, 0.0
        %v4116 = vmax.f32 %v4024, 0.0
        %v4117 = vmax.f32 %v4029, 0.0
        %v4118 = vmax.f32 %v4032, 0.0
        %v4119 = vmax.f32 %v4037, 0.0
        %v4120 = vmax.f32 %v4040, 0.0
        %v4121 = vmax.f32 %v4045, 0.0
        %v4122 = vmax.f32 %v4048, 0.0
        %v4123 = vmax.f32 %v4053, 0.0
        %v4124 = vmax.f32 %v4056, 0.0
        %v4125 = vmax.f32 %v4061, 0.0
        %v4126 = vmax.f32 %v4064, 0.0
        %v4127 = vmax.f32 %v4069, 0.0
        %v4128 = vmax.f32 %v4072, 0.0
        %v4129 = vmax.f32 %v4077, 0.0
        %v4130 = vmax.f32 %v4080, 0.0
        %v4131 = vmax.f32 %v4085, 0.0
        %v4132 = vmax.f32 %v4088, 0.0
        %v4133 = vmax.f32 %v4093, 0.0
        %v4134 = vmax.f32 %v4096, 0.0
        %v4135 = vld [vmem:[%s1] sm:$0xff]
        %v4136 = vld [vmem:[%s1 + $0x8] sm:$0xff]
        %v4137 = vld [vmem:[%s1 + $0x10] sm:$0xff]
        %v4138 = vld [vmem:[%s1 + $0x18] sm:$0xff]
        %v4139 = vld [vmem:[%s1 + $0x20] sm:$0xff]
        %v4140 = vld [vmem:[%s1 + $0x28] sm:$0xff]
        %v4141 = vld [vmem:[%s1 + $0x30] sm:$0xff]
        %v4142 = vld [vmem:[%s1 + $0x38] sm:$0xff]
        %v4143 = vld [vmem:[%s1 + $0x40] sm:$0xff]
        %v4144 = vld [vmem:[%s1 + $0x48] sm:$0xff]
        %v4145 = vld [vmem:[%s1 + $0x50] sm:$0xff]
        %v4146 = vld [vmem:[%s1 + $0x58] sm:$0xff]
        %v4147 = vld [vmem:[%s1 + $0x60] sm:$0xff]
        %v4148 = vld [vmem:[%s1 + $0x68] sm:$0xff]
        %v4149 = vld [vmem:[%s1 + $0x70] sm:$0xff]
        %v4150 = vld [vmem:[%s1 + $0x78] sm:$0xff]
        %v4151 = vld [vmem:[%s1 + $0x80] sm:$0xff]
        %v4152 = vld [vmem:[%s1 + $0x88] sm:$0xff]
        %v4153 = vld [vmem:[%s1 + $0x90] sm:$0xff]
        %v4154 = vld [vmem:[%s1 + $0x98] sm:$0xff]
        %v4155 = vld [vmem:[%s1 + $0xa0] sm:$0xff]
        %v4156 = vld [vmem:[%s1 + $0xa8] sm:$0xff]
        %v4157 = vld [vmem:[%s1 + $0xb0] sm:$0xff]
        %v4158 = vld [vmem:[%s1 + $0xb8] sm:$0xff]
        %v4159 = vld [vmem:[%s1 + $0xc0] sm:$0xff]
        %v4160 = vld [vmem:[%s1 + $0xc8] sm:$0xff]
        %v4161 = vld [vmem:[%s1 + $0xd0] sm:$0xff]
        %v4162 = vld [vmem:[%s1 + $0xd8] sm:$0xff]
        %v4163 = vld [vmem:[%s1 + $0xe0] sm:$0xff]
        %v4164 = vld [vmem:[%s1 + $0xe8] sm:$0xff]
        %v4165 = vld [vmem:[%s1 + $0xf0] sm:$0xff]
        %v4166 = vld [vmem:[%s1 + $0xf8] sm:$0xff]
        %v4167 = vld [vmem:[%s1 + $0x100] sm:$0xff]
        %v4168 = vld [vmem:[%s1 + $0x108] sm:$0xff]
        %v4169 = vld [vmem:[%s1 + $0x110] sm:$0xff]
        %v4170 = vld [vmem:[%s1 + $0x118] sm:$0xff]
        %4172 = vset.pattern.permute.xlu0 0
        %4173 = vperm.xlu0 %4172, %v4135
        %v4174 = vpop.permute.xlu0 %4173
        %4177 = vset.pattern.permute.xlu0 0
        %4178 = vperm.xlu0 %4177, %v4136
        %v4179 = vpop.permute.xlu0 %4178
        %4182 = vset.pattern.permute.xlu0 0
        %4183 = vperm.xlu0 %4182, %v4137
        %v4184 = vpop.permute.xlu0 %4183
        %4187 = vset.pattern.permute.xlu0 0
        %4188 = vperm.xlu0 %4187, %v4138
        %v4189 = vpop.permute.xlu0 %4188
        %4192 = vset.pattern.permute.xlu0 0
        %4193 = vperm.xlu0 %4192, %v4139
        %v4194 = vpop.permute.xlu0 %4193
        %4197 = vset.pattern.permute.xlu0 0
        %4198 = vperm.xlu0 %4197, %v4140
        %v4199 = vpop.permute.xlu0 %4198
        %4202 = vset.pattern.permute.xlu0 0
        %4203 = vperm.xlu0 %4202, %v4141
        %v4204 = vpop.permute.xlu0 %4203
        %4207 = vset.pattern.permute.xlu0 0
        %4208 = vperm.xlu0 %4207, %v4142
        %v4209 = vpop.permute.xlu0 %4208
        %4212 = vset.pattern.permute.xlu0 0
        %4213 = vperm.xlu0 %4212, %v4143
        %v4214 = vpop.permute.xlu0 %4213
        %4217 = vset.pattern.permute.xlu0 0
        %4218 = vperm.xlu0 %4217, %v4144
        %v4219 = vpop.permute.xlu0 %4218
        %4222 = vset.pattern.permute.xlu0 0
        %4223 = vperm.xlu0 %4222, %v4145
        %v4224 = vpop.permute.xlu0 %4223
        %4227 = vset.pattern.permute.xlu0 0
        %4228 = vperm.xlu0 %4227, %v4146
        %v4229 = vpop.permute.xlu0 %4228
        %4232 = vset.pattern.permute.xlu0 0
        %4233 = vperm.xlu0 %4232, %v4147
        %v4234 = vpop.permute.xlu0 %4233
        %4237 = vset.pattern.permute.xlu0 0
        %4238 = vperm.xlu0 %4237, %v4148
        %v4239 = vpop.permute.xlu0 %4238
        %4242 = vset.pattern.permute.xlu0 0
        %4243 = vperm.xlu0 %4242, %v4149
        %v4244 = vpop.permute.xlu0 %4243
        %4247 = vset.pattern.permute.xlu0 0
        %4248 = vperm.xlu0 %4247, %v4150
        %v4249 = vpop.permute.xlu0 %4248
        %4252 = vset.pattern.permute.xlu0 0
        %4253 = vperm.xlu0 %4252, %v4151
        %v4254 = vpop.permute.xlu0 %4253
        %4257 = vset.pattern.permute.xlu0 0
        %4258 = vperm.xlu0 %4257, %v4152
        %v4259 = vpop.permute.xlu0 %4258
        %4262 = vset.pattern.permute.xlu0 0
        %4263 = vperm.xlu0 %4262, %v4153
        %v4264 = vpop.permute.xlu0 %4263
        %4267 = vset.pattern.permute.xlu0 0
        %4268 = vperm.xlu0 %4267, %v4154
        %v4269 = vpop.permute.xlu0 %4268
        %4272 = vset.pattern.permute.xlu0 0
        %4273 = vperm.xlu0 %4272, %v4155
        %v4274 = vpop.permute.xlu0 %4273
        %4277 = vset.pattern.permute.xlu0 0
        %4278 = vperm.xlu0 %4277, %v4156
        %v4279 = vpop.permute.xlu0 %4278
        %4282 = vset.pattern.permute.xlu0 0
        %4283 = vperm.xlu0 %4282, %v4157
        %v4284 = vpop.permute.xlu0 %4283
        %4287 = vset.pattern.permute.xlu0 0
        %4288 = vperm.xlu0 %4287, %v4158
        %v4289 = vpop.permute.xlu0 %4288
        %4292 = vset.pattern.permute.xlu0 0
        %4293 = vperm.xlu0 %4292, %v4159
        %v4294 = vpop.permute.xlu0 %4293
        %4297 = vset.pattern.permute.xlu0 0
        %4298 = vperm.xlu0 %4297, %v4160
        %v4299 = vpop.permute.xlu0 %4298
        %4302 = vset.pattern.permute.xlu0 0
        %4303 = vperm.xlu0 %4302, %v4161
        %v4304 = vpop.permute.xlu0 %4303
        %4307 = vset.pattern.permute.xlu0 0
        %4308 = vperm.xlu0 %4307, %v4162
        %v4309 = vpop.permute.xlu0 %4308
        %4312 = vset.pattern.permute.xlu0 0
        %4313 = vperm.xlu0 %4312, %v4163
        %v4314 = vpop.permute.xlu0 %4313
        %4317 = vset.pattern.permute.xlu0 0
        %4318 = vperm.xlu0 %4317, %v4164
        %v4319 = vpop.permute.xlu0 %4318
        %4322 = vset.pattern.permute.xlu0 0
        %4323 = vperm.xlu0 %4322, %v4165
        %v4324 = vpop.permute.xlu0 %4323
        %4327 = vset.pattern.permute.xlu0 0
        %4328 = vperm.xlu0 %4327, %v4166
        %v4329 = vpop.permute.xlu0 %4328
        %4332 = vset.pattern.permute.xlu0 0
        %4333 = vperm.xlu0 %4332, %v4167
        %v4334 = vpop.permute.xlu0 %4333
        %4337 = vset.pattern.permute.xlu0 0
        %4338 = vperm.xlu0 %4337, %v4168
        %v4339 = vpop.permute.xlu0 %4338
        %4342 = vset.pattern.permute.xlu0 0
        %4343 = vperm.xlu0 %4342, %v4169
        %v4344 = vpop.permute.xlu0 %4343
        %4347 = vset.pattern.permute.xlu0 0
        %4348 = vperm.xlu0 %4347, %v4170
        %v4349 = vpop.permute.xlu0 %4348
        %v4351 = vmul.f32 %v4099, %v4174
        %v4352 = vmul.f32 %v4100, %v4179
        %v4353 = vmul.f32 %v4101, %v4184
        %v4354 = vmul.f32 %v4102, %v4189
        %v4355 = vmul.f32 %v4103, %v4194
        %v4356 = vmul.f32 %v4104, %v4199
        %v4357 = vmul.f32 %v4105, %v4204
        %v4358 = vmul.f32 %v4106, %v4209
        %v4359 = vmul.f32 %v4107, %v4214
        %v4360 = vmul.f32 %v4108, %v4219
        %v4361 = vmul.f32 %v4109, %v4224
        %v4362 = vmul.f32 %v4110, %v4229
        %v4363 = vmul.f32 %v4111, %v4234
        %v4364 = vmul.f32 %v4112, %v4239
        %v4365 = vmul.f32 %v4113, %v4244
        %v4366 = vmul.f32 %v4114, %v4249
        %v4367 = vmul.f32 %v4115, %v4254
        %v4368 = vmul.f32 %v4116, %v4259
        %v4369 = vmul.f32 %v4117, %v4264
        %v4370 = vmul.f32 %v4118, %v4269
        %v4371 = vmul.f32 %v4119, %v4274
        %v4372 = vmul.f32 %v4120, %v4279
        %v4373 = vmul.f32 %v4121, %v4284
        %v4374 = vmul.f32 %v4122, %v4289
        %v4375 = vmul.f32 %v4123, %v4294
        %v4376 = vmul.f32 %v4124, %v4299
        %v4377 = vmul.f32 %v4125, %v4304
        %v4378 = vmul.f32 %v4126, %v4309
        %v4379 = vmul.f32 %v4127, %v4314
        %v4380 = vmul.f32 %v4128, %v4319
        %v4381 = vmul.f32 %v4129, %v4324
        %v4382 = vmul.f32 %v4130, %v4329
        %v4383 = vmul.f32 %v4131, %v4334
        %v4384 = vmul.f32 %v4132, %v4339
        %v4385 = vmul.f32 %v4133, %v4344
        %v4386 = vmul.f32 %v4134, %v4349
        %4387 = vst [vmem:[#allocation3] sm:$0xf] 0
        %4388 = vst [vmem:[#allocation3 + $0x4] sm:$0xf] 0
        %vm4389 = vcmask 1041408
        %vm4390 = vsmask.f32 1280
        %vm4391 = vmand %vm4389, %vm4390
        %v4392 = vld [vmem:[#allocation3 + $0x8] sm:$0x3]
        %v4393 = vsel %vm4391, 0, %v4392
        %4394 = vst [vmem:[#allocation3 + $0x8] sm:$0x3] %v4393
        %vm4395 = vcmask 1043457
        %vm4396 = vsmask.f32 7942
        %vm4397 = vmand %vm4395, %vm4396
        %v4398 = vld [vmem:[#allocation3 + $0x98] sm:$0xe]
        %v4399 = vsel %vm4397, 0, %v4398
        %4400 = vst [vmem:[#allocation3 + $0x98] sm:$0xe] %v4399
        %4401 = vst [vmem:[#allocation3 + $0x9c] sm:$0xf] 0
        %4402 = vst [vmem:[#allocation3 + $0xa0] sm:$0xf] 0
        %v4403 = vpack.c.bf16 %v4352, %v4351
        %v4404 = vpack.c.bf16 %v4354, %v4353
        %v4405 = vpack.c.bf16 %v4356, %v4355
        %v4406 = vpack.c.bf16 %v4358, %v4357
        %v4407 = vpack.c.bf16 %v4360, %v4359
        %v4408 = vpack.c.bf16 %v4362, %v4361
        %v4409 = vpack.c.bf16 %v4364, %v4363
        %v4410 = vpack.c.bf16 %v4366, %v4365
        %v4411 = vpack.c.bf16 %v4368, %v4367
        %v4412 = vpack.c.bf16 %v4370, %v4369
        %v4413 = vpack.c.bf16 %v4372, %v4371
        %v4414 = vpack.c.bf16 %v4374, %v4373
        %v4415 = vpack.c.bf16 %v4376, %v4375
        %v4416 = vpack.c.bf16 %v4378, %v4377
        %v4417 = vpack.c.bf16 %v4380, %v4379
        %v4418 = vpack.c.bf16 %v4382, %v4381
        %v4419 = vpack.c.bf16 %v4384, %v4383
        %v4420 = vpack.c.bf16 %v4386, %v4385
        %v4439 = vunpack.c.l.b16 %v4403
        %v4440 = vunpack.c.h.b16 %v4403
        %v4441 = vunpack.c.l.b16 %v4404
        %v4442 = vunpack.c.h.b16 %v4404
        %v4443 = vunpack.c.l.b16 %v4405
        %v4444 = vunpack.c.h.b16 %v4405
        %v4445 = vunpack.c.l.b16 %v4406
        %v4446 = vunpack.c.h.b16 %v4406
        %v4447 = vunpack.c.l.b16 %v4407
        %v4448 = vunpack.c.h.b16 %v4407
        %v4449 = vunpack.c.l.b16 %v4408
        %v4450 = vunpack.c.h.b16 %v4408
        %v4451 = vunpack.c.l.b16 %v4409
        %v4452 = vunpack.c.h.b16 %v4409
        %v4453 = vunpack.c.l.b16 %v4410
        %v4454 = vunpack.c.h.b16 %v4410
        %v4455 = vunpack.c.l.b16 %v4411
        %v4456 = vunpack.c.h.b16 %v4411
        %v4457 = vunpack.c.l.b16 %v4412
        %v4458 = vunpack.c.h.b16 %v4412
        %v4459 = vunpack.c.l.b16 %v4413
        %v4460 = vunpack.c.h.b16 %v4413
        %v4461 = vunpack.c.l.b16 %v4414
        %v4462 = vunpack.c.h.b16 %v4414
        %v4463 = vunpack.c.l.b16 %v4415
        %v4464 = vunpack.c.h.b16 %v4415
        %v4465 = vunpack.c.l.b16 %v4416
        %v4466 = vunpack.c.h.b16 %v4416
        %v4467 = vunpack.c.l.b16 %v4417
        %v4468 = vunpack.c.h.b16 %v4417
        %v4469 = vunpack.c.l.b16 %v4418
        %v4470 = vunpack.c.h.b16 %v4418
        %v4471 = vunpack.c.l.b16 %v4419
        %v4472 = vunpack.c.h.b16 %v4419
        %v4473 = vunpack.c.l.b16 %v4420
        %v4474 = vunpack.c.h.b16 %v4420
        %v4475 = vpack.c.b16 %v4439, %v4439
        %v4476 = vpack.c.b16 %v4440, %v4440
        %v4477 = vpack.c.b16 %v4441, %v4441
        %v4478 = vpack.c.b16 %v4442, %v4442
        %v4479 = vpack.c.b16 %v4443, %v4443
        %v4480 = vpack.c.b16 %v4444, %v4444
        %v4481 = vpack.c.b16 %v4445, %v4445
        %v4482 = vpack.c.b16 %v4446, %v4446
        %v4483 = vpack.c.b16 %v4447, %v4447
        %v4484 = vpack.c.b16 %v4448, %v4448
        %v4485 = vpack.c.b16 %v4449, %v4449
        %v4486 = vpack.c.b16 %v4450, %v4450
        %v4487 = vpack.c.b16 %v4451, %v4451
        %v4488 = vpack.c.b16 %v4452, %v4452
        %v4489 = vpack.c.b16 %v4453, %v4453
        %v4490 = vpack.c.b16 %v4454, %v4454
        %v4491 = vpack.c.b16 %v4455, %v4455
        %v4492 = vpack.c.b16 %v4456, %v4456
        %v4493 = vpack.c.b16 %v4457, %v4457
        %v4494 = vpack.c.b16 %v4458, %v4458
        %v4495 = vpack.c.b16 %v4459, %v4459
        %v4496 = vpack.c.b16 %v4460, %v4460
        %v4497 = vpack.c.b16 %v4461, %v4461
        %v4498 = vpack.c.b16 %v4462, %v4462
        %v4499 = vpack.c.b16 %v4463, %v4463
        %v4500 = vpack.c.b16 %v4464, %v4464
        %v4501 = vpack.c.b16 %v4465, %v4465
        %v4502 = vpack.c.b16 %v4466, %v4466
        %v4503 = vpack.c.b16 %v4467, %v4467
        %v4504 = vpack.c.b16 %v4468, %v4468
        %v4505 = vpack.c.b16 %v4469, %v4469
        %v4506 = vpack.c.b16 %v4470, %v4470
        %v4507 = vpack.c.b16 %v4471, %v4471
        %v4508 = vpack.c.b16 %v4472, %v4472
        %v4509 = vpack.c.b16 %v4473, %v4473
        %v4510 = vpack.c.b16 %v4474, %v4474
        %vm4511 = vsmask.f32 5392
        %vm4512 = vmor %vm4390, %vm4511
        %v4514 = vshrl.u32 %v4475, 16
        %v4516 = vrot.slane %v4514, 6
        %v4517 = vshll.u32 %v4475, 16
        %v4519 = vrot.slane %v4517, 7
        %v4520 = vor.u32 %v4516, %v4519
        %v4521 = vrot.slane %v4520, 4
        %v4523 = vshrl.u32 %v4476, 16
        %v4525 = vrot.slane %v4523, 6
        %v4526 = vshll.u32 %v4476, 16
        %v4528 = vrot.slane %v4526, 7
        %v4529 = vor.u32 %v4525, %v4528
        %v4530 = vsel %vm4512, %v4521, %v4529
        %v4531 = vrot.slane %v4529, 4
        %v4533 = vshrl.u32 %v4477, 16
        %v4535 = vrot.slane %v4533, 6
        %v4536 = vshll.u32 %v4477, 16
        %v4538 = vrot.slane %v4536, 7
        %v4539 = vor.u32 %v4535, %v4538
        %v4540 = vsel %vm4512, %v4531, %v4539
        %v4541 = vrot.slane %v4539, 4
        %v4543 = vshrl.u32 %v4478, 16
        %v4545 = vrot.slane %v4543, 6
        %v4546 = vshll.u32 %v4478, 16
        %v4548 = vrot.slane %v4546, 7
        %v4549 = vor.u32 %v4545, %v4548
        %v4550 = vsel %vm4512, %v4541, %v4549
        %v4551 = vrot.slane %v4549, 4
        %v4553 = vshrl.u32 %v4479, 16
        %v4555 = vrot.slane %v4553, 6
        %v4556 = vshll.u32 %v4479, 16
        %v4558 = vrot.slane %v4556, 7
        %v4559 = vor.u32 %v4555, %v4558
        %v4560 = vsel %vm4512, %v4551, %v4559
        %v4561 = vrot.slane %v4559, 4
        %v4563 = vshrl.u32 %v4480, 16
        %v4565 = vrot.slane %v4563, 6
        %v4566 = vshll.u32 %v4480, 16
        %v4568 = vrot.slane %v4566, 7
        %v4569 = vor.u32 %v4565, %v4568
        %v4570 = vsel %vm4512, %v4561, %v4569
        %v4571 = vrot.slane %v4569, 4
        %v4573 = vshrl.u32 %v4481, 16
        %v4575 = vrot.slane %v4573, 6
        %v4576 = vshll.u32 %v4481, 16
        %v4578 = vrot.slane %v4576, 7
        %v4579 = vor.u32 %v4575, %v4578
        %v4580 = vsel %vm4512, %v4571, %v4579
        %v4581 = vrot.slane %v4579, 4
        %v4583 = vshrl.u32 %v4482, 16
        %v4585 = vrot.slane %v4583, 6
        %v4586 = vshll.u32 %v4482, 16
        %v4588 = vrot.slane %v4586, 7
        %v4589 = vor.u32 %v4585, %v4588
        %v4590 = vsel %vm4512, %v4581, %v4589
        %v4591 = vrot.slane %v4589, 4
        %v4593 = vshrl.u32 %v4483, 16
        %v4595 = vrot.slane %v4593, 6
        %v4596 = vshll.u32 %v4483, 16
        %v4598 = vrot.slane %v4596, 7
        %v4599 = vor.u32 %v4595, %v4598
        %v4600 = vsel %vm4512, %v4591, %v4599
        %v4601 = vrot.slane %v4599, 4
        %v4603 = vshrl.u32 %v4484, 16
        %v4605 = vrot.slane %v4603, 6
        %v4606 = vshll.u32 %v4484, 16
        %v4608 = vrot.slane %v4606, 7
        %v4609 = vor.u32 %v4605, %v4608
        %v4610 = vsel %vm4512, %v4601, %v4609
        %v4611 = vrot.slane %v4609, 4
        %v4613 = vshrl.u32 %v4485, 16
        %v4615 = vrot.slane %v4613, 6
        %v4616 = vshll.u32 %v4485, 16
        %v4618 = vrot.slane %v4616, 7
        %v4619 = vor.u32 %v4615, %v4618
        %v4620 = vsel %vm4512, %v4611, %v4619
        %v4621 = vrot.slane %v4619, 4
        %v4623 = vshrl.u32 %v4486, 16
        %v4625 = vrot.slane %v4623, 6
        %v4626 = vshll.u32 %v4486, 16
        %v4628 = vrot.slane %v4626, 7
        %v4629 = vor.u32 %v4625, %v4628
        %v4630 = vsel %vm4512, %v4621, %v4629
        %v4631 = vrot.slane %v4629, 4
        %v4633 = vshrl.u32 %v4487, 16
        %v4635 = vrot.slane %v4633, 6
        %v4636 = vshll.u32 %v4487, 16
        %v4638 = vrot.slane %v4636, 7
        %v4639 = vor.u32 %v4635, %v4638
        %v4640 = vsel %vm4512, %v4631, %v4639
        %v4641 = vrot.slane %v4639, 4
        %v4643 = vshrl.u32 %v4488, 16
        %v4645 = vrot.slane %v4643, 6
        %v4646 = vshll.u32 %v4488, 16
        %v4648 = vrot.slane %v4646, 7
        %v4649 = vor.u32 %v4645, %v4648
        %v4650 = vsel %vm4512, %v4641, %v4649
        %v4651 = vrot.slane %v4649, 4
        %v4653 = vshrl.u32 %v4489, 16
        %v4655 = vrot.slane %v4653, 6
        %v4656 = vshll.u32 %v4489, 16
        %v4658 = vrot.slane %v4656, 7
        %v4659 = vor.u32 %v4655, %v4658
        %v4660 = vsel %vm4512, %v4651, %v4659
        %v4661 = vrot.slane %v4659, 4
        %v4663 = vshrl.u32 %v4490, 16
        %v4665 = vrot.slane %v4663, 6
        %v4666 = vshll.u32 %v4490, 16
        %v4668 = vrot.slane %v4666, 7
        %v4669 = vor.u32 %v4665, %v4668
        %v4670 = vsel %vm4512, %v4661, %v4669
        %v4671 = vrot.slane %v4669, 4
        %v4673 = vshrl.u32 %v4491, 16
        %v4675 = vrot.slane %v4673, 6
        %v4676 = vshll.u32 %v4491, 16
        %v4678 = vrot.slane %v4676, 7
        %v4679 = vor.u32 %v4675, %v4678
        %v4680 = vsel %vm4512, %v4671, %v4679
        %v4681 = vrot.slane %v4679, 4
        %v4683 = vshrl.u32 %v4492, 16
        %v4685 = vrot.slane %v4683, 6
        %v4686 = vshll.u32 %v4492, 16
        %v4688 = vrot.slane %v4686, 7
        %v4689 = vor.u32 %v4685, %v4688
        %v4690 = vsel %vm4512, %v4681, %v4689
        %v4691 = vrot.slane %v4689, 4
        %v4693 = vshrl.u32 %v4493, 16
        %v4695 = vrot.slane %v4693, 6
        %v4696 = vshll.u32 %v4493, 16
        %v4698 = vrot.slane %v4696, 7
        %v4699 = vor.u32 %v4695, %v4698
        %v4700 = vsel %vm4512, %v4691, %v4699
        %v4701 = vrot.slane %v4699, 4
        %v4703 = vshrl.u32 %v4494, 16
        %v4705 = vrot.slane %v4703, 6
        %v4706 = vshll.u32 %v4494, 16
        %v4708 = vrot.slane %v4706, 7
        %v4709 = vor.u32 %v4705, %v4708
        %v4710 = vsel %vm4512, %v4701, %v4709
        %v4711 = vrot.slane %v4709, 4
        %v4713 = vshrl.u32 %v4495, 16
        %v4715 = vrot.slane %v4713, 6
        %v4716 = vshll.u32 %v4495, 16
        %v4718 = vrot.slane %v4716, 7
        %v4719 = vor.u32 %v4715, %v4718
        %v4720 = vsel %vm4512, %v4711, %v4719
        %v4721 = vrot.slane %v4719, 4
        %v4723 = vshrl.u32 %v4496, 16
        %v4725 = vrot.slane %v4723, 6
        %v4726 = vshll.u32 %v4496, 16
        %v4728 = vrot.slane %v4726, 7
        %v4729 = vor.u32 %v4725, %v4728
        %v4730 = vsel %vm4512, %v4721, %v4729
        %v4731 = vrot.slane %v4729, 4
        %v4733 = vshrl.u32 %v4497, 16
        %v4735 = vrot.slane %v4733, 6
        %v4736 = vshll.u32 %v4497, 16
        %v4738 = vrot.slane %v4736, 7
        %v4739 = vor.u32 %v4735, %v4738
        %v4740 = vsel %vm4512, %v4731, %v4739
        %v4741 = vrot.slane %v4739, 4
        %v4743 = vshrl.u32 %v4498, 16
        %v4745 = vrot.slane %v4743, 6
        %v4746 = vshll.u32 %v4498, 16
        %v4748 = vrot.slane %v4746, 7
        %v4749 = vor.u32 %v4745, %v4748
        %v4750 = vsel %vm4512, %v4741, %v4749
        %v4751 = vrot.slane %v4749, 4
        %v4753 = vshrl.u32 %v4499, 16
        %v4755 = vrot.slane %v4753, 6
        %v4756 = vshll.u32 %v4499, 16
        %v4758 = vrot.slane %v4756, 7
        %v4759 = vor.u32 %v4755, %v4758
        %v4760 = vsel %vm4512, %v4751, %v4759
        %v4761 = vrot.slane %v4759, 4
        %v4763 = vshrl.u32 %v4500, 16
        %v4765 = vrot.slane %v4763, 6
        %v4766 = vshll.u32 %v4500, 16
        %v4768 = vrot.slane %v4766, 7
        %v4769 = vor.u32 %v4765, %v4768
        %v4770 = vsel %vm4512, %v4761, %v4769
        %v4771 = vrot.slane %v4769, 4
        %v4773 = vshrl.u32 %v4501, 16
        %v4775 = vrot.slane %v4773, 6
        %v4776 = vshll.u32 %v4501, 16
        %v4778 = vrot.slane %v4776, 7
        %v4779 = vor.u32 %v4775, %v4778
        %v4780 = vsel %vm4512, %v4771, %v4779
        %v4781 = vrot.slane %v4779, 4
        %v4783 = vshrl.u32 %v4502, 16
        %v4785 = vrot.slane %v4783, 6
        %v4786 = vshll.u32 %v4502, 16
        %v4788 = vrot.slane %v4786, 7
        %v4789 = vor.u32 %v4785, %v4788
        %v4790 = vsel %vm4512, %v4781, %v4789
        %v4791 = vrot.slane %v4789, 4
        %v4793 = vshrl.u32 %v4503, 16
        %v4795 = vrot.slane %v4793, 6
        %v4796 = vshll.u32 %v4503, 16
        %v4798 = vrot.slane %v4796, 7
        %v4799 = vor.u32 %v4795, %v4798
        %v4800 = vsel %vm4512, %v4791, %v4799
        %v4801 = vrot.slane %v4799, 4
        %v4803 = vshrl.u32 %v4504, 16
        %v4805 = vrot.slane %v4803, 6
        %v4806 = vshll.u32 %v4504, 16
        %v4808 = vrot.slane %v4806, 7
        %v4809 = vor.u32 %v4805, %v4808
        %v4810 = vsel %vm4512, %v4801, %v4809
        %v4811 = vrot.slane %v4809, 4
        %v4813 = vshrl.u32 %v4505, 16
        %v4815 = vrot.slane %v4813, 6
        %v4816 = vshll.u32 %v4505, 16
        %v4818 = vrot.slane %v4816, 7
        %v4819 = vor.u32 %v4815, %v4818
        %v4820 = vsel %vm4512, %v4811, %v4819
        %v4821 = vrot.slane %v4819, 4
        %v4823 = vshrl.u32 %v4506, 16
        %v4825 = vrot.slane %v4823, 6
        %v4826 = vshll.u32 %v4506, 16
        %v4828 = vrot.slane %v4826, 7
        %v4829 = vor.u32 %v4825, %v4828
        %v4830 = vsel %vm4512, %v4821, %v4829
        %v4831 = vrot.slane %v4829, 4
        %v4833 = vshrl.u32 %v4507, 16
        %v4835 = vrot.slane %v4833, 6
        %v4836 = vshll.u32 %v4507, 16
        %v4838 = vrot.slane %v4836, 7
        %v4839 = vor.u32 %v4835, %v4838
        %v4840 = vsel %vm4512, %v4831, %v4839
        %v4841 = vrot.slane %v4839, 4
        %v4843 = vshrl.u32 %v4508, 16
        %v4845 = vrot.slane %v4843, 6
        %v4846 = vshll.u32 %v4508, 16
        %v4848 = vrot.slane %v4846, 7
        %v4849 = vor.u32 %v4845, %v4848
        %v4850 = vsel %vm4512, %v4841, %v4849
        %v4851 = vrot.slane %v4849, 4
        %v4853 = vshrl.u32 %v4509, 16
        %v4855 = vrot.slane %v4853, 6
        %v4856 = vshll.u32 %v4509, 16
        %v4858 = vrot.slane %v4856, 7
        %v4859 = vor.u32 %v4855, %v4858
        %v4860 = vsel %vm4512, %v4851, %v4859
        %v4861 = vrot.slane %v4859, 4
        %v4863 = vshrl.u32 %v4510, 16
        %v4865 = vrot.slane %v4863, 6
        %v4866 = vshll.u32 %v4510, 16
        %v4868 = vrot.slane %v4866, 7
        %v4869 = vor.u32 %v4865, %v4868
        %v4870 = vsel %vm4512, %v4861, %v4869
        %v4871 = vrot.slane %v4869, 4
        %v4909 = vld [vmem:[#allocation3 + $0x8] sm:$0xe]
        %v4910 = vsel %vm4397, %v4520, %v4909
        %4911 = vst [vmem:[#allocation3 + $0x8] sm:$0xe] %v4910
        %4912 = vst [vmem:[#allocation3 + $0xc] sm:$0xf] %v4530
        %4913 = vst [vmem:[#allocation3 + $0x10] sm:$0xf] %v4540
        %4914 = vst [vmem:[#allocation3 + $0x14] sm:$0xf] %v4550
        %4915 = vst [vmem:[#allocation3 + $0x18] sm:$0xf] %v4560
        %4916 = vst [vmem:[#allocation3 + $0x1c] sm:$0xf] %v4570
        %4917 = vst [vmem:[#allocation3 + $0x20] sm:$0xf] %v4580
        %4918 = vst [vmem:[#allocation3 + $0x24] sm:$0xf] %v4590
        %4919 = vst [vmem:[#allocation3 + $0x28] sm:$0xf] %v4600
        %4920 = vst [vmem:[#allocation3 + $0x2c] sm:$0xf] %v4610
        %4921 = vst [vmem:[#allocation3 + $0x30] sm:$0xf] %v4620
        %4922 = vst [vmem:[#allocation3 + $0x34] sm:$0xf] %v4630
        %4923 = vst [vmem:[#allocation3 + $0x38] sm:$0xf] %v4640
        %4924 = vst [vmem:[#allocation3 + $0x3c] sm:$0xf] %v4650
        %4925 = vst [vmem:[#allocation3 + $0x40] sm:$0xf] %v4660
        %4926 = vst [vmem:[#allocation3 + $0x44] sm:$0xf] %v4670
        %4927 = vst [vmem:[#allocation3 + $0x48] sm:$0xf] %v4680
        %4928 = vst [vmem:[#allocation3 + $0x4c] sm:$0xf] %v4690
        %4929 = vst [vmem:[#allocation3 + $0x50] sm:$0xf] %v4700
        %4930 = vst [vmem:[#allocation3 + $0x54] sm:$0xf] %v4710
        %4931 = vst [vmem:[#allocation3 + $0x58] sm:$0xf] %v4720
        %4932 = vst [vmem:[#allocation3 + $0x5c] sm:$0xf] %v4730
        %4933 = vst [vmem:[#allocation3 + $0x60] sm:$0xf] %v4740
        %4934 = vst [vmem:[#allocation3 + $0x64] sm:$0xf] %v4750
        %4935 = vst [vmem:[#allocation3 + $0x68] sm:$0xf] %v4760
        %4936 = vst [vmem:[#allocation3 + $0x6c] sm:$0xf] %v4770
        %4937 = vst [vmem:[#allocation3 + $0x70] sm:$0xf] %v4780
        %4938 = vst [vmem:[#allocation3 + $0x74] sm:$0xf] %v4790
        %4939 = vst [vmem:[#allocation3 + $0x78] sm:$0xf] %v4800
        %4940 = vst [vmem:[#allocation3 + $0x7c] sm:$0xf] %v4810
        %4941 = vst [vmem:[#allocation3 + $0x80] sm:$0xf] %v4820
        %4942 = vst [vmem:[#allocation3 + $0x84] sm:$0xf] %v4830
        %4943 = vst [vmem:[#allocation3 + $0x88] sm:$0xf] %v4840
        %4944 = vst [vmem:[#allocation3 + $0x8c] sm:$0xf] %v4850
        %4945 = vst [vmem:[#allocation3 + $0x90] sm:$0xf] %v4860
        %4946 = vst [vmem:[#allocation3 + $0x94] sm:$0xf] %v4870
        %v4947 = vld [vmem:[#allocation3 + $0x98] sm:$0x3]
        %v4948 = vsel %vm4391, %v4871, %v4947
        %4949 = vst [vmem:[#allocation3 + $0x98] sm:$0x3] %v4948
        %v4950 = vld [vmem:[#allocation3] sm:$0xf]
        %v4951 = vld [vmem:[#allocation3 + $0x4] sm:$0xf]
        %v4952 = vld [vmem:[#allocation3 + $0x8] sm:$0xf]
        %v4953 = vld [vmem:[#allocation3 + $0xc] sm:$0xf]
        %v4954 = vld [vmem:[#allocation3 + $0x10] sm:$0xf]
        %v4955 = vld [vmem:[#allocation3 + $0x14] sm:$0xf]
        %v4956 = vld [vmem:[#allocation3 + $0x18] sm:$0xf]
        %v4957 = vld [vmem:[#allocation3 + $0x1c] sm:$0xf]
        %v4958 = vld [vmem:[#allocation3 + $0x20] sm:$0xf]
        %v4959 = vld [vmem:[#allocation3 + $0x24] sm:$0xf]
        %v4960 = vld [vmem:[#allocation3 + $0x28] sm:$0xf]
        %v4961 = vld [vmem:[#allocation3 + $0x2c] sm:$0xf]
        %v4962 = vld [vmem:[#allocation3 + $0x30] sm:$0xf]
        %v4963 = vld [vmem:[#allocation3 + $0x34] sm:$0xf]
        %v4964 = vld [vmem:[#allocation3 + $0x38] sm:$0xf]
        %v4965 = vld [vmem:[#allocation3 + $0x3c] sm:$0xf]
        %v4966 = vld [vmem:[#allocation3 + $0x40] sm:$0xf]
        %v4967 = vld [vmem:[#allocation3 + $0x44] sm:$0xf]
        %v4968 = vld [vmem:[#allocation3 + $0x48] sm:$0xf]
        %v4969 = vld [vmem:[#allocation3 + $0x4c] sm:$0xf]
        %v4970 = vld [vmem:[#allocation3 + $0x50] sm:$0xf]
        %v4971 = vld [vmem:[#allocation3 + $0x54] sm:$0xf]
        %v4972 = vld [vmem:[#allocation3 + $0x58] sm:$0xf]
        %v4973 = vld [vmem:[#allocation3 + $0x5c] sm:$0xf]
        %v4974 = vld [vmem:[#allocation3 + $0x60] sm:$0xf]
        %v4975 = vld [vmem:[#allocation3 + $0x64] sm:$0xf]
        %v4976 = vld [vmem:[#allocation3 + $0x68] sm:$0xf]
        %v4977 = vld [vmem:[#allocation3 + $0x6c] sm:$0xf]
        %v4978 = vld [vmem:[#allocation3 + $0x70] sm:$0xf]
        %v4979 = vld [vmem:[#allocation3 + $0x74] sm:$0xf]
        %v4980 = vld [vmem:[#allocation3 + $0x78] sm:$0xf]
        %v4981 = vld [vmem:[#allocation3 + $0x7c] sm:$0xf]
        %v4982 = vld [vmem:[#allocation3 + $0x80] sm:$0xf]
        %v4983 = vld [vmem:[#allocation3 + $0x84] sm:$0xf]
        %v4984 = vld [vmem:[#allocation3 + $0x88] sm:$0xf]
        %v4985 = vld [vmem:[#allocation3 + $0x8c] sm:$0xf]
        %v5022 = vunpack.c.l.b16 %v4950
        %v5023 = vunpack.c.l.b16 %v4951
        %v5024 = vunpack.c.l.b16 %v4952
        %v5025 = vunpack.c.l.b16 %v4953
        %v5026 = vunpack.c.l.b16 %v4954
        %v5027 = vunpack.c.l.b16 %v4955
        %v5028 = vunpack.c.l.b16 %v4956
        %v5029 = vunpack.c.l.b16 %v4957
        %v5030 = vunpack.c.l.b16 %v4958
        %v5031 = vunpack.c.l.b16 %v4959
        %v5032 = vunpack.c.l.b16 %v4960
        %v5033 = vunpack.c.l.b16 %v4961
        %v5034 = vunpack.c.l.b16 %v4962
        %v5035 = vunpack.c.l.b16 %v4963
        %v5036 = vunpack.c.l.b16 %v4964
        %v5037 = vunpack.c.l.b16 %v4965
        %v5038 = vunpack.c.l.b16 %v4966
        %v5039 = vunpack.c.l.b16 %v4967
        %v5040 = vunpack.c.l.b16 %v4968
        %v5041 = vunpack.c.l.b16 %v4969
        %v5042 = vunpack.c.l.b16 %v4970
        %v5043 = vunpack.c.l.b16 %v4971
        %v5044 = vunpack.c.l.b16 %v4972
        %v5045 = vunpack.c.l.b16 %v4973
        %v5046 = vunpack.c.l.b16 %v4974
        %v5047 = vunpack.c.l.b16 %v4975
        %v5048 = vunpack.c.l.b16 %v4976
        %v5049 = vunpack.c.l.b16 %v4977
        %v5050 = vunpack.c.l.b16 %v4978
        %v5051 = vunpack.c.l.b16 %v4979
        %v5052 = vunpack.c.l.b16 %v4980
        %v5053 = vunpack.c.l.b16 %v4981
        %v5054 = vunpack.c.l.b16 %v4982
        %v5055 = vunpack.c.l.b16 %v4983
        %v5056 = vunpack.c.l.b16 %v4984
        %v5057 = vunpack.c.l.b16 %v4985
        %v5058 = vpack.c.b16 %v5023, %v5022
        %v5059 = vpack.c.b16 %v5025, %v5024
        %v5060 = vpack.c.b16 %v5027, %v5026
        %v5061 = vpack.c.b16 %v5029, %v5028
        %v5062 = vpack.c.b16 %v5031, %v5030
        %v5063 = vpack.c.b16 %v5033, %v5032
        %v5064 = vpack.c.b16 %v5035, %v5034
        %v5065 = vpack.c.b16 %v5037, %v5036
        %v5066 = vpack.c.b16 %v5039, %v5038
        %v5067 = vpack.c.b16 %v5041, %v5040
        %v5068 = vpack.c.b16 %v5043, %v5042
        %v5069 = vpack.c.b16 %v5045, %v5044
        %v5070 = vpack.c.b16 %v5047, %v5046
        %v5071 = vpack.c.b16 %v5049, %v5048
        %v5072 = vpack.c.b16 %v5051, %v5050
        %v5073 = vpack.c.b16 %v5053, %v5052
        %v5074 = vpack.c.b16 %v5055, %v5054
        %v5075 = vpack.c.b16 %v5057, %v5056
        %5094 = vst [vmem:[#allocation2] sm:$0xff] %v5058
        %5095 = vst [vmem:[#allocation2 + $0x48] sm:$0xff] %v5059
        %5096 = vst [vmem:[#allocation2 + $0x90] sm:$0xff] %v5060
        %5097 = vst [vmem:[#allocation2 + $0xd8] sm:$0xff] %v5061
        %5098 = vst [vmem:[#allocation2 + $0x120] sm:$0xff] %v5062
        %5099 = vst [vmem:[#allocation2 + $0x168] sm:$0xff] %v5063
        %5100 = vst [vmem:[#allocation2 + $0x1b0] sm:$0xff] %v5064
        %5101 = vst [vmem:[#allocation2 + $0x1f8] sm:$0xff] %v5065
        %5102 = vst [vmem:[#allocation2 + $0x240] sm:$0xff] %v5066
        %5103 = vst [vmem:[#allocation2 + $0x288] sm:$0xff] %v5067
        %5104 = vst [vmem:[#allocation2 + $0x2d0] sm:$0xff] %v5068
        %5105 = vst [vmem:[#allocation2 + $0x318] sm:$0xff] %v5069
        %5106 = vst [vmem:[#allocation2 + $0x360] sm:$0xff] %v5070
        %5107 = vst [vmem:[#allocation2 + $0x3a8] sm:$0xff] %v5071
        %5108 = vst [vmem:[#allocation2 + $0x3f0] sm:$0xff] %v5072
        %5109 = vst [vmem:[#allocation2 + $0x438] sm:$0xff] %v5073
        %5110 = vst [vmem:[#allocation2 + $0x480] sm:$0xff] %v5074
        %5111 = vst [vmem:[#allocation2 + $0x4c8] sm:$0xff] %v5075
        %v5112 = vld [vmem:[#allocation3] sm:$0xf]
        %v5113 = vld [vmem:[#allocation3 + $0x4] sm:$0xf]
        %v5114 = vld [vmem:[#allocation3 + $0x8] sm:$0xf]
        %v5115 = vld [vmem:[#allocation3 + $0xc] sm:$0xf]
        %v5116 = vld [vmem:[#allocation3 + $0x10] sm:$0xf]
        %v5117 = vld [vmem:[#allocation3 + $0x14] sm:$0xf]
        %v5118 = vld [vmem:[#allocation3 + $0x18] sm:$0xf]
        %v5119 = vld [vmem:[#allocation3 + $0x1c] sm:$0xf]
        %v5120 = vld [vmem:[#allocation3 + $0x20] sm:$0xf]
        %v5121 = vld [vmem:[#allocation3 + $0x24] sm:$0xf]
        %v5122 = vld [vmem:[#allocation3 + $0x28] sm:$0xf]
        %v5123 = vld [vmem:[#allocation3 + $0x2c] sm:$0xf]
        %v5124 = vld [vmem:[#allocation3 + $0x30] sm:$0xf]
        %v5125 = vld [vmem:[#allocation3 + $0x34] sm:$0xf]
        %v5126 = vld [vmem:[#allocation3 + $0x38] sm:$0xf]
        %v5127 = vld [vmem:[#allocation3 + $0x3c] sm:$0xf]
        %v5128 = vld [vmem:[#allocation3 + $0x40] sm:$0xf]
        %v5129 = vld [vmem:[#allocation3 + $0x44] sm:$0xf]
        %v5130 = vld [vmem:[#allocation3 + $0x48] sm:$0xf]
        %v5131 = vld [vmem:[#allocation3 + $0x4c] sm:$0xf]
        %v5132 = vld [vmem:[#allocation3 + $0x50] sm:$0xf]
        %v5133 = vld [vmem:[#allocation3 + $0x54] sm:$0xf]
        %v5134 = vld [vmem:[#allocation3 + $0x58] sm:$0xf]
        %v5135 = vld [vmem:[#allocation3 + $0x5c] sm:$0xf]
        %v5136 = vld [vmem:[#allocation3 + $0x60] sm:$0xf]
        %v5137 = vld [vmem:[#allocation3 + $0x64] sm:$0xf]
        %v5138 = vld [vmem:[#allocation3 + $0x68] sm:$0xf]
        %v5139 = vld [vmem:[#allocation3 + $0x6c] sm:$0xf]
        %v5140 = vld [vmem:[#allocation3 + $0x70] sm:$0xf]
        %v5141 = vld [vmem:[#allocation3 + $0x74] sm:$0xf]
        %v5142 = vld [vmem:[#allocation3 + $0x78] sm:$0xf]
        %v5143 = vld [vmem:[#allocation3 + $0x7c] sm:$0xf]
        %v5144 = vld [vmem:[#allocation3 + $0x80] sm:$0xf]
        %v5145 = vld [vmem:[#allocation3 + $0x84] sm:$0xf]
        %v5146 = vld [vmem:[#allocation3 + $0x88] sm:$0xf]
        %v5147 = vld [vmem:[#allocation3 + $0x8c] sm:$0xf]
        %v5148 = vld [vmem:[#allocation3 + $0x90] sm:$0x1]
        %v5186 = vunpack.c.l.b16 %v5112
        %v5187 = vunpack.c.l.b16 %v5113
        %v5188 = vunpack.c.l.b16 %v5114
        %v5189 = vunpack.c.l.b16 %v5115
        %v5190 = vunpack.c.l.b16 %v5116
        %v5191 = vunpack.c.l.b16 %v5117
        %v5192 = vunpack.c.l.b16 %v5118
        %v5193 = vunpack.c.l.b16 %v5119
        %v5194 = vunpack.c.l.b16 %v5120
        %v5195 = vunpack.c.l.b16 %v5121
        %v5196 = vunpack.c.l.b16 %v5122
        %v5197 = vunpack.c.l.b16 %v5123
        %v5198 = vunpack.c.l.b16 %v5124
        %v5199 = vunpack.c.l.b16 %v5125
        %v5200 = vunpack.c.l.b16 %v5126
        %v5201 = vunpack.c.l.b16 %v5127
        %v5202 = vunpack.c.l.b16 %v5128
        %v5203 = vunpack.c.l.b16 %v5129
        %v5204 = vunpack.c.l.b16 %v5130
        %v5205 = vunpack.c.l.b16 %v5131
        %v5206 = vunpack.c.l.b16 %v5132
        %v5207 = vunpack.c.l.b16 %v5133
        %v5208 = vunpack.c.l.b16 %v5134
        %v5209 = vunpack.c.l.b16 %v5135
        %v5210 = vunpack.c.l.b16 %v5136
        %v5211 = vunpack.c.l.b16 %v5137
        %v5212 = vunpack.c.l.b16 %v5138
        %v5213 = vunpack.c.l.b16 %v5139
        %v5214 = vunpack.c.l.b16 %v5140
        %v5215 = vunpack.c.l.b16 %v5141
        %v5216 = vunpack.c.l.b16 %v5142
        %v5217 = vunpack.c.l.b16 %v5143
        %v5218 = vunpack.c.l.b16 %v5144
        %v5219 = vunpack.c.l.b16 %v5145
        %v5220 = vunpack.c.l.b16 %v5146
        %v5221 = vunpack.c.l.b16 %v5147
        %v5222 = vunpack.c.l.b16 %v5148
        %v5223 = vpack.c.b16 %v5187, %v5186
        %v5224 = vpack.c.b16 %v5189, %v5188
        %v5225 = vpack.c.b16 %v5191, %v5190
        %v5226 = vpack.c.b16 %v5193, %v5192
        %v5227 = vpack.c.b16 %v5195, %v5194
        %v5228 = vpack.c.b16 %v5197, %v5196
        %v5229 = vpack.c.b16 %v5199, %v5198
        %v5230 = vpack.c.b16 %v5201, %v5200
        %v5231 = vpack.c.b16 %v5203, %v5202
        %v5232 = vpack.c.b16 %v5205, %v5204
        %v5233 = vpack.c.b16 %v5207, %v5206
        %v5234 = vpack.c.b16 %v5209, %v5208
        %v5235 = vpack.c.b16 %v5211, %v5210
        %v5236 = vpack.c.b16 %v5213, %v5212
        %v5237 = vpack.c.b16 %v5215, %v5214
        %v5238 = vpack.c.b16 %v5217, %v5216
        %v5239 = vpack.c.b16 %v5219, %v5218
        %v5240 = vpack.c.b16 %v5221, %v5220
        %v5241 = vpack.c.b16 %v5222, %v5222
        %v5243 = vshrl.u32 %v5223, 16
        %v5245 = vshll.u32 %v5223, 16
        %v5247 = vrot.slane %v5245, 1
        %v5248 = vor.u32 %v5243, %v5247
        %v5250 = vshll.u32 %v5224, 16
        %v5252 = vrot.slane %v5250, 1
        %v5253 = vsel %vm592, %v5248, %v5252
        %v5254 = vshrl.u32 %v5224, 16
        %v5256 = vor.u32 %v5254, %v5252
        %v5258 = vshll.u32 %v5225, 16
        %v5260 = vrot.slane %v5258, 1
        %v5261 = vsel %vm592, %v5256, %v5260
        %v5262 = vshrl.u32 %v5225, 16
        %v5264 = vor.u32 %v5262, %v5260
        %v5266 = vshll.u32 %v5226, 16
        %v5268 = vrot.slane %v5266, 1
        %v5269 = vsel %vm592, %v5264, %v5268
        %v5270 = vshrl.u32 %v5226, 16
        %v5272 = vor.u32 %v5270, %v5268
        %v5274 = vshll.u32 %v5227, 16
        %v5276 = vrot.slane %v5274, 1
        %v5277 = vsel %vm592, %v5272, %v5276
        %v5278 = vshrl.u32 %v5227, 16
        %v5280 = vor.u32 %v5278, %v5276
        %v5282 = vshll.u32 %v5228, 16
        %v5284 = vrot.slane %v5282, 1
        %v5285 = vsel %vm592, %v5280, %v5284
        %v5286 = vshrl.u32 %v5228, 16
        %v5288 = vor.u32 %v5286, %v5284
        %v5290 = vshll.u32 %v5229, 16
        %v5292 = vrot.slane %v5290, 1
        %v5293 = vsel %vm592, %v5288, %v5292
        %v5294 = vshrl.u32 %v5229, 16
        %v5296 = vor.u32 %v5294, %v5292
        %v5298 = vshll.u32 %v5230, 16
        %v5300 = vrot.slane %v5298, 1
        %v5301 = vsel %vm592, %v5296, %v5300
        %v5302 = vshrl.u32 %v5230, 16
        %v5304 = vor.u32 %v5302, %v5300
        %v5306 = vshll.u32 %v5231, 16
        %v5308 = vrot.slane %v5306, 1
        %v5309 = vsel %vm592, %v5304, %v5308
        %v5310 = vshrl.u32 %v5231, 16
        %v5312 = vor.u32 %v5310, %v5308
        %v5314 = vshll.u32 %v5232, 16
        %v5316 = vrot.slane %v5314, 1
        %v5317 = vsel %vm592, %v5312, %v5316
        %v5318 = vshrl.u32 %v5232, 16
        %v5320 = vor.u32 %v5318, %v5316
        %v5322 = vshll.u32 %v5233, 16
        %v5324 = vrot.slane %v5322, 1
        %v5325 = vsel %vm592, %v5320, %v5324
        %v5326 = vshrl.u32 %v5233, 16
        %v5328 = vor.u32 %v5326, %v5324
        %v5330 = vshll.u32 %v5234, 16
        %v5332 = vrot.slane %v5330, 1
        %v5333 = vsel %vm592, %v5328, %v5332
        %v5334 = vshrl.u32 %v5234, 16
        %v5336 = vor.u32 %v5334, %v5332
        %v5338 = vshll.u32 %v5235, 16
        %v5340 = vrot.slane %v5338, 1
        %v5341 = vsel %vm592, %v5336, %v5340
        %v5342 = vshrl.u32 %v5235, 16
        %v5344 = vor.u32 %v5342, %v5340
        %v5346 = vshll.u32 %v5236, 16
        %v5348 = vrot.slane %v5346, 1
        %v5349 = vsel %vm592, %v5344, %v5348
        %v5350 = vshrl.u32 %v5236, 16
        %v5352 = vor.u32 %v5350, %v5348
        %v5354 = vshll.u32 %v5237, 16
        %v5356 = vrot.slane %v5354, 1
        %v5357 = vsel %vm592, %v5352, %v5356
        %v5358 = vshrl.u32 %v5237, 16
        %v5360 = vor.u32 %v5358, %v5356
        %v5362 = vshll.u32 %v5238, 16
        %v5364 = vrot.slane %v5362, 1
        %v5365 = vsel %vm592, %v5360, %v5364
        %v5366 = vshrl.u32 %v5238, 16
        %v5368 = vor.u32 %v5366, %v5364
        %v5370 = vshll.u32 %v5239, 16
        %v5372 = vrot.slane %v5370, 1
        %v5373 = vsel %vm592, %v5368, %v5372
        %v5374 = vshrl.u32 %v5239, 16
        %v5376 = vor.u32 %v5374, %v5372
        %v5378 = vshll.u32 %v5240, 16
        %v5380 = vrot.slane %v5378, 1
        %v5381 = vsel %vm592, %v5376, %v5380
        %v5382 = vshrl.u32 %v5240, 16
        %v5384 = vor.u32 %v5382, %v5380
        %v5386 = vshll.u32 %v5241, 16
        %v5388 = vrot.slane %v5386, 1
        %v5389 = vsel %vm592, %v5384, %v5388
        %5408 = vst [vmem:[#allocation2 + $0x8] sm:$0xff] %v5253
        %5409 = vst [vmem:[#allocation2 + $0x50] sm:$0xff] %v5261
        %5410 = vst [vmem:[#allocation2 + $0x98] sm:$0xff] %v5269
        %5411 = vst [vmem:[#allocation2 + $0xe0] sm:$0xff] %v5277
        %5412 = vst [vmem:[#allocation2 + $0x128] sm:$0xff] %v5285
        %5413 = vst [vmem:[#allocation2 + $0x170] sm:$0xff] %v5293
        %5414 = vst [vmem:[#allocation2 + $0x1b8] sm:$0xff] %v5301
        %5415 = vst [vmem:[#allocation2 + $0x200] sm:$0xff] %v5309
        %5416 = vst [vmem:[#allocation2 + $0x248] sm:$0xff] %v5317
        %5417 = vst [vmem:[#allocation2 + $0x290] sm:$0xff] %v5325
        %5418 = vst [vmem:[#allocation2 + $0x2d8] sm:$0xff] %v5333
        %5419 = vst [vmem:[#allocation2 + $0x320] sm:$0xff] %v5341
        %5420 = vst [vmem:[#allocation2 + $0x368] sm:$0xff] %v5349
        %5421 = vst [vmem:[#allocation2 + $0x3b0] sm:$0xff] %v5357
        %5422 = vst [vmem:[#allocation2 + $0x3f8] sm:$0xff] %v5365
        %5423 = vst [vmem:[#allocation2 + $0x440] sm:$0xff] %v5373
        %5424 = vst [vmem:[#allocation2 + $0x488] sm:$0xff] %v5381
        %5425 = vst [vmem:[#allocation2 + $0x4d0] sm:$0xff] %v5389
        %v5426 = vld [vmem:[#allocation3] sm:$0xe]
        %v5427 = vld [vmem:[#allocation3 + $0x4] sm:$0xf]
        %v5428 = vld [vmem:[#allocation3 + $0x8] sm:$0xf]
        %v5429 = vld [vmem:[#allocation3 + $0xc] sm:$0xf]
        %v5430 = vld [vmem:[#allocation3 + $0x10] sm:$0xf]
        %v5431 = vld [vmem:[#allocation3 + $0x14] sm:$0xf]
        %v5432 = vld [vmem:[#allocation3 + $0x18] sm:$0xf]
        %v5433 = vld [vmem:[#allocation3 + $0x1c] sm:$0xf]
        %v5434 = vld [vmem:[#allocation3 + $0x20] sm:$0xf]
        %v5435 = vld [vmem:[#allocation3 + $0x24] sm:$0xf]
        %v5436 = vld [vmem:[#allocation3 + $0x28] sm:$0xf]
        %v5437 = vld [vmem:[#allocation3 + $0x2c] sm:$0xf]
        %v5438 = vld [vmem:[#allocation3 + $0x30] sm:$0xf]
        %v5439 = vld [vmem:[#allocation3 + $0x34] sm:$0xf]
        %v5440 = vld [vmem:[#allocation3 + $0x38] sm:$0xf]
        %v5441 = vld [vmem:[#allocation3 + $0x3c] sm:$0xf]
        %v5442 = vld [vmem:[#allocation3 + $0x40] sm:$0xf]
        %v5443 = vld [vmem:[#allocation3 + $0x44] sm:$0xf]
        %v5444 = vld [vmem:[#allocation3 + $0x48] sm:$0xf]
        %v5445 = vld [vmem:[#allocation3 + $0x4c] sm:$0xf]
        %v5446 = vld [vmem:[#allocation3 + $0x50] sm:$0xf]
        %v5447 = vld [vmem:[#allocation3 + $0x54] sm:$0xf]
        %v5448 = vld [vmem:[#allocation3 + $0x58] sm:$0xf]
        %v5449 = vld [vmem:[#allocation3 + $0x5c] sm:$0xf]
        %v5450 = vld [vmem:[#allocation3 + $0x60] sm:$0xf]
        %v5451 = vld [vmem:[#allocation3 + $0x64] sm:$0xf]
        %v5452 = vld [vmem:[#allocation3 + $0x68] sm:$0xf]
        %v5453 = vld [vmem:[#allocation3 + $0x6c] sm:$0xf]
        %v5454 = vld [vmem:[#allocation3 + $0x70] sm:$0xf]
        %v5455 = vld [vmem:[#allocation3 + $0x74] sm:$0xf]
        %v5456 = vld [vmem:[#allocation3 + $0x78] sm:$0xf]
        %v5457 = vld [vmem:[#allocation3 + $0x7c] sm:$0xf]
        %v5458 = vld [vmem:[#allocation3 + $0x80] sm:$0xf]
        %v5459 = vld [vmem:[#allocation3 + $0x84] sm:$0xf]
        %v5460 = vld [vmem:[#allocation3 + $0x88] sm:$0xf]
        %v5461 = vld [vmem:[#allocation3 + $0x8c] sm:$0xf]
        %v5462 = vld [vmem:[#allocation3 + $0x90] sm:$0x1]
        %v5500 = vunpack.c.l.b16 %v5426
        %v5501 = vunpack.c.l.b16 %v5427
        %v5502 = vunpack.c.l.b16 %v5428
        %v5503 = vunpack.c.l.b16 %v5429
        %v5504 = vunpack.c.l.b16 %v5430
        %v5505 = vunpack.c.l.b16 %v5431
        %v5506 = vunpack.c.l.b16 %v5432
        %v5507 = vunpack.c.l.b16 %v5433
        %v5508 = vunpack.c.l.b16 %v5434
        %v5509 = vunpack.c.l.b16 %v5435
        %v5510 = vunpack.c.l.b16 %v5436
        %v5511 = vunpack.c.l.b16 %v5437
        %v5512 = vunpack.c.l.b16 %v5438
        %v5513 = vunpack.c.l.b16 %v5439
        %v5514 = vunpack.c.l.b16 %v5440
        %v5515 = vunpack.c.l.b16 %v5441
        %v5516 = vunpack.c.l.b16 %v5442
        %v5517 = vunpack.c.l.b16 %v5443
        %v5518 = vunpack.c.l.b16 %v5444
        %v5519 = vunpack.c.l.b16 %v5445
        %v5520 = vunpack.c.l.b16 %v5446
        %v5521 = vunpack.c.l.b16 %v5447
        %v5522 = vunpack.c.l.b16 %v5448
        %v5523 = vunpack.c.l.b16 %v5449
        %v5524 = vunpack.c.l.b16 %v5450
        %v5525 = vunpack.c.l.b16 %v5451
        %v5526 = vunpack.c.l.b16 %v5452
        %v5527 = vunpack.c.l.b16 %v5453
        %v5528 = vunpack.c.l.b16 %v5454
        %v5529 = vunpack.c.l.b16 %v5455
        %v5530 = vunpack.c.l.b16 %v5456
        %v5531 = vunpack.c.l.b16 %v5457
        %v5532 = vunpack.c.l.b16 %v5458
        %v5533 = vunpack.c.l.b16 %v5459
        %v5534 = vunpack.c.l.b16 %v5460
        %v5535 = vunpack.c.l.b16 %v5461
        %v5536 = vunpack.c.l.b16 %v5462
        %v5537 = vpack.c.b16 %v5501, %v5500
        %v5538 = vpack.c.b16 %v5503, %v5502
        %v5539 = vpack.c.b16 %v5505, %v5504
        %v5540 = vpack.c.b16 %v5507, %v5506
        %v5541 = vpack.c.b16 %v5509, %v5508
        %v5542 = vpack.c.b16 %v5511, %v5510
        %v5543 = vpack.c.b16 %v5513, %v5512
        %v5544 = vpack.c.b16 %v5515, %v5514
        %v5545 = vpack.c.b16 %v5517, %v5516
        %v5546 = vpack.c.b16 %v5519, %v5518
        %v5547 = vpack.c.b16 %v5521, %v5520
        %v5548 = vpack.c.b16 %v5523, %v5522
        %v5549 = vpack.c.b16 %v5525, %v5524
        %v5550 = vpack.c.b16 %v5527, %v5526
        %v5551 = vpack.c.b16 %v5529, %v5528
        %v5552 = vpack.c.b16 %v5531, %v5530
        %v5553 = vpack.c.b16 %v5533, %v5532
        %v5554 = vpack.c.b16 %v5535, %v5534
        %v5555 = vpack.c.b16 %v5536, %v5536
        %v5556 = vrot.slane %v5537, 1
        %v5557 = vrot.slane %v5538, 1
        %v5558 = vsel %vm907, %v5556, %v5557
        %v5559 = vrot.slane %v5539, 1
        %v5560 = vsel %vm907, %v5557, %v5559
        %v5561 = vrot.slane %v5540, 1
        %v5562 = vsel %vm907, %v5559, %v5561
        %v5563 = vrot.slane %v5541, 1
        %v5564 = vsel %vm907, %v5561, %v5563
        %v5565 = vrot.slane %v5542, 1
        %v5566 = vsel %vm907, %v5563, %v5565
        %v5567 = vrot.slane %v5543, 1
        %v5568 = vsel %vm907, %v5565, %v5567
        %v5569 = vrot.slane %v5544, 1
        %v5570 = vsel %vm907, %v5567, %v5569
        %v5571 = vrot.slane %v5545, 1
        %v5572 = vsel %vm907, %v5569, %v5571
        %v5573 = vrot.slane %v5546, 1
        %v5574 = vsel %vm907, %v5571, %v5573
        %v5575 = vrot.slane %v5547, 1
        %v5576 = vsel %vm907, %v5573, %v5575
        %v5577 = vrot.slane %v5548, 1
        %v5578 = vsel %vm907, %v5575, %v5577
        %v5579 = vrot.slane %v5549, 1
        %v5580 = vsel %vm907, %v5577, %v5579
        %v5581 = vrot.slane %v5550, 1
        %v5582 = vsel %vm907, %v5579, %v5581
        %v5583 = vrot.slane %v5551, 1
        %v5584 = vsel %vm907, %v5581, %v5583
        %v5585 = vrot.slane %v5552, 1
        %v5586 = vsel %vm907, %v5583, %v5585
        %v5587 = vrot.slane %v5553, 1
        %v5588 = vsel %vm907, %v5585, %v5587
        %v5589 = vrot.slane %v5554, 1
        %v5590 = vsel %vm907, %v5587, %v5589
        %v5591 = vrot.slane %v5555, 1
        %v5592 = vsel %vm907, %v5589, %v5591
        %5611 = vst [vmem:[#allocation2 + $0x10] sm:$0xff] %v5558
        %5612 = vst [vmem:[#allocation2 + $0x58] sm:$0xff] %v5560
        %5613 = vst [vmem:[#allocation2 + $0xa0] sm:$0xff] %v5562
        %5614 = vst [vmem:[#allocation2 + $0xe8] sm:$0xff] %v5564
        %5615 = vst [vmem:[#allocation2 + $0x130] sm:$0xff] %v5566
        %5616 = vst [vmem:[#allocation2 + $0x178] sm:$0xff] %v5568
        %5617 = vst [vmem:[#allocation2 + $0x1c0] sm:$0xff] %v5570
        %5618 = vst [vmem:[#allocation2 + $0x208] sm:$0xff] %v5572
        %5619 = vst [vmem:[#allocation2 + $0x250] sm:$0xff] %v5574
        %5620 = vst [vmem:[#allocation2 + $0x298] sm:$0xff] %v5576
        %5621 = vst [vmem:[#allocation2 + $0x2e0] sm:$0xff] %v5578
        %5622 = vst [vmem:[#allocation2 + $0x328] sm:$0xff] %v5580
        %5623 = vst [vmem:[#allocation2 + $0x370] sm:$0xff] %v5582
        %5624 = vst [vmem:[#allocation2 + $0x3b8] sm:$0xff] %v5584
        %5625 = vst [vmem:[#allocation2 + $0x400] sm:$0xff] %v5586
        %5626 = vst [vmem:[#allocation2 + $0x448] sm:$0xff] %v5588
        %5627 = vst [vmem:[#allocation2 + $0x490] sm:$0xff] %v5590
        %5628 = vst [vmem:[#allocation2 + $0x4d8] sm:$0xff] %v5592
        %v5629 = vld [vmem:[#allocation3 + $0x8] sm:$0xe]
        %v5630 = vld [vmem:[#allocation3 + $0xc] sm:$0xf]
        %v5631 = vld [vmem:[#allocation3 + $0x10] sm:$0xf]
        %v5632 = vld [vmem:[#allocation3 + $0x14] sm:$0xf]
        %v5633 = vld [vmem:[#allocation3 + $0x18] sm:$0xf]
        %v5634 = vld [vmem:[#allocation3 + $0x1c] sm:$0xf]
        %v5635 = vld [vmem:[#allocation3 + $0x20] sm:$0xf]
        %v5636 = vld [vmem:[#allocation3 + $0x24] sm:$0xf]
        %v5637 = vld [vmem:[#allocation3 + $0x28] sm:$0xf]
        %v5638 = vld [vmem:[#allocation3 + $0x2c] sm:$0xf]
        %v5639 = vld [vmem:[#allocation3 + $0x30] sm:$0xf]
        %v5640 = vld [vmem:[#allocation3 + $0x34] sm:$0xf]
        %v5641 = vld [vmem:[#allocation3 + $0x38] sm:$0xf]
        %v5642 = vld [vmem:[#allocation3 + $0x3c] sm:$0xf]
        %v5643 = vld [vmem:[#allocation3 + $0x40] sm:$0xf]
        %v5644 = vld [vmem:[#allocation3 + $0x44] sm:$0xf]
        %v5645 = vld [vmem:[#allocation3 + $0x48] sm:$0xf]
        %v5646 = vld [vmem:[#allocation3 + $0x4c] sm:$0xf]
        %v5647 = vld [vmem:[#allocation3 + $0x50] sm:$0xf]
        %v5648 = vld [vmem:[#allocation3 + $0x54] sm:$0xf]
        %v5649 = vld [vmem:[#allocation3 + $0x58] sm:$0xf]
        %v5650 = vld [vmem:[#allocation3 + $0x5c] sm:$0xf]
        %v5651 = vld [vmem:[#allocation3 + $0x60] sm:$0xf]
        %v5652 = vld [vmem:[#allocation3 + $0x64] sm:$0xf]
        %v5653 = vld [vmem:[#allocation3 + $0x68] sm:$0xf]
        %v5654 = vld [vmem:[#allocation3 + $0x6c] sm:$0xf]
        %v5655 = vld [vmem:[#allocation3 + $0x70] sm:$0xf]
        %v5656 = vld [vmem:[#allocation3 + $0x74] sm:$0xf]
        %v5657 = vld [vmem:[#allocation3 + $0x78] sm:$0xf]
        %v5658 = vld [vmem:[#allocation3 + $0x7c] sm:$0xf]
        %v5659 = vld [vmem:[#allocation3 + $0x80] sm:$0xf]
        %v5660 = vld [vmem:[#allocation3 + $0x84] sm:$0xf]
        %v5661 = vld [vmem:[#allocation3 + $0x88] sm:$0xf]
        %v5662 = vld [vmem:[#allocation3 + $0x8c] sm:$0xf]
        %v5663 = vld [vmem:[#allocation3 + $0x90] sm:$0xf]
        %v5664 = vld [vmem:[#allocation3 + $0x94] sm:$0xf]
        %v5665 = vld [vmem:[#allocation3 + $0x98] sm:$0x1]
        %v5703 = vunpack.c.l.b16 %v5629
        %v5704 = vunpack.c.l.b16 %v5630
        %v5705 = vunpack.c.l.b16 %v5631
        %v5706 = vunpack.c.l.b16 %v5632
        %v5707 = vunpack.c.l.b16 %v5633
        %v5708 = vunpack.c.l.b16 %v5634
        %v5709 = vunpack.c.l.b16 %v5635
        %v5710 = vunpack.c.l.b16 %v5636
        %v5711 = vunpack.c.l.b16 %v5637
        %v5712 = vunpack.c.l.b16 %v5638
        %v5713 = vunpack.c.l.b16 %v5639
        %v5714 = vunpack.c.l.b16 %v5640
        %v5715 = vunpack.c.l.b16 %v5641
        %v5716 = vunpack.c.l.b16 %v5642
        %v5717 = vunpack.c.l.b16 %v5643
        %v5718 = vunpack.c.l.b16 %v5644
        %v5719 = vunpack.c.l.b16 %v5645
        %v5720 = vunpack.c.l.b16 %v5646
        %v5721 = vunpack.c.l.b16 %v5647
        %v5722 = vunpack.c.l.b16 %v5648
        %v5723 = vunpack.c.l.b16 %v5649
        %v5724 = vunpack.c.l.b16 %v5650
        %v5725 = vunpack.c.l.b16 %v5651
        %v5726 = vunpack.c.l.b16 %v5652
        %v5727 = vunpack.c.l.b16 %v5653
        %v5728 = vunpack.c.l.b16 %v5654
        %v5729 = vunpack.c.l.b16 %v5655
        %v5730 = vunpack.c.l.b16 %v5656
        %v5731 = vunpack.c.l.b16 %v5657
        %v5732 = vunpack.c.l.b16 %v5658
        %v5733 = vunpack.c.l.b16 %v5659
        %v5734 = vunpack.c.l.b16 %v5660
        %v5735 = vunpack.c.l.b16 %v5661
        %v5736 = vunpack.c.l.b16 %v5662
        %v5737 = vunpack.c.l.b16 %v5663
        %v5738 = vunpack.c.l.b16 %v5664
        %v5739 = vunpack.c.l.b16 %v5665
        %v5740 = vpack.c.b16 %v5704, %v5703
        %v5741 = vpack.c.b16 %v5706, %v5705
        %v5742 = vpack.c.b16 %v5708, %v5707
        %v5743 = vpack.c.b16 %v5710, %v5709
        %v5744 = vpack.c.b16 %v5712, %v5711
        %v5745 = vpack.c.b16 %v5714, %v5713
        %v5746 = vpack.c.b16 %v5716, %v5715
        %v5747 = vpack.c.b16 %v5718, %v5717
        %v5748 = vpack.c.b16 %v5720, %v5719
        %v5749 = vpack.c.b16 %v5722, %v5721
        %v5750 = vpack.c.b16 %v5724, %v5723
        %v5751 = vpack.c.b16 %v5726, %v5725
        %v5752 = vpack.c.b16 %v5728, %v5727
        %v5753 = vpack.c.b16 %v5730, %v5729
        %v5754 = vpack.c.b16 %v5732, %v5731
        %v5755 = vpack.c.b16 %v5734, %v5733
        %v5756 = vpack.c.b16 %v5736, %v5735
        %v5757 = vpack.c.b16 %v5738, %v5737
        %v5758 = vpack.c.b16 %v5739, %v5739
        %v5759 = vrot.slane %v5740, 1
        %v5760 = vrot.slane %v5741, 1
        %v5761 = vsel %vm907, %v5759, %v5760
        %v5762 = vrot.slane %v5742, 1
        %v5763 = vsel %vm907, %v5760, %v5762
        %v5764 = vrot.slane %v5743, 1
        %v5765 = vsel %vm907, %v5762, %v5764
        %v5766 = vrot.slane %v5744, 1
        %v5767 = vsel %vm907, %v5764, %v5766
        %v5768 = vrot.slane %v5745, 1
        %v5769 = vsel %vm907, %v5766, %v5768
        %v5770 = vrot.slane %v5746, 1
        %v5771 = vsel %vm907, %v5768, %v5770
        %v5772 = vrot.slane %v5747, 1
        %v5773 = vsel %vm907, %v5770, %v5772
        %v5774 = vrot.slane %v5748, 1
        %v5775 = vsel %vm907, %v5772, %v5774
        %v5776 = vrot.slane %v5749, 1
        %v5777 = vsel %vm907, %v5774, %v5776
        %v5778 = vrot.slane %v5750, 1
        %v5779 = vsel %vm907, %v5776, %v5778
        %v5780 = vrot.slane %v5751, 1
        %v5781 = vsel %vm907, %v5778, %v5780
        %v5782 = vrot.slane %v5752, 1
        %v5783 = vsel %vm907, %v5780, %v5782
        %v5784 = vrot.slane %v5753, 1
        %v5785 = vsel %vm907, %v5782, %v5784
        %v5786 = vrot.slane %v5754, 1
        %v5787 = vsel %vm907, %v5784, %v5786
        %v5788 = vrot.slane %v5755, 1
        %v5789 = vsel %vm907, %v5786, %v5788
        %v5790 = vrot.slane %v5756, 1
        %v5791 = vsel %vm907, %v5788, %v5790
        %v5792 = vrot.slane %v5757, 1
        %v5793 = vsel %vm907, %v5790, %v5792
        %v5794 = vrot.slane %v5758, 1
        %v5795 = vsel %vm907, %v5792, %v5794
        %5814 = vst [vmem:[#allocation2 + $0x18] sm:$0xff] %v5761
        %5815 = vst [vmem:[#allocation2 + $0x60] sm:$0xff] %v5763
        %5816 = vst [vmem:[#allocation2 + $0xa8] sm:$0xff] %v5765
        %5817 = vst [vmem:[#allocation2 + $0xf0] sm:$0xff] %v5767
        %5818 = vst [vmem:[#allocation2 + $0x138] sm:$0xff] %v5769
        %5819 = vst [vmem:[#allocation2 + $0x180] sm:$0xff] %v5771
        %5820 = vst [vmem:[#allocation2 + $0x1c8] sm:$0xff] %v5773
        %5821 = vst [vmem:[#allocation2 + $0x210] sm:$0xff] %v5775
        %5822 = vst [vmem:[#allocation2 + $0x258] sm:$0xff] %v5777
        %5823 = vst [vmem:[#allocation2 + $0x2a0] sm:$0xff] %v5779
        %5824 = vst [vmem:[#allocation2 + $0x2e8] sm:$0xff] %v5781
        %5825 = vst [vmem:[#allocation2 + $0x330] sm:$0xff] %v5783
        %5826 = vst [vmem:[#allocation2 + $0x378] sm:$0xff] %v5785
        %5827 = vst [vmem:[#allocation2 + $0x3c0] sm:$0xff] %v5787
        %5828 = vst [vmem:[#allocation2 + $0x408] sm:$0xff] %v5789
        %5829 = vst [vmem:[#allocation2 + $0x450] sm:$0xff] %v5791
        %5830 = vst [vmem:[#allocation2 + $0x498] sm:$0xff] %v5793
        %5831 = vst [vmem:[#allocation2 + $0x4e0] sm:$0xff] %v5795
        %v5832 = vld [vmem:[#allocation3 + $0x8] sm:$0xe]
        %v5833 = vld [vmem:[#allocation3 + $0xc] sm:$0xf]
        %v5834 = vld [vmem:[#allocation3 + $0x10] sm:$0xf]
        %v5835 = vld [vmem:[#allocation3 + $0x14] sm:$0xf]
        %v5836 = vld [vmem:[#allocation3 + $0x18] sm:$0xf]
        %v5837 = vld [vmem:[#allocation3 + $0x1c] sm:$0xf]
        %v5838 = vld [vmem:[#allocation3 + $0x20] sm:$0xf]
        %v5839 = vld [vmem:[#allocation3 + $0x24] sm:$0xf]
        %v5840 = vld [vmem:[#allocation3 + $0x28] sm:$0xf]
        %v5841 = vld [vmem:[#allocation3 + $0x2c] sm:$0xf]
        %v5842 = vld [vmem:[#allocation3 + $0x30] sm:$0xf]
        %v5843 = vld [vmem:[#allocation3 + $0x34] sm:$0xf]
        %v5844 = vld [vmem:[#allocation3 + $0x38] sm:$0xf]
        %v5845 = vld [vmem:[#allocation3 + $0x3c] sm:$0xf]
        %v5846 = vld [vmem:[#allocation3 + $0x40] sm:$0xf]
        %v5847 = vld [vmem:[#allocation3 + $0x44] sm:$0xf]
        %v5848 = vld [vmem:[#allocation3 + $0x48] sm:$0xf]
        %v5849 = vld [vmem:[#allocation3 + $0x4c] sm:$0xf]
        %v5850 = vld [vmem:[#allocation3 + $0x50] sm:$0xf]
        %v5851 = vld [vmem:[#allocation3 + $0x54] sm:$0xf]
        %v5852 = vld [vmem:[#allocation3 + $0x58] sm:$0xf]
        %v5853 = vld [vmem:[#allocation3 + $0x5c] sm:$0xf]
        %v5854 = vld [vmem:[#allocation3 + $0x60] sm:$0xf]
        %v5855 = vld [vmem:[#allocation3 + $0x64] sm:$0xf]
        %v5856 = vld [vmem:[#allocation3 + $0x68] sm:$0xf]
        %v5857 = vld [vmem:[#allocation3 + $0x6c] sm:$0xf]
        %v5858 = vld [vmem:[#allocation3 + $0x70] sm:$0xf]
        %v5859 = vld [vmem:[#allocation3 + $0x74] sm:$0xf]
        %v5860 = vld [vmem:[#allocation3 + $0x78] sm:$0xf]
        %v5861 = vld [vmem:[#allocation3 + $0x7c] sm:$0xf]
        %v5862 = vld [vmem:[#allocation3 + $0x80] sm:$0xf]
        %v5863 = vld [vmem:[#allocation3 + $0x84] sm:$0xf]
        %v5864 = vld [vmem:[#allocation3 + $0x88] sm:$0xf]
        %v5865 = vld [vmem:[#allocation3 + $0x8c] sm:$0xf]
        %v5866 = vld [vmem:[#allocation3 + $0x90] sm:$0xf]
        %v5867 = vld [vmem:[#allocation3 + $0x94] sm:$0xf]
        %v5868 = vld [vmem:[#allocation3 + $0x98] sm:$0x3]
        %v5906 = vunpack.c.l.b16 %v5832
        %v5907 = vunpack.c.l.b16 %v5833
        %v5908 = vunpack.c.l.b16 %v5834
        %v5909 = vunpack.c.l.b16 %v5835
        %v5910 = vunpack.c.l.b16 %v5836
        %v5911 = vunpack.c.l.b16 %v5837
        %v5912 = vunpack.c.l.b16 %v5838
        %v5913 = vunpack.c.l.b16 %v5839
        %v5914 = vunpack.c.l.b16 %v5840
        %v5915 = vunpack.c.l.b16 %v5841
        %v5916 = vunpack.c.l.b16 %v5842
        %v5917 = vunpack.c.l.b16 %v5843
        %v5918 = vunpack.c.l.b16 %v5844
        %v5919 = vunpack.c.l.b16 %v5845
        %v5920 = vunpack.c.l.b16 %v5846
        %v5921 = vunpack.c.l.b16 %v5847
        %v5922 = vunpack.c.l.b16 %v5848
        %v5923 = vunpack.c.l.b16 %v5849
        %v5924 = vunpack.c.l.b16 %v5850
        %v5925 = vunpack.c.l.b16 %v5851
        %v5926 = vunpack.c.l.b16 %v5852
        %v5927 = vunpack.c.l.b16 %v5853
        %v5928 = vunpack.c.l.b16 %v5854
        %v5929 = vunpack.c.l.b16 %v5855
        %v5930 = vunpack.c.l.b16 %v5856
        %v5931 = vunpack.c.l.b16 %v5857
        %v5932 = vunpack.c.l.b16 %v5858
        %v5933 = vunpack.c.l.b16 %v5859
        %v5934 = vunpack.c.l.b16 %v5860
        %v5935 = vunpack.c.l.b16 %v5861
        %v5936 = vunpack.c.l.b16 %v5862
        %v5937 = vunpack.c.l.b16 %v5863
        %v5938 = vunpack.c.l.b16 %v5864
        %v5939 = vunpack.c.l.b16 %v5865
        %v5940 = vunpack.c.l.b16 %v5866
        %v5941 = vunpack.c.l.b16 %v5867
        %v5942 = vunpack.c.l.b16 %v5868
        %v5943 = vpack.c.b16 %v5907, %v5906
        %v5944 = vpack.c.b16 %v5909, %v5908
        %v5945 = vpack.c.b16 %v5911, %v5910
        %v5946 = vpack.c.b16 %v5913, %v5912
        %v5947 = vpack.c.b16 %v5915, %v5914
        %v5948 = vpack.c.b16 %v5917, %v5916
        %v5949 = vpack.c.b16 %v5919, %v5918
        %v5950 = vpack.c.b16 %v5921, %v5920
        %v5951 = vpack.c.b16 %v5923, %v5922
        %v5952 = vpack.c.b16 %v5925, %v5924
        %v5953 = vpack.c.b16 %v5927, %v5926
        %v5954 = vpack.c.b16 %v5929, %v5928
        %v5955 = vpack.c.b16 %v5931, %v5930
        %v5956 = vpack.c.b16 %v5933, %v5932
        %v5957 = vpack.c.b16 %v5935, %v5934
        %v5958 = vpack.c.b16 %v5937, %v5936
        %v5959 = vpack.c.b16 %v5939, %v5938
        %v5960 = vpack.c.b16 %v5941, %v5940
        %v5961 = vpack.c.b16 %v5942, %v5942
        %v5963 = vshrl.u32 %v5943, 16
        %v5965 = vrot.slane %v5963, 1
        %v5966 = vshll.u32 %v5943, 16
        %v5968 = vrot.slane %v5966, 2
        %v5969 = vor.u32 %v5965, %v5968
        %v5971 = vshrl.u32 %v5944, 16
        %v5973 = vrot.slane %v5971, 1
        %v5974 = vshll.u32 %v5944, 16
        %v5976 = vrot.slane %v5974, 2
        %v5977 = vor.u32 %v5973, %v5976
        %v5978 = vsel %vm1314, %v5969, %v5977
        %v5980 = vshrl.u32 %v5945, 16
        %v5982 = vrot.slane %v5980, 1
        %v5983 = vshll.u32 %v5945, 16
        %v5985 = vrot.slane %v5983, 2
        %v5986 = vor.u32 %v5982, %v5985
        %v5987 = vsel %vm1314, %v5977, %v5986
        %v5989 = vshrl.u32 %v5946, 16
        %v5991 = vrot.slane %v5989, 1
        %v5992 = vshll.u32 %v5946, 16
        %v5994 = vrot.slane %v5992, 2
        %v5995 = vor.u32 %v5991, %v5994
        %v5996 = vsel %vm1314, %v5986, %v5995
        %v5998 = vshrl.u32 %v5947, 16
        %v6000 = vrot.slane %v5998, 1
        %v6001 = vshll.u32 %v5947, 16
        %v6003 = vrot.slane %v6001, 2
        %v6004 = vor.u32 %v6000, %v6003
        %v6005 = vsel %vm1314, %v5995, %v6004
        %v6007 = vshrl.u32 %v5948, 16
        %v6009 = vrot.slane %v6007, 1
        %v6010 = vshll.u32 %v5948, 16
        %v6012 = vrot.slane %v6010, 2
        %v6013 = vor.u32 %v6009, %v6012
        %v6014 = vsel %vm1314, %v6004, %v6013
        %v6016 = vshrl.u32 %v5949, 16
        %v6018 = vrot.slane %v6016, 1
        %v6019 = vshll.u32 %v5949, 16
        %v6021 = vrot.slane %v6019, 2
        %v6022 = vor.u32 %v6018, %v6021
        %v6023 = vsel %vm1314, %v6013, %v6022
        %v6025 = vshrl.u32 %v5950, 16
        %v6027 = vrot.slane %v6025, 1
        %v6028 = vshll.u32 %v5950, 16
        %v6030 = vrot.slane %v6028, 2
        %v6031 = vor.u32 %v6027, %v6030
        %v6032 = vsel %vm1314, %v6022, %v6031
        %v6034 = vshrl.u32 %v5951, 16
        %v6036 = vrot.slane %v6034, 1
        %v6037 = vshll.u32 %v5951, 16
        %v6039 = vrot.slane %v6037, 2
        %v6040 = vor.u32 %v6036, %v6039
        %v6041 = vsel %vm1314, %v6031, %v6040
        %v6043 = vshrl.u32 %v5952, 16
        %v6045 = vrot.slane %v6043, 1
        %v6046 = vshll.u32 %v5952, 16
        %v6048 = vrot.slane %v6046, 2
        %v6049 = vor.u32 %v6045, %v6048
        %v6050 = vsel %vm1314, %v6040, %v6049
        %v6052 = vshrl.u32 %v5953, 16
        %v6054 = vrot.slane %v6052, 1
        %v6055 = vshll.u32 %v5953, 16
        %v6057 = vrot.slane %v6055, 2
        %v6058 = vor.u32 %v6054, %v6057
        %v6059 = vsel %vm1314, %v6049, %v6058
        %v6061 = vshrl.u32 %v5954, 16
        %v6063 = vrot.slane %v6061, 1
        %v6064 = vshll.u32 %v5954, 16
        %v6066 = vrot.slane %v6064, 2
        %v6067 = vor.u32 %v6063, %v6066
        %v6068 = vsel %vm1314, %v6058, %v6067
        %v6070 = vshrl.u32 %v5955, 16
        %v6072 = vrot.slane %v6070, 1
        %v6073 = vshll.u32 %v5955, 16
        %v6075 = vrot.slane %v6073, 2
        %v6076 = vor.u32 %v6072, %v6075
        %v6077 = vsel %vm1314, %v6067, %v6076
        %v6079 = vshrl.u32 %v5956, 16
        %v6081 = vrot.slane %v6079, 1
        %v6082 = vshll.u32 %v5956, 16
        %v6084 = vrot.slane %v6082, 2
        %v6085 = vor.u32 %v6081, %v6084
        %v6086 = vsel %vm1314, %v6076, %v6085
        %v6088 = vshrl.u32 %v5957, 16
        %v6090 = vrot.slane %v6088, 1
        %v6091 = vshll.u32 %v5957, 16
        %v6093 = vrot.slane %v6091, 2
        %v6094 = vor.u32 %v6090, %v6093
        %v6095 = vsel %vm1314, %v6085, %v6094
        %v6097 = vshrl.u32 %v5958, 16
        %v6099 = vrot.slane %v6097, 1
        %v6100 = vshll.u32 %v5958, 16
        %v6102 = vrot.slane %v6100, 2
        %v6103 = vor.u32 %v6099, %v6102
        %v6104 = vsel %vm1314, %v6094, %v6103
        %v6106 = vshrl.u32 %v5959, 16
        %v6108 = vrot.slane %v6106, 1
        %v6109 = vshll.u32 %v5959, 16
        %v6111 = vrot.slane %v6109, 2
        %v6112 = vor.u32 %v6108, %v6111
        %v6113 = vsel %vm1314, %v6103, %v6112
        %v6115 = vshrl.u32 %v5960, 16
        %v6117 = vrot.slane %v6115, 1
        %v6118 = vshll.u32 %v5960, 16
        %v6120 = vrot.slane %v6118, 2
        %v6121 = vor.u32 %v6117, %v6120
        %v6122 = vsel %vm1314, %v6112, %v6121
        %v6124 = vshrl.u32 %v5961, 16
        %v6126 = vrot.slane %v6124, 1
        %v6127 = vshll.u32 %v5961, 16
        %v6129 = vrot.slane %v6127, 2
        %v6130 = vor.u32 %v6126, %v6129
        %v6131 = vsel %vm1314, %v6121, %v6130
        %6150 = vst [vmem:[#allocation2 + $0x20] sm:$0xff] %v5978
        %6151 = vst [vmem:[#allocation2 + $0x68] sm:$0xff] %v5987
        %6152 = vst [vmem:[#allocation2 + $0xb0] sm:$0xff] %v5996
        %6153 = vst [vmem:[#allocation2 + $0xf8] sm:$0xff] %v6005
        %6154 = vst [vmem:[#allocation2 + $0x140] sm:$0xff] %v6014
        %6155 = vst [vmem:[#allocation2 + $0x188] sm:$0xff] %v6023
        %6156 = vst [vmem:[#allocation2 + $0x1d0] sm:$0xff] %v6032
        %6157 = vst [vmem:[#allocation2 + $0x218] sm:$0xff] %v6041
        %6158 = vst [vmem:[#allocation2 + $0x260] sm:$0xff] %v6050
        %6159 = vst [vmem:[#allocation2 + $0x2a8] sm:$0xff] %v6059
        %6160 = vst [vmem:[#allocation2 + $0x2f0] sm:$0xff] %v6068
        %6161 = vst [vmem:[#allocation2 + $0x338] sm:$0xff] %v6077
        %6162 = vst [vmem:[#allocation2 + $0x380] sm:$0xff] %v6086
        %6163 = vst [vmem:[#allocation2 + $0x3c8] sm:$0xff] %v6095
        %6164 = vst [vmem:[#allocation2 + $0x410] sm:$0xff] %v6104
        %6165 = vst [vmem:[#allocation2 + $0x458] sm:$0xff] %v6113
        %6166 = vst [vmem:[#allocation2 + $0x4a0] sm:$0xff] %v6122
        %6167 = vst [vmem:[#allocation2 + $0x4e8] sm:$0xff] %v6131
        %v6168 = vld [vmem:[#allocation3 + $0x8] sm:$0xc]
        %v6169 = vld [vmem:[#allocation3 + $0xc] sm:$0xf]
        %v6170 = vld [vmem:[#allocation3 + $0x10] sm:$0xf]
        %v6171 = vld [vmem:[#allocation3 + $0x14] sm:$0xf]
        %v6172 = vld [vmem:[#allocation3 + $0x18] sm:$0xf]
        %v6173 = vld [vmem:[#allocation3 + $0x1c] sm:$0xf]
        %v6174 = vld [vmem:[#allocation3 + $0x20] sm:$0xf]
        %v6175 = vld [vmem:[#allocation3 + $0x24] sm:$0xf]
        %v6176 = vld [vmem:[#allocation3 + $0x28] sm:$0xf]
        %v6177 = vld [vmem:[#allocation3 + $0x2c] sm:$0xf]
        %v6178 = vld [vmem:[#allocation3 + $0x30] sm:$0xf]
        %v6179 = vld [vmem:[#allocation3 + $0x34] sm:$0xf]
        %v6180 = vld [vmem:[#allocation3 + $0x38] sm:$0xf]
        %v6181 = vld [vmem:[#allocation3 + $0x3c] sm:$0xf]
        %v6182 = vld [vmem:[#allocation3 + $0x40] sm:$0xf]
        %v6183 = vld [vmem:[#allocation3 + $0x44] sm:$0xf]
        %v6184 = vld [vmem:[#allocation3 + $0x48] sm:$0xf]
        %v6185 = vld [vmem:[#allocation3 + $0x4c] sm:$0xf]
        %v6186 = vld [vmem:[#allocation3 + $0x50] sm:$0xf]
        %v6187 = vld [vmem:[#allocation3 + $0x54] sm:$0xf]
        %v6188 = vld [vmem:[#allocation3 + $0x58] sm:$0xf]
        %v6189 = vld [vmem:[#allocation3 + $0x5c] sm:$0xf]
        %v6190 = vld [vmem:[#allocation3 + $0x60] sm:$0xf]
        %v6191 = vld [vmem:[#allocation3 + $0x64] sm:$0xf]
        %v6192 = vld [vmem:[#allocation3 + $0x68] sm:$0xf]
        %v6193 = vld [vmem:[#allocation3 + $0x6c] sm:$0xf]
        %v6194 = vld [vmem:[#allocation3 + $0x70] sm:$0xf]
        %v6195 = vld [vmem:[#allocation3 + $0x74] sm:$0xf]
        %v6196 = vld [vmem:[#allocation3 + $0x78] sm:$0xf]
        %v6197 = vld [vmem:[#allocation3 + $0x7c] sm:$0xf]
        %v6198 = vld [vmem:[#allocation3 + $0x80] sm:$0xf]
        %v6199 = vld [vmem:[#allocation3 + $0x84] sm:$0xf]
        %v6200 = vld [vmem:[#allocation3 + $0x88] sm:$0xf]
        %v6201 = vld [vmem:[#allocation3 + $0x8c] sm:$0xf]
        %v6202 = vld [vmem:[#allocation3 + $0x90] sm:$0xf]
        %v6203 = vld [vmem:[#allocation3 + $0x94] sm:$0xf]
        %v6204 = vld [vmem:[#allocation3 + $0x98] sm:$0x3]
        %v6242 = vunpack.c.l.b16 %v6168
        %v6243 = vunpack.c.l.b16 %v6169
        %v6244 = vunpack.c.l.b16 %v6170
        %v6245 = vunpack.c.l.b16 %v6171
        %v6246 = vunpack.c.l.b16 %v6172
        %v6247 = vunpack.c.l.b16 %v6173
        %v6248 = vunpack.c.l.b16 %v6174
        %v6249 = vunpack.c.l.b16 %v6175
        %v6250 = vunpack.c.l.b16 %v6176
        %v6251 = vunpack.c.l.b16 %v6177
        %v6252 = vunpack.c.l.b16 %v6178
        %v6253 = vunpack.c.l.b16 %v6179
        %v6254 = vunpack.c.l.b16 %v6180
        %v6255 = vunpack.c.l.b16 %v6181
        %v6256 = vunpack.c.l.b16 %v6182
        %v6257 = vunpack.c.l.b16 %v6183
        %v6258 = vunpack.c.l.b16 %v6184
        %v6259 = vunpack.c.l.b16 %v6185
        %v6260 = vunpack.c.l.b16 %v6186
        %v6261 = vunpack.c.l.b16 %v6187
        %v6262 = vunpack.c.l.b16 %v6188
        %v6263 = vunpack.c.l.b16 %v6189
        %v6264 = vunpack.c.l.b16 %v6190
        %v6265 = vunpack.c.l.b16 %v6191
        %v6266 = vunpack.c.l.b16 %v6192
        %v6267 = vunpack.c.l.b16 %v6193
        %v6268 = vunpack.c.l.b16 %v6194
        %v6269 = vunpack.c.l.b16 %v6195
        %v6270 = vunpack.c.l.b16 %v6196
        %v6271 = vunpack.c.l.b16 %v6197
        %v6272 = vunpack.c.l.b16 %v6198
        %v6273 = vunpack.c.l.b16 %v6199
        %v6274 = vunpack.c.l.b16 %v6200
        %v6275 = vunpack.c.l.b16 %v6201
        %v6276 = vunpack.c.l.b16 %v6202
        %v6277 = vunpack.c.l.b16 %v6203
        %v6278 = vunpack.c.l.b16 %v6204
        %v6279 = vpack.c.b16 %v6243, %v6242
        %v6280 = vpack.c.b16 %v6245, %v6244
        %v6281 = vpack.c.b16 %v6247, %v6246
        %v6282 = vpack.c.b16 %v6249, %v6248
        %v6283 = vpack.c.b16 %v6251, %v6250
        %v6284 = vpack.c.b16 %v6253, %v6252
        %v6285 = vpack.c.b16 %v6255, %v6254
        %v6286 = vpack.c.b16 %v6257, %v6256
        %v6287 = vpack.c.b16 %v6259, %v6258
        %v6288 = vpack.c.b16 %v6261, %v6260
        %v6289 = vpack.c.b16 %v6263, %v6262
        %v6290 = vpack.c.b16 %v6265, %v6264
        %v6291 = vpack.c.b16 %v6267, %v6266
        %v6292 = vpack.c.b16 %v6269, %v6268
        %v6293 = vpack.c.b16 %v6271, %v6270
        %v6294 = vpack.c.b16 %v6273, %v6272
        %v6295 = vpack.c.b16 %v6275, %v6274
        %v6296 = vpack.c.b16 %v6277, %v6276
        %v6297 = vpack.c.b16 %v6278, %v6278
        %v6298 = vrot.slane %v6279, 2
        %v6299 = vrot.slane %v6280, 2
        %v6300 = vsel %vm1651, %v6298, %v6299
        %v6301 = vrot.slane %v6281, 2
        %v6302 = vsel %vm1651, %v6299, %v6301
        %v6303 = vrot.slane %v6282, 2
        %v6304 = vsel %vm1651, %v6301, %v6303
        %v6305 = vrot.slane %v6283, 2
        %v6306 = vsel %vm1651, %v6303, %v6305
        %v6307 = vrot.slane %v6284, 2
        %v6308 = vsel %vm1651, %v6305, %v6307
        %v6309 = vrot.slane %v6285, 2
        %v6310 = vsel %vm1651, %v6307, %v6309
        %v6311 = vrot.slane %v6286, 2
        %v6312 = vsel %vm1651, %v6309, %v6311
        %v6313 = vrot.slane %v6287, 2
        %v6314 = vsel %vm1651, %v6311, %v6313
        %v6315 = vrot.slane %v6288, 2
        %v6316 = vsel %vm1651, %v6313, %v6315
        %v6317 = vrot.slane %v6289, 2
        %v6318 = vsel %vm1651, %v6315, %v6317
        %v6319 = vrot.slane %v6290, 2
        %v6320 = vsel %vm1651, %v6317, %v6319
        %v6321 = vrot.slane %v6291, 2
        %v6322 = vsel %vm1651, %v6319, %v6321
        %v6323 = vrot.slane %v6292, 2
        %v6324 = vsel %vm1651, %v6321, %v6323
        %v6325 = vrot.slane %v6293, 2
        %v6326 = vsel %vm1651, %v6323, %v6325
        %v6327 = vrot.slane %v6294, 2
        %v6328 = vsel %vm1651, %v6325, %v6327
        %v6329 = vrot.slane %v6295, 2
        %v6330 = vsel %vm1651, %v6327, %v6329
        %v6331 = vrot.slane %v6296, 2
        %v6332 = vsel %vm1651, %v6329, %v6331
        %v6333 = vrot.slane %v6297, 2
        %v6334 = vsel %vm1651, %v6331, %v6333
        %6353 = vst [vmem:[#allocation2 + $0x28] sm:$0xff] %v6300
        %6354 = vst [vmem:[#allocation2 + $0x70] sm:$0xff] %v6302
        %6355 = vst [vmem:[#allocation2 + $0xb8] sm:$0xff] %v6304
        %6356 = vst [vmem:[#allocation2 + $0x100] sm:$0xff] %v6306
        %6357 = vst [vmem:[#allocation2 + $0x148] sm:$0xff] %v6308
        %6358 = vst [vmem:[#allocation2 + $0x190] sm:$0xff] %v6310
        %6359 = vst [vmem:[#allocation2 + $0x1d8] sm:$0xff] %v6312
        %6360 = vst [vmem:[#allocation2 + $0x220] sm:$0xff] %v6314
        %6361 = vst [vmem:[#allocation2 + $0x268] sm:$0xff] %v6316
        %6362 = vst [vmem:[#allocation2 + $0x2b0] sm:$0xff] %v6318
        %6363 = vst [vmem:[#allocation2 + $0x2f8] sm:$0xff] %v6320
        %6364 = vst [vmem:[#allocation2 + $0x340] sm:$0xff] %v6322
        %6365 = vst [vmem:[#allocation2 + $0x388] sm:$0xff] %v6324
        %6366 = vst [vmem:[#allocation2 + $0x3d0] sm:$0xff] %v6326
        %6367 = vst [vmem:[#allocation2 + $0x418] sm:$0xff] %v6328
        %6368 = vst [vmem:[#allocation2 + $0x460] sm:$0xff] %v6330
        %6369 = vst [vmem:[#allocation2 + $0x4a8] sm:$0xff] %v6332
        %6370 = vst [vmem:[#allocation2 + $0x4f0] sm:$0xff] %v6334
        %v6371 = vld [vmem:[#allocation3 + $0x10] sm:$0xc]
        %v6372 = vld [vmem:[#allocation3 + $0x14] sm:$0xf]
        %v6373 = vld [vmem:[#allocation3 + $0x18] sm:$0xf]
        %v6374 = vld [vmem:[#allocation3 + $0x1c] sm:$0xf]
        %v6375 = vld [vmem:[#allocation3 + $0x20] sm:$0xf]
        %v6376 = vld [vmem:[#allocation3 + $0x24] sm:$0xf]
        %v6377 = vld [vmem:[#allocation3 + $0x28] sm:$0xf]
        %v6378 = vld [vmem:[#allocation3 + $0x2c] sm:$0xf]
        %v6379 = vld [vmem:[#allocation3 + $0x30] sm:$0xf]
        %v6380 = vld [vmem:[#allocation3 + $0x34] sm:$0xf]
        %v6381 = vld [vmem:[#allocation3 + $0x38] sm:$0xf]
        %v6382 = vld [vmem:[#allocation3 + $0x3c] sm:$0xf]
        %v6383 = vld [vmem:[#allocation3 + $0x40] sm:$0xf]
        %v6384 = vld [vmem:[#allocation3 + $0x44] sm:$0xf]
        %v6385 = vld [vmem:[#allocation3 + $0x48] sm:$0xf]
        %v6386 = vld [vmem:[#allocation3 + $0x4c] sm:$0xf]
        %v6387 = vld [vmem:[#allocation3 + $0x50] sm:$0xf]
        %v6388 = vld [vmem:[#allocation3 + $0x54] sm:$0xf]
        %v6389 = vld [vmem:[#allocation3 + $0x58] sm:$0xf]
        %v6390 = vld [vmem:[#allocation3 + $0x5c] sm:$0xf]
        %v6391 = vld [vmem:[#allocation3 + $0x60] sm:$0xf]
        %v6392 = vld [vmem:[#allocation3 + $0x64] sm:$0xf]
        %v6393 = vld [vmem:[#allocation3 + $0x68] sm:$0xf]
        %v6394 = vld [vmem:[#allocation3 + $0x6c] sm:$0xf]
        %v6395 = vld [vmem:[#allocation3 + $0x70] sm:$0xf]
        %v6396 = vld [vmem:[#allocation3 + $0x74] sm:$0xf]
        %v6397 = vld [vmem:[#allocation3 + $0x78] sm:$0xf]
        %v6398 = vld [vmem:[#allocation3 + $0x7c] sm:$0xf]
        %v6399 = vld [vmem:[#allocation3 + $0x80] sm:$0xf]
        %v6400 = vld [vmem:[#allocation3 + $0x84] sm:$0xf]
        %v6401 = vld [vmem:[#allocation3 + $0x88] sm:$0xf]
        %v6402 = vld [vmem:[#allocation3 + $0x8c] sm:$0xf]
        %v6403 = vld [vmem:[#allocation3 + $0x90] sm:$0xf]
        %v6404 = vld [vmem:[#allocation3 + $0x94] sm:$0xf]
        %v6405 = vld [vmem:[#allocation3 + $0x98] sm:$0xf]
        %v6406 = vld [vmem:[#allocation3 + $0x9c] sm:$0xf]
        %v6407 = vld [vmem:[#allocation3 + $0xa0] sm:$0x3]
        %v6445 = vunpack.c.l.b16 %v6371
        %v6446 = vunpack.c.l.b16 %v6372
        %v6447 = vunpack.c.l.b16 %v6373
        %v6448 = vunpack.c.l.b16 %v6374
        %v6449 = vunpack.c.l.b16 %v6375
        %v6450 = vunpack.c.l.b16 %v6376
        %v6451 = vunpack.c.l.b16 %v6377
        %v6452 = vunpack.c.l.b16 %v6378
        %v6453 = vunpack.c.l.b16 %v6379
        %v6454 = vunpack.c.l.b16 %v6380
        %v6455 = vunpack.c.l.b16 %v6381
        %v6456 = vunpack.c.l.b16 %v6382
        %v6457 = vunpack.c.l.b16 %v6383
        %v6458 = vunpack.c.l.b16 %v6384
        %v6459 = vunpack.c.l.b16 %v6385
        %v6460 = vunpack.c.l.b16 %v6386
        %v6461 = vunpack.c.l.b16 %v6387
        %v6462 = vunpack.c.l.b16 %v6388
        %v6463 = vunpack.c.l.b16 %v6389
        %v6464 = vunpack.c.l.b16 %v6390
        %v6465 = vunpack.c.l.b16 %v6391
        %v6466 = vunpack.c.l.b16 %v6392
        %v6467 = vunpack.c.l.b16 %v6393
        %v6468 = vunpack.c.l.b16 %v6394
        %v6469 = vunpack.c.l.b16 %v6395
        %v6470 = vunpack.c.l.b16 %v6396
        %v6471 = vunpack.c.l.b16 %v6397
        %v6472 = vunpack.c.l.b16 %v6398
        %v6473 = vunpack.c.l.b16 %v6399
        %v6474 = vunpack.c.l.b16 %v6400
        %v6475 = vunpack.c.l.b16 %v6401
        %v6476 = vunpack.c.l.b16 %v6402
        %v6477 = vunpack.c.l.b16 %v6403
        %v6478 = vunpack.c.l.b16 %v6404
        %v6479 = vunpack.c.l.b16 %v6405
        %v6480 = vunpack.c.l.b16 %v6406
        %v6481 = vunpack.c.l.b16 %v6407
        %v6482 = vpack.c.b16 %v6446, %v6445
        %v6483 = vpack.c.b16 %v6448, %v6447
        %v6484 = vpack.c.b16 %v6450, %v6449
        %v6485 = vpack.c.b16 %v6452, %v6451
        %v6486 = vpack.c.b16 %v6454, %v6453
        %v6487 = vpack.c.b16 %v6456, %v6455
        %v6488 = vpack.c.b16 %v6458, %v6457
        %v6489 = vpack.c.b16 %v6460, %v6459
        %v6490 = vpack.c.b16 %v6462, %v6461
        %v6491 = vpack.c.b16 %v6464, %v6463
        %v6492 = vpack.c.b16 %v6466, %v6465
        %v6493 = vpack.c.b16 %v6468, %v6467
        %v6494 = vpack.c.b16 %v6470, %v6469
        %v6495 = vpack.c.b16 %v6472, %v6471
        %v6496 = vpack.c.b16 %v6474, %v6473
        %v6497 = vpack.c.b16 %v6476, %v6475
        %v6498 = vpack.c.b16 %v6478, %v6477
        %v6499 = vpack.c.b16 %v6480, %v6479
        %v6500 = vpack.c.b16 %v6481, %v6481
        %v6501 = vrot.slane %v6482, 2
        %v6502 = vrot.slane %v6483, 2
        %v6503 = vsel %vm1651, %v6501, %v6502
        %v6504 = vrot.slane %v6484, 2
        %v6505 = vsel %vm1651, %v6502, %v6504
        %v6506 = vrot.slane %v6485, 2
        %v6507 = vsel %vm1651, %v6504, %v6506
        %v6508 = vrot.slane %v6486, 2
        %v6509 = vsel %vm1651, %v6506, %v6508
        %v6510 = vrot.slane %v6487, 2
        %v6511 = vsel %vm1651, %v6508, %v6510
        %v6512 = vrot.slane %v6488, 2
        %v6513 = vsel %vm1651, %v6510, %v6512
        %v6514 = vrot.slane %v6489, 2
        %v6515 = vsel %vm1651, %v6512, %v6514
        %v6516 = vrot.slane %v6490, 2
        %v6517 = vsel %vm1651, %v6514, %v6516
        %v6518 = vrot.slane %v6491, 2
        %v6519 = vsel %vm1651, %v6516, %v6518
        %v6520 = vrot.slane %v6492, 2
        %v6521 = vsel %vm1651, %v6518, %v6520
        %v6522 = vrot.slane %v6493, 2
        %v6523 = vsel %vm1651, %v6520, %v6522
        %v6524 = vrot.slane %v6494, 2
        %v6525 = vsel %vm1651, %v6522, %v6524
        %v6526 = vrot.slane %v6495, 2
        %v6527 = vsel %vm1651, %v6524, %v6526
        %v6528 = vrot.slane %v6496, 2
        %v6529 = vsel %vm1651, %v6526, %v6528
        %v6530 = vrot.slane %v6497, 2
        %v6531 = vsel %vm1651, %v6528, %v6530
        %v6532 = vrot.slane %v6498, 2
        %v6533 = vsel %vm1651, %v6530, %v6532
        %v6534 = vrot.slane %v6499, 2
        %v6535 = vsel %vm1651, %v6532, %v6534
        %v6536 = vrot.slane %v6500, 2
        %v6537 = vsel %vm1651, %v6534, %v6536
        %6556 = vst [vmem:[#allocation2 + $0x30] sm:$0xff] %v6503
        %6557 = vst [vmem:[#allocation2 + $0x78] sm:$0xff] %v6505
        %6558 = vst [vmem:[#allocation2 + $0xc0] sm:$0xff] %v6507
        %6559 = vst [vmem:[#allocation2 + $0x108] sm:$0xff] %v6509
        %6560 = vst [vmem:[#allocation2 + $0x150] sm:$0xff] %v6511
        %6561 = vst [vmem:[#allocation2 + $0x198] sm:$0xff] %v6513
        %6562 = vst [vmem:[#allocation2 + $0x1e0] sm:$0xff] %v6515
        %6563 = vst [vmem:[#allocation2 + $0x228] sm:$0xff] %v6517
        %6564 = vst [vmem:[#allocation2 + $0x270] sm:$0xff] %v6519
        %6565 = vst [vmem:[#allocation2 + $0x2b8] sm:$0xff] %v6521
        %6566 = vst [vmem:[#allocation2 + $0x300] sm:$0xff] %v6523
        %6567 = vst [vmem:[#allocation2 + $0x348] sm:$0xff] %v6525
        %6568 = vst [vmem:[#allocation2 + $0x390] sm:$0xff] %v6527
        %6569 = vst [vmem:[#allocation2 + $0x3d8] sm:$0xff] %v6529
        %6570 = vst [vmem:[#allocation2 + $0x420] sm:$0xff] %v6531
        %6571 = vst [vmem:[#allocation2 + $0x468] sm:$0xff] %v6533
        %6572 = vst [vmem:[#allocation2 + $0x4b0] sm:$0xff] %v6535
        %6573 = vst [vmem:[#allocation2 + $0x4f8] sm:$0xff] %v6537
        %v6574 = vld [vmem:[#allocation3 + $0x10] sm:$0xc]
        %v6575 = vld [vmem:[#allocation3 + $0x14] sm:$0xf]
        %v6576 = vld [vmem:[#allocation3 + $0x18] sm:$0xf]
        %v6577 = vld [vmem:[#allocation3 + $0x1c] sm:$0xf]
        %v6578 = vld [vmem:[#allocation3 + $0x20] sm:$0xf]
        %v6579 = vld [vmem:[#allocation3 + $0x24] sm:$0xf]
        %v6580 = vld [vmem:[#allocation3 + $0x28] sm:$0xf]
        %v6581 = vld [vmem:[#allocation3 + $0x2c] sm:$0xf]
        %v6582 = vld [vmem:[#allocation3 + $0x30] sm:$0xf]
        %v6583 = vld [vmem:[#allocation3 + $0x34] sm:$0xf]
        %v6584 = vld [vmem:[#allocation3 + $0x38] sm:$0xf]
        %v6585 = vld [vmem:[#allocation3 + $0x3c] sm:$0xf]
        %v6586 = vld [vmem:[#allocation3 + $0x40] sm:$0xf]
        %v6587 = vld [vmem:[#allocation3 + $0x44] sm:$0xf]
        %v6588 = vld [vmem:[#allocation3 + $0x48] sm:$0xf]
        %v6589 = vld [vmem:[#allocation3 + $0x4c] sm:$0xf]
        %v6590 = vld [vmem:[#allocation3 + $0x50] sm:$0xf]
        %v6591 = vld [vmem:[#allocation3 + $0x54] sm:$0xf]
        %v6592 = vld [vmem:[#allocation3 + $0x58] sm:$0xf]
        %v6593 = vld [vmem:[#allocation3 + $0x5c] sm:$0xf]
        %v6594 = vld [vmem:[#allocation3 + $0x60] sm:$0xf]
        %v6595 = vld [vmem:[#allocation3 + $0x64] sm:$0xf]
        %v6596 = vld [vmem:[#allocation3 + $0x68] sm:$0xf]
        %v6597 = vld [vmem:[#allocation3 + $0x6c] sm:$0xf]
        %v6598 = vld [vmem:[#allocation3 + $0x70] sm:$0xf]
        %v6599 = vld [vmem:[#allocation3 + $0x74] sm:$0xf]
        %v6600 = vld [vmem:[#allocation3 + $0x78] sm:$0xf]
        %v6601 = vld [vmem:[#allocation3 + $0x7c] sm:$0xf]
        %v6602 = vld [vmem:[#allocation3 + $0x80] sm:$0xf]
        %v6603 = vld [vmem:[#allocation3 + $0x84] sm:$0xf]
        %v6604 = vld [vmem:[#allocation3 + $0x88] sm:$0xf]
        %v6605 = vld [vmem:[#allocation3 + $0x8c] sm:$0xf]
        %v6606 = vld [vmem:[#allocation3 + $0x90] sm:$0xf]
        %v6607 = vld [vmem:[#allocation3 + $0x94] sm:$0xf]
        %v6608 = vld [vmem:[#allocation3 + $0x98] sm:$0xf]
        %v6609 = vld [vmem:[#allocation3 + $0x9c] sm:$0xf]
        %v6610 = vld [vmem:[#allocation3 + $0xa0] sm:$0x7]
        %v6648 = vunpack.c.l.b16 %v6574
        %v6649 = vunpack.c.l.b16 %v6575
        %v6650 = vunpack.c.l.b16 %v6576
        %v6651 = vunpack.c.l.b16 %v6577
        %v6652 = vunpack.c.l.b16 %v6578
        %v6653 = vunpack.c.l.b16 %v6579
        %v6654 = vunpack.c.l.b16 %v6580
        %v6655 = vunpack.c.l.b16 %v6581
        %v6656 = vunpack.c.l.b16 %v6582
        %v6657 = vunpack.c.l.b16 %v6583
        %v6658 = vunpack.c.l.b16 %v6584
        %v6659 = vunpack.c.l.b16 %v6585
        %v6660 = vunpack.c.l.b16 %v6586
        %v6661 = vunpack.c.l.b16 %v6587
        %v6662 = vunpack.c.l.b16 %v6588
        %v6663 = vunpack.c.l.b16 %v6589
        %v6664 = vunpack.c.l.b16 %v6590
        %v6665 = vunpack.c.l.b16 %v6591
        %v6666 = vunpack.c.l.b16 %v6592
        %v6667 = vunpack.c.l.b16 %v6593
        %v6668 = vunpack.c.l.b16 %v6594
        %v6669 = vunpack.c.l.b16 %v6595
        %v6670 = vunpack.c.l.b16 %v6596
        %v6671 = vunpack.c.l.b16 %v6597
        %v6672 = vunpack.c.l.b16 %v6598
        %v6673 = vunpack.c.l.b16 %v6599
        %v6674 = vunpack.c.l.b16 %v6600
        %v6675 = vunpack.c.l.b16 %v6601
        %v6676 = vunpack.c.l.b16 %v6602
        %v6677 = vunpack.c.l.b16 %v6603
        %v6678 = vunpack.c.l.b16 %v6604
        %v6679 = vunpack.c.l.b16 %v6605
        %v6680 = vunpack.c.l.b16 %v6606
        %v6681 = vunpack.c.l.b16 %v6607
        %v6682 = vunpack.c.l.b16 %v6608
        %v6683 = vunpack.c.l.b16 %v6609
        %v6684 = vunpack.c.l.b16 %v6610
        %v6685 = vpack.c.b16 %v6649, %v6648
        %v6686 = vpack.c.b16 %v6651, %v6650
        %v6687 = vpack.c.b16 %v6653, %v6652
        %v6688 = vpack.c.b16 %v6655, %v6654
        %v6689 = vpack.c.b16 %v6657, %v6656
        %v6690 = vpack.c.b16 %v6659, %v6658
        %v6691 = vpack.c.b16 %v6661, %v6660
        %v6692 = vpack.c.b16 %v6663, %v6662
        %v6693 = vpack.c.b16 %v6665, %v6664
        %v6694 = vpack.c.b16 %v6667, %v6666
        %v6695 = vpack.c.b16 %v6669, %v6668
        %v6696 = vpack.c.b16 %v6671, %v6670
        %v6697 = vpack.c.b16 %v6673, %v6672
        %v6698 = vpack.c.b16 %v6675, %v6674
        %v6699 = vpack.c.b16 %v6677, %v6676
        %v6700 = vpack.c.b16 %v6679, %v6678
        %v6701 = vpack.c.b16 %v6681, %v6680
        %v6702 = vpack.c.b16 %v6683, %v6682
        %v6703 = vpack.c.b16 %v6684, %v6684
        %v6705 = vshrl.u32 %v6685, 16
        %v6707 = vrot.slane %v6705, 2
        %v6708 = vshll.u32 %v6685, 16
        %v6710 = vrot.slane %v6708, 3
        %v6711 = vor.u32 %v6707, %v6710
        %v6713 = vshrl.u32 %v6686, 16
        %v6715 = vrot.slane %v6713, 2
        %v6716 = vshll.u32 %v6686, 16
        %v6718 = vrot.slane %v6716, 3
        %v6719 = vor.u32 %v6715, %v6718
        %v6720 = vsel %vm2058, %v6711, %v6719
        %v6722 = vshrl.u32 %v6687, 16
        %v6724 = vrot.slane %v6722, 2
        %v6725 = vshll.u32 %v6687, 16
        %v6727 = vrot.slane %v6725, 3
        %v6728 = vor.u32 %v6724, %v6727
        %v6729 = vsel %vm2058, %v6719, %v6728
        %v6731 = vshrl.u32 %v6688, 16
        %v6733 = vrot.slane %v6731, 2
        %v6734 = vshll.u32 %v6688, 16
        %v6736 = vrot.slane %v6734, 3
        %v6737 = vor.u32 %v6733, %v6736
        %v6738 = vsel %vm2058, %v6728, %v6737
        %v6740 = vshrl.u32 %v6689, 16
        %v6742 = vrot.slane %v6740, 2
        %v6743 = vshll.u32 %v6689, 16
        %v6745 = vrot.slane %v6743, 3
        %v6746 = vor.u32 %v6742, %v6745
        %v6747 = vsel %vm2058, %v6737, %v6746
        %v6749 = vshrl.u32 %v6690, 16
        %v6751 = vrot.slane %v6749, 2
        %v6752 = vshll.u32 %v6690, 16
        %v6754 = vrot.slane %v6752, 3
        %v6755 = vor.u32 %v6751, %v6754
        %v6756 = vsel %vm2058, %v6746, %v6755
        %v6758 = vshrl.u32 %v6691, 16
        %v6760 = vrot.slane %v6758, 2
        %v6761 = vshll.u32 %v6691, 16
        %v6763 = vrot.slane %v6761, 3
        %v6764 = vor.u32 %v6760, %v6763
        %v6765 = vsel %vm2058, %v6755, %v6764
        %v6767 = vshrl.u32 %v6692, 16
        %v6769 = vrot.slane %v6767, 2
        %v6770 = vshll.u32 %v6692, 16
        %v6772 = vrot.slane %v6770, 3
        %v6773 = vor.u32 %v6769, %v6772
        %v6774 = vsel %vm2058, %v6764, %v6773
        %v6776 = vshrl.u32 %v6693, 16
        %v6778 = vrot.slane %v6776, 2
        %v6779 = vshll.u32 %v6693, 16
        %v6781 = vrot.slane %v6779, 3
        %v6782 = vor.u32 %v6778, %v6781
        %v6783 = vsel %vm2058, %v6773, %v6782
        %v6785 = vshrl.u32 %v6694, 16
        %v6787 = vrot.slane %v6785, 2
        %v6788 = vshll.u32 %v6694, 16
        %v6790 = vrot.slane %v6788, 3
        %v6791 = vor.u32 %v6787, %v6790
        %v6792 = vsel %vm2058, %v6782, %v6791
        %v6794 = vshrl.u32 %v6695, 16
        %v6796 = vrot.slane %v6794, 2
        %v6797 = vshll.u32 %v6695, 16
        %v6799 = vrot.slane %v6797, 3
        %v6800 = vor.u32 %v6796, %v6799
        %v6801 = vsel %vm2058, %v6791, %v6800
        %v6803 = vshrl.u32 %v6696, 16
        %v6805 = vrot.slane %v6803, 2
        %v6806 = vshll.u32 %v6696, 16
        %v6808 = vrot.slane %v6806, 3
        %v6809 = vor.u32 %v6805, %v6808
        %v6810 = vsel %vm2058, %v6800, %v6809
        %v6812 = vshrl.u32 %v6697, 16
        %v6814 = vrot.slane %v6812, 2
        %v6815 = vshll.u32 %v6697, 16
        %v6817 = vrot.slane %v6815, 3
        %v6818 = vor.u32 %v6814, %v6817
        %v6819 = vsel %vm2058, %v6809, %v6818
        %v6821 = vshrl.u32 %v6698, 16
        %v6823 = vrot.slane %v6821, 2
        %v6824 = vshll.u32 %v6698, 16
        %v6826 = vrot.slane %v6824, 3
        %v6827 = vor.u32 %v6823, %v6826
        %v6828 = vsel %vm2058, %v6818, %v6827
        %v6830 = vshrl.u32 %v6699, 16
        %v6832 = vrot.slane %v6830, 2
        %v6833 = vshll.u32 %v6699, 16
        %v6835 = vrot.slane %v6833, 3
        %v6836 = vor.u32 %v6832, %v6835
        %v6837 = vsel %vm2058, %v6827, %v6836
        %v6839 = vshrl.u32 %v6700, 16
        %v6841 = vrot.slane %v6839, 2
        %v6842 = vshll.u32 %v6700, 16
        %v6844 = vrot.slane %v6842, 3
        %v6845 = vor.u32 %v6841, %v6844
        %v6846 = vsel %vm2058, %v6836, %v6845
        %v6848 = vshrl.u32 %v6701, 16
        %v6850 = vrot.slane %v6848, 2
        %v6851 = vshll.u32 %v6701, 16
        %v6853 = vrot.slane %v6851, 3
        %v6854 = vor.u32 %v6850, %v6853
        %v6855 = vsel %vm2058, %v6845, %v6854
        %v6857 = vshrl.u32 %v6702, 16
        %v6859 = vrot.slane %v6857, 2
        %v6860 = vshll.u32 %v6702, 16
        %v6862 = vrot.slane %v6860, 3
        %v6863 = vor.u32 %v6859, %v6862
        %v6864 = vsel %vm2058, %v6854, %v6863
        %v6866 = vshrl.u32 %v6703, 16
        %v6868 = vrot.slane %v6866, 2
        %v6869 = vshll.u32 %v6703, 16
        %v6871 = vrot.slane %v6869, 3
        %v6872 = vor.u32 %v6868, %v6871
        %v6873 = vsel %vm2058, %v6863, %v6872
        %6892 = vst [vmem:[#allocation2 + $0x38] sm:$0xff] %v6720
        %6893 = vst [vmem:[#allocation2 + $0x80] sm:$0xff] %v6729
        %6894 = vst [vmem:[#allocation2 + $0xc8] sm:$0xff] %v6738
        %6895 = vst [vmem:[#allocation2 + $0x110] sm:$0xff] %v6747
        %6896 = vst [vmem:[#allocation2 + $0x158] sm:$0xff] %v6756
        %6897 = vst [vmem:[#allocation2 + $0x1a0] sm:$0xff] %v6765
        %6898 = vst [vmem:[#allocation2 + $0x1e8] sm:$0xff] %v6774
        %6899 = vst [vmem:[#allocation2 + $0x230] sm:$0xff] %v6783
        %6900 = vst [vmem:[#allocation2 + $0x278] sm:$0xff] %v6792
        %6901 = vst [vmem:[#allocation2 + $0x2c0] sm:$0xff] %v6801
        %6902 = vst [vmem:[#allocation2 + $0x308] sm:$0xff] %v6810
        %6903 = vst [vmem:[#allocation2 + $0x350] sm:$0xff] %v6819
        %6904 = vst [vmem:[#allocation2 + $0x398] sm:$0xff] %v6828
        %6905 = vst [vmem:[#allocation2 + $0x3e0] sm:$0xff] %v6837
        %6906 = vst [vmem:[#allocation2 + $0x428] sm:$0xff] %v6846
        %6907 = vst [vmem:[#allocation2 + $0x470] sm:$0xff] %v6855
        %6908 = vst [vmem:[#allocation2 + $0x4b8] sm:$0xff] %v6864
        %6909 = vst [vmem:[#allocation2 + $0x500] sm:$0xff] %v6873
        %v6910 = vld [vmem:[#allocation3 + $0x10] sm:$0x8]
        %v6911 = vld [vmem:[#allocation3 + $0x14] sm:$0xf]
        %v6912 = vld [vmem:[#allocation3 + $0x18] sm:$0xf]
        %v6913 = vld [vmem:[#allocation3 + $0x1c] sm:$0xf]
        %v6914 = vld [vmem:[#allocation3 + $0x20] sm:$0xf]
        %v6915 = vld [vmem:[#allocation3 + $0x24] sm:$0xf]
        %v6916 = vld [vmem:[#allocation3 + $0x28] sm:$0xf]
        %v6917 = vld [vmem:[#allocation3 + $0x2c] sm:$0xf]
        %v6918 = vld [vmem:[#allocation3 + $0x30] sm:$0xf]
        %v6919 = vld [vmem:[#allocation3 + $0x34] sm:$0xf]
        %v6920 = vld [vmem:[#allocation3 + $0x38] sm:$0xf]
        %v6921 = vld [vmem:[#allocation3 + $0x3c] sm:$0xf]
        %v6922 = vld [vmem:[#allocation3 + $0x40] sm:$0xf]
        %v6923 = vld [vmem:[#allocation3 + $0x44] sm:$0xf]
        %v6924 = vld [vmem:[#allocation3 + $0x48] sm:$0xf]
        %v6925 = vld [vmem:[#allocation3 + $0x4c] sm:$0xf]
        %v6926 = vld [vmem:[#allocation3 + $0x50] sm:$0xf]
        %v6927 = vld [vmem:[#allocation3 + $0x54] sm:$0xf]
        %v6928 = vld [vmem:[#allocation3 + $0x58] sm:$0xf]
        %v6929 = vld [vmem:[#allocation3 + $0x5c] sm:$0xf]
        %v6930 = vld [vmem:[#allocation3 + $0x60] sm:$0xf]
        %v6931 = vld [vmem:[#allocation3 + $0x64] sm:$0xf]
        %v6932 = vld [vmem:[#allocation3 + $0x68] sm:$0xf]
        %v6933 = vld [vmem:[#allocation3 + $0x6c] sm:$0xf]
        %v6934 = vld [vmem:[#allocation3 + $0x70] sm:$0xf]
        %v6935 = vld [vmem:[#allocation3 + $0x74] sm:$0xf]
        %v6936 = vld [vmem:[#allocation3 + $0x78] sm:$0xf]
        %v6937 = vld [vmem:[#allocation3 + $0x7c] sm:$0xf]
        %v6938 = vld [vmem:[#allocation3 + $0x80] sm:$0xf]
        %v6939 = vld [vmem:[#allocation3 + $0x84] sm:$0xf]
        %v6940 = vld [vmem:[#allocation3 + $0x88] sm:$0xf]
        %v6941 = vld [vmem:[#allocation3 + $0x8c] sm:$0xf]
        %v6942 = vld [vmem:[#allocation3 + $0x90] sm:$0xf]
        %v6943 = vld [vmem:[#allocation3 + $0x94] sm:$0xf]
        %v6944 = vld [vmem:[#allocation3 + $0x98] sm:$0xf]
        %v6945 = vld [vmem:[#allocation3 + $0x9c] sm:$0xf]
        %v6946 = vld [vmem:[#allocation3 + $0xa0] sm:$0x7]
        %v6984 = vunpack.c.l.b16 %v6910
        %v6985 = vunpack.c.l.b16 %v6911
        %v6986 = vunpack.c.l.b16 %v6912
        %v6987 = vunpack.c.l.b16 %v6913
        %v6988 = vunpack.c.l.b16 %v6914
        %v6989 = vunpack.c.l.b16 %v6915
        %v6990 = vunpack.c.l.b16 %v6916
        %v6991 = vunpack.c.l.b16 %v6917
        %v6992 = vunpack.c.l.b16 %v6918
        %v6993 = vunpack.c.l.b16 %v6919
        %v6994 = vunpack.c.l.b16 %v6920
        %v6995 = vunpack.c.l.b16 %v6921
        %v6996 = vunpack.c.l.b16 %v6922
        %v6997 = vunpack.c.l.b16 %v6923
        %v6998 = vunpack.c.l.b16 %v6924
        %v6999 = vunpack.c.l.b16 %v6925
        %v7000 = vunpack.c.l.b16 %v6926
        %v7001 = vunpack.c.l.b16 %v6927
        %v7002 = vunpack.c.l.b16 %v6928
        %v7003 = vunpack.c.l.b16 %v6929
        %v7004 = vunpack.c.l.b16 %v6930
        %v7005 = vunpack.c.l.b16 %v6931
        %v7006 = vunpack.c.l.b16 %v6932
        %v7007 = vunpack.c.l.b16 %v6933
        %v7008 = vunpack.c.l.b16 %v6934
        %v7009 = vunpack.c.l.b16 %v6935
        %v7010 = vunpack.c.l.b16 %v6936
        %v7011 = vunpack.c.l.b16 %v6937
        %v7012 = vunpack.c.l.b16 %v6938
        %v7013 = vunpack.c.l.b16 %v6939
        %v7014 = vunpack.c.l.b16 %v6940
        %v7015 = vunpack.c.l.b16 %v6941
        %v7016 = vunpack.c.l.b16 %v6942
        %v7017 = vunpack.c.l.b16 %v6943
        %v7018 = vunpack.c.l.b16 %v6944
        %v7019 = vunpack.c.l.b16 %v6945
        %v7020 = vunpack.c.l.b16 %v6946
        %v7021 = vpack.c.b16 %v6985, %v6984
        %v7022 = vpack.c.b16 %v6987, %v6986
        %v7023 = vpack.c.b16 %v6989, %v6988
        %v7024 = vpack.c.b16 %v6991, %v6990
        %v7025 = vpack.c.b16 %v6993, %v6992
        %v7026 = vpack.c.b16 %v6995, %v6994
        %v7027 = vpack.c.b16 %v6997, %v6996
        %v7028 = vpack.c.b16 %v6999, %v6998
        %v7029 = vpack.c.b16 %v7001, %v7000
        %v7030 = vpack.c.b16 %v7003, %v7002
        %v7031 = vpack.c.b16 %v7005, %v7004
        %v7032 = vpack.c.b16 %v7007, %v7006
        %v7033 = vpack.c.b16 %v7009, %v7008
        %v7034 = vpack.c.b16 %v7011, %v7010
        %v7035 = vpack.c.b16 %v7013, %v7012
        %v7036 = vpack.c.b16 %v7015, %v7014
        %v7037 = vpack.c.b16 %v7017, %v7016
        %v7038 = vpack.c.b16 %v7019, %v7018
        %v7039 = vpack.c.b16 %v7020, %v7020
        %v7040 = vrot.slane %v7021, 3
        %v7041 = vrot.slane %v7022, 3
        %v7042 = vsel %vm2395, %v7040, %v7041
        %v7043 = vrot.slane %v7023, 3
        %v7044 = vsel %vm2395, %v7041, %v7043
        %v7045 = vrot.slane %v7024, 3
        %v7046 = vsel %vm2395, %v7043, %v7045
        %v7047 = vrot.slane %v7025, 3
        %v7048 = vsel %vm2395, %v7045, %v7047
        %v7049 = vrot.slane %v7026, 3
        %v7050 = vsel %vm2395, %v7047, %v7049
        %v7051 = vrot.slane %v7027, 3
        %v7052 = vsel %vm2395, %v7049, %v7051
        %v7053 = vrot.slane %v7028, 3
        %v7054 = vsel %vm2395, %v7051, %v7053
        %v7055 = vrot.slane %v7029, 3
        %v7056 = vsel %vm2395, %v7053, %v7055
        %v7057 = vrot.slane %v7030, 3
        %v7058 = vsel %vm2395, %v7055, %v7057
        %v7059 = vrot.slane %v7031, 3
        %v7060 = vsel %vm2395, %v7057, %v7059
        %v7061 = vrot.slane %v7032, 3
        %v7062 = vsel %vm2395, %v7059, %v7061
        %v7063 = vrot.slane %v7033, 3
        %v7064 = vsel %vm2395, %v7061, %v7063
        %v7065 = vrot.slane %v7034, 3
        %v7066 = vsel %vm2395, %v7063, %v7065
        %v7067 = vrot.slane %v7035, 3
        %v7068 = vsel %vm2395, %v7065, %v7067
        %v7069 = vrot.slane %v7036, 3
        %v7070 = vsel %vm2395, %v7067, %v7069
        %v7071 = vrot.slane %v7037, 3
        %v7072 = vsel %vm2395, %v7069, %v7071
        %v7073 = vrot.slane %v7038, 3
        %v7074 = vsel %vm2395, %v7071, %v7073
        %v7075 = vrot.slane %v7039, 3
        %v7076 = vsel %vm2395, %v7073, %v7075
        %7095 = vst [vmem:[#allocation2 + $0x40] sm:$0xff] %v7042
        %7096 = vst [vmem:[#allocation2 + $0x88] sm:$0xff] %v7044
        %7097 = vst [vmem:[#allocation2 + $0xd0] sm:$0xff] %v7046
        %7098 = vst [vmem:[#allocation2 + $0x118] sm:$0xff] %v7048
        %7099 = vst [vmem:[#allocation2 + $0x160] sm:$0xff] %v7050
        %7100 = vst [vmem:[#allocation2 + $0x1a8] sm:$0xff] %v7052
        %7101 = vst [vmem:[#allocation2 + $0x1f0] sm:$0xff] %v7054
        %7102 = vst [vmem:[#allocation2 + $0x238] sm:$0xff] %v7056
        %7103 = vst [vmem:[#allocation2 + $0x280] sm:$0xff] %v7058
        %7104 = vst [vmem:[#allocation2 + $0x2c8] sm:$0xff] %v7060
        %7105 = vst [vmem:[#allocation2 + $0x310] sm:$0xff] %v7062
        %7106 = vst [vmem:[#allocation2 + $0x358] sm:$0xff] %v7064
        %7107 = vst [vmem:[#allocation2 + $0x3a0] sm:$0xff] %v7066
        %7108 = vst [vmem:[#allocation2 + $0x3e8] sm:$0xff] %v7068
        %7109 = vst [vmem:[#allocation2 + $0x430] sm:$0xff] %v7070
        %7110 = vst [vmem:[#allocation2 + $0x478] sm:$0xff] %v7072
        %7111 = vst [vmem:[#allocation2 + $0x4c0] sm:$0xff] %v7074
        %7112 = vst [vmem:[#allocation2 + $0x508] sm:$0xff] %v7076
        %v7113 = vld [vmem:[#allocation2] sm:$0xff]
        %v7114 = vld [vmem:[#allocation2 + $0x8] sm:$0xff]
        %v7115 = vld [vmem:[#allocation2 + $0x10] sm:$0xff]
        %v7116 = vld [vmem:[#allocation2 + $0x18] sm:$0xff]
        %v7117 = vld [vmem:[#allocation2 + $0x20] sm:$0xff]
        %v7118 = vld [vmem:[#allocation2 + $0x28] sm:$0xff]
        %v7119 = vld [vmem:[#allocation2 + $0x30] sm:$0xff]
        %v7120 = vld [vmem:[#allocation2 + $0x38] sm:$0xff]
        %v7121 = vld [vmem:[#allocation2 + $0x40] sm:$0xff]
        %v7122 = vld [vmem:[#allocation2 + $0x48] sm:$0xff]
        %v7123 = vld [vmem:[#allocation2 + $0x50] sm:$0xff]
        %v7124 = vld [vmem:[#allocation2 + $0x58] sm:$0xff]
        %v7125 = vld [vmem:[#allocation2 + $0x60] sm:$0xff]
        %v7126 = vld [vmem:[#allocation2 + $0x68] sm:$0xff]
        %v7127 = vld [vmem:[#allocation2 + $0x70] sm:$0xff]
        %v7128 = vld [vmem:[#allocation2 + $0x78] sm:$0xff]
        %v7129 = vld [vmem:[#allocation2 + $0x80] sm:$0xff]
        %v7130 = vld [vmem:[#allocation2 + $0x88] sm:$0xff]
        %v7131 = vld [vmem:[#allocation2 + $0x90] sm:$0xff]
        %v7132 = vld [vmem:[#allocation2 + $0x98] sm:$0xff]
        %v7133 = vld [vmem:[#allocation2 + $0xa0] sm:$0xff]
        %v7134 = vld [vmem:[#allocation2 + $0xa8] sm:$0xff]
        %v7135 = vld [vmem:[#allocation2 + $0xb0] sm:$0xff]
        %v7136 = vld [vmem:[#allocation2 + $0xb8] sm:$0xff]
        %v7137 = vld [vmem:[#allocation2 + $0xc0] sm:$0xff]
        %v7138 = vld [vmem:[#allocation2 + $0xc8] sm:$0xff]
        %v7139 = vld [vmem:[#allocation2 + $0xd0] sm:$0xff]
        %v7140 = vld [vmem:[#allocation2 + $0xd8] sm:$0xff]
        %v7141 = vld [vmem:[#allocation2 + $0xe0] sm:$0xff]
        %v7142 = vld [vmem:[#allocation2 + $0xe8] sm:$0xff]
        %v7143 = vld [vmem:[#allocation2 + $0xf0] sm:$0xff]
        %v7144 = vld [vmem:[#allocation2 + $0xf8] sm:$0xff]
        %v7145 = vld [vmem:[#allocation2 + $0x100] sm:$0xff]
        %v7146 = vld [vmem:[#allocation2 + $0x108] sm:$0xff]
        %v7147 = vld [vmem:[#allocation2 + $0x110] sm:$0xff]
        %v7148 = vld [vmem:[#allocation2 + $0x118] sm:$0xff]
        %v7149 = vld [vmem:[#allocation2 + $0x120] sm:$0xff]
        %v7150 = vld [vmem:[#allocation2 + $0x128] sm:$0xff]
        %v7151 = vld [vmem:[#allocation2 + $0x130] sm:$0xff]
        %v7152 = vld [vmem:[#allocation2 + $0x138] sm:$0xff]
        %v7153 = vld [vmem:[#allocation2 + $0x140] sm:$0xff]
        %v7154 = vld [vmem:[#allocation2 + $0x148] sm:$0xff]
        %v7155 = vld [vmem:[#allocation2 + $0x150] sm:$0xff]
        %v7156 = vld [vmem:[#allocation2 + $0x158] sm:$0xff]
        %v7157 = vld [vmem:[#allocation2 + $0x160] sm:$0xff]
        %v7158 = vld [vmem:[#allocation2 + $0x168] sm:$0xff]
        %v7159 = vld [vmem:[#allocation2 + $0x170] sm:$0xff]
        %v7160 = vld [vmem:[#allocation2 + $0x178] sm:$0xff]
        %v7161 = vld [vmem:[#allocation2 + $0x180] sm:$0xff]
        %v7162 = vld [vmem:[#allocation2 + $0x188] sm:$0xff]
        %v7163 = vld [vmem:[#allocation2 + $0x190] sm:$0xff]
        %v7164 = vld [vmem:[#allocation2 + $0x198] sm:$0xff]
        %v7165 = vld [vmem:[#allocation2 + $0x1a0] sm:$0xff]
        %v7166 = vld [vmem:[#allocation2 + $0x1a8] sm:$0xff]
        %v7167 = vld [vmem:[#allocation2 + $0x1b0] sm:$0xff]
        %v7168 = vld [vmem:[#allocation2 + $0x1b8] sm:$0xff]
        %v7169 = vld [vmem:[#allocation2 + $0x1c0] sm:$0xff]
        %v7170 = vld [vmem:[#allocation2 + $0x1c8] sm:$0xff]
        %v7171 = vld [vmem:[#allocation2 + $0x1d0] sm:$0xff]
        %v7172 = vld [vmem:[#allocation2 + $0x1d8] sm:$0xff]
        %v7173 = vld [vmem:[#allocation2 + $0x1e0] sm:$0xff]
        %v7174 = vld [vmem:[#allocation2 + $0x1e8] sm:$0xff]
        %v7175 = vld [vmem:[#allocation2 + $0x1f0] sm:$0xff]
        %v7176 = vld [vmem:[#allocation2 + $0x1f8] sm:$0xff]
        %v7177 = vld [vmem:[#allocation2 + $0x200] sm:$0xff]
        %v7178 = vld [vmem:[#allocation2 + $0x208] sm:$0xff]
        %v7179 = vld [vmem:[#allocation2 + $0x210] sm:$0xff]
        %v7180 = vld [vmem:[#allocation2 + $0x218] sm:$0xff]
        %v7181 = vld [vmem:[#allocation2 + $0x220] sm:$0xff]
        %v7182 = vld [vmem:[#allocation2 + $0x228] sm:$0xff]
        %v7183 = vld [vmem:[#allocation2 + $0x230] sm:$0xff]
        %v7184 = vld [vmem:[#allocation2 + $0x238] sm:$0xff]
        %v7185 = vld [vmem:[#allocation2 + $0x240] sm:$0xff]
        %v7186 = vld [vmem:[#allocation2 + $0x248] sm:$0xff]
        %v7187 = vld [vmem:[#allocation2 + $0x250] sm:$0xff]
        %v7188 = vld [vmem:[#allocation2 + $0x258] sm:$0xff]
        %v7189 = vld [vmem:[#allocation2 + $0x260] sm:$0xff]
        %v7190 = vld [vmem:[#allocation2 + $0x268] sm:$0xff]
        %v7191 = vld [vmem:[#allocation2 + $0x270] sm:$0xff]
        %v7192 = vld [vmem:[#allocation2 + $0x278] sm:$0xff]
        %v7193 = vld [vmem:[#allocation2 + $0x280] sm:$0xff]
        %v7194 = vld [vmem:[#allocation2 + $0x288] sm:$0xff]
        %v7195 = vld [vmem:[#allocation2 + $0x290] sm:$0xff]
        %v7196 = vld [vmem:[#allocation2 + $0x298] sm:$0xff]
        %v7197 = vld [vmem:[#allocation2 + $0x2a0] sm:$0xff]
        %v7198 = vld [vmem:[#allocation2 + $0x2a8] sm:$0xff]
        %v7199 = vld [vmem:[#allocation2 + $0x2b0] sm:$0xff]
        %v7200 = vld [vmem:[#allocation2 + $0x2b8] sm:$0xff]
        %v7201 = vld [vmem:[#allocation2 + $0x2c0] sm:$0xff]
        %v7202 = vld [vmem:[#allocation2 + $0x2c8] sm:$0xff]
        %v7203 = vld [vmem:[#allocation2 + $0x2d0] sm:$0xff]
        %v7204 = vld [vmem:[#allocation2 + $0x2d8] sm:$0xff]
        %v7205 = vld [vmem:[#allocation2 + $0x2e0] sm:$0xff]
        %v7206 = vld [vmem:[#allocation2 + $0x2e8] sm:$0xff]
        %v7207 = vld [vmem:[#allocation2 + $0x2f0] sm:$0xff]
        %v7208 = vld [vmem:[#allocation2 + $0x2f8] sm:$0xff]
        %v7209 = vld [vmem:[#allocation2 + $0x300] sm:$0xff]
        %v7210 = vld [vmem:[#allocation2 + $0x308] sm:$0xff]
        %v7211 = vld [vmem:[#allocation2 + $0x310] sm:$0xff]
        %v7212 = vld [vmem:[#allocation2 + $0x318] sm:$0xff]
        %v7213 = vld [vmem:[#allocation2 + $0x320] sm:$0xff]
        %v7214 = vld [vmem:[#allocation2 + $0x328] sm:$0xff]
        %v7215 = vld [vmem:[#allocation2 + $0x330] sm:$0xff]
        %v7216 = vld [vmem:[#allocation2 + $0x338] sm:$0xff]
        %v7217 = vld [vmem:[#allocation2 + $0x340] sm:$0xff]
        %v7218 = vld [vmem:[#allocation2 + $0x348] sm:$0xff]
        %v7219 = vld [vmem:[#allocation2 + $0x350] sm:$0xff]
        %v7220 = vld [vmem:[#allocation2 + $0x358] sm:$0xff]
        %v7221 = vld [vmem:[#allocation2 + $0x360] sm:$0xff]
        %v7222 = vld [vmem:[#allocation2 + $0x368] sm:$0xff]
        %v7223 = vld [vmem:[#allocation2 + $0x370] sm:$0xff]
        %v7224 = vld [vmem:[#allocation2 + $0x378] sm:$0xff]
        %v7225 = vld [vmem:[#allocation2 + $0x380] sm:$0xff]
        %v7226 = vld [vmem:[#allocation2 + $0x388] sm:$0xff]
        %v7227 = vld [vmem:[#allocation2 + $0x390] sm:$0xff]
        %v7228 = vld [vmem:[#allocation2 + $0x398] sm:$0xff]
        %v7229 = vld [vmem:[#allocation2 + $0x3a0] sm:$0xff]
        %v7230 = vld [vmem:[#allocation2 + $0x3a8] sm:$0xff]
        %v7231 = vld [vmem:[#allocation2 + $0x3b0] sm:$0xff]
        %v7232 = vld [vmem:[#allocation2 + $0x3b8] sm:$0xff]
        %v7233 = vld [vmem:[#allocation2 + $0x3c0] sm:$0xff]
        %v7234 = vld [vmem:[#allocation2 + $0x3c8] sm:$0xff]
        %v7235 = vld [vmem:[#allocation2 + $0x3d0] sm:$0xff]
        %v7236 = vld [vmem:[#allocation2 + $0x3d8] sm:$0xff]
        %v7237 = vld [vmem:[#allocation2 + $0x3e0] sm:$0xff]
        %v7238 = vld [vmem:[#allocation2 + $0x3e8] sm:$0xff]
        %v7239 = vld [vmem:[#allocation2 + $0x3f0] sm:$0xff]
        %v7240 = vld [vmem:[#allocation2 + $0x3f8] sm:$0xff]
        %v7241 = vld [vmem:[#allocation2 + $0x400] sm:$0xff]
        %v7242 = vld [vmem:[#allocation2 + $0x408] sm:$0xff]
        %v7243 = vld [vmem:[#allocation2 + $0x410] sm:$0xff]
        %v7244 = vld [vmem:[#allocation2 + $0x418] sm:$0xff]
        %v7245 = vld [vmem:[#allocation2 + $0x420] sm:$0xff]
        %v7246 = vld [vmem:[#allocation2 + $0x428] sm:$0xff]
        %v7247 = vld [vmem:[#allocation2 + $0x430] sm:$0xff]
        %v7248 = vld [vmem:[#allocation2 + $0x438] sm:$0xff]
        %v7249 = vld [vmem:[#allocation2 + $0x440] sm:$0xff]
        %v7250 = vld [vmem:[#allocation2 + $0x448] sm:$0xff]
        %v7251 = vld [vmem:[#allocation2 + $0x450] sm:$0xff]
        %v7252 = vld [vmem:[#allocation2 + $0x458] sm:$0xff]
        %v7253 = vld [vmem:[#allocation2 + $0x460] sm:$0xff]
        %v7254 = vld [vmem:[#allocation2 + $0x468] sm:$0xff]
        %v7255 = vld [vmem:[#allocation2 + $0x470] sm:$0xff]
        %v7256 = vld [vmem:[#allocation2 + $0x478] sm:$0xff]
        %v7257 = vld [vmem:[#allocation2 + $0x480] sm:$0xff]
        %v7258 = vld [vmem:[#allocation2 + $0x488] sm:$0xff]
        %v7259 = vld [vmem:[#allocation2 + $0x490] sm:$0xff]
        %v7260 = vld [vmem:[#allocation2 + $0x498] sm:$0xff]
        %v7261 = vld [vmem:[#allocation2 + $0x4a0] sm:$0xff]
        %v7262 = vld [vmem:[#allocation2 + $0x4a8] sm:$0xff]
        %v7263 = vld [vmem:[#allocation2 + $0x4b0] sm:$0xff]
        %v7264 = vld [vmem:[#allocation2 + $0x4b8] sm:$0xff]
        %v7265 = vld [vmem:[#allocation2 + $0x4c0] sm:$0xff]
        %v7266 = vld [vmem:[#allocation2 + $0x4c8] sm:$0xff]
        %v7267 = vld [vmem:[#allocation2 + $0x4d0] sm:$0xff]
        %v7268 = vld [vmem:[#allocation2 + $0x4d8] sm:$0xff]
        %v7269 = vld [vmem:[#allocation2 + $0x4e0] sm:$0xff]
        %v7270 = vld [vmem:[#allocation2 + $0x4e8] sm:$0xff]
        %v7271 = vld [vmem:[#allocation2 + $0x4f0] sm:$0xff]
        %v7272 = vld [vmem:[#allocation2 + $0x4f8] sm:$0xff]
        %v7273 = vld [vmem:[#allocation2 + $0x500] sm:$0xff]
        %v7274 = vld [vmem:[#allocation2 + $0x508] sm:$0xff]
        %v7275 = vld [vmem:[#allocation9] sm:$0xf]
        %v7276 = vld [vmem:[#allocation9 + $0x4] sm:$0xf]
        %v7277 = vld [vmem:[#allocation9 + $0x8] sm:$0xf]
        %v7278 = vld [vmem:[#allocation9 + $0xc] sm:$0xf]
        %v7279 = vld [vmem:[#allocation9 + $0x10] sm:$0xf]
        %v7280 = vld [vmem:[#allocation9 + $0x14] sm:$0xf]
        %v7281 = vld [vmem:[#allocation9 + $0x18] sm:$0xf]
        %v7282 = vld [vmem:[#allocation9 + $0x1c] sm:$0xf]
        %v7283 = vld [vmem:[#allocation9 + $0x20] sm:$0xf]
        %v7284 = vld [vmem:[#allocation9 + $0x24] sm:$0xf]
        %v7285 = vld [vmem:[#allocation9 + $0x28] sm:$0xf]
        %v7286 = vld [vmem:[#allocation9 + $0x2c] sm:$0xf]
        %v7287 = vld [vmem:[#allocation9 + $0x30] sm:$0xf]
        %v7288 = vld [vmem:[#allocation9 + $0x34] sm:$0xf]
        %v7289 = vld [vmem:[#allocation9 + $0x38] sm:$0xf]
        %v7290 = vld [vmem:[#allocation9 + $0x3c] sm:$0xf]
        %v7291 = vld [vmem:[#allocation9 + $0x40] sm:$0xf]
        %v7292 = vld [vmem:[#allocation9 + $0x44] sm:$0xf]
        %v7293 = vld [vmem:[#allocation9 + $0x48] sm:$0xf]
        %v7294 = vld [vmem:[#allocation9 + $0x4c] sm:$0xf]
        %v7295 = vld [vmem:[#allocation9 + $0x50] sm:$0xf]
        %v7296 = vld [vmem:[#allocation9 + $0x54] sm:$0xf]
        %v7297 = vld [vmem:[#allocation9 + $0x58] sm:$0xf]
        %v7298 = vld [vmem:[#allocation9 + $0x5c] sm:$0xf]
        %v7299 = vld [vmem:[#allocation9 + $0x60] sm:$0xf]
        %v7300 = vld [vmem:[#allocation9 + $0x64] sm:$0xf]
        %v7301 = vld [vmem:[#allocation9 + $0x68] sm:$0xf]
        %v7302 = vld [vmem:[#allocation9 + $0x6c] sm:$0xf]
        %v7303 = vld [vmem:[#allocation9 + $0x70] sm:$0xf]
        %v7304 = vld [vmem:[#allocation9 + $0x74] sm:$0xf]
        %v7305 = vld [vmem:[#allocation9 + $0x78] sm:$0xf]
        %v7306 = vld [vmem:[#allocation9 + $0x7c] sm:$0xf]
        %v7307 = vld [vmem:[#allocation9 + $0x80] sm:$0xf]
        %v7308 = vld [vmem:[#allocation9 + $0x84] sm:$0xf]
        %v7309 = vld [vmem:[#allocation9 + $0x88] sm:$0xf]
        %v7310 = vld [vmem:[#allocation9 + $0x8c] sm:$0xf]
        %v7311 = vld [vmem:[#allocation9 + $0x90] sm:$0xf]
        %v7312 = vld [vmem:[#allocation9 + $0x94] sm:$0xf]
        %v7313 = vld [vmem:[#allocation9 + $0x98] sm:$0xf]
        %v7314 = vld [vmem:[#allocation9 + $0x9c] sm:$0xf]
        %v7315 = vld [vmem:[#allocation9 + $0xa0] sm:$0xf]
        %v7316 = vld [vmem:[#allocation9 + $0xa4] sm:$0xf]
        %v7317 = vld [vmem:[#allocation9 + $0xa8] sm:$0xf]
        %v7318 = vld [vmem:[#allocation9 + $0xac] sm:$0xf]
        %v7319 = vld [vmem:[#allocation9 + $0xb0] sm:$0xf]
        %v7320 = vld [vmem:[#allocation9 + $0xb4] sm:$0xf]
        %v7321 = vld [vmem:[#allocation9 + $0xb8] sm:$0xf]
        %v7322 = vld [vmem:[#allocation9 + $0xbc] sm:$0xf]
        %v7323 = vld [vmem:[#allocation9 + $0xc0] sm:$0xf]
        %v7324 = vld [vmem:[#allocation9 + $0xc4] sm:$0xf]
        %v7325 = vld [vmem:[#allocation9 + $0xc8] sm:$0xf]
        %v7326 = vld [vmem:[#allocation9 + $0xcc] sm:$0xf]
        %v7327 = vld [vmem:[#allocation9 + $0xd0] sm:$0xf]
        %v7328 = vld [vmem:[#allocation9 + $0xd4] sm:$0xf]
        %v7329 = vld [vmem:[#allocation9 + $0xd8] sm:$0xf]
        %v7330 = vld [vmem:[#allocation9 + $0xdc] sm:$0xf]
        %v7331 = vld [vmem:[#allocation9 + $0xe0] sm:$0xf]
        %v7332 = vld [vmem:[#allocation9 + $0xe4] sm:$0xf]
        %v7333 = vld [vmem:[#allocation9 + $0xe8] sm:$0xf]
        %v7334 = vld [vmem:[#allocation9 + $0xec] sm:$0xf]
        %v7335 = vld [vmem:[#allocation9 + $0xf0] sm:$0xf]
        %v7336 = vld [vmem:[#allocation9 + $0xf4] sm:$0xf]
        %v7337 = vld [vmem:[#allocation9 + $0xf8] sm:$0xf]
        %v7338 = vld [vmem:[#allocation9 + $0xfc] sm:$0xf]
        %v7339 = vld [vmem:[#allocation9 + $0x100] sm:$0xf]
        %v7340 = vld [vmem:[#allocation9 + $0x104] sm:$0xf]
        %v7341 = vld [vmem:[#allocation9 + $0x108] sm:$0xf]
        %v7342 = vld [vmem:[#allocation9 + $0x10c] sm:$0xf]
        %v7343 = vld [vmem:[#allocation9 + $0x110] sm:$0xf]
        %v7344 = vld [vmem:[#allocation9 + $0x114] sm:$0xf]
        %v7345 = vld [vmem:[#allocation9 + $0x118] sm:$0xf]
        %v7346 = vld [vmem:[#allocation9 + $0x11c] sm:$0xf]
        %v7347 = vld [vmem:[#allocation9 + $0x120] sm:$0xf]
        %v7348 = vld [vmem:[#allocation9 + $0x124] sm:$0xf]
        %v7349 = vld [vmem:[#allocation9 + $0x128] sm:$0xf]
        %v7350 = vld [vmem:[#allocation9 + $0x12c] sm:$0xf]
        %v7351 = vld [vmem:[#allocation9 + $0x130] sm:$0xf]
        %v7352 = vld [vmem:[#allocation9 + $0x134] sm:$0xf]
        %v7353 = vld [vmem:[#allocation9 + $0x138] sm:$0xf]
        %v7354 = vld [vmem:[#allocation9 + $0x13c] sm:$0xf]
        %v7355 = vld [vmem:[#allocation9 + $0x140] sm:$0xf]
        %v7356 = vld [vmem:[#allocation9 + $0x144] sm:$0xf]
        %v7357 = vld [vmem:[#allocation9 + $0x148] sm:$0xf]
        %v7358 = vld [vmem:[#allocation9 + $0x14c] sm:$0xf]
        %v7359 = vld [vmem:[#allocation9 + $0x150] sm:$0xf]
        %v7360 = vld [vmem:[#allocation9 + $0x154] sm:$0xf]
        %v7361 = vld [vmem:[#allocation9 + $0x158] sm:$0xf]
        %v7362 = vld [vmem:[#allocation9 + $0x15c] sm:$0xf]
        %v7363 = vld [vmem:[#allocation9 + $0x160] sm:$0xf]
        %v7364 = vld [vmem:[#allocation9 + $0x164] sm:$0xf]
        %v7365 = vld [vmem:[#allocation9 + $0x168] sm:$0xf]
        %v7366 = vld [vmem:[#allocation9 + $0x16c] sm:$0xf]
        %v7367 = vld [vmem:[#allocation9 + $0x170] sm:$0xf]
        %v7368 = vld [vmem:[#allocation9 + $0x174] sm:$0xf]
        %v7369 = vld [vmem:[#allocation9 + $0x178] sm:$0xf]
        %v7370 = vld [vmem:[#allocation9 + $0x17c] sm:$0xf]
        %v7371 = vld [vmem:[#allocation9 + $0x180] sm:$0xf]
        %v7372 = vld [vmem:[#allocation9 + $0x184] sm:$0xf]
        %v7373 = vld [vmem:[#allocation9 + $0x188] sm:$0xf]
        %v7374 = vld [vmem:[#allocation9 + $0x18c] sm:$0xf]
        %v7375 = vld [vmem:[#allocation9 + $0x190] sm:$0xf]
        %v7376 = vld [vmem:[#allocation9 + $0x194] sm:$0xf]
        %v7377 = vld [vmem:[#allocation9 + $0x198] sm:$0xf]
        %v7378 = vld [vmem:[#allocation9 + $0x19c] sm:$0xf]
        %v7379 = vld [vmem:[#allocation9 + $0x1a0] sm:$0xf]
        %v7380 = vld [vmem:[#allocation9 + $0x1a4] sm:$0xf]
        %v7381 = vld [vmem:[#allocation9 + $0x1a8] sm:$0xf]
        %v7382 = vld [vmem:[#allocation9 + $0x1ac] sm:$0xf]
        %v7383 = vld [vmem:[#allocation9 + $0x1b0] sm:$0xf]
        %v7384 = vld [vmem:[#allocation9 + $0x1b4] sm:$0xf]
        %v7385 = vld [vmem:[#allocation9 + $0x1b8] sm:$0xf]
        %v7386 = vld [vmem:[#allocation9 + $0x1bc] sm:$0xf]
        %v7387 = vld [vmem:[#allocation9 + $0x1c0] sm:$0xf]
        %v7388 = vld [vmem:[#allocation9 + $0x1c4] sm:$0xf]
        %v7389 = vld [vmem:[#allocation9 + $0x1c8] sm:$0xf]
        %v7390 = vld [vmem:[#allocation9 + $0x1cc] sm:$0xf]
        %v7391 = vld [vmem:[#allocation9 + $0x1d0] sm:$0xf]
        %v7392 = vld [vmem:[#allocation9 + $0x1d4] sm:$0xf]
        %v7393 = vld [vmem:[#allocation9 + $0x1d8] sm:$0xf]
        %v7394 = vld [vmem:[#allocation9 + $0x1dc] sm:$0xf]
        %v7395 = vld [vmem:[#allocation9 + $0x1e0] sm:$0xf]
        %v7396 = vld [vmem:[#allocation9 + $0x1e4] sm:$0xf]
        %v7397 = vld [vmem:[#allocation9 + $0x1e8] sm:$0xf]
        %v7398 = vld [vmem:[#allocation9 + $0x1ec] sm:$0xf]
        %v7399 = vld [vmem:[#allocation9 + $0x1f0] sm:$0xf]
        %v7400 = vld [vmem:[#allocation9 + $0x1f4] sm:$0xf]
        %v7401 = vld [vmem:[#allocation9 + $0x1f8] sm:$0xf]
        %v7402 = vld [vmem:[#allocation9 + $0x1fc] sm:$0xf]
        %v7403 = vld [vmem:[#allocation9 + $0x200] sm:$0xf]
        %v7404 = vld [vmem:[#allocation9 + $0x204] sm:$0xf]
        %v7405 = vld [vmem:[#allocation9 + $0x208] sm:$0xf]
        %v7406 = vld [vmem:[#allocation9 + $0x20c] sm:$0xf]
        %v7407 = vld [vmem:[#allocation9 + $0x210] sm:$0xf]
        %v7408 = vld [vmem:[#allocation9 + $0x214] sm:$0xf]
        %v7409 = vld [vmem:[#allocation9 + $0x218] sm:$0xf]
        %v7410 = vld [vmem:[#allocation9 + $0x21c] sm:$0xf]
        %v7411 = vld [vmem:[#allocation9 + $0x220] sm:$0xf]
        %v7412 = vld [vmem:[#allocation9 + $0x224] sm:$0xf]
        %v7413 = vld [vmem:[#allocation9 + $0x228] sm:$0xf]
        %v7414 = vld [vmem:[#allocation9 + $0x22c] sm:$0xf]
        %v7415 = vld [vmem:[#allocation9 + $0x230] sm:$0xf]
        %v7416 = vld [vmem:[#allocation9 + $0x234] sm:$0xf]
        %v7417 = vld [vmem:[#allocation9 + $0x238] sm:$0xf]
        %v7418 = vld [vmem:[#allocation9 + $0x23c] sm:$0xf]
        %v7419 = vld [vmem:[%s5] sm:$0x1]
        %v7421 = vlaneseq
        %v7422 = vshrl.u32 %v7421, 7
        %v7423 = vsub.s32 0, %v7422
        %v7424 = vrot.slane %v7419, %v7423
        %v7570 = vunpack.c.l.b16 %v7275
        %v7571 = vunpack.c.l.b16 %v7276
        %v7572 = vunpack.c.l.b16 %v7277
        %v7573 = vunpack.c.l.b16 %v7278
        %v7574 = vunpack.c.l.b16 %v7279
        %v7575 = vunpack.c.l.b16 %v7280
        %v7576 = vunpack.c.l.b16 %v7281
        %v7577 = vunpack.c.l.b16 %v7282
        %v7578 = vunpack.c.l.b16 %v7283
        %v7579 = vunpack.c.l.b16 %v7284
        %v7580 = vunpack.c.l.b16 %v7285
        %v7581 = vunpack.c.l.b16 %v7286
        %v7582 = vunpack.c.l.b16 %v7287
        %v7583 = vunpack.c.l.b16 %v7288
        %v7584 = vunpack.c.l.b16 %v7289
        %v7585 = vunpack.c.l.b16 %v7290
        %v7586 = vunpack.c.l.b16 %v7291
        %v7587 = vunpack.c.l.b16 %v7292
        %v7588 = vunpack.c.l.b16 %v7293
        %v7589 = vunpack.c.l.b16 %v7294
        %v7590 = vunpack.c.l.b16 %v7295
        %v7591 = vunpack.c.l.b16 %v7296
        %v7592 = vunpack.c.l.b16 %v7297
        %v7593 = vunpack.c.l.b16 %v7298
        %v7594 = vunpack.c.l.b16 %v7299
        %v7595 = vunpack.c.l.b16 %v7300
        %v7596 = vunpack.c.l.b16 %v7301
        %v7597 = vunpack.c.l.b16 %v7302
        %v7598 = vunpack.c.l.b16 %v7303
        %v7599 = vunpack.c.l.b16 %v7304
        %v7600 = vunpack.c.l.b16 %v7305
        %v7601 = vunpack.c.l.b16 %v7306
        %v7602 = vunpack.c.l.b16 %v7307
        %v7603 = vunpack.c.l.b16 %v7308
        %v7604 = vunpack.c.l.b16 %v7309
        %v7605 = vunpack.c.l.b16 %v7310
        %v7606 = vunpack.c.l.b16 %v7311
        %v7607 = vunpack.c.l.b16 %v7312
        %v7608 = vunpack.c.l.b16 %v7313
        %v7609 = vunpack.c.l.b16 %v7314
        %v7610 = vunpack.c.l.b16 %v7315
        %v7611 = vunpack.c.l.b16 %v7316
        %v7612 = vunpack.c.l.b16 %v7317
        %v7613 = vunpack.c.l.b16 %v7318
        %v7614 = vunpack.c.l.b16 %v7319
        %v7615 = vunpack.c.l.b16 %v7320
        %v7616 = vunpack.c.l.b16 %v7321
        %v7617 = vunpack.c.l.b16 %v7322
        %v7618 = vunpack.c.l.b16 %v7323
        %v7619 = vunpack.c.l.b16 %v7324
        %v7620 = vunpack.c.l.b16 %v7325
        %v7621 = vunpack.c.l.b16 %v7326
        %v7622 = vunpack.c.l.b16 %v7327
        %v7623 = vunpack.c.l.b16 %v7328
        %v7624 = vunpack.c.l.b16 %v7329
        %v7625 = vunpack.c.l.b16 %v7330
        %v7626 = vunpack.c.l.b16 %v7331
        %v7627 = vunpack.c.l.b16 %v7332
        %v7628 = vunpack.c.l.b16 %v7333
        %v7629 = vunpack.c.l.b16 %v7334
        %v7630 = vunpack.c.l.b16 %v7335
        %v7631 = vunpack.c.l.b16 %v7336
        %v7632 = vunpack.c.l.b16 %v7337
        %v7633 = vunpack.c.l.b16 %v7338
        %v7634 = vunpack.c.l.b16 %v7339
        %v7635 = vunpack.c.l.b16 %v7340
        %v7636 = vunpack.c.l.b16 %v7341
        %v7637 = vunpack.c.l.b16 %v7342
        %v7638 = vunpack.c.l.b16 %v7343
        %v7639 = vunpack.c.l.b16 %v7344
        %v7640 = vunpack.c.l.b16 %v7345
        %v7641 = vunpack.c.l.b16 %v7346
        %v7642 = vunpack.c.l.b16 %v7347
        %v7643 = vunpack.c.l.b16 %v7348
        %v7644 = vunpack.c.l.b16 %v7349
        %v7645 = vunpack.c.l.b16 %v7350
        %v7646 = vunpack.c.l.b16 %v7351
        %v7647 = vunpack.c.l.b16 %v7352
        %v7648 = vunpack.c.l.b16 %v7353
        %v7649 = vunpack.c.l.b16 %v7354
        %v7650 = vunpack.c.l.b16 %v7355
        %v7651 = vunpack.c.l.b16 %v7356
        %v7652 = vunpack.c.l.b16 %v7357
        %v7653 = vunpack.c.l.b16 %v7358
        %v7654 = vunpack.c.l.b16 %v7359
        %v7655 = vunpack.c.l.b16 %v7360
        %v7656 = vunpack.c.l.b16 %v7361
        %v7657 = vunpack.c.l.b16 %v7362
        %v7658 = vunpack.c.l.b16 %v7363
        %v7659 = vunpack.c.l.b16 %v7364
        %v7660 = vunpack.c.l.b16 %v7365
        %v7661 = vunpack.c.l.b16 %v7366
        %v7662 = vunpack.c.l.b16 %v7367
        %v7663 = vunpack.c.l.b16 %v7368
        %v7664 = vunpack.c.l.b16 %v7369
        %v7665 = vunpack.c.l.b16 %v7370
        %v7666 = vunpack.c.l.b16 %v7371
        %v7667 = vunpack.c.l.b16 %v7372
        %v7668 = vunpack.c.l.b16 %v7373
        %v7669 = vunpack.c.l.b16 %v7374
        %v7670 = vunpack.c.l.b16 %v7375
        %v7671 = vunpack.c.l.b16 %v7376
        %v7672 = vunpack.c.l.b16 %v7377
        %v7673 = vunpack.c.l.b16 %v7378
        %v7674 = vunpack.c.l.b16 %v7379
        %v7675 = vunpack.c.l.b16 %v7380
        %v7676 = vunpack.c.l.b16 %v7381
        %v7677 = vunpack.c.l.b16 %v7382
        %v7678 = vunpack.c.l.b16 %v7383
        %v7679 = vunpack.c.l.b16 %v7384
        %v7680 = vunpack.c.l.b16 %v7385
        %v7681 = vunpack.c.l.b16 %v7386
        %v7682 = vunpack.c.l.b16 %v7387
        %v7683 = vunpack.c.l.b16 %v7388
        %v7684 = vunpack.c.l.b16 %v7389
        %v7685 = vunpack.c.l.b16 %v7390
        %v7686 = vunpack.c.l.b16 %v7391
        %v7687 = vunpack.c.l.b16 %v7392
        %v7688 = vunpack.c.l.b16 %v7393
        %v7689 = vunpack.c.l.b16 %v7394
        %v7690 = vunpack.c.l.b16 %v7395
        %v7691 = vunpack.c.l.b16 %v7396
        %v7692 = vunpack.c.l.b16 %v7397
        %v7693 = vunpack.c.l.b16 %v7398
        %v7694 = vunpack.c.l.b16 %v7399
        %v7695 = vunpack.c.l.b16 %v7400
        %v7696 = vunpack.c.l.b16 %v7401
        %v7697 = vunpack.c.l.b16 %v7402
        %v7698 = vunpack.c.l.b16 %v7403
        %v7699 = vunpack.c.l.b16 %v7404
        %v7700 = vunpack.c.l.b16 %v7405
        %v7701 = vunpack.c.l.b16 %v7406
        %v7702 = vunpack.c.l.b16 %v7407
        %v7703 = vunpack.c.l.b16 %v7408
        %v7704 = vunpack.c.l.b16 %v7409
        %v7705 = vunpack.c.l.b16 %v7410
        %v7706 = vunpack.c.l.b16 %v7411
        %v7707 = vunpack.c.l.b16 %v7412
        %v7708 = vunpack.c.l.b16 %v7413
        %v7709 = vunpack.c.l.b16 %v7414
        %v7710 = vunpack.c.l.b16 %v7415
        %v7711 = vunpack.c.l.b16 %v7416
        %v7712 = vunpack.c.l.b16 %v7417
        %v7713 = vunpack.c.l.b16 %v7418
        %v7714 = vpack.c.b16 %v7571, %v7570
        %v7715 = vpack.c.b16 %v7573, %v7572
        %v7716 = vpack.c.b16 %v7575, %v7574
        %v7717 = vpack.c.b16 %v7577, %v7576
        %v7718 = vpack.c.b16 %v7579, %v7578
        %v7719 = vpack.c.b16 %v7581, %v7580
        %v7720 = vpack.c.b16 %v7583, %v7582
        %v7721 = vpack.c.b16 %v7585, %v7584
        %v7722 = vpack.c.b16 %v7587, %v7586
        %v7723 = vpack.c.b16 %v7589, %v7588
        %v7724 = vpack.c.b16 %v7591, %v7590
        %v7725 = vpack.c.b16 %v7593, %v7592
        %v7726 = vpack.c.b16 %v7595, %v7594
        %v7727 = vpack.c.b16 %v7597, %v7596
        %v7728 = vpack.c.b16 %v7599, %v7598
        %v7729 = vpack.c.b16 %v7601, %v7600
        %v7730 = vpack.c.b16 %v7603, %v7602
        %v7731 = vpack.c.b16 %v7605, %v7604
        %v7732 = vpack.c.b16 %v7607, %v7606
        %v7733 = vpack.c.b16 %v7609, %v7608
        %v7734 = vpack.c.b16 %v7611, %v7610
        %v7735 = vpack.c.b16 %v7613, %v7612
        %v7736 = vpack.c.b16 %v7615, %v7614
        %v7737 = vpack.c.b16 %v7617, %v7616
        %v7738 = vpack.c.b16 %v7619, %v7618
        %v7739 = vpack.c.b16 %v7621, %v7620
        %v7740 = vpack.c.b16 %v7623, %v7622
        %v7741 = vpack.c.b16 %v7625, %v7624
        %v7742 = vpack.c.b16 %v7627, %v7626
        %v7743 = vpack.c.b16 %v7629, %v7628
        %v7744 = vpack.c.b16 %v7631, %v7630
        %v7745 = vpack.c.b16 %v7633, %v7632
        %v7746 = vpack.c.b16 %v7635, %v7634
        %v7747 = vpack.c.b16 %v7637, %v7636
        %v7748 = vpack.c.b16 %v7639, %v7638
        %v7749 = vpack.c.b16 %v7641, %v7640
        %v7750 = vpack.c.b16 %v7643, %v7642
        %v7751 = vpack.c.b16 %v7645, %v7644
        %v7752 = vpack.c.b16 %v7647, %v7646
        %v7753 = vpack.c.b16 %v7649, %v7648
        %v7754 = vpack.c.b16 %v7651, %v7650
        %v7755 = vpack.c.b16 %v7653, %v7652
        %v7756 = vpack.c.b16 %v7655, %v7654
        %v7757 = vpack.c.b16 %v7657, %v7656
        %v7758 = vpack.c.b16 %v7659, %v7658
        %v7759 = vpack.c.b16 %v7661, %v7660
        %v7760 = vpack.c.b16 %v7663, %v7662
        %v7761 = vpack.c.b16 %v7665, %v7664
        %v7762 = vpack.c.b16 %v7667, %v7666
        %v7763 = vpack.c.b16 %v7669, %v7668
        %v7764 = vpack.c.b16 %v7671, %v7670
        %v7765 = vpack.c.b16 %v7673, %v7672
        %v7766 = vpack.c.b16 %v7675, %v7674
        %v7767 = vpack.c.b16 %v7677, %v7676
        %v7768 = vpack.c.b16 %v7679, %v7678
        %v7769 = vpack.c.b16 %v7681, %v7680
        %v7770 = vpack.c.b16 %v7683, %v7682
        %v7771 = vpack.c.b16 %v7685, %v7684
        %v7772 = vpack.c.b16 %v7687, %v7686
        %v7773 = vpack.c.b16 %v7689, %v7688
        %v7774 = vpack.c.b16 %v7691, %v7690
        %v7775 = vpack.c.b16 %v7693, %v7692
        %v7776 = vpack.c.b16 %v7695, %v7694
        %v7777 = vpack.c.b16 %v7697, %v7696
        %v7778 = vpack.c.b16 %v7699, %v7698
        %v7779 = vpack.c.b16 %v7701, %v7700
        %v7780 = vpack.c.b16 %v7703, %v7702
        %v7781 = vpack.c.b16 %v7705, %v7704
        %v7782 = vpack.c.b16 %v7707, %v7706
        %v7783 = vpack.c.b16 %v7709, %v7708
        %v7784 = vpack.c.b16 %v7711, %v7710
        %v7785 = vpack.c.b16 %v7713, %v7712
        %7858 = vmatprep.subr.bf16.mxu0 0
        %7859 = vmatpush1.bf16.msra.mxu0 %v7714
        %7860 = vmatprep.subr.bf16.mxu0 0
        %7861 = vmatpush1.bf16.msra.mxu0 %v7715
        %7862 = vmatprep.subr.bf16.mxu0 0
        %7863 = vmatpush1.bf16.msra.mxu0 %v7716
        %7864 = vmatprep.subr.bf16.mxu0 0
        %7865 = vmatpush1.bf16.msra.mxu0 %v7717
        %7866 = vmatprep.subr.bf16.mxu0 0
        %7867 = vmatpush1.bf16.msra.mxu0 %v7718
        %7868 = vmatprep.subr.bf16.mxu0 0
        %7869 = vmatpush1.bf16.msra.mxu0 %v7719
        %7870 = vmatprep.subr.bf16.mxu0 0
        %7871 = vmatpush1.bf16.msra.mxu0 %v7720
        %7872 = vmatprep.subr.bf16.mxu0 0
        %7873 = vmatpush1.bf16.msra.mxu0 %v7721
        %7874 = vmatprep.subr.bf16.mxu0 0
        %7875 = vmatpush1.bf16.msra.mxu0 %v7722
        %7876 = vmatprep.subr.bf16.mxu0 0
        %7877 = vmatpush1.bf16.msra.mxu0 %v7723
        %7878 = vmatprep.subr.bf16.mxu0 0
        %7879 = vmatpush1.bf16.msra.mxu0 %v7724
        %7880 = vmatprep.subr.bf16.mxu0 0
        %7881 = vmatpush1.bf16.msra.mxu0 %v7725
        %7882 = vmatprep.subr.bf16.mxu0 0
        %7883 = vmatpush1.bf16.msra.mxu0 %v7726
        %7884 = vmatprep.subr.bf16.mxu0 0
        %7885 = vmatpush1.bf16.msra.mxu0 %v7727
        %7886 = vmatprep.subr.bf16.mxu0 0
        %7887 = vmatpush1.bf16.msra.mxu0 %v7728
        %7888 = vmatprep.subr.bf16.mxu0 0
        %7889 = vmatpush1.bf16.msra.mxu0 %v7729
        %7890 = vmatprep.mubr.bf16.mxu0 %v7114
        %7891 = vmatmul.mubr.bf16.gmra.mrb[0].mxu0 %v7113
        %v7892 = vpop.f32.mrb[0].mxu0
        %v7893 = vadd.f32 %v7424, %v7892
        %v7894 = vpop.f32.mrb[0].mxu0
        %v7895 = vpop.f32.mrb[0].mxu0
        %v7896 = vadd.f32 %v7424, %v7895
        %v7897 = vpop.f32.mrb[0].mxu0
        %7898 = vmatprep.mubr.bf16.mxu0 %v7123
        %7899 = vmatmul.mubr.bf16.gmra.mrb[0].mxu0 %v7122
        %v7900 = vpop.f32.mrb[0].mxu0
        %v7901 = vadd.f32 %v7424, %v7900
        %v7902 = vpop.f32.mrb[0].mxu0
        %v7903 = vpop.f32.mrb[0].mxu0
        %v7904 = vadd.f32 %v7424, %v7903
        %v7905 = vpop.f32.mrb[0].mxu0
        %7906 = vmatprep.mubr.bf16.mxu0 %v7132
        %7907 = vmatmul.mubr.bf16.gmra.mrb[0].mxu0 %v7131
        %v7908 = vpop.f32.mrb[0].mxu0
        %v7909 = vadd.f32 %v7424, %v7908
        %v7910 = vpop.f32.mrb[0].mxu0
        %v7911 = vpop.f32.mrb[0].mxu0
        %v7912 = vadd.f32 %v7424, %v7911
        %v7913 = vpop.f32.mrb[0].mxu0
        %7914 = vmatprep.mubr.bf16.mxu0 %v7141
        %7915 = vmatmul.mubr.bf16.gmra.mrb[0].mxu0 %v7140
        %v7916 = vpop.f32.mrb[0].mxu0
        %v7917 = vadd.f32 %v7424, %v7916
        %v7918 = vpop.f32.mrb[0].mxu0
        %v7919 = vpop.f32.mrb[0].mxu0
        %v7920 = vadd.f32 %v7424, %v7919
        %v7921 = vpop.f32.mrb[0].mxu0
        %7922 = vmatprep.mubr.bf16.mxu0 %v7150
        %7923 = vmatmul.mubr.bf16.gmra.mrb[0].mxu0 %v7149
        %v7924 = vpop.f32.mrb[0].mxu0
        %v7925 = vadd.f32 %v7424, %v7924
        %v7926 = vpop.f32.mrb[0].mxu0
        %v7927 = vpop.f32.mrb[0].mxu0
        %v7928 = vadd.f32 %v7424, %v7927
        %v7929 = vpop.f32.mrb[0].mxu0
        %7930 = vmatprep.mubr.bf16.mxu0 %v7159
        %7931 = vmatmul.mubr.bf16.gmra.mrb[0].mxu0 %v7158
        %v7932 = vpop.f32.mrb[0].mxu0
        %v7933 = vadd.f32 %v7424, %v7932
        %v7934 = vpop.f32.mrb[0].mxu0
        %v7935 = vpop.f32.mrb[0].mxu0
        %v7936 = vadd.f32 %v7424, %v7935
        %v7937 = vpop.f32.mrb[0].mxu0
        %7938 = vmatprep.mubr.bf16.mxu0 %v7168
        %7939 = vmatmul.mubr.bf16.gmra.mrb[0].mxu0 %v7167
        %v7940 = vpop.f32.mrb[0].mxu0
        %v7941 = vadd.f32 %v7424, %v7940
        %v7942 = vpop.f32.mrb[0].mxu0
        %v7943 = vpop.f32.mrb[0].mxu0
        %v7944 = vadd.f32 %v7424, %v7943
        %v7945 = vpop.f32.mrb[0].mxu0
        %7946 = vmatprep.mubr.bf16.mxu0 %v7177
        %7947 = vmatmul.mubr.bf16.gmra.mrb[0].mxu0 %v7176
        %v7948 = vpop.f32.mrb[0].mxu0
        %v7949 = vadd.f32 %v7424, %v7948
        %v7950 = vpop.f32.mrb[0].mxu0
        %v7951 = vpop.f32.mrb[0].mxu0
        %v7952 = vadd.f32 %v7424, %v7951
        %v7953 = vpop.f32.mrb[0].mxu0
        %7954 = vmatprep.mubr.bf16.mxu0 %v7186
        %7955 = vmatmul.mubr.bf16.gmra.mrb[0].mxu0 %v7185
        %v7956 = vpop.f32.mrb[0].mxu0
        %v7957 = vadd.f32 %v7424, %v7956
        %v7958 = vpop.f32.mrb[0].mxu0
        %v7959 = vpop.f32.mrb[0].mxu0
        %v7960 = vadd.f32 %v7424, %v7959
        %v7961 = vpop.f32.mrb[0].mxu0
        %7962 = vmatprep.mubr.bf16.mxu0 %v7195
        %7963 = vmatmul.mubr.bf16.gmra.mrb[0].mxu0 %v7194
        %v7964 = vpop.f32.mrb[0].mxu0
        %v7965 = vadd.f32 %v7424, %v7964
        %v7966 = vpop.f32.mrb[0].mxu0
        %v7967 = vpop.f32.mrb[0].mxu0
        %v7968 = vadd.f32 %v7424, %v7967
        %v7969 = vpop.f32.mrb[0].mxu0
        %7970 = vmatprep.mubr.bf16.mxu0 %v7204
        %7971 = vmatmul.mubr.bf16.gmra.mrb[0].mxu0 %v7203
        %v7972 = vpop.f32.mrb[0].mxu0
        %v7973 = vadd.f32 %v7424, %v7972
        %v7974 = vpop.f32.mrb[0].mxu0
        %v7975 = vpop.f32.mrb[0].mxu0
        %v7976 = vadd.f32 %v7424, %v7975
        %v7977 = vpop.f32.mrb[0].mxu0
        %7978 = vmatprep.mubr.bf16.mxu0 %v7213
        %7979 = vmatmul.mubr.bf16.gmra.mrb[0].mxu0 %v7212
        %v7980 = vpop.f32.mrb[0].mxu0
        %v7981 = vadd.f32 %v7424, %v7980
        %v7982 = vpop.f32.mrb[0].mxu0
        %v7983 = vpop.f32.mrb[0].mxu0
        %v7984 = vadd.f32 %v7424, %v7983
        %v7985 = vpop.f32.mrb[0].mxu0
        %7986 = vmatprep.mubr.bf16.mxu0 %v7222
        %7987 = vmatmul.mubr.bf16.gmra.mrb[0].mxu0 %v7221
        %v7988 = vpop.f32.mrb[0].mxu0
        %v7989 = vadd.f32 %v7424, %v7988
        %v7990 = vpop.f32.mrb[0].mxu0
        %v7991 = vpop.f32.mrb[0].mxu0
        %v7992 = vadd.f32 %v7424, %v7991
        %v7993 = vpop.f32.mrb[0].mxu0
        %7994 = vmatprep.mubr.bf16.mxu0 %v7231
        %7995 = vmatmul.mubr.bf16.gmra.mrb[0].mxu0 %v7230
        %v7996 = vpop.f32.mrb[0].mxu0
        %v7997 = vadd.f32 %v7424, %v7996
        %v7998 = vpop.f32.mrb[0].mxu0
        %v7999 = vpop.f32.mrb[0].mxu0
        %v8000 = vadd.f32 %v7424, %v7999
        %v8001 = vpop.f32.mrb[0].mxu0
        %8002 = vmatprep.mubr.bf16.mxu0 %v7240
        %8003 = vmatmul.mubr.bf16.gmra.mrb[0].mxu0 %v7239
        %v8004 = vpop.f32.mrb[0].mxu0
        %v8005 = vadd.f32 %v7424, %v8004
        %v8006 = vpop.f32.mrb[0].mxu0
        %v8007 = vpop.f32.mrb[0].mxu0
        %v8008 = vadd.f32 %v7424, %v8007
        %v8009 = vpop.f32.mrb[0].mxu0
        %8010 = vmatprep.mubr.bf16.mxu0 %v7249
        %8011 = vmatmul.mubr.bf16.gmra.mrb[0].mxu0 %v7248
        %v8012 = vpop.f32.mrb[0].mxu0
        %v8013 = vadd.f32 %v7424, %v8012
        %v8014 = vpop.f32.mrb[0].mxu0
        %v8015 = vpop.f32.mrb[0].mxu0
        %v8016 = vadd.f32 %v7424, %v8015
        %v8017 = vpop.f32.mrb[0].mxu0
        %8018 = vmatprep.mubr.bf16.mxu0 %v7258
        %8019 = vmatmul.mubr.bf16.gmra.mrb[0].mxu0 %v7257
        %v8020 = vpop.f32.mrb[0].mxu0
        %v8021 = vadd.f32 %v7424, %v8020
        %v8022 = vpop.f32.mrb[0].mxu0
        %v8023 = vpop.f32.mrb[0].mxu0
        %v8024 = vadd.f32 %v7424, %v8023
        %v8025 = vpop.f32.mrb[0].mxu0
        %8026 = vmatprep.mubr.bf16.mxu0 %v7267
        %8027 = vmatmul.mubr.bf16.gmra.mrb[0].mxu0 %v7266
        %v8028 = vpop.f32.mrb[0].mxu0
        %v8029 = vadd.f32 %v7424, %v8028
        %v8030 = vpop.f32.mrb[0].mxu0
        %v8031 = vpop.f32.mrb[0].mxu0
        %v8032 = vadd.f32 %v7424, %v8031
        %v8033 = vpop.f32.mrb[0].mxu0
        %8034 = vdwg.mxu0
        %8035 = vmatprep.subr.bf16.mxu0 0
        %8036 = vmatpush1.bf16.msra.mxu0 %v7730
        %8037 = vmatprep.subr.bf16.mxu0 0
        %8038 = vmatpush1.bf16.msra.mxu0 %v7731
        %8039 = vmatprep.subr.bf16.mxu0 0
        %8040 = vmatpush1.bf16.msra.mxu0 %v7732
        %8041 = vmatprep.subr.bf16.mxu0 0
        %8042 = vmatpush1.bf16.msra.mxu0 %v7733
        %8043 = vmatprep.subr.bf16.mxu0 0
        %8044 = vmatpush1.bf16.msra.mxu0 %v7734
        %8045 = vmatprep.subr.bf16.mxu0 0
        %8046 = vmatpush1.bf16.msra.mxu0 %v7735
        %8047 = vmatprep.subr.bf16.mxu0 0
        %8048 = vmatpush1.bf16.msra.mxu0 %v7736
        %8049 = vmatprep.subr.bf16.mxu0 0
        %8050 = vmatpush1.bf16.msra.mxu0 %v7737
        %8051 = vmatprep.subr.bf16.mxu0 0
        %8052 = vmatpush1.bf16.msra.mxu0 %v7738
        %8053 = vmatprep.subr.bf16.mxu0 0
        %8054 = vmatpush1.bf16.msra.mxu0 %v7739
        %8055 = vmatprep.subr.bf16.mxu0 0
        %8056 = vmatpush1.bf16.msra.mxu0 %v7740
        %8057 = vmatprep.subr.bf16.mxu0 0
        %8058 = vmatpush1.bf16.msra.mxu0 %v7741
        %8059 = vmatprep.subr.bf16.mxu0 0
        %8060 = vmatpush1.bf16.msra.mxu0 %v7742
        %8061 = vmatprep.subr.bf16.mxu0 0
        %8062 = vmatpush1.bf16.msra.mxu0 %v7743
        %8063 = vmatprep.subr.bf16.mxu0 0
        %8064 = vmatpush1.bf16.msra.mxu0 %v7744
        %8065 = vmatprep.subr.bf16.mxu0 0
        %8066 = vmatpush1.bf16.msra.mxu0 %v7745
        %8067 = vmatprep.mubr.bf16.mxu0 %v7116
        %8068 = vmatmul.mubr.bf16.gmra.mrb[0].mxu0 %v7115
        %v8069 = vpop.f32.mrb[0].mxu0
        %v8070 = vadd.f32 %v7893, %v8069
        %v8071 = vpop.f32.mrb[0].mxu0
        %v8072 = vpop.f32.mrb[0].mxu0
        %v8073 = vadd.f32 %v7896, %v8072
        %v8074 = vpop.f32.mrb[0].mxu0
        %8075 = vmatprep.mubr.bf16.mxu0 %v7125
        %8076 = vmatmul.mubr.bf16.gmra.mrb[0].mxu0 %v7124
        %v8077 = vpop.f32.mrb[0].mxu0
        %v8078 = vadd.f32 %v7901, %v8077
        %v8079 = vpop.f32.mrb[0].mxu0
        %v8080 = vpop.f32.mrb[0].mxu0
        %v8081 = vadd.f32 %v7904, %v8080
        %v8082 = vpop.f32.mrb[0].mxu0
        %8083 = vmatprep.mubr.bf16.mxu0 %v7134
        %8084 = vmatmul.mubr.bf16.gmra.mrb[0].mxu0 %v7133
        %v8085 = vpop.f32.mrb[0].mxu0
        %v8086 = vadd.f32 %v7909, %v8085
        %v8087 = vpop.f32.mrb[0].mxu0
        %v8088 = vpop.f32.mrb[0].mxu0
        %v8089 = vadd.f32 %v7912, %v8088
        %v8090 = vpop.f32.mrb[0].mxu0
        %8091 = vmatprep.mubr.bf16.mxu0 %v7143
        %8092 = vmatmul.mubr.bf16.gmra.mrb[0].mxu0 %v7142
        %v8093 = vpop.f32.mrb[0].mxu0
        %v8094 = vadd.f32 %v7917, %v8093
        %v8095 = vpop.f32.mrb[0].mxu0
        %v8096 = vpop.f32.mrb[0].mxu0
        %v8097 = vadd.f32 %v7920, %v8096
        %v8098 = vpop.f32.mrb[0].mxu0
        %8099 = vmatprep.mubr.bf16.mxu0 %v7152
        %8100 = vmatmul.mubr.bf16.gmra.mrb[0].mxu0 %v7151
        %v8101 = vpop.f32.mrb[0].mxu0
        %v8102 = vadd.f32 %v7925, %v8101
        %v8103 = vpop.f32.mrb[0].mxu0
        %v8104 = vpop.f32.mrb[0].mxu0
        %v8105 = vadd.f32 %v7928, %v8104
        %v8106 = vpop.f32.mrb[0].mxu0
        %8107 = vmatprep.mubr.bf16.mxu0 %v7161
        %8108 = vmatmul.mubr.bf16.gmra.mrb[0].mxu0 %v7160
        %v8109 = vpop.f32.mrb[0].mxu0
        %v8110 = vadd.f32 %v7933, %v8109
        %v8111 = vpop.f32.mrb[0].mxu0
        %v8112 = vpop.f32.mrb[0].mxu0
        %v8113 = vadd.f32 %v7936, %v8112
        %v8114 = vpop.f32.mrb[0].mxu0
        %8115 = vmatprep.mubr.bf16.mxu0 %v7170
        %8116 = vmatmul.mubr.bf16.gmra.mrb[0].mxu0 %v7169
        %v8117 = vpop.f32.mrb[0].mxu0
        %v8118 = vadd.f32 %v7941, %v8117
        %v8119 = vpop.f32.mrb[0].mxu0
        %v8120 = vpop.f32.mrb[0].mxu0
        %v8121 = vadd.f32 %v7944, %v8120
        %v8122 = vpop.f32.mrb[0].mxu0
        %8123 = vmatprep.mubr.bf16.mxu0 %v7179
        %8124 = vmatmul.mubr.bf16.gmra.mrb[0].mxu0 %v7178
        %v8125 = vpop.f32.mrb[0].mxu0
        %v8126 = vadd.f32 %v7949, %v8125
        %v8127 = vpop.f32.mrb[0].mxu0
        %v8128 = vpop.f32.mrb[0].mxu0
        %v8129 = vadd.f32 %v7952, %v8128
        %v8130 = vpop.f32.mrb[0].mxu0
        %8131 = vmatprep.mubr.bf16.mxu0 %v7188
        %8132 = vmatmul.mubr.bf16.gmra.mrb[0].mxu0 %v7187
        %v8133 = vpop.f32.mrb[0].mxu0
        %v8134 = vadd.f32 %v7957, %v8133
        %v8135 = vpop.f32.mrb[0].mxu0
        %v8136 = vpop.f32.mrb[0].mxu0
        %v8137 = vadd.f32 %v7960, %v8136
        %v8138 = vpop.f32.mrb[0].mxu0
        %8139 = vmatprep.mubr.bf16.mxu0 %v7197
        %8140 = vmatmul.mubr.bf16.gmra.mrb[0].mxu0 %v7196
        %v8141 = vpop.f32.mrb[0].mxu0
        %v8142 = vadd.f32 %v7965, %v8141
        %v8143 = vpop.f32.mrb[0].mxu0
        %v8144 = vpop.f32.mrb[0].mxu0
        %v8145 = vadd.f32 %v7968, %v8144
        %v8146 = vpop.f32.mrb[0].mxu0
        %8147 = vmatprep.mubr.bf16.mxu0 %v7206
        %8148 = vmatmul.mubr.bf16.gmra.mrb[0].mxu0 %v7205
        %v8149 = vpop.f32.mrb[0].mxu0
        %v8150 = vadd.f32 %v7973, %v8149
        %v8151 = vpop.f32.mrb[0].mxu0
        %v8152 = vpop.f32.mrb[0].mxu0
        %v8153 = vadd.f32 %v7976, %v8152
        %v8154 = vpop.f32.mrb[0].mxu0
        %8155 = vmatprep.mubr.bf16.mxu0 %v7215
        %8156 = vmatmul.mubr.bf16.gmra.mrb[0].mxu0 %v7214
        %v8157 = vpop.f32.mrb[0].mxu0
        %v8158 = vadd.f32 %v7981, %v8157
        %v8159 = vpop.f32.mrb[0].mxu0
        %v8160 = vpop.f32.mrb[0].mxu0
        %v8161 = vadd.f32 %v7984, %v8160
        %v8162 = vpop.f32.mrb[0].mxu0
        %8163 = vmatprep.mubr.bf16.mxu0 %v7224
        %8164 = vmatmul.mubr.bf16.gmra.mrb[0].mxu0 %v7223
        %v8165 = vpop.f32.mrb[0].mxu0
        %v8166 = vadd.f32 %v7989, %v8165
        %v8167 = vpop.f32.mrb[0].mxu0
        %v8168 = vpop.f32.mrb[0].mxu0
        %v8169 = vadd.f32 %v7992, %v8168
        %v8170 = vpop.f32.mrb[0].mxu0
        %8171 = vmatprep.mubr.bf16.mxu0 %v7233
        %8172 = vmatmul.mubr.bf16.gmra.mrb[0].mxu0 %v7232
        %v8173 = vpop.f32.mrb[0].mxu0
        %v8174 = vadd.f32 %v7997, %v8173
        %v8175 = vpop.f32.mrb[0].mxu0
        %v8176 = vpop.f32.mrb[0].mxu0
        %v8177 = vadd.f32 %v8000, %v8176
        %v8178 = vpop.f32.mrb[0].mxu0
        %8179 = vmatprep.mubr.bf16.mxu0 %v7242
        %8180 = vmatmul.mubr.bf16.gmra.mrb[0].mxu0 %v7241
        %v8181 = vpop.f32.mrb[0].mxu0
        %v8182 = vadd.f32 %v8005, %v8181
        %v8183 = vpop.f32.mrb[0].mxu0
        %v8184 = vpop.f32.mrb[0].mxu0
        %v8185 = vadd.f32 %v8008, %v8184
        %v8186 = vpop.f32.mrb[0].mxu0
        %8187 = vmatprep.mubr.bf16.mxu0 %v7251
        %8188 = vmatmul.mubr.bf16.gmra.mrb[0].mxu0 %v7250
        %v8189 = vpop.f32.mrb[0].mxu0
        %v8190 = vadd.f32 %v8013, %v8189
        %v8191 = vpop.f32.mrb[0].mxu0
        %v8192 = vpop.f32.mrb[0].mxu0
        %v8193 = vadd.f32 %v8016, %v8192
        %v8194 = vpop.f32.mrb[0].mxu0
        %8195 = vmatprep.mubr.bf16.mxu0 %v7260
        %8196 = vmatmul.mubr.bf16.gmra.mrb[0].mxu0 %v7259
        %v8197 = vpop.f32.mrb[0].mxu0
        %v8198 = vadd.f32 %v8021, %v8197
        %v8199 = vpop.f32.mrb[0].mxu0
        %v8200 = vpop.f32.mrb[0].mxu0
        %v8201 = vadd.f32 %v8024, %v8200
        %v8202 = vpop.f32.mrb[0].mxu0
        %8203 = vmatprep.mubr.bf16.mxu0 %v7269
        %8204 = vmatmul.mubr.bf16.gmra.mrb[0].mxu0 %v7268
        %v8205 = vpop.f32.mrb[0].mxu0
        %v8206 = vadd.f32 %v8029, %v8205
        %v8207 = vpop.f32.mrb[0].mxu0
        %v8208 = vpop.f32.mrb[0].mxu0
        %v8209 = vadd.f32 %v8032, %v8208
        %v8210 = vpop.f32.mrb[0].mxu0
        %8211 = vdwg.mxu0
        %8212 = vmatprep.subr.bf16.mxu0 0
        %8213 = vmatpush1.bf16.msra.mxu0 %v7746
        %8214 = vmatprep.subr.bf16.mxu0 0
        %8215 = vmatpush1.bf16.msra.mxu0 %v7747
        %8216 = vmatprep.subr.bf16.mxu0 0
        %8217 = vmatpush1.bf16.msra.mxu0 %v7748
        %8218 = vmatprep.subr.bf16.mxu0 0
        %8219 = vmatpush1.bf16.msra.mxu0 %v7749
        %8220 = vmatprep.subr.bf16.mxu0 0
        %8221 = vmatpush1.bf16.msra.mxu0 %v7750
        %8222 = vmatprep.subr.bf16.mxu0 0
        %8223 = vmatpush1.bf16.msra.mxu0 %v7751
        %8224 = vmatprep.subr.bf16.mxu0 0
        %8225 = vmatpush1.bf16.msra.mxu0 %v7752
        %8226 = vmatprep.subr.bf16.mxu0 0
        %8227 = vmatpush1.bf16.msra.mxu0 %v7753
        %8228 = vmatprep.subr.bf16.mxu0 0
        %8229 = vmatpush1.bf16.msra.mxu0 %v7754
        %8230 = vmatprep.subr.bf16.mxu0 0
        %8231 = vmatpush1.bf16.msra.mxu0 %v7755
        %8232 = vmatprep.subr.bf16.mxu0 0
        %8233 = vmatpush1.bf16.msra.mxu0 %v7756
        %8234 = vmatprep.subr.bf16.mxu0 0
        %8235 = vmatpush1.bf16.msra.mxu0 %v7757
        %8236 = vmatprep.subr.bf16.mxu0 0
        %8237 = vmatpush1.bf16.msra.mxu0 %v7758
        %8238 = vmatprep.subr.bf16.mxu0 0
        %8239 = vmatpush1.bf16.msra.mxu0 %v7759
        %8240 = vmatprep.subr.bf16.mxu0 0
        %8241 = vmatpush1.bf16.msra.mxu0 %v7760
        %8242 = vmatprep.subr.bf16.mxu0 0
        %8243 = vmatpush1.bf16.msra.mxu0 %v7761
        %8244 = vmatprep.mubr.bf16.mxu0 %v7118
        %8245 = vmatmul.mubr.bf16.gmra.mrb[0].mxu0 %v7117
        %v8246 = vpop.f32.mrb[0].mxu0
        %v8247 = vadd.f32 %v8070, %v8246
        %v8248 = vpop.f32.mrb[0].mxu0
        %v8249 = vpop.f32.mrb[0].mxu0
        %v8250 = vadd.f32 %v8073, %v8249
        %v8251 = vpop.f32.mrb[0].mxu0
        %8252 = vmatprep.mubr.bf16.mxu0 %v7127
        %8253 = vmatmul.mubr.bf16.gmra.mrb[0].mxu0 %v7126
        %v8254 = vpop.f32.mrb[0].mxu0
        %v8255 = vadd.f32 %v8078, %v8254
        %v8256 = vpop.f32.mrb[0].mxu0
        %v8257 = vpop.f32.mrb[0].mxu0
        %v8258 = vadd.f32 %v8081, %v8257
        %v8259 = vpop.f32.mrb[0].mxu0
        %8260 = vmatprep.mubr.bf16.mxu0 %v7136
        %8261 = vmatmul.mubr.bf16.gmra.mrb[0].mxu0 %v7135
        %v8262 = vpop.f32.mrb[0].mxu0
        %v8263 = vadd.f32 %v8086, %v8262
        %v8264 = vpop.f32.mrb[0].mxu0
        %v8265 = vpop.f32.mrb[0].mxu0
        %v8266 = vadd.f32 %v8089, %v8265
        %v8267 = vpop.f32.mrb[0].mxu0
        %8268 = vmatprep.mubr.bf16.mxu0 %v7145
        %8269 = vmatmul.mubr.bf16.gmra.mrb[0].mxu0 %v7144
        %v8270 = vpop.f32.mrb[0].mxu0
        %v8271 = vadd.f32 %v8094, %v8270
        %v8272 = vpop.f32.mrb[0].mxu0
        %v8273 = vpop.f32.mrb[0].mxu0
        %v8274 = vadd.f32 %v8097, %v8273
        %v8275 = vpop.f32.mrb[0].mxu0
        %8276 = vmatprep.mubr.bf16.mxu0 %v7154
        %8277 = vmatmul.mubr.bf16.gmra.mrb[0].mxu0 %v7153
        %v8278 = vpop.f32.mrb[0].mxu0
        %v8279 = vadd.f32 %v8102, %v8278
        %v8280 = vpop.f32.mrb[0].mxu0
        %v8281 = vpop.f32.mrb[0].mxu0
        %v8282 = vadd.f32 %v8105, %v8281
        %v8283 = vpop.f32.mrb[0].mxu0
        %8284 = vmatprep.mubr.bf16.mxu0 %v7163
        %8285 = vmatmul.mubr.bf16.gmra.mrb[0].mxu0 %v7162
        %v8286 = vpop.f32.mrb[0].mxu0
        %v8287 = vadd.f32 %v8110, %v8286
        %v8288 = vpop.f32.mrb[0].mxu0
        %v8289 = vpop.f32.mrb[0].mxu0
        %v8290 = vadd.f32 %v8113, %v8289
        %v8291 = vpop.f32.mrb[0].mxu0
        %8292 = vmatprep.mubr.bf16.mxu0 %v7172
        %8293 = vmatmul.mubr.bf16.gmra.mrb[0].mxu0 %v7171
        %v8294 = vpop.f32.mrb[0].mxu0
        %v8295 = vadd.f32 %v8118, %v8294
        %v8296 = vpop.f32.mrb[0].mxu0
        %v8297 = vpop.f32.mrb[0].mxu0
        %v8298 = vadd.f32 %v8121, %v8297
        %v8299 = vpop.f32.mrb[0].mxu0
        %8300 = vmatprep.mubr.bf16.mxu0 %v7181
        %8301 = vmatmul.mubr.bf16.gmra.mrb[0].mxu0 %v7180
        %v8302 = vpop.f32.mrb[0].mxu0
        %v8303 = vadd.f32 %v8126, %v8302
        %v8304 = vpop.f32.mrb[0].mxu0
        %v8305 = vpop.f32.mrb[0].mxu0
        %v8306 = vadd.f32 %v8129, %v8305
        %v8307 = vpop.f32.mrb[0].mxu0
        %8308 = vmatprep.mubr.bf16.mxu0 %v7190
        %8309 = vmatmul.mubr.bf16.gmra.mrb[0].mxu0 %v7189
        %v8310 = vpop.f32.mrb[0].mxu0
        %v8311 = vadd.f32 %v8134, %v8310
        %v8312 = vpop.f32.mrb[0].mxu0
        %v8313 = vpop.f32.mrb[0].mxu0
        %v8314 = vadd.f32 %v8137, %v8313
        %v8315 = vpop.f32.mrb[0].mxu0
        %8316 = vmatprep.mubr.bf16.mxu0 %v7199
        %8317 = vmatmul.mubr.bf16.gmra.mrb[0].mxu0 %v7198
        %v8318 = vpop.f32.mrb[0].mxu0
        %v8319 = vadd.f32 %v8142, %v8318
        %v8320 = vpop.f32.mrb[0].mxu0
        %v8321 = vpop.f32.mrb[0].mxu0
        %v8322 = vadd.f32 %v8145, %v8321
        %v8323 = vpop.f32.mrb[0].mxu0
        %8324 = vmatprep.mubr.bf16.mxu0 %v7208
        %8325 = vmatmul.mubr.bf16.gmra.mrb[0].mxu0 %v7207
        %v8326 = vpop.f32.mrb[0].mxu0
        %v8327 = vadd.f32 %v8150, %v8326
        %v8328 = vpop.f32.mrb[0].mxu0
        %v8329 = vpop.f32.mrb[0].mxu0
        %v8330 = vadd.f32 %v8153, %v8329
        %v8331 = vpop.f32.mrb[0].mxu0
        %8332 = vmatprep.mubr.bf16.mxu0 %v7217
        %8333 = vmatmul.mubr.bf16.gmra.mrb[0].mxu0 %v7216
        %v8334 = vpop.f32.mrb[0].mxu0
        %v8335 = vadd.f32 %v8158, %v8334
        %v8336 = vpop.f32.mrb[0].mxu0
        %v8337 = vpop.f32.mrb[0].mxu0
        %v8338 = vadd.f32 %v8161, %v8337
        %v8339 = vpop.f32.mrb[0].mxu0
        %8340 = vmatprep.mubr.bf16.mxu0 %v7226
        %8341 = vmatmul.mubr.bf16.gmra.mrb[0].mxu0 %v7225
        %v8342 = vpop.f32.mrb[0].mxu0
        %v8343 = vadd.f32 %v8166, %v8342
        %v8344 = vpop.f32.mrb[0].mxu0
        %v8345 = vpop.f32.mrb[0].mxu0
        %v8346 = vadd.f32 %v8169, %v8345
        %v8347 = vpop.f32.mrb[0].mxu0
        %8348 = vmatprep.mubr.bf16.mxu0 %v7235
        %8349 = vmatmul.mubr.bf16.gmra.mrb[0].mxu0 %v7234
        %v8350 = vpop.f32.mrb[0].mxu0
        %v8351 = vadd.f32 %v8174, %v8350
        %v8352 = vpop.f32.mrb[0].mxu0
        %v8353 = vpop.f32.mrb[0].mxu0
        %v8354 = vadd.f32 %v8177, %v8353
        %v8355 = vpop.f32.mrb[0].mxu0
        %8356 = vmatprep.mubr.bf16.mxu0 %v7244
        %8357 = vmatmul.mubr.bf16.gmra.mrb[0].mxu0 %v7243
        %v8358 = vpop.f32.mrb[0].mxu0
        %v8359 = vadd.f32 %v8182, %v8358
        %v8360 = vpop.f32.mrb[0].mxu0
        %v8361 = vpop.f32.mrb[0].mxu0
        %v8362 = vadd.f32 %v8185, %v8361
        %v8363 = vpop.f32.mrb[0].mxu0
        %8364 = vmatprep.mubr.bf16.mxu0 %v7253
        %8365 = vmatmul.mubr.bf16.gmra.mrb[0].mxu0 %v7252
        %v8366 = vpop.f32.mrb[0].mxu0
        %v8367 = vadd.f32 %v8190, %v8366
        %v8368 = vpop.f32.mrb[0].mxu0
        %v8369 = vpop.f32.mrb[0].mxu0
        %v8370 = vadd.f32 %v8193, %v8369
        %v8371 = vpop.f32.mrb[0].mxu0
        %8372 = vmatprep.mubr.bf16.mxu0 %v7262
        %8373 = vmatmul.mubr.bf16.gmra.mrb[0].mxu0 %v7261
        %v8374 = vpop.f32.mrb[0].mxu0
        %v8375 = vadd.f32 %v8198, %v8374
        %v8376 = vpop.f32.mrb[0].mxu0
        %v8377 = vpop.f32.mrb[0].mxu0
        %v8378 = vadd.f32 %v8201, %v8377
        %v8379 = vpop.f32.mrb[0].mxu0
        %8380 = vmatprep.mubr.bf16.mxu0 %v7271
        %8381 = vmatmul.mubr.bf16.gmra.mrb[0].mxu0 %v7270
        %v8382 = vpop.f32.mrb[0].mxu0
        %v8383 = vadd.f32 %v8206, %v8382
        %v8384 = vpop.f32.mrb[0].mxu0
        %v8385 = vpop.f32.mrb[0].mxu0
        %v8386 = vadd.f32 %v8209, %v8385
        %v8387 = vpop.f32.mrb[0].mxu0
        %8388 = vdwg.mxu0
        %8389 = vmatprep.subr.bf16.mxu0 0
        %8390 = vmatpush1.bf16.msra.mxu0 %v7762
        %8391 = vmatprep.subr.bf16.mxu0 0
        %8392 = vmatpush1.bf16.msra.mxu0 %v7763
        %8393 = vmatprep.subr.bf16.mxu0 0
        %8394 = vmatpush1.bf16.msra.mxu0 %v7764
        %8395 = vmatprep.subr.bf16.mxu0 0
        %8396 = vmatpush1.bf16.msra.mxu0 %v7765
        %8397 = vmatprep.subr.bf16.mxu0 0
        %8398 = vmatpush1.bf16.msra.mxu0 %v7766
        %8399 = vmatprep.subr.bf16.mxu0 0
        %8400 = vmatpush1.bf16.msra.mxu0 %v7767
        %8401 = vmatprep.subr.bf16.mxu0 0
        %8402 = vmatpush1.bf16.msra.mxu0 %v7768
        %8403 = vmatprep.subr.bf16.mxu0 0
        %8404 = vmatpush1.bf16.msra.mxu0 %v7769
        %8405 = vmatprep.subr.bf16.mxu0 0
        %8406 = vmatpush1.bf16.msra.mxu0 %v7770
        %8407 = vmatprep.subr.bf16.mxu0 0
        %8408 = vmatpush1.bf16.msra.mxu0 %v7771
        %8409 = vmatprep.subr.bf16.mxu0 0
        %8410 = vmatpush1.bf16.msra.mxu0 %v7772
        %8411 = vmatprep.subr.bf16.mxu0 0
        %8412 = vmatpush1.bf16.msra.mxu0 %v7773
        %8413 = vmatprep.subr.bf16.mxu0 0
        %8414 = vmatpush1.bf16.msra.mxu0 %v7774
        %8415 = vmatprep.subr.bf16.mxu0 0
        %8416 = vmatpush1.bf16.msra.mxu0 %v7775
        %8417 = vmatprep.subr.bf16.mxu0 0
        %8418 = vmatpush1.bf16.msra.mxu0 %v7776
        %8419 = vmatprep.subr.bf16.mxu0 0
        %8420 = vmatpush1.bf16.msra.mxu0 %v7777
        %8421 = vmatprep.mubr.bf16.mxu0 %v7120
        %8422 = vmatmul.mubr.bf16.gmra.mrb[0].mxu0 %v7119
        %v8423 = vpop.f32.mrb[0].mxu0
        %v8424 = vadd.f32 %v8247, %v8423
        %v8425 = vpop.f32.mrb[0].mxu0
        %v8426 = vpop.f32.mrb[0].mxu0
        %v8427 = vadd.f32 %v8250, %v8426
        %v8428 = vpop.f32.mrb[0].mxu0
        %8429 = vmatprep.mubr.bf16.mxu0 %v7129
        %8430 = vmatmul.mubr.bf16.gmra.mrb[0].mxu0 %v7128
        %v8431 = vpop.f32.mrb[0].mxu0
        %v8432 = vadd.f32 %v8255, %v8431
        %v8433 = vpop.f32.mrb[0].mxu0
        %v8434 = vpop.f32.mrb[0].mxu0
        %v8435 = vadd.f32 %v8258, %v8434
        %v8436 = vpop.f32.mrb[0].mxu0
        %8437 = vmatprep.mubr.bf16.mxu0 %v7138
        %8438 = vmatmul.mubr.bf16.gmra.mrb[0].mxu0 %v7137
        %v8439 = vpop.f32.mrb[0].mxu0
        %v8440 = vadd.f32 %v8263, %v8439
        %v8441 = vpop.f32.mrb[0].mxu0
        %v8442 = vpop.f32.mrb[0].mxu0
        %v8443 = vadd.f32 %v8266, %v8442
        %v8444 = vpop.f32.mrb[0].mxu0
        %8445 = vmatprep.mubr.bf16.mxu0 %v7147
        %8446 = vmatmul.mubr.bf16.gmra.mrb[0].mxu0 %v7146
        %v8447 = vpop.f32.mrb[0].mxu0
        %v8448 = vadd.f32 %v8271, %v8447
        %v8449 = vpop.f32.mrb[0].mxu0
        %v8450 = vpop.f32.mrb[0].mxu0
        %v8451 = vadd.f32 %v8274, %v8450
        %v8452 = vpop.f32.mrb[0].mxu0
        %8453 = vmatprep.mubr.bf16.mxu0 %v7156
        %8454 = vmatmul.mubr.bf16.gmra.mrb[0].mxu0 %v7155
        %v8455 = vpop.f32.mrb[0].mxu0
        %v8456 = vadd.f32 %v8279, %v8455
        %v8457 = vpop.f32.mrb[0].mxu0
        %v8458 = vpop.f32.mrb[0].mxu0
        %v8459 = vadd.f32 %v8282, %v8458
        %v8460 = vpop.f32.mrb[0].mxu0
        %8461 = vmatprep.mubr.bf16.mxu0 %v7165
        %8462 = vmatmul.mubr.bf16.gmra.mrb[0].mxu0 %v7164
        %v8463 = vpop.f32.mrb[0].mxu0
        %v8464 = vadd.f32 %v8287, %v8463
        %v8465 = vpop.f32.mrb[0].mxu0
        %v8466 = vpop.f32.mrb[0].mxu0
        %v8467 = vadd.f32 %v8290, %v8466
        %v8468 = vpop.f32.mrb[0].mxu0
        %8469 = vmatprep.mubr.bf16.mxu0 %v7174
        %8470 = vmatmul.mubr.bf16.gmra.mrb[0].mxu0 %v7173
        %v8471 = vpop.f32.mrb[0].mxu0
        %v8472 = vadd.f32 %v8295, %v8471
        %v8473 = vpop.f32.mrb[0].mxu0
        %v8474 = vpop.f32.mrb[0].mxu0
        %v8475 = vadd.f32 %v8298, %v8474
        %v8476 = vpop.f32.mrb[0].mxu0
        %8477 = vmatprep.mubr.bf16.mxu0 %v7183
        %8478 = vmatmul.mubr.bf16.gmra.mrb[0].mxu0 %v7182
        %v8479 = vpop.f32.mrb[0].mxu0
        %v8480 = vadd.f32 %v8303, %v8479
        %v8481 = vpop.f32.mrb[0].mxu0
        %v8482 = vpop.f32.mrb[0].mxu0
        %v8483 = vadd.f32 %v8306, %v8482
        %v8484 = vpop.f32.mrb[0].mxu0
        %8485 = vmatprep.mubr.bf16.mxu0 %v7192
        %8486 = vmatmul.mubr.bf16.gmra.mrb[0].mxu0 %v7191
        %v8487 = vpop.f32.mrb[0].mxu0
        %v8488 = vadd.f32 %v8311, %v8487
        %v8489 = vpop.f32.mrb[0].mxu0
        %v8490 = vpop.f32.mrb[0].mxu0
        %v8491 = vadd.f32 %v8314, %v8490
        %v8492 = vpop.f32.mrb[0].mxu0
        %8493 = vmatprep.mubr.bf16.mxu0 %v7201
        %8494 = vmatmul.mubr.bf16.gmra.mrb[0].mxu0 %v7200
        %v8495 = vpop.f32.mrb[0].mxu0
        %v8496 = vadd.f32 %v8319, %v8495
        %v8497 = vpop.f32.mrb[0].mxu0
        %v8498 = vpop.f32.mrb[0].mxu0
        %v8499 = vadd.f32 %v8322, %v8498
        %v8500 = vpop.f32.mrb[0].mxu0
        %8501 = vmatprep.mubr.bf16.mxu0 %v7210
        %8502 = vmatmul.mubr.bf16.gmra.mrb[0].mxu0 %v7209
        %v8503 = vpop.f32.mrb[0].mxu0
        %v8504 = vadd.f32 %v8327, %v8503
        %v8505 = vpop.f32.mrb[0].mxu0
        %v8506 = vpop.f32.mrb[0].mxu0
        %v8507 = vadd.f32 %v8330, %v8506
        %v8508 = vpop.f32.mrb[0].mxu0
        %8509 = vmatprep.mubr.bf16.mxu0 %v7219
        %8510 = vmatmul.mubr.bf16.gmra.mrb[0].mxu0 %v7218
        %v8511 = vpop.f32.mrb[0].mxu0
        %v8512 = vadd.f32 %v8335, %v8511
        %v8513 = vpop.f32.mrb[0].mxu0
        %v8514 = vpop.f32.mrb[0].mxu0
        %v8515 = vadd.f32 %v8338, %v8514
        %v8516 = vpop.f32.mrb[0].mxu0
        %8517 = vmatprep.mubr.bf16.mxu0 %v7228
        %8518 = vmatmul.mubr.bf16.gmra.mrb[0].mxu0 %v7227
        %v8519 = vpop.f32.mrb[0].mxu0
        %v8520 = vadd.f32 %v8343, %v8519
        %v8521 = vpop.f32.mrb[0].mxu0
        %v8522 = vpop.f32.mrb[0].mxu0
        %v8523 = vadd.f32 %v8346, %v8522
        %v8524 = vpop.f32.mrb[0].mxu0
        %8525 = vmatprep.mubr.bf16.mxu0 %v7237
        %8526 = vmatmul.mubr.bf16.gmra.mrb[0].mxu0 %v7236
        %v8527 = vpop.f32.mrb[0].mxu0
        %v8528 = vadd.f32 %v8351, %v8527
        %v8529 = vpop.f32.mrb[0].mxu0
        %v8530 = vpop.f32.mrb[0].mxu0
        %v8531 = vadd.f32 %v8354, %v8530
        %v8532 = vpop.f32.mrb[0].mxu0
        %8533 = vmatprep.mubr.bf16.mxu0 %v7246
        %8534 = vmatmul.mubr.bf16.gmra.mrb[0].mxu0 %v7245
        %v8535 = vpop.f32.mrb[0].mxu0
        %v8536 = vadd.f32 %v8359, %v8535
        %v8537 = vpop.f32.mrb[0].mxu0
        %v8538 = vpop.f32.mrb[0].mxu0
        %v8539 = vadd.f32 %v8362, %v8538
        %v8540 = vpop.f32.mrb[0].mxu0
        %8541 = vmatprep.mubr.bf16.mxu0 %v7255
        %8542 = vmatmul.mubr.bf16.gmra.mrb[0].mxu0 %v7254
        %v8543 = vpop.f32.mrb[0].mxu0
        %v8544 = vadd.f32 %v8367, %v8543
        %v8545 = vpop.f32.mrb[0].mxu0
        %v8546 = vpop.f32.mrb[0].mxu0
        %v8547 = vadd.f32 %v8370, %v8546
        %v8548 = vpop.f32.mrb[0].mxu0
        %8549 = vmatprep.mubr.bf16.mxu0 %v7264
        %8550 = vmatmul.mubr.bf16.gmra.mrb[0].mxu0 %v7263
        %v8551 = vpop.f32.mrb[0].mxu0
        %v8552 = vadd.f32 %v8375, %v8551
        %v8553 = vpop.f32.mrb[0].mxu0
        %v8554 = vpop.f32.mrb[0].mxu0
        %v8555 = vadd.f32 %v8378, %v8554
        %v8556 = vpop.f32.mrb[0].mxu0
        %8557 = vmatprep.mubr.bf16.mxu0 %v7273
        %8558 = vmatmul.mubr.bf16.gmra.mrb[0].mxu0 %v7272
        %v8559 = vpop.f32.mrb[0].mxu0
        %v8560 = vadd.f32 %v8383, %v8559
        %v8561 = vpop.f32.mrb[0].mxu0
        %v8562 = vpop.f32.mrb[0].mxu0
        %v8563 = vadd.f32 %v8386, %v8562
        %v8564 = vpop.f32.mrb[0].mxu0
        %8565 = vdwg.mxu0
        %8566 = vmatprep.subr.bf16.mxu0 0
        %8567 = vmatpush1.bf16.msra.mxu0 %v7778
        %8568 = vmatprep.subr.bf16.mxu0 0
        %8569 = vmatpush1.bf16.msra.mxu0 %v7779
        %8570 = vmatprep.subr.bf16.mxu0 0
        %8571 = vmatpush1.bf16.msra.mxu0 %v7780
        %8572 = vmatprep.subr.bf16.mxu0 0
        %8573 = vmatpush1.bf16.msra.mxu0 %v7781
        %8574 = vmatprep.subr.bf16.mxu0 0
        %8575 = vmatpush1.bf16.msra.mxu0 %v7782
        %8576 = vmatprep.subr.bf16.mxu0 0
        %8577 = vmatpush1.bf16.msra.mxu0 %v7783
        %8578 = vmatprep.subr.bf16.mxu0 0
        %8579 = vmatpush1.bf16.msra.mxu0 %v7784
        %8580 = vmatprep.subr.bf16.mxu0 0
        %8581 = vmatpush1.bf16.msra.mxu0 %v7785
        %8582 = vmatprep.subr.bf16.mxu0 0
        %8583 = vmatpush1.bf16.msra.mxu0 0
        %8584 = vmatprep.subr.bf16.mxu0 0
        %8585 = vmatpush1.bf16.msra.mxu0 0
        %8586 = vmatprep.subr.bf16.mxu0 0
        %8587 = vmatpush1.bf16.msra.mxu0 0
        %8588 = vmatprep.subr.bf16.mxu0 0
        %8589 = vmatpush1.bf16.msra.mxu0 0
        %8590 = vmatprep.subr.bf16.mxu0 0
        %8591 = vmatpush1.bf16.msra.mxu0 0
        %8592 = vmatprep.subr.bf16.mxu0 0
        %8593 = vmatpush1.bf16.msra.mxu0 0
        %8594 = vmatprep.subr.bf16.mxu0 0
        %8595 = vmatpush1.bf16.msra.mxu0 0
        %8596 = vmatprep.subr.bf16.mxu0 0
        %8597 = vmatpush1.bf16.msra.mxu0 0
        %8598 = vmatprep.mubr.bf16.mxu0 0
        %8599 = vmatmul.mubr.bf16.gmra.mrb[0].mxu0 %v7121
        %v8600 = vpop.f32.mrb[0].mxu0
        %v8601 = vadd.f32 %v8424, %v8600
        %v8602 = vpop.f32.mrb[0].mxu0
        %v8603 = vpop.f32.mrb[0].mxu0
        %v8604 = vadd.f32 %v8427, %v8603
        %v8605 = vpop.f32.mrb[0].mxu0
        %8606 = vmatprep.mubr.bf16.mxu0 0
        %8607 = vmatmul.mubr.bf16.gmra.mrb[0].mxu0 %v7130
        %v8608 = vpop.f32.mrb[0].mxu0
        %v8609 = vadd.f32 %v8432, %v8608
        %v8610 = vpop.f32.mrb[0].mxu0
        %v8611 = vpop.f32.mrb[0].mxu0
        %v8612 = vadd.f32 %v8435, %v8611
        %v8613 = vpop.f32.mrb[0].mxu0
        %8614 = vmatprep.mubr.bf16.mxu0 0
        %8615 = vmatmul.mubr.bf16.gmra.mrb[0].mxu0 %v7139
        %v8616 = vpop.f32.mrb[0].mxu0
        %v8617 = vadd.f32 %v8440, %v8616
        %v8618 = vpop.f32.mrb[0].mxu0
        %v8619 = vpop.f32.mrb[0].mxu0
        %v8620 = vadd.f32 %v8443, %v8619
        %v8621 = vpop.f32.mrb[0].mxu0
        %8622 = vmatprep.mubr.bf16.mxu0 0
        %8623 = vmatmul.mubr.bf16.gmra.mrb[0].mxu0 %v7148
        %v8624 = vpop.f32.mrb[0].mxu0
        %v8625 = vadd.f32 %v8448, %v8624
        %v8626 = vpop.f32.mrb[0].mxu0
        %v8627 = vpop.f32.mrb[0].mxu0
        %v8628 = vadd.f32 %v8451, %v8627
        %v8629 = vpop.f32.mrb[0].mxu0
        %8630 = vmatprep.mubr.bf16.mxu0 0
        %8631 = vmatmul.mubr.bf16.gmra.mrb[0].mxu0 %v7157
        %v8632 = vpop.f32.mrb[0].mxu0
        %v8633 = vadd.f32 %v8456, %v8632
        %v8634 = vpop.f32.mrb[0].mxu0
        %v8635 = vpop.f32.mrb[0].mxu0
        %v8636 = vadd.f32 %v8459, %v8635
        %v8637 = vpop.f32.mrb[0].mxu0
        %8638 = vmatprep.mubr.bf16.mxu0 0
        %8639 = vmatmul.mubr.bf16.gmra.mrb[0].mxu0 %v7166
        %v8640 = vpop.f32.mrb[0].mxu0
        %v8641 = vadd.f32 %v8464, %v8640
        %v8642 = vpop.f32.mrb[0].mxu0
        %v8643 = vpop.f32.mrb[0].mxu0
        %v8644 = vadd.f32 %v8467, %v8643
        %v8645 = vpop.f32.mrb[0].mxu0
        %8646 = vmatprep.mubr.bf16.mxu0 0
        %8647 = vmatmul.mubr.bf16.gmra.mrb[0].mxu0 %v7175
        %v8648 = vpop.f32.mrb[0].mxu0
        %v8649 = vadd.f32 %v8472, %v8648
        %v8650 = vpop.f32.mrb[0].mxu0
        %v8651 = vpop.f32.mrb[0].mxu0
        %v8652 = vadd.f32 %v8475, %v8651
        %v8653 = vpop.f32.mrb[0].mxu0
        %8654 = vmatprep.mubr.bf16.mxu0 0
        %8655 = vmatmul.mubr.bf16.gmra.mrb[0].mxu0 %v7184
        %v8656 = vpop.f32.mrb[0].mxu0
        %v8657 = vadd.f32 %v8480, %v8656
        %v8658 = vpop.f32.mrb[0].mxu0
        %v8659 = vpop.f32.mrb[0].mxu0
        %v8660 = vadd.f32 %v8483, %v8659
        %v8661 = vpop.f32.mrb[0].mxu0
        %8662 = vmatprep.mubr.bf16.mxu0 0
        %8663 = vmatmul.mubr.bf16.gmra.mrb[0].mxu0 %v7193
        %v8664 = vpop.f32.mrb[0].mxu0
        %v8665 = vadd.f32 %v8488, %v8664
        %v8666 = vpop.f32.mrb[0].mxu0
        %v8667 = vpop.f32.mrb[0].mxu0
        %v8668 = vadd.f32 %v8491, %v8667
        %v8669 = vpop.f32.mrb[0].mxu0
        %8670 = vmatprep.mubr.bf16.mxu0 0
        %8671 = vmatmul.mubr.bf16.gmra.mrb[0].mxu0 %v7202
        %v8672 = vpop.f32.mrb[0].mxu0
        %v8673 = vadd.f32 %v8496, %v8672
        %v8674 = vpop.f32.mrb[0].mxu0
        %v8675 = vpop.f32.mrb[0].mxu0
        %v8676 = vadd.f32 %v8499, %v8675
        %v8677 = vpop.f32.mrb[0].mxu0
        %8678 = vmatprep.mubr.bf16.mxu0 0
        %8679 = vmatmul.mubr.bf16.gmra.mrb[0].mxu0 %v7211
        %v8680 = vpop.f32.mrb[0].mxu0
        %v8681 = vadd.f32 %v8504, %v8680
        %v8682 = vpop.f32.mrb[0].mxu0
        %v8683 = vpop.f32.mrb[0].mxu0
        %v8684 = vadd.f32 %v8507, %v8683
        %v8685 = vpop.f32.mrb[0].mxu0
        %8686 = vmatprep.mubr.bf16.mxu0 0
        %8687 = vmatmul.mubr.bf16.gmra.mrb[0].mxu0 %v7220
        %v8688 = vpop.f32.mrb[0].mxu0
        %v8689 = vadd.f32 %v8512, %v8688
        %v8690 = vpop.f32.mrb[0].mxu0
        %v8691 = vpop.f32.mrb[0].mxu0
        %v8692 = vadd.f32 %v8515, %v8691
        %v8693 = vpop.f32.mrb[0].mxu0
        %8694 = vmatprep.mubr.bf16.mxu0 0
        %8695 = vmatmul.mubr.bf16.gmra.mrb[0].mxu0 %v7229
        %v8696 = vpop.f32.mrb[0].mxu0
        %v8697 = vadd.f32 %v8520, %v8696
        %v8698 = vpop.f32.mrb[0].mxu0
        %v8699 = vpop.f32.mrb[0].mxu0
        %v8700 = vadd.f32 %v8523, %v8699
        %v8701 = vpop.f32.mrb[0].mxu0
        %8702 = vmatprep.mubr.bf16.mxu0 0
        %8703 = vmatmul.mubr.bf16.gmra.mrb[0].mxu0 %v7238
        %v8704 = vpop.f32.mrb[0].mxu0
        %v8705 = vadd.f32 %v8528, %v8704
        %v8706 = vpop.f32.mrb[0].mxu0
        %v8707 = vpop.f32.mrb[0].mxu0
        %v8708 = vadd.f32 %v8531, %v8707
        %v8709 = vpop.f32.mrb[0].mxu0
        %8710 = vmatprep.mubr.bf16.mxu0 0
        %8711 = vmatmul.mubr.bf16.gmra.mrb[0].mxu0 %v7247
        %v8712 = vpop.f32.mrb[0].mxu0
        %v8713 = vadd.f32 %v8536, %v8712
        %v8714 = vpop.f32.mrb[0].mxu0
        %v8715 = vpop.f32.mrb[0].mxu0
        %v8716 = vadd.f32 %v8539, %v8715
        %v8717 = vpop.f32.mrb[0].mxu0
        %8718 = vmatprep.mubr.bf16.mxu0 0
        %8719 = vmatmul.mubr.bf16.gmra.mrb[0].mxu0 %v7256
        %v8720 = vpop.f32.mrb[0].mxu0
        %v8721 = vadd.f32 %v8544, %v8720
        %v8722 = vpop.f32.mrb[0].mxu0
        %v8723 = vpop.f32.mrb[0].mxu0
        %v8724 = vadd.f32 %v8547, %v8723
        %v8725 = vpop.f32.mrb[0].mxu0
        %8726 = vmatprep.mubr.bf16.mxu0 0
        %8727 = vmatmul.mubr.bf16.gmra.mrb[0].mxu0 %v7265
        %v8728 = vpop.f32.mrb[0].mxu0
        %v8729 = vadd.f32 %v8552, %v8728
        %v8730 = vpop.f32.mrb[0].mxu0
        %v8731 = vpop.f32.mrb[0].mxu0
        %v8732 = vadd.f32 %v8555, %v8731
        %v8733 = vpop.f32.mrb[0].mxu0
        %8734 = vmatprep.mubr.bf16.mxu0 0
        %8735 = vmatmul.mubr.bf16.gmra.mrb[0].mxu0 %v7274
        %v8736 = vpop.f32.mrb[0].mxu0
        %v8737 = vadd.f32 %v8560, %v8736
        %v8738 = vpop.f32.mrb[0].mxu0
        %v8739 = vpop.f32.mrb[0].mxu0
        %v8740 = vadd.f32 %v8563, %v8739
        %v8741 = vpop.f32.mrb[0].mxu0
        %8742 = vdwg.mxu0
        %v8743 = vmax.f32 %v8601, 0.0
        %v8744 = vmax.f32 %v8604, 0.0
        %v8745 = vmax.f32 %v8609, 0.0
        %v8746 = vmax.f32 %v8612, 0.0
        %v8747 = vmax.f32 %v8617, 0.0
        %v8748 = vmax.f32 %v8620, 0.0
        %v8749 = vmax.f32 %v8625, 0.0
        %v8750 = vmax.f32 %v8628, 0.0
        %v8751 = vmax.f32 %v8633, 0.0
        %v8752 = vmax.f32 %v8636, 0.0
        %v8753 = vmax.f32 %v8641, 0.0
        %v8754 = vmax.f32 %v8644, 0.0
        %v8755 = vmax.f32 %v8649, 0.0
        %v8756 = vmax.f32 %v8652, 0.0
        %v8757 = vmax.f32 %v8657, 0.0
        %v8758 = vmax.f32 %v8660, 0.0
        %v8759 = vmax.f32 %v8665, 0.0
        %v8760 = vmax.f32 %v8668, 0.0
        %v8761 = vmax.f32 %v8673, 0.0
        %v8762 = vmax.f32 %v8676, 0.0
        %v8763 = vmax.f32 %v8681, 0.0
        %v8764 = vmax.f32 %v8684, 0.0
        %v8765 = vmax.f32 %v8689, 0.0
        %v8766 = vmax.f32 %v8692, 0.0
        %v8767 = vmax.f32 %v8697, 0.0
        %v8768 = vmax.f32 %v8700, 0.0
        %v8769 = vmax.f32 %v8705, 0.0
        %v8770 = vmax.f32 %v8708, 0.0
        %v8771 = vmax.f32 %v8713, 0.0
        %v8772 = vmax.f32 %v8716, 0.0
        %v8773 = vmax.f32 %v8721, 0.0
        %v8774 = vmax.f32 %v8724, 0.0
        %v8775 = vmax.f32 %v8729, 0.0
        %v8776 = vmax.f32 %v8732, 0.0
        %v8777 = vmax.f32 %v8737, 0.0
        %v8778 = vmax.f32 %v8740, 0.0
        %v8779 = vld [vmem:[%s262 + $0x8] sm:$0xe]
        %v8780 = vld [vmem:[%s262 + $0xc] sm:$0xf]
        %v8781 = vld [vmem:[%s262 + $0x10] sm:$0xf]
        %v8782 = vld [vmem:[%s262 + $0x14] sm:$0xf]
        %v8783 = vld [vmem:[%s262 + $0x18] sm:$0xf]
        %v8784 = vld [vmem:[%s262 + $0x1c] sm:$0xf]
        %v8785 = vld [vmem:[%s262 + $0x20] sm:$0xf]
        %v8786 = vld [vmem:[%s262 + $0x24] sm:$0xf]
        %v8787 = vld [vmem:[%s262 + $0x28] sm:$0xf]
        %v8788 = vld [vmem:[%s262 + $0x2c] sm:$0xf]
        %v8789 = vld [vmem:[%s262 + $0x30] sm:$0xf]
        %v8790 = vld [vmem:[%s262 + $0x34] sm:$0xf]
        %v8791 = vld [vmem:[%s262 + $0x38] sm:$0xf]
        %v8792 = vld [vmem:[%s262 + $0x3c] sm:$0xf]
        %v8793 = vld [vmem:[%s262 + $0x40] sm:$0xf]
        %v8794 = vld [vmem:[%s262 + $0x44] sm:$0xf]
        %v8795 = vld [vmem:[%s262 + $0x48] sm:$0xf]
        %v8796 = vld [vmem:[%s262 + $0x4c] sm:$0xf]
        %v8797 = vld [vmem:[%s262 + $0x50] sm:$0xf]
        %v8798 = vld [vmem:[%s262 + $0x54] sm:$0xf]
        %v8799 = vld [vmem:[%s262 + $0x58] sm:$0xf]
        %v8800 = vld [vmem:[%s262 + $0x5c] sm:$0xf]
        %v8801 = vld [vmem:[%s262 + $0x60] sm:$0xf]
        %v8802 = vld [vmem:[%s262 + $0x64] sm:$0xf]
        %v8803 = vld [vmem:[%s262 + $0x68] sm:$0xf]
        %v8804 = vld [vmem:[%s262 + $0x6c] sm:$0xf]
        %v8805 = vld [vmem:[%s262 + $0x70] sm:$0xf]
        %v8806 = vld [vmem:[%s262 + $0x74] sm:$0xf]
        %v8807 = vld [vmem:[%s262 + $0x78] sm:$0xf]
        %v8808 = vld [vmem:[%s262 + $0x7c] sm:$0xf]
        %v8809 = vld [vmem:[%s262 + $0x80] sm:$0xf]
        %v8810 = vld [vmem:[%s262 + $0x84] sm:$0xf]
        %v8811 = vld [vmem:[%s262 + $0x88] sm:$0xf]
        %v8812 = vld [vmem:[%s262 + $0x8c] sm:$0xf]
        %v8813 = vld [vmem:[%s262 + $0x90] sm:$0xf]
        %v8814 = vld [vmem:[%s262 + $0x94] sm:$0xf]
        %v8815 = vld [vmem:[%s262 + $0x98] sm:$0x3]
        %v8816 = vunpack.c.l.bf16 %v8779
        %v8817 = vunpack.c.l.bf16 %v8780
        %v8818 = vunpack.c.l.bf16 %v8781
        %v8819 = vunpack.c.l.bf16 %v8782
        %v8820 = vunpack.c.l.bf16 %v8783
        %v8821 = vunpack.c.l.bf16 %v8784
        %v8822 = vunpack.c.l.bf16 %v8785
        %v8823 = vunpack.c.l.bf16 %v8786
        %v8824 = vunpack.c.l.bf16 %v8787
        %v8825 = vunpack.c.l.bf16 %v8788
        %v8826 = vunpack.c.l.bf16 %v8789
        %v8827 = vunpack.c.l.bf16 %v8790
        %v8828 = vunpack.c.l.bf16 %v8791
        %v8829 = vunpack.c.l.bf16 %v8792
        %v8830 = vunpack.c.l.bf16 %v8793
        %v8831 = vunpack.c.l.bf16 %v8794
        %v8832 = vunpack.c.l.bf16 %v8795
        %v8833 = vunpack.c.l.bf16 %v8796
        %v8834 = vunpack.c.l.bf16 %v8797
        %v8835 = vunpack.c.l.bf16 %v8798
        %v8836 = vunpack.c.l.bf16 %v8799
        %v8837 = vunpack.c.l.bf16 %v8800
        %v8838 = vunpack.c.l.bf16 %v8801
        %v8839 = vunpack.c.l.bf16 %v8802
        %v8840 = vunpack.c.l.bf16 %v8803
        %v8841 = vunpack.c.l.bf16 %v8804
        %v8842 = vunpack.c.l.bf16 %v8805
        %v8843 = vunpack.c.l.bf16 %v8806
        %v8844 = vunpack.c.l.bf16 %v8807
        %v8845 = vunpack.c.l.bf16 %v8808
        %v8846 = vunpack.c.l.bf16 %v8809
        %v8847 = vunpack.c.l.bf16 %v8810
        %v8848 = vunpack.c.l.bf16 %v8811
        %v8849 = vunpack.c.l.bf16 %v8812
        %v8850 = vunpack.c.l.bf16 %v8813
        %v8851 = vunpack.c.l.bf16 %v8814
        %v8852 = vunpack.c.l.bf16 %v8815
        %vm8890 = vcmask 1044480
        %v8891 = vrot.slane %v8816, 3
        %v8892 = vrot.slane %v8817, 3
        %v8893 = vsel %vm8890, %v8891, %v8892
        %v8894 = vrot.slane %v8818, 3
        %v8895 = vsel %vm8890, %v8892, %v8894
        %v8896 = vrot.slane %v8819, 3
        %v8897 = vsel %vm8890, %v8894, %v8896
        %v8898 = vrot.slane %v8820, 3
        %v8899 = vsel %vm8890, %v8896, %v8898
        %v8900 = vrot.slane %v8821, 3
        %v8901 = vsel %vm8890, %v8898, %v8900
        %v8902 = vrot.slane %v8822, 3
        %v8903 = vsel %vm8890, %v8900, %v8902
        %v8904 = vrot.slane %v8823, 3
        %v8905 = vsel %vm8890, %v8902, %v8904
        %v8906 = vrot.slane %v8824, 3
        %v8907 = vsel %vm8890, %v8904, %v8906
        %v8908 = vrot.slane %v8825, 3
        %v8909 = vsel %vm8890, %v8906, %v8908
        %v8910 = vrot.slane %v8826, 3
        %v8911 = vsel %vm8890, %v8908, %v8910
        %v8912 = vrot.slane %v8827, 3
        %v8913 = vsel %vm8890, %v8910, %v8912
        %v8914 = vrot.slane %v8828, 3
        %v8915 = vsel %vm8890, %v8912, %v8914
        %v8916 = vrot.slane %v8829, 3
        %v8917 = vsel %vm8890, %v8914, %v8916
        %v8918 = vrot.slane %v8830, 3
        %v8919 = vsel %vm8890, %v8916, %v8918
        %v8920 = vrot.slane %v8831, 3
        %v8921 = vsel %vm8890, %v8918, %v8920
        %v8922 = vrot.slane %v8832, 3
        %v8923 = vsel %vm8890, %v8920, %v8922
        %v8924 = vrot.slane %v8833, 3
        %v8925 = vsel %vm8890, %v8922, %v8924
        %v8926 = vrot.slane %v8834, 3
        %v8927 = vsel %vm8890, %v8924, %v8926
        %v8928 = vrot.slane %v8835, 3
        %v8929 = vsel %vm8890, %v8926, %v8928
        %v8930 = vrot.slane %v8836, 3
        %v8931 = vsel %vm8890, %v8928, %v8930
        %v8932 = vrot.slane %v8837, 3
        %v8933 = vsel %vm8890, %v8930, %v8932
        %v8934 = vrot.slane %v8838, 3
        %v8935 = vsel %vm8890, %v8932, %v8934
        %v8936 = vrot.slane %v8839, 3
        %v8937 = vsel %vm8890, %v8934, %v8936
        %v8938 = vrot.slane %v8840, 3
        %v8939 = vsel %vm8890, %v8936, %v8938
        %v8940 = vrot.slane %v8841, 3
        %v8941 = vsel %vm8890, %v8938, %v8940
        %v8942 = vrot.slane %v8842, 3
        %v8943 = vsel %vm8890, %v8940, %v8942
        %v8944 = vrot.slane %v8843, 3
        %v8945 = vsel %vm8890, %v8942, %v8944
        %v8946 = vrot.slane %v8844, 3
        %v8947 = vsel %vm8890, %v8944, %v8946
        %v8948 = vrot.slane %v8845, 3
        %v8949 = vsel %vm8890, %v8946, %v8948
        %v8950 = vrot.slane %v8846, 3
        %v8951 = vsel %vm8890, %v8948, %v8950
        %v8952 = vrot.slane %v8847, 3
        %v8953 = vsel %vm8890, %v8950, %v8952
        %v8954 = vrot.slane %v8848, 3
        %v8955 = vsel %vm8890, %v8952, %v8954
        %v8956 = vrot.slane %v8849, 3
        %v8957 = vsel %vm8890, %v8954, %v8956
        %v8958 = vrot.slane %v8850, 3
        %v8959 = vsel %vm8890, %v8956, %v8958
        %v8960 = vrot.slane %v8851, 3
        %v8961 = vsel %vm8890, %v8958, %v8960
        %v8962 = vrot.slane %v8852, 3
        %v8963 = vsel %vm8890, %v8960, %v8962
        %v9000 = vadd.f32 %v8743, %v8893
        %v9001 = vadd.f32 %v8744, %v8895
        %v9002 = vadd.f32 %v8745, %v8897
        %v9003 = vadd.f32 %v8746, %v8899
        %v9004 = vadd.f32 %v8747, %v8901
        %v9005 = vadd.f32 %v8748, %v8903
        %v9006 = vadd.f32 %v8749, %v8905
        %v9007 = vadd.f32 %v8750, %v8907
        %v9008 = vadd.f32 %v8751, %v8909
        %v9009 = vadd.f32 %v8752, %v8911
        %v9010 = vadd.f32 %v8753, %v8913
        %v9011 = vadd.f32 %v8754, %v8915
        %v9012 = vadd.f32 %v8755, %v8917
        %v9013 = vadd.f32 %v8756, %v8919
        %v9014 = vadd.f32 %v8757, %v8921
        %v9015 = vadd.f32 %v8758, %v8923
        %v9016 = vadd.f32 %v8759, %v8925
        %v9017 = vadd.f32 %v8760, %v8927
        %v9018 = vadd.f32 %v8761, %v8929
        %v9019 = vadd.f32 %v8762, %v8931
        %v9020 = vadd.f32 %v8763, %v8933
        %v9021 = vadd.f32 %v8764, %v8935
        %v9022 = vadd.f32 %v8765, %v8937
        %v9023 = vadd.f32 %v8766, %v8939
        %v9024 = vadd.f32 %v8767, %v8941
        %v9025 = vadd.f32 %v8768, %v8943
        %v9026 = vadd.f32 %v8769, %v8945
        %v9027 = vadd.f32 %v8770, %v8947
        %v9028 = vadd.f32 %v8771, %v8949
        %v9029 = vadd.f32 %v8772, %v8951
        %v9030 = vadd.f32 %v8773, %v8953
        %v9031 = vadd.f32 %v8774, %v8955
        %v9032 = vadd.f32 %v8775, %v8957
        %v9033 = vadd.f32 %v8776, %v8959
        %v9034 = vadd.f32 %v8777, %v8961
        %v9035 = vadd.f32 %v8778, %v8963
        %v9036 = vmax.f32 %v9000, 0.0
        %v9037 = vmax.f32 %v9001, 0.0
        %v9038 = vmax.f32 %v9002, 0.0
        %v9039 = vmax.f32 %v9003, 0.0
        %v9040 = vmax.f32 %v9004, 0.0
        %v9041 = vmax.f32 %v9005, 0.0
        %v9042 = vmax.f32 %v9006, 0.0
        %v9043 = vmax.f32 %v9007, 0.0
        %v9044 = vmax.f32 %v9008, 0.0
        %v9045 = vmax.f32 %v9009, 0.0
        %v9046 = vmax.f32 %v9010, 0.0
        %v9047 = vmax.f32 %v9011, 0.0
        %v9048 = vmax.f32 %v9012, 0.0
        %v9049 = vmax.f32 %v9013, 0.0
        %v9050 = vmax.f32 %v9014, 0.0
        %v9051 = vmax.f32 %v9015, 0.0
        %v9052 = vmax.f32 %v9016, 0.0
        %v9053 = vmax.f32 %v9017, 0.0
        %v9054 = vmax.f32 %v9018, 0.0
        %v9055 = vmax.f32 %v9019, 0.0
        %v9056 = vmax.f32 %v9020, 0.0
        %v9057 = vmax.f32 %v9021, 0.0
        %v9058 = vmax.f32 %v9022, 0.0
        %v9059 = vmax.f32 %v9023, 0.0
        %v9060 = vmax.f32 %v9024, 0.0
        %v9061 = vmax.f32 %v9025, 0.0
        %v9062 = vmax.f32 %v9026, 0.0
        %v9063 = vmax.f32 %v9027, 0.0
        %v9064 = vmax.f32 %v9028, 0.0
        %v9065 = vmax.f32 %v9029, 0.0
        %v9066 = vmax.f32 %v9030, 0.0
        %v9067 = vmax.f32 %v9031, 0.0
        %v9068 = vmax.f32 %v9032, 0.0
        %v9069 = vmax.f32 %v9033, 0.0
        %v9070 = vmax.f32 %v9034, 0.0
        %v9071 = vmax.f32 %v9035, 0.0
        %9072 = vst [vmem:[%s298] sm:$0xff] %v9036
        %9073 = vst [vmem:[%s298 + $0x8] sm:$0xff] %v9037
        %9074 = vst [vmem:[%s298 + $0x10] sm:$0xff] %v9038
        %9075 = vst [vmem:[%s298 + $0x18] sm:$0xff] %v9039
        %9076 = vst [vmem:[%s298 + $0x20] sm:$0xff] %v9040
        %9077 = vst [vmem:[%s298 + $0x28] sm:$0xff] %v9041
        %9078 = vst [vmem:[%s298 + $0x30] sm:$0xff] %v9042
        %9079 = vst [vmem:[%s298 + $0x38] sm:$0xff] %v9043
        %9080 = vst [vmem:[%s298 + $0x40] sm:$0xff] %v9044
        %9081 = vst [vmem:[%s298 + $0x48] sm:$0xff] %v9045
        %9082 = vst [vmem:[%s298 + $0x50] sm:$0xff] %v9046
        %9083 = vst [vmem:[%s298 + $0x58] sm:$0xff] %v9047
        %9084 = vst [vmem:[%s298 + $0x60] sm:$0xff] %v9048
        %9085 = vst [vmem:[%s298 + $0x68] sm:$0xff] %v9049
        %9086 = vst [vmem:[%s298 + $0x70] sm:$0xff] %v9050
        %9087 = vst [vmem:[%s298 + $0x78] sm:$0xff] %v9051
        %9088 = vst [vmem:[%s298 + $0x80] sm:$0xff] %v9052
        %9089 = vst [vmem:[%s298 + $0x88] sm:$0xff] %v9053
        %9090 = vst [vmem:[%s298 + $0x90] sm:$0xff] %v9054
        %9091 = vst [vmem:[%s298 + $0x98] sm:$0xff] %v9055
        %9092 = vst [vmem:[%s298 + $0xa0] sm:$0xff] %v9056
        %9093 = vst [vmem:[%s298 + $0xa8] sm:$0xff] %v9057
        %9094 = vst [vmem:[%s298 + $0xb0] sm:$0xff] %v9058
        %9095 = vst [vmem:[%s298 + $0xb8] sm:$0xff] %v9059
        %9096 = vst [vmem:[%s298 + $0xc0] sm:$0xff] %v9060
        %9097 = vst [vmem:[%s298 + $0xc8] sm:$0xff] %v9061
        %9098 = vst [vmem:[%s298 + $0xd0] sm:$0xff] %v9062
        %9099 = vst [vmem:[%s298 + $0xd8] sm:$0xff] %v9063
        %9100 = vst [vmem:[%s298 + $0xe0] sm:$0xff] %v9064
        %9101 = vst [vmem:[%s298 + $0xe8] sm:$0xff] %v9065
        %9102 = vst [vmem:[%s298 + $0xf0] sm:$0xff] %v9066
        %9103 = vst [vmem:[%s298 + $0xf8] sm:$0xff] %v9067
        %9104 = vst [vmem:[%s298 + $0x100] sm:$0xff] %v9068
        %9105 = vst [vmem:[%s298 + $0x108] sm:$0xff] %v9069
        %9106 = vst [vmem:[%s298 + $0x110] sm:$0xff] %v9070
        %9107 = vst [vmem:[%s298 + $0x118] sm:$0xff] %v9071
        %s9108 = sand.u32 %s163, 1
        %s9109 = scalar_lea.sflag [#allocation6], %s9108
        %s9110 = sand.u32 %s163, 1
        %s9111 = smul.addr %s9110, 288
        %s9112 = scalar_lea.vmem [#allocation10], %s9111
        // Predicated region
        $region57: #{tpu_custom_call.1} parent=43 // pred_check
          %p9113 = pneg %p173
        $region58: #{tpu_custom_call.1} parent=43 // pred_check_branch
          %9115 = sbr.rel (%p9113) target = $region60
        $region59: #{tpu_custom_call.1} parent=43 // pred_region
          %s9117 = ssub.s32 4608, 4608
          %9118 = vsyncadd %s9109, %s9117
          %s9119 = smul.addr %s24, 36
          %s9120 = smul.addr %s9119, 128
          %s9121 = scalar_lea.hbm %s6, %s9120
          %s9122 = sshll.u32 %s9112, 4
          %s9123 = int_to_ptr.vmem [resolvable:$true] %s9122
          %9128 = dma.vmem_to_hbm [thread:$0]  %s9123, 4608, %s9121, %s9109, 128, 128, 8
        $region60: #{tpu_custom_call.1} parent=43 // pred_fallthru
          _
      $region44: #{tpu_custom_call.1} parent=5 // pred_fallthru
        _
      %p9129 = scmp.le.s32.totalorder 2, %s19
      // Predicated region
      $region61: #{tpu_custom_call.1} parent=5 // pred_check
        %p9130 = pneg %p9129
      $region62: #{tpu_custom_call.1} parent=5 // pred_check_branch
        %9132 = sbr.rel (%p9130) target = $region64
      $region63: #{tpu_custom_call.1} parent=5 // pred_region
        %s9133 = ssub.s32 %s19, 2
        // Predicated region
        $region65: #{tpu_custom_call.1} parent=63 // pred_check
          %p9134 = pneg %p179
        $region66: #{tpu_custom_call.1} parent=63 // pred_check_branch
          %9136 = sbr.rel (%p9134) target = $region68
        $region67: #{tpu_custom_call.1} parent=63 // pred_region
          %s9137 = sand.u32 %s164, 1
          %s9138 = scalar_lea.sflag [#allocation6], %s9137
          %s9139 = sand.u32 %s164, 1
          %s9140 = smul.addr %s9139, 288
          %s9141 = scalar_lea.vmem [#allocation10], %s9140
          %9142 = dma.done %s9138, 4608
        $region68: #{tpu_custom_call.1} parent=63 // pred_fallthru
          _
      $region64: #{tpu_custom_call.1} parent=5 // pred_fallthru
        _
    $region6: #{tpu_custom_call.1} parent=1 // loop_footer
      %s23 = sadd.s32 1, %s19
    $region7: #{tpu_custom_call.1} parent=1 // loop_footer_branch
      %18 = sbr.rel target = $region3
    $region8: #{tpu_custom_call.1} parent=1 // loop_exit
      _
    %9143 = vsyncpa [#allocation5], 1
    %s9144 = scalar_lea.sflag [#allocation5], 1
    %9145 = vsyncpa %s9144, 1
    %9146 = vsyncpa [#allocation8], 1
    %9147 = vsyncpa [#allocation6], 1
    %s9148 = scalar_lea.sflag [#allocation6], 1
    %9149 = vsyncpa %s9148, 1

</llo_original>
